<compile_context>
chip_gen: v7x
topology: tpu7x:2x2x1
jax: 0.10.0
libtpu: 0.0.40
codegen_flags: <defaults>
</compile_context>

<pallas_src>
import jax
import jax.numpy as jnp
from jax.experimental import pallas as pl
from jax.experimental.pallas import tpu as pltpu

C = 128      # lane-padded channel width (true channel count is 12)
HIN = 16     # input spatial size (four 2x2 pools reduce it to 1x1)


# --------------------------------------------------------------------------
# In-kernel helpers (trace-time Python, fully unrolled)
# --------------------------------------------------------------------------
def _maxpool2x2(y, H, W):
    """2x2 max-pool, stride 2, on an (H, W, C) activation (C on lanes)."""
    y = jnp.max(y.reshape(H // 2, 2, W, C), axis=1)        # pool H pairs (cheap)
    y = jnp.max(y.reshape(H // 2, W // 2, 2, C), axis=2)   # pool W pairs
    return y                                               # (H//2, W//2, C)


def _conv_relu_pool(pin_ref, H, W, w_ref, b_ref):
    """3x3 'same' conv (Cin=Cout=C, lane-padded) + bias + ReLU + 2x2 max-pool.
       pin_ref: (H+2, W+2, C) zero-padded input activation in VMEM
       w_ref  : (9, C, C)  per-tap (Cin, Cout) weights
       b_ref  : (1, C)"""
    acc = jnp.zeros((H * W, C), jnp.float32)
    for kh in range(3):
        for kw in range(3):
            patch = pin_ref[kh:kh + H, kw:kw + W, :].reshape(H * W, C)
            acc = acc + jnp.dot(patch, w_ref[kh * 3 + kw],
                                preferred_element_type=jnp.float32)
    acc = jnp.maximum(acc + b_ref[...], 0.0)
    return _maxpool2x2(acc.reshape(H, W, C), H, W)


# --------------------------------------------------------------------------
# Fused forward kernel: one batch element per grid step, all stages in VMEM
# --------------------------------------------------------------------------
def fused_forward_kernel(x_ref, w1_ref, b1_ref, w2_ref, b2_ref, wo_ref, bo_ref,
                         o_ref, xpad_ref, p1_ref, p2_ref, p3_ref):
    H = HIN

    # ---- stage 1: conv1 (Cin=1) as VPU broadcast-MAC + ReLU + 2x2 pool -----
    xpad_ref[...] = jnp.zeros_like(xpad_ref)                 # in-kernel zero pad
    img = x_ref[0]                                           # (16, 16)
    xpad_ref[1:H + 1, 1:H + 1, :] = jnp.broadcast_to(img[:, :, None], (H, H, C))

    acc = jnp.zeros((H, H, C), jnp.float32)
    for kh in range(3):
        for kw in range(3):
            acc = acc + xpad_ref[kh:kh + H, kw:kw + H, :] * w1_ref[kh * 3 + kw]
    acc = jnp.maximum(acc + b1_ref[...], 0.0)
    y = _maxpool2x2(acc, H, H)                               # (8, 8, C)

    # ---- stages 2-4: conv2 reused three times (matches the PyTorch forward) -
    p1_ref[...] = jnp.zeros_like(p1_ref)
    p1_ref[1:9, 1:9, :] = y
    y = _conv_relu_pool(p1_ref, 8, 8, w2_ref, b2_ref)        # (4, 4, C)

    p2_ref[...] = jnp.zeros_like(p2_ref)
    p2_ref[1:5, 1:5, :] = y
    y = _conv_relu_pool(p2_ref, 4, 4, w2_ref, b2_ref)        # (2, 2, C)

    p3_ref[...] = jnp.zeros_like(p3_ref)
    p3_ref[1:3, 1:3, :] = y
    y = _conv_relu_pool(p3_ref, 2, 2, w2_ref, b2_ref)        # (1, 1, C)

    # ---- head: mean over H,W (1x1 -> identity), Linear(12,2), log-softmax --
    feat = y.reshape(1, C)           # spatial is 1x1 after 4 pools of 16x16
    logits = jnp.dot(feat, wo_ref[...],
                     preferred_element_type=jnp.float32) + bo_ref[...]   # (1,2)
    m = jnp.max(logits, axis=1, keepdims=True)
    s = logits - m
    lse = jnp.log(jnp.sum(jnp.exp(s), axis=1, keepdims=True))
    o_ref[...] = (s - lse).reshape(1, 1, 2).astype(o_ref.dtype)


# --------------------------------------------------------------------------
# Wrapper: single pallas_call for the whole forward pass
# --------------------------------------------------------------------------
@jax.jit
def model_forward(x_nchw, params):
    N, Cin, H, W = x_nchw.shape
    assert (Cin, H, W) == (1, HIN, HIN)
    x = x_nchw.reshape(N, H, W)                  # squeeze the single channel

    out = pl.pallas_call(
        fused_forward_kernel,
        out_shape=jax.ShapeDtypeStruct((N, 1, 2), jnp.float32),
        grid=(N,),
        in_specs=[
            pl.BlockSpec((1, H, W), lambda n: (n, 0, 0)),       # input image
            pl.BlockSpec((9, C), lambda n: (0, 0)),             # conv1 taps
            pl.BlockSpec((1, C), lambda n: (0, 0)),             # conv1 bias
            pl.BlockSpec((9, C, C), lambda n: (0, 0, 0)),       # conv2 taps
            pl.BlockSpec((1, C), lambda n: (0, 0)),             # conv2 bias
            pl.BlockSpec((C, 2), lambda n: (0, 0)),             # linear weight
            pl.BlockSpec((1, 2), lambda n: (0, 0)),             # linear bias
        ],
        out_specs=pl.BlockSpec((1, 1, 2), lambda n: (n, 0, 0)),
        scratch_shapes=[
            pltpu.VMEM((HIN + 2, HIN + 2, C), jnp.float32),  # padded bcast input
            pltpu.VMEM((10, 10, C), jnp.float32),            # padded stage-1 act
            pltpu.VMEM((6, 6, C), jnp.float32),              # padded stage-2 act
            pltpu.VMEM((4, 4, C), jnp.float32),              # padded stage-3 act
        ],
        compiler_params=pltpu.CompilerParams(
            dimension_semantics=("parallel",)),
    )(x, params["w1p"], params["b1p"], params["w2p"], params["b2p"],
      params["wop"], params["bop"])
    return out.reshape(N, 2)


# --------------------------------------------------------------------------
# Deterministic synthetic parameters (PyTorch shapes: OIHW convs, (out,in) fc)
# --------------------------------------------------------------------------
def init_params(key):
    ks = jax.random.split(key, 6)
    w1_oihw = 0.2 * jax.random.normal(ks[0], (12, 1, 3, 3), jnp.float32)
    b1 = 0.1 * jax.random.normal(ks[1], (12,), jnp.float32)
    w2_oihw = 0.1 * jax.random.normal(ks[2], (12, 12, 3, 3), jnp.float32)
    b2 = 0.1 * jax.random.normal(ks[3], (12,), jnp.float32)
    wo = 0.3 * jax.random.normal(ks[4], (2, 12), jnp.float32)
    bo = 0.1 * jax.random.normal(ks[5], (2,), jnp.float32)
    # conv3 / conv4 exist in the PyTorch __init__ but are unused in forward().

    pad_c = C - 12
    # conv1: (O=12, I=1, 3, 3) -> (9 taps, 128) lane-padded per-tap vectors
    w1_taps = jnp.transpose(w1_oihw[:, 0], (1, 2, 0)).reshape(9, 12)
    w1p = jnp.pad(w1_taps, ((0, 0), (0, pad_c)))
    b1p = jnp.pad(b1, (0, pad_c)).reshape(1, C)
    # conv2: (O, I, 3, 3) -> (9 taps, 128in, 128out), zero padded channels
    w2_taps = jnp.transpose(w2_oihw, (2, 3, 1, 0)).reshape(9, 12, 12)
    w2p = jnp.pad(w2_taps, ((0, 0), (0, pad_c), (0, pad_c)))
    b2p = jnp.pad(b2, (0, pad_c)).reshape(1, C)
    # linear: (2, 12) -> (128, 2); zero rows for the padded channels
    wop = jnp.pad(wo.T, ((0, pad_c), (0, 0)))
    bop = bo.reshape(1, 2)

    return {
        # kernel (lane-padded) parameters
        "w1p": w1p, "b1p": b1p, "w2p": w2p, "b2p": b2p, "wop": wop, "bop": bop,
        # torch-layout copies kept only for the pure-JAX reference check
        "w1_oihw": w1_oihw, "b1": b1, "w2_oihw": w2_oihw, "b2": b2,
        "wo_torch": wo, "bo": bo,
    }


def reference_forward(x_nchw, params):
    def conv(x, w, b):
        y = jax.lax.conv_general_dilated(
            x, w, window_strides=(1, 1), padding=((1, 1), (1, 1)),
            dimension_numbers=("NCHW", "OIHW", "NCHW"),
            precision=jax.lax.Precision.HIGHEST)
        return jax.nn.relu(y + b[None, :, None, None])

    def pool(x):
        return jax.lax.reduce_window(x, -jnp.inf, jax.lax.max,
                                     (1, 1, 2, 2), (1, 1, 2, 2), "VALID")

    x = pool(conv(x_nchw, params["w1_oihw"], params["b1"]))
    for _ in range(3):
        x = pool(conv(x, params["w2_oihw"], params["b2"]))
    feat = jnp.mean(x, axis=(2, 3))
    logits = feat @ params["wo_torch"].T + params["bo"]
    return jax.nn.log_softmax(logits, axis=1)


if __name__ == "__main__":
    key = jax.random.PRNGKey(0)
    kx, kp = jax.random.split(key)
    params = init_params(kp)
    # PyTorch-style NCHW input; 16x16 so four 2x2 pools reduce it to 1x1.
    x = jax.random.normal(kx, (2, 1, 16, 16), jnp.float32)

    out = jax.block_until_ready(model_forward(x, params))
    assert out.shape == (2, 2) and out.dtype == jnp.float32

    ref = reference_forward(x, params)
    if not jnp.allclose(out, ref, atol=2e-2, rtol=2e-2):
        raise AssertionError(f"mismatch vs reference:\n{out}\n{ref}")

    print("KERNEL_OK")
</pallas_src>

<mosaic_0001>
module attributes {stable_mosaic.version = 11 : i64} {
  func.func @fused_forward_kernel(%arg0: i32, %arg1: memref<1x16x16xf32, #tpu.memory_space<vmem>>, %arg2: memref<9x128xf32, #tpu.memory_space<vmem>>, %arg3: memref<1x128xf32, #tpu.memory_space<vmem>>, %arg4: memref<9x128x128xf32, #tpu.memory_space<vmem>>, %arg5: memref<1x128xf32, #tpu.memory_space<vmem>>, %arg6: memref<128x2xf32, #tpu.memory_space<vmem>>, %arg7: memref<1x2xf32, #tpu.memory_space<vmem>>, %arg8: memref<1x1x2xf32, #tpu.memory_space<vmem>>, %arg9: memref<18x18x128xf32, #tpu.memory_space<vmem>>, %arg10: memref<10x10x128xf32, #tpu.memory_space<vmem>>, %arg11: memref<6x6x128xf32, #tpu.memory_space<vmem>>, %arg12: memref<4x4x128xf32, #tpu.memory_space<vmem>>) attributes {dimension_semantics = [#tpu.dimension_semantics<parallel>], iteration_bounds = array<i64: 2>, scalar_prefetch = 0 : i64, scratch_operands = 4 : i64, tpu.core_type = #tpu.core_type<tc>, window_params = [{transform_indices = @transform_0, window_bounds = array<i64: 1, 16, 16>}, {pipeline_mode = #tpu.pipeline_mode<synchronous>, transform_indices = @transform_1, window_bounds = array<i64: 9, 128>}, {pipeline_mode = #tpu.pipeline_mode<synchronous>, transform_indices = @transform_2, window_bounds = array<i64: 1, 128>}, {pipeline_mode = #tpu.pipeline_mode<synchronous>, transform_indices = @transform_3, window_bounds = array<i64: 9, 128, 128>}, {pipeline_mode = #tpu.pipeline_mode<synchronous>, transform_indices = @transform_4, window_bounds = array<i64: 1, 128>}, {pipeline_mode = #tpu.pipeline_mode<synchronous>, transform_indices = @transform_5, window_bounds = array<i64: 128, 2>}, {pipeline_mode = #tpu.pipeline_mode<synchronous>, transform_indices = @transform_6, window_bounds = array<i64: 1, 2>}, {transform_indices = @transform_7, window_bounds = array<i64: 1, 1, 2>}]} {
    %cst = arith.constant 0.000000e+00 : f32
    %0 = vector.broadcast %cst : f32 to vector<18x18x128xf32>
    %c0 = arith.constant 0 : index
    %c0_0 = arith.constant 0 : index
    %c0_1 = arith.constant 0 : index
    %1 = vector.load %arg9[%c0, %c0_0, %c0_1] : memref<18x18x128xf32, #tpu.memory_space<vmem>>, vector<18x18x128xf32>
    tpu.vector_store %arg9[%c0, %c0_0, %c0_1], %0 {strides = array<i32>} : memref<18x18x128xf32, #tpu.memory_space<vmem>>, vector<18x18x128xf32>,
    %c0_2 = arith.constant 0 : index
    %c0_3 = arith.constant 0 : index
    %c0_4 = arith.constant 0 : index
    %2 = vector.load %arg1[%c0_2, %c0_3, %c0_4] : memref<1x16x16xf32, #tpu.memory_space<vmem>>, vector<1x16x16xf32>
    %3 = vector.shape_cast %2 : vector<1x16x16xf32> to vector<16x16xf32>
    %4 = vector.shape_cast %3 : vector<16x16xf32> to vector<16x16x1xf32>
    %5 = vector.shape_cast %4 : vector<16x16x1xf32> to vector<16x16x1xf32>
    %6 = vector.broadcast %5 : vector<16x16x1xf32> to vector<16x16x128xf32>
    %c1 = arith.constant 1 : index
    %c1_5 = arith.constant 1 : index
    %c0_6 = arith.constant 0 : index
    %7 = vector.load %arg9[%c1, %c1_5, %c0_6] : memref<18x18x128xf32, #tpu.memory_space<vmem>>, vector<16x16x128xf32>
    tpu.vector_store %arg9[%c1, %c1_5, %c0_6], %6 {strides = array<i32>} : memref<18x18x128xf32, #tpu.memory_space<vmem>>, vector<16x16x128xf32>,
    %cst_7 = arith.constant 0.000000e+00 : f32
    %8 = vector.broadcast %cst_7 : f32 to vector<16x16x128xf32>
    %c0_8 = arith.constant 0 : index
    %c0_9 = arith.constant 0 : index
    %c0_10 = arith.constant 0 : index
    %9 = vector.load %arg9[%c0_8, %c0_9, %c0_10] : memref<18x18x128xf32, #tpu.memory_space<vmem>>, vector<16x16x128xf32>
    %c0_11 = arith.constant 0 : index
    %c0_12 = arith.constant 0 : index
    %10 = vector.load %arg2[%c0_11, %c0_12] : memref<9x128xf32, #tpu.memory_space<vmem>>, vector<1x128xf32>
    %11 = vector.shape_cast %10 : vector<1x128xf32> to vector<128xf32>
    %12 = vector.shape_cast %11 : vector<128xf32> to vector<1x1x128xf32>
    %13 = vector.broadcast %12 : vector<1x1x128xf32> to vector<16x16x128xf32>
    %14 = arith.mulf %9, %13 : vector<16x16x128xf32>
    %15 = arith.addf %8, %14 : vector<16x16x128xf32>
    %c0_13 = arith.constant 0 : index
    %c1_14 = arith.constant 1 : index
    %c0_15 = arith.constant 0 : index
    %16 = vector.load %arg9[%c0_13, %c1_14, %c0_15] : memref<18x18x128xf32, #tpu.memory_space<vmem>>, vector<16x16x128xf32>
    %c1_16 = arith.constant 1 : index
    %c0_17 = arith.constant 0 : index
    %17 = vector.load %arg2[%c1_16, %c0_17] : memref<9x128xf32, #tpu.memory_space<vmem>>, vector<1x128xf32>
    %18 = vector.shape_cast %17 : vector<1x128xf32> to vector<128xf32>
    %19 = vector.shape_cast %18 : vector<128xf32> to vector<1x1x128xf32>
    %20 = vector.broadcast %19 : vector<1x1x128xf32> to vector<16x16x128xf32>
    %21 = arith.mulf %16, %20 : vector<16x16x128xf32>
    %22 = arith.addf %15, %21 : vector<16x16x128xf32>
    %c0_18 = arith.constant 0 : index
    %c2 = arith.constant 2 : index
    %c0_19 = arith.constant 0 : index
    %23 = vector.load %arg9[%c0_18, %c2, %c0_19] : memref<18x18x128xf32, #tpu.memory_space<vmem>>, vector<16x16x128xf32>
    %c2_20 = arith.constant 2 : index
    %c0_21 = arith.constant 0 : index
    %24 = vector.load %arg2[%c2_20, %c0_21] : memref<9x128xf32, #tpu.memory_space<vmem>>, vector<1x128xf32>
    %25 = vector.shape_cast %24 : vector<1x128xf32> to vector<128xf32>
    %26 = vector.shape_cast %25 : vector<128xf32> to vector<1x1x128xf32>
    %27 = vector.broadcast %26 : vector<1x1x128xf32> to vector<16x16x128xf32>
    %28 = arith.mulf %23, %27 : vector<16x16x128xf32>
    %29 = arith.addf %22, %28 : vector<16x16x128xf32>
    %c1_22 = arith.constant 1 : index
    %c0_23 = arith.constant 0 : index
    %c0_24 = arith.constant 0 : index
    %30 = vector.load %arg9[%c1_22, %c0_23, %c0_24] : memref<18x18x128xf32, #tpu.memory_space<vmem>>, vector<16x16x128xf32>
    %c3 = arith.constant 3 : index
    %c0_25 = arith.constant 0 : index
    %31 = vector.load %arg2[%c3, %c0_25] : memref<9x128xf32, #tpu.memory_space<vmem>>, vector<1x128xf32>
    %32 = vector.shape_cast %31 : vector<1x128xf32> to vector<128xf32>
    %33 = vector.shape_cast %32 : vector<128xf32> to vector<1x1x128xf32>
    %34 = vector.broadcast %33 : vector<1x1x128xf32> to vector<16x16x128xf32>
    %35 = arith.mulf %30, %34 : vector<16x16x128xf32>
    %36 = arith.addf %29, %35 : vector<16x16x128xf32>
    %c1_26 = arith.constant 1 : index
    %c1_27 = arith.constant 1 : index
    %c0_28 = arith.constant 0 : index
    %37 = vector.load %arg9[%c1_26, %c1_27, %c0_28] : memref<18x18x128xf32, #tpu.memory_space<vmem>>, vector<16x16x128xf32>
    %c4 = arith.constant 4 : index
    %c0_29 = arith.constant 0 : index
    %38 = vector.load %arg2[%c4, %c0_29] : memref<9x128xf32, #tpu.memory_space<vmem>>, vector<1x128xf32>
    %39 = vector.shape_cast %38 : vector<1x128xf32> to vector<128xf32>
    %40 = vector.shape_cast %39 : vector<128xf32> to vector<1x1x128xf32>
    %41 = vector.broadcast %40 : vector<1x1x128xf32> to vector<16x16x128xf32>
    %42 = arith.mulf %37, %41 : vector<16x16x128xf32>
    %43 = arith.addf %36, %42 : vector<16x16x128xf32>
    %c1_30 = arith.constant 1 : index
    %c2_31 = arith.constant 2 : index
    %c0_32 = arith.constant 0 : index
    %44 = vector.load %arg9[%c1_30, %c2_31, %c0_32] : memref<18x18x128xf32, #tpu.memory_space<vmem>>, vector<16x16x128xf32>
    %c5 = arith.constant 5 : index
    %c0_33 = arith.constant 0 : index
    %45 = vector.load %arg2[%c5, %c0_33] : memref<9x128xf32, #tpu.memory_space<vmem>>, vector<1x128xf32>
    %46 = vector.shape_cast %45 : vector<1x128xf32> to vector<128xf32>
    %47 = vector.shape_cast %46 : vector<128xf32> to vector<1x1x128xf32>
    %48 = vector.broadcast %47 : vector<1x1x128xf32> to vector<16x16x128xf32>
    %49 = arith.mulf %44, %48 : vector<16x16x128xf32>
    %50 = arith.addf %43, %49 : vector<16x16x128xf32>
    %c2_34 = arith.constant 2 : index
    %c0_35 = arith.constant 0 : index
    %c0_36 = arith.constant 0 : index
    %51 = vector.load %arg9[%c2_34, %c0_35, %c0_36] : memref<18x18x128xf32, #tpu.memory_space<vmem>>, vector<16x16x128xf32>
    %c6 = arith.constant 6 : index
    %c0_37 = arith.constant 0 : index
    %52 = vector.load %arg2[%c6, %c0_37] : memref<9x128xf32, #tpu.memory_space<vmem>>, vector<1x128xf32>
    %53 = vector.shape_cast %52 : vector<1x128xf32> to vector<128xf32>
    %54 = vector.shape_cast %53 : vector<128xf32> to vector<1x1x128xf32>
    %55 = vector.broadcast %54 : vector<1x1x128xf32> to vector<16x16x128xf32>
    %56 = arith.mulf %51, %55 : vector<16x16x128xf32>
    %57 = arith.addf %50, %56 : vector<16x16x128xf32>
    %c2_38 = arith.constant 2 : index
    %c1_39 = arith.constant 1 : index
    %c0_40 = arith.constant 0 : index
    %58 = vector.load %arg9[%c2_38, %c1_39, %c0_40] : memref<18x18x128xf32, #tpu.memory_space<vmem>>, vector<16x16x128xf32>
    %c7 = arith.constant 7 : index
    %c0_41 = arith.constant 0 : index
    %59 = vector.load %arg2[%c7, %c0_41] : memref<9x128xf32, #tpu.memory_space<vmem>>, vector<1x128xf32>
    %60 = vector.shape_cast %59 : vector<1x128xf32> to vector<128xf32>
    %61 = vector.shape_cast %60 : vector<128xf32> to vector<1x1x128xf32>
    %62 = vector.broadcast %61 : vector<1x1x128xf32> to vector<16x16x128xf32>
    %63 = arith.mulf %58, %62 : vector<16x16x128xf32>
    %64 = arith.addf %57, %63 : vector<16x16x128xf32>
    %c2_42 = arith.constant 2 : index
    %c2_43 = arith.constant 2 : index
    %c0_44 = arith.constant 0 : index
    %65 = vector.load %arg9[%c2_42, %c2_43, %c0_44] : memref<18x18x128xf32, #tpu.memory_space<vmem>>, vector<16x16x128xf32>
    %c8 = arith.constant 8 : index
    %c0_45 = arith.constant 0 : index
    %66 = vector.load %arg2[%c8, %c0_45] : memref<9x128xf32, #tpu.memory_space<vmem>>, vector<1x128xf32>
    %67 = vector.shape_cast %66 : vector<1x128xf32> to vector<128xf32>
    %68 = vector.shape_cast %67 : vector<128xf32> to vector<1x1x128xf32>
    %69 = vector.broadcast %68 : vector<1x1x128xf32> to vector<16x16x128xf32>
    %70 = arith.mulf %65, %69 : vector<16x16x128xf32>
    %71 = arith.addf %64, %70 : vector<16x16x128xf32>
    %c0_46 = arith.constant 0 : index
    %c0_47 = arith.constant 0 : index
    %72 = vector.load %arg3[%c0_46, %c0_47] : memref<1x128xf32, #tpu.memory_space<vmem>>, vector<1x128xf32>
    %73 = vector.shape_cast %72 : vector<1x128xf32> to vector<1x1x128xf32>
    %74 = vector.broadcast %73 : vector<1x1x128xf32> to vector<16x16x128xf32>
    %75 = arith.addf %71, %74 : vector<16x16x128xf32>
    %cst_48 = arith.constant 0.000000e+00 : f32
    %76 = vector.broadcast %cst_48 : f32 to vector<16x16x128xf32>
    %77 = arith.maximumf %75, %76 : vector<16x16x128xf32>
    %78 = vector.shape_cast %77 : vector<16x16x128xf32> to vector<8x2x16x128xf32>
    %cst_49 = arith.constant dense<0xFF800000> : vector<8x16x128xf32>
    %79 = vector.multi_reduction <maximumf>, %78, %cst_49 [1] : vector<8x2x16x128xf32> to vector<8x16x128xf32>
    %80 = vector.shape_cast %79 : vector<8x16x128xf32> to vector<8x8x2x128xf32>
    %cst_50 = arith.constant dense<0xFF800000> : vector<8x8x128xf32>
    %81 = vector.multi_reduction <maximumf>, %80, %cst_50 [2] : vector<8x8x2x128xf32> to vector<8x8x128xf32>
    %cst_51 = arith.constant 0.000000e+00 : f32
    %82 = vector.broadcast %cst_51 : f32 to vector<10x10x128xf32>
    %c0_52 = arith.constant 0 : index
    %c0_53 = arith.constant 0 : index
    %c0_54 = arith.constant 0 : index
    %83 = vector.load %arg10[%c0_52, %c0_53, %c0_54] : memref<10x10x128xf32, #tpu.memory_space<vmem>>, vector<10x10x128xf32>
    tpu.vector_store %arg10[%c0_52, %c0_53, %c0_54], %82 {strides = array<i32>} : memref<10x10x128xf32, #tpu.memory_space<vmem>>, vector<10x10x128xf32>,
    %c1_55 = arith.constant 1 : index
    %c1_56 = arith.constant 1 : index
    %c0_57 = arith.constant 0 : index
    %84 = vector.load %arg10[%c1_55, %c1_56, %c0_57] : memref<10x10x128xf32, #tpu.memory_space<vmem>>, vector<8x8x128xf32>
    tpu.vector_store %arg10[%c1_55, %c1_56, %c0_57], %81 {strides = array<i32>} : memref<10x10x128xf32, #tpu.memory_space<vmem>>, vector<8x8x128xf32>,
    %cst_58 = arith.constant 0.000000e+00 : f32
    %85 = vector.broadcast %cst_58 : f32 to vector<64x128xf32>
    %c0_59 = arith.constant 0 : index
    %c0_60 = arith.constant 0 : index
    %c0_61 = arith.constant 0 : index
    %86 = vector.load %arg10[%c0_59, %c0_60, %c0_61] : memref<10x10x128xf32, #tpu.memory_space<vmem>>, vector<8x8x128xf32>
    %87 = vector.shape_cast %86 : vector<8x8x128xf32> to vector<64x128xf32>
    %c0_62 = arith.constant 0 : index
    %c0_63 = arith.constant 0 : index
    %c0_64 = arith.constant 0 : index
    %88 = vector.load %arg4[%c0_62, %c0_63, %c0_64] : memref<9x128x128xf32, #tpu.memory_space<vmem>>, vector<1x128x128xf32>
    %89 = vector.shape_cast %88 : vector<1x128x128xf32> to vector<128x128xf32>
    %cst_65 = arith.constant dense<0.000000e+00> : vector<64x128xf32>
    %90 = tpu.matmul %87, %89, %cst_65 {dimension_numbers = #tpu.dot_dimension_numbers<[1], [0], [0], [1], [0, 0, 1, 1], [], []>} : vector<64x128xf32>, vector<128x128xf32>, vector<64x128xf32> -> vector<64x128xf32>
    %91 = arith.addf %85, %90 : vector<64x128xf32>
    %c0_66 = arith.constant 0 : index
    %c1_67 = arith.constant 1 : index
    %c0_68 = arith.constant 0 : index
    %92 = vector.load %arg10[%c0_66, %c1_67, %c0_68] : memref<10x10x128xf32, #tpu.memory_space<vmem>>, vector<8x8x128xf32>
    %93 = vector.shape_cast %92 : vector<8x8x128xf32> to vector<64x128xf32>
    %c1_69 = arith.constant 1 : index
    %c0_70 = arith.constant 0 : index
    %c0_71 = arith.constant 0 : index
    %94 = vector.load %arg4[%c1_69, %c0_70, %c0_71] : memref<9x128x128xf32, #tpu.memory_space<vmem>>, vector<1x128x128xf32>
    %95 = vector.shape_cast %94 : vector<1x128x128xf32> to vector<128x128xf32>
    %cst_72 = arith.constant dense<0.000000e+00> : vector<64x128xf32>
    %96 = tpu.matmul %93, %95, %cst_72 {dimension_numbers = #tpu.dot_dimension_numbers<[1], [0], [0], [1], [0, 0, 1, 1], [], []>} : vector<64x128xf32>, vector<128x128xf32>, vector<64x128xf32> -> vector<64x128xf32>
    %97 = arith.addf %91, %96 : vector<64x128xf32>
    %c0_73 = arith.constant 0 : index
    %c2_74 = arith.constant 2 : index
    %c0_75 = arith.constant 0 : index
    %98 = vector.load %arg10[%c0_73, %c2_74, %c0_75] : memref<10x10x128xf32, #tpu.memory_space<vmem>>, vector<8x8x128xf32>
    %99 = vector.shape_cast %98 : vector<8x8x128xf32> to vector<64x128xf32>
    %c2_76 = arith.constant 2 : index
    %c0_77 = arith.constant 0 : index
    %c0_78 = arith.constant 0 : index
    %100 = vector.load %arg4[%c2_76, %c0_77, %c0_78] : memref<9x128x128xf32, #tpu.memory_space<vmem>>, vector<1x128x128xf32>
    %101 = vector.shape_cast %100 : vector<1x128x128xf32> to vector<128x128xf32>
    %cst_79 = arith.constant dense<0.000000e+00> : vector<64x128xf32>
    %102 = tpu.matmul %99, %101, %cst_79 {dimension_numbers = #tpu.dot_dimension_numbers<[1], [0], [0], [1], [0, 0, 1, 1], [], []>} : vector<64x128xf32>, vector<128x128xf32>, vector<64x128xf32> -> vector<64x128xf32>
    %103 = arith.addf %97, %102 : vector<64x128xf32>
    %c1_80 = arith.constant 1 : index
    %c0_81 = arith.constant 0 : index
    %c0_82 = arith.constant 0 : index
    %104 = vector.load %arg10[%c1_80, %c0_81, %c0_82] : memref<10x10x128xf32, #tpu.memory_space<vmem>>, vector<8x8x128xf32>
    %105 = vector.shape_cast %104 : vector<8x8x128xf32> to vector<64x128xf32>
    %c3_83 = arith.constant 3 : index
    %c0_84 = arith.constant 0 : index
    %c0_85 = arith.constant 0 : index
    %106 = vector.load %arg4[%c3_83, %c0_84, %c0_85] : memref<9x128x128xf32, #tpu.memory_space<vmem>>, vector<1x128x128xf32>
    %107 = vector.shape_cast %106 : vector<1x128x128xf32> to vector<128x128xf32>
    %cst_86 = arith.constant dense<0.000000e+00> : vector<64x128xf32>
    %108 = tpu.matmul %105, %107, %cst_86 {dimension_numbers = #tpu.dot_dimension_numbers<[1], [0], [0], [1], [0, 0, 1, 1], [], []>} : vector<64x128xf32>, vector<128x128xf32>, vector<64x128xf32> -> vector<64x128xf32>
    %109 = arith.addf %103, %108 : vector<64x128xf32>
    %c1_87 = arith.constant 1 : index
    %c1_88 = arith.constant 1 : index
    %c0_89 = arith.constant 0 : index
    %110 = vector.load %arg10[%c1_87, %c1_88, %c0_89] : memref<10x10x128xf32, #tpu.memory_space<vmem>>, vector<8x8x128xf32>
    %111 = vector.shape_cast %110 : vector<8x8x128xf32> to vector<64x128xf32>
    %c4_90 = arith.constant 4 : index
    %c0_91 = arith.constant 0 : index
    %c0_92 = arith.constant 0 : index
    %112 = vector.load %arg4[%c4_90, %c0_91, %c0_92] : memref<9x128x128xf32, #tpu.memory_space<vmem>>, vector<1x128x128xf32>
    %113 = vector.shape_cast %112 : vector<1x128x128xf32> to vector<128x128xf32>
    %cst_93 = arith.constant dense<0.000000e+00> : vector<64x128xf32>
    %114 = tpu.matmul %111, %113, %cst_93 {dimension_numbers = #tpu.dot_dimension_numbers<[1], [0], [0], [1], [0, 0, 1, 1], [], []>} : vector<64x128xf32>, vector<128x128xf32>, vector<64x128xf32> -> vector<64x128xf32>
    %115 = arith.addf %109, %114 : vector<64x128xf32>
    %c1_94 = arith.constant 1 : index
    %c2_95 = arith.constant 2 : index
    %c0_96 = arith.constant 0 : index
    %116 = vector.load %arg10[%c1_94, %c2_95, %c0_96] : memref<10x10x128xf32, #tpu.memory_space<vmem>>, vector<8x8x128xf32>
    %117 = vector.shape_cast %116 : vector<8x8x128xf32> to vector<64x128xf32>
    %c5_97 = arith.constant 5 : index
    %c0_98 = arith.constant 0 : index
    %c0_99 = arith.constant 0 : index
    %118 = vector.load %arg4[%c5_97, %c0_98, %c0_99] : memref<9x128x128xf32, #tpu.memory_space<vmem>>, vector<1x128x128xf32>
    %119 = vector.shape_cast %118 : vector<1x128x128xf32> to vector<128x128xf32>
    %cst_100 = arith.constant dense<0.000000e+00> : vector<64x128xf32>
    %120 = tpu.matmul %117, %119, %cst_100 {dimension_numbers = #tpu.dot_dimension_numbers<[1], [0], [0], [1], [0, 0, 1, 1], [], []>} : vector<64x128xf32>, vector<128x128xf32>, vector<64x128xf32> -> vector<64x128xf32>
    %121 = arith.addf %115, %120 : vector<64x128xf32>
    %c2_101 = arith.constant 2 : index
    %c0_102 = arith.constant 0 : index
    %c0_103 = arith.constant 0 : index
    %122 = vector.load %arg10[%c2_101, %c0_102, %c0_103] : memref<10x10x128xf32, #tpu.memory_space<vmem>>, vector<8x8x128xf32>
    %123 = vector.shape_cast %122 : vector<8x8x128xf32> to vector<64x128xf32>
    %c6_104 = arith.constant 6 : index
    %c0_105 = arith.constant 0 : index
    %c0_106 = arith.constant 0 : index
    %124 = vector.load %arg4[%c6_104, %c0_105, %c0_106] : memref<9x128x128xf32, #tpu.memory_space<vmem>>, vector<1x128x128xf32>
    %125 = vector.shape_cast %124 : vector<1x128x128xf32> to vector<128x128xf32>
    %cst_107 = arith.constant dense<0.000000e+00> : vector<64x128xf32>
    %126 = tpu.matmul %123, %125, %cst_107 {dimension_numbers = #tpu.dot_dimension_numbers<[1], [0], [0], [1], [0, 0, 1, 1], [], []>} : vector<64x128xf32>, vector<128x128xf32>, vector<64x128xf32> -> vector<64x128xf32>
    %127 = arith.addf %121, %126 : vector<64x128xf32>
    %c2_108 = arith.constant 2 : index
    %c1_109 = arith.constant 1 : index
    %c0_110 = arith.constant 0 : index
    %128 = vector.load %arg10[%c2_108, %c1_109, %c0_110] : memref<10x10x128xf32, #tpu.memory_space<vmem>>, vector<8x8x128xf32>
    %129 = vector.shape_cast %128 : vector<8x8x128xf32> to vector<64x128xf32>
    %c7_111 = arith.constant 7 : index
    %c0_112 = arith.constant 0 : index
    %c0_113 = arith.constant 0 : index
    %130 = vector.load %arg4[%c7_111, %c0_112, %c0_113] : memref<9x128x128xf32, #tpu.memory_space<vmem>>, vector<1x128x128xf32>
    %131 = vector.shape_cast %130 : vector<1x128x128xf32> to vector<128x128xf32>
    %cst_114 = arith.constant dense<0.000000e+00> : vector<64x128xf32>
    %132 = tpu.matmul %129, %131, %cst_114 {dimension_numbers = #tpu.dot_dimension_numbers<[1], [0], [0], [1], [0, 0, 1, 1], [], []>} : vector<64x128xf32>, vector<128x128xf32>, vector<64x128xf32> -> vector<64x128xf32>
    %133 = arith.addf %127, %132 : vector<64x128xf32>
    %c2_115 = arith.constant 2 : index
    %c2_116 = arith.constant 2 : index
    %c0_117 = arith.constant 0 : index
    %134 = vector.load %arg10[%c2_115, %c2_116, %c0_117] : memref<10x10x128xf32, #tpu.memory_space<vmem>>, vector<8x8x128xf32>
    %135 = vector.shape_cast %134 : vector<8x8x128xf32> to vector<64x128xf32>
    %c8_118 = arith.constant 8 : index
    %c0_119 = arith.constant 0 : index
    %c0_120 = arith.constant 0 : index
    %136 = vector.load %arg4[%c8_118, %c0_119, %c0_120] : memref<9x128x128xf32, #tpu.memory_space<vmem>>, vector<1x128x128xf32>
    %137 = vector.shape_cast %136 : vector<1x128x128xf32> to vector<128x128xf32>
    %cst_121 = arith.constant dense<0.000000e+00> : vector<64x128xf32>
    %138 = tpu.matmul %135, %137, %cst_121 {dimension_numbers = #tpu.dot_dimension_numbers<[1], [0], [0], [1], [0, 0, 1, 1], [], []>} : vector<64x128xf32>, vector<128x128xf32>, vector<64x128xf32> -> vector<64x128xf32>
    %139 = arith.addf %133, %138 : vector<64x128xf32>
    %c0_122 = arith.constant 0 : index
    %c0_123 = arith.constant 0 : index
    %140 = vector.load %arg5[%c0_122, %c0_123] : memref<1x128xf32, #tpu.memory_space<vmem>>, vector<1x128xf32>
    %141 = vector.broadcast %140 : vector<1x128xf32> to vector<64x128xf32>
    %142 = arith.addf %139, %141 : vector<64x128xf32>
    %cst_124 = arith.constant 0.000000e+00 : f32
    %143 = vector.broadcast %cst_124 : f32 to vector<64x128xf32>
    %144 = arith.maximumf %142, %143 : vector<64x128xf32>
    %145 = vector.shape_cast %144 : vector<64x128xf32> to vector<8x8x128xf32>
    %146 = vector.shape_cast %145 : vector<8x8x128xf32> to vector<4x2x8x128xf32>
    %cst_125 = arith.constant dense<0xFF800000> : vector<4x8x128xf32>
    %147 = vector.multi_reduction <maximumf>, %146, %cst_125 [1] : vector<4x2x8x128xf32> to vector<4x8x128xf32>
    %148 = vector.shape_cast %147 : vector<4x8x128xf32> to vector<4x4x2x128xf32>
    %cst_126 = arith.constant dense<0xFF800000> : vector<4x4x128xf32>
    %149 = vector.multi_reduction <maximumf>, %148, %cst_126 [2] : vector<4x4x2x128xf32> to vector<4x4x128xf32>
    %cst_127 = arith.constant 0.000000e+00 : f32
    %150 = vector.broadcast %cst_127 : f32 to vector<6x6x128xf32>
    %c0_128 = arith.constant 0 : index
    %c0_129 = arith.constant 0 : index
    %c0_130 = arith.constant 0 : index
    %151 = vector.load %arg11[%c0_128, %c0_129, %c0_130] : memref<6x6x128xf32, #tpu.memory_space<vmem>>, vector<6x6x128xf32>
    tpu.vector_store %arg11[%c0_128, %c0_129, %c0_130], %150 {strides = array<i32>} : memref<6x6x128xf32, #tpu.memory_space<vmem>>, vector<6x6x128xf32>,
    %c1_131 = arith.constant 1 : index
    %c1_132 = arith.constant 1 : index
    %c0_133 = arith.constant 0 : index
    %152 = vector.load %arg11[%c1_131, %c1_132, %c0_133] : memref<6x6x128xf32, #tpu.memory_space<vmem>>, vector<4x4x128xf32>
    tpu.vector_store %arg11[%c1_131, %c1_132, %c0_133], %149 {strides = array<i32>} : memref<6x6x128xf32, #tpu.memory_space<vmem>>, vector<4x4x128xf32>,
    %cst_134 = arith.constant 0.000000e+00 : f32
    %153 = vector.broadcast %cst_134 : f32 to vector<16x128xf32>
    %c0_135 = arith.constant 0 : index
    %c0_136 = arith.constant 0 : index
    %c0_137 = arith.constant 0 : index
    %154 = vector.load %arg11[%c0_135, %c0_136, %c0_137] : memref<6x6x128xf32, #tpu.memory_space<vmem>>, vector<4x4x128xf32>
    %155 = vector.shape_cast %154 : vector<4x4x128xf32> to vector<16x128xf32>
    %c0_138 = arith.constant 0 : index
    %c0_139 = arith.constant 0 : index
    %c0_140 = arith.constant 0 : index
    %156 = vector.load %arg4[%c0_138, %c0_139, %c0_140] : memref<9x128x128xf32, #tpu.memory_space<vmem>>, vector<1x128x128xf32>
    %157 = vector.shape_cast %156 : vector<1x128x128xf32> to vector<128x128xf32>
    %cst_141 = arith.constant dense<0.000000e+00> : vector<16x128xf32>
    %158 = tpu.matmul %155, %157, %cst_141 {dimension_numbers = #tpu.dot_dimension_numbers<[1], [0], [0], [1], [0, 0, 1, 1], [], []>} : vector<16x128xf32>, vector<128x128xf32>, vector<16x128xf32> -> vector<16x128xf32>
    %159 = arith.addf %153, %158 : vector<16x128xf32>
    %c0_142 = arith.constant 0 : index
    %c1_143 = arith.constant 1 : index
    %c0_144 = arith.constant 0 : index
    %160 = vector.load %arg11[%c0_142, %c1_143, %c0_144] : memref<6x6x128xf32, #tpu.memory_space<vmem>>, vector<4x4x128xf32>
    %161 = vector.shape_cast %160 : vector<4x4x128xf32> to vector<16x128xf32>
    %c1_145 = arith.constant 1 : index
    %c0_146 = arith.constant 0 : index
    %c0_147 = arith.constant 0 : index
    %162 = vector.load %arg4[%c1_145, %c0_146, %c0_147] : memref<9x128x128xf32, #tpu.memory_space<vmem>>, vector<1x128x128xf32>
    %163 = vector.shape_cast %162 : vector<1x128x128xf32> to vector<128x128xf32>
    %cst_148 = arith.constant dense<0.000000e+00> : vector<16x128xf32>
    %164 = tpu.matmul %161, %163, %cst_148 {dimension_numbers = #tpu.dot_dimension_numbers<[1], [0], [0], [1], [0, 0, 1, 1], [], []>} : vector<16x128xf32>, vector<128x128xf32>, vector<16x128xf32> -> vector<16x128xf32>
    %165 = arith.addf %159, %164 : vector<16x128xf32>
    %c0_149 = arith.constant 0 : index
    %c2_150 = arith.constant 2 : index
    %c0_151 = arith.constant 0 : index
    %166 = vector.load %arg11[%c0_149, %c2_150, %c0_151] : memref<6x6x128xf32, #tpu.memory_space<vmem>>, vector<4x4x128xf32>
    %167 = vector.shape_cast %166 : vector<4x4x128xf32> to vector<16x128xf32>
    %c2_152 = arith.constant 2 : index
    %c0_153 = arith.constant 0 : index
    %c0_154 = arith.constant 0 : index
    %168 = vector.load %arg4[%c2_152, %c0_153, %c0_154] : memref<9x128x128xf32, #tpu.memory_space<vmem>>, vector<1x128x128xf32>
    %169 = vector.shape_cast %168 : vector<1x128x128xf32> to vector<128x128xf32>
    %cst_155 = arith.constant dense<0.000000e+00> : vector<16x128xf32>
    %170 = tpu.matmul %167, %169, %cst_155 {dimension_numbers = #tpu.dot_dimension_numbers<[1], [0], [0], [1], [0, 0, 1, 1], [], []>} : vector<16x128xf32>, vector<128x128xf32>, vector<16x128xf32> -> vector<16x128xf32>
    %171 = arith.addf %165, %170 : vector<16x128xf32>
    %c1_156 = arith.constant 1 : index
    %c0_157 = arith.constant 0 : index
    %c0_158 = arith.constant 0 : index
    %172 = vector.load %arg11[%c1_156, %c0_157, %c0_158] : memref<6x6x128xf32, #tpu.memory_space<vmem>>, vector<4x4x128xf32>
    %173 = vector.shape_cast %172 : vector<4x4x128xf32> to vector<16x128xf32>
    %c3_159 = arith.constant 3 : index
    %c0_160 = arith.constant 0 : index
    %c0_161 = arith.constant 0 : index
    %174 = vector.load %arg4[%c3_159, %c0_160, %c0_161] : memref<9x128x128xf32, #tpu.memory_space<vmem>>, vector<1x128x128xf32>
    %175 = vector.shape_cast %174 : vector<1x128x128xf32> to vector<128x128xf32>
    %cst_162 = arith.constant dense<0.000000e+00> : vector<16x128xf32>
    %176 = tpu.matmul %173, %175, %cst_162 {dimension_numbers = #tpu.dot_dimension_numbers<[1], [0], [0], [1], [0, 0, 1, 1], [], []>} : vector<16x128xf32>, vector<128x128xf32>, vector<16x128xf32> -> vector<16x128xf32>
    %177 = arith.addf %171, %176 : vector<16x128xf32>
    %c1_163 = arith.constant 1 : index
    %c1_164 = arith.constant 1 : index
    %c0_165 = arith.constant 0 : index
    %178 = vector.load %arg11[%c1_163, %c1_164, %c0_165] : memref<6x6x128xf32, #tpu.memory_space<vmem>>, vector<4x4x128xf32>
    %179 = vector.shape_cast %178 : vector<4x4x128xf32> to vector<16x128xf32>
    %c4_166 = arith.constant 4 : index
    %c0_167 = arith.constant 0 : index
    %c0_168 = arith.constant 0 : index
    %180 = vector.load %arg4[%c4_166, %c0_167, %c0_168] : memref<9x128x128xf32, #tpu.memory_space<vmem>>, vector<1x128x128xf32>
    %181 = vector.shape_cast %180 : vector<1x128x128xf32> to vector<128x128xf32>
    %cst_169 = arith.constant dense<0.000000e+00> : vector<16x128xf32>
    %182 = tpu.matmul %179, %181, %cst_169 {dimension_numbers = #tpu.dot_dimension_numbers<[1], [0], [0], [1], [0, 0, 1, 1], [], []>} : vector<16x128xf32>, vector<128x128xf32>, vector<16x128xf32> -> vector<16x128xf32>
    %183 = arith.addf %177, %182 : vector<16x128xf32>
    %c1_170 = arith.constant 1 : index
    %c2_171 = arith.constant 2 : index
    %c0_172 = arith.constant 0 : index
    %184 = vector.load %arg11[%c1_170, %c2_171, %c0_172] : memref<6x6x128xf32, #tpu.memory_space<vmem>>, vector<4x4x128xf32>
    %185 = vector.shape_cast %184 : vector<4x4x128xf32> to vector<16x128xf32>
    %c5_173 = arith.constant 5 : index
    %c0_174 = arith.constant 0 : index
    %c0_175 = arith.constant 0 : index
    %186 = vector.load %arg4[%c5_173, %c0_174, %c0_175] : memref<9x128x128xf32, #tpu.memory_space<vmem>>, vector<1x128x128xf32>
    %187 = vector.shape_cast %186 : vector<1x128x128xf32> to vector<128x128xf32>
    %cst_176 = arith.constant dense<0.000000e+00> : vector<16x128xf32>
    %188 = tpu.matmul %185, %187, %cst_176 {dimension_numbers = #tpu.dot_dimension_numbers<[1], [0], [0], [1], [0, 0, 1, 1], [], []>} : vector<16x128xf32>, vector<128x128xf32>, vector<16x128xf32> -> vector<16x128xf32>
    %189 = arith.addf %183, %188 : vector<16x128xf32>
    %c2_177 = arith.constant 2 : index
    %c0_178 = arith.constant 0 : index
    %c0_179 = arith.constant 0 : index
    %190 = vector.load %arg11[%c2_177, %c0_178, %c0_179] : memref<6x6x128xf32, #tpu.memory_space<vmem>>, vector<4x4x128xf32>
    %191 = vector.shape_cast %190 : vector<4x4x128xf32> to vector<16x128xf32>
    %c6_180 = arith.constant 6 : index
    %c0_181 = arith.constant 0 : index
    %c0_182 = arith.constant 0 : index
    %192 = vector.load %arg4[%c6_180, %c0_181, %c0_182] : memref<9x128x128xf32, #tpu.memory_space<vmem>>, vector<1x128x128xf32>
    %193 = vector.shape_cast %192 : vector<1x128x128xf32> to vector<128x128xf32>
    %cst_183 = arith.constant dense<0.000000e+00> : vector<16x128xf32>
    %194 = tpu.matmul %191, %193, %cst_183 {dimension_numbers = #tpu.dot_dimension_numbers<[1], [0], [0], [1], [0, 0, 1, 1], [], []>} : vector<16x128xf32>, vector<128x128xf32>, vector<16x128xf32> -> vector<16x128xf32>
    %195 = arith.addf %189, %194 : vector<16x128xf32>
    %c2_184 = arith.constant 2 : index
    %c1_185 = arith.constant 1 : index
    %c0_186 = arith.constant 0 : index
    %196 = vector.load %arg11[%c2_184, %c1_185, %c0_186] : memref<6x6x128xf32, #tpu.memory_space<vmem>>, vector<4x4x128xf32>
    %197 = vector.shape_cast %196 : vector<4x4x128xf32> to vector<16x128xf32>
    %c7_187 = arith.constant 7 : index
    %c0_188 = arith.constant 0 : index
    %c0_189 = arith.constant 0 : index
    %198 = vector.load %arg4[%c7_187, %c0_188, %c0_189] : memref<9x128x128xf32, #tpu.memory_space<vmem>>, vector<1x128x128xf32>
    %199 = vector.shape_cast %198 : vector<1x128x128xf32> to vector<128x128xf32>
    %cst_190 = arith.constant dense<0.000000e+00> : vector<16x128xf32>
    %200 = tpu.matmul %197, %199, %cst_190 {dimension_numbers = #tpu.dot_dimension_numbers<[1], [0], [0], [1], [0, 0, 1, 1], [], []>} : vector<16x128xf32>, vector<128x128xf32>, vector<16x128xf32> -> vector<16x128xf32>
    %201 = arith.addf %195, %200 : vector<16x128xf32>
    %c2_191 = arith.constant 2 : index
    %c2_192 = arith.constant 2 : index
    %c0_193 = arith.constant 0 : index
    %202 = vector.load %arg11[%c2_191, %c2_192, %c0_193] : memref<6x6x128xf32, #tpu.memory_space<vmem>>, vector<4x4x128xf32>
    %203 = vector.shape_cast %202 : vector<4x4x128xf32> to vector<16x128xf32>
    %c8_194 = arith.constant 8 : index
    %c0_195 = arith.constant 0 : index
    %c0_196 = arith.constant 0 : index
    %204 = vector.load %arg4[%c8_194, %c0_195, %c0_196] : memref<9x128x128xf32, #tpu.memory_space<vmem>>, vector<1x128x128xf32>
    %205 = vector.shape_cast %204 : vector<1x128x128xf32> to vector<128x128xf32>
    %cst_197 = arith.constant dense<0.000000e+00> : vector<16x128xf32>
    %206 = tpu.matmul %203, %205, %cst_197 {dimension_numbers = #tpu.dot_dimension_numbers<[1], [0], [0], [1], [0, 0, 1, 1], [], []>} : vector<16x128xf32>, vector<128x128xf32>, vector<16x128xf32> -> vector<16x128xf32>
    %207 = arith.addf %201, %206 : vector<16x128xf32>
    %c0_198 = arith.constant 0 : index
    %c0_199 = arith.constant 0 : index
    %208 = vector.load %arg5[%c0_198, %c0_199] : memref<1x128xf32, #tpu.memory_space<vmem>>, vector<1x128xf32>
    %209 = vector.broadcast %208 : vector<1x128xf32> to vector<16x128xf32>
    %210 = arith.addf %207, %209 : vector<16x128xf32>
    %cst_200 = arith.constant 0.000000e+00 : f32
    %211 = vector.broadcast %cst_200 : f32 to vector<16x128xf32>
    %212 = arith.maximumf %210, %211 : vector<16x128xf32>
    %213 = vector.shape_cast %212 : vector<16x128xf32> to vector<4x4x128xf32>
    %214 = vector.shape_cast %213 : vector<4x4x128xf32> to vector<2x2x4x128xf32>
    %cst_201 = arith.constant dense<0xFF800000> : vector<2x4x128xf32>
    %215 = vector.multi_reduction <maximumf>, %214, %cst_201 [1] : vector<2x2x4x128xf32> to vector<2x4x128xf32>
    %216 = vector.shape_cast %215 : vector<2x4x128xf32> to vector<2x2x2x128xf32>
    %cst_202 = arith.constant dense<0xFF800000> : vector<2x2x128xf32>
    %217 = vector.multi_reduction <maximumf>, %216, %cst_202 [2] : vector<2x2x2x128xf32> to vector<2x2x128xf32>
    %cst_203 = arith.constant 0.000000e+00 : f32
    %218 = vector.broadcast %cst_203 : f32 to vector<4x4x128xf32>
    %c0_204 = arith.constant 0 : index
    %c0_205 = arith.constant 0 : index
    %c0_206 = arith.constant 0 : index
    %219 = vector.load %arg12[%c0_204, %c0_205, %c0_206] : memref<4x4x128xf32, #tpu.memory_space<vmem>>, vector<4x4x128xf32>
    tpu.vector_store %arg12[%c0_204, %c0_205, %c0_206], %218 {strides = array<i32>} : memref<4x4x128xf32, #tpu.memory_space<vmem>>, vector<4x4x128xf32>,
    %c1_207 = arith.constant 1 : index
    %c1_208 = arith.constant 1 : index
    %c0_209 = arith.constant 0 : index
    %220 = vector.load %arg12[%c1_207, %c1_208, %c0_209] : memref<4x4x128xf32, #tpu.memory_space<vmem>>, vector<2x2x128xf32>
    tpu.vector_store %arg12[%c1_207, %c1_208, %c0_209], %217 {strides = array<i32>} : memref<4x4x128xf32, #tpu.memory_space<vmem>>, vector<2x2x128xf32>,
    %cst_210 = arith.constant 0.000000e+00 : f32
    %221 = vector.broadcast %cst_210 : f32 to vector<4x128xf32>
    %c0_211 = arith.constant 0 : index
    %c0_212 = arith.constant 0 : index
    %c0_213 = arith.constant 0 : index
    %222 = vector.load %arg12[%c0_211, %c0_212, %c0_213] : memref<4x4x128xf32, #tpu.memory_space<vmem>>, vector<2x2x128xf32>
    %223 = vector.shape_cast %222 : vector<2x2x128xf32> to vector<4x128xf32>
    %c0_214 = arith.constant 0 : index
    %c0_215 = arith.constant 0 : index
    %c0_216 = arith.constant 0 : index
    %224 = vector.load %arg4[%c0_214, %c0_215, %c0_216] : memref<9x128x128xf32, #tpu.memory_space<vmem>>, vector<1x128x128xf32>
    %225 = vector.shape_cast %224 : vector<1x128x128xf32> to vector<128x128xf32>
    %cst_217 = arith.constant dense<0.000000e+00> : vector<4x128xf32>
    %226 = tpu.matmul %223, %225, %cst_217 {dimension_numbers = #tpu.dot_dimension_numbers<[1], [0], [0], [1], [0, 0, 1, 1], [], []>} : vector<4x128xf32>, vector<128x128xf32>, vector<4x128xf32> -> vector<4x128xf32>
    %227 = arith.addf %221, %226 : vector<4x128xf32>
    %c0_218 = arith.constant 0 : index
    %c1_219 = arith.constant 1 : index
    %c0_220 = arith.constant 0 : index
    %228 = vector.load %arg12[%c0_218, %c1_219, %c0_220] : memref<4x4x128xf32, #tpu.memory_space<vmem>>, vector<2x2x128xf32>
    %229 = vector.shape_cast %228 : vector<2x2x128xf32> to vector<4x128xf32>
    %c1_221 = arith.constant 1 : index
    %c0_222 = arith.constant 0 : index
    %c0_223 = arith.constant 0 : index
    %230 = vector.load %arg4[%c1_221, %c0_222, %c0_223] : memref<9x128x128xf32, #tpu.memory_space<vmem>>, vector<1x128x128xf32>
    %231 = vector.shape_cast %230 : vector<1x128x128xf32> to vector<128x128xf32>
    %cst_224 = arith.constant dense<0.000000e+00> : vector<4x128xf32>
    %232 = tpu.matmul %229, %231, %cst_224 {dimension_numbers = #tpu.dot_dimension_numbers<[1], [0], [0], [1], [0, 0, 1, 1], [], []>} : vector<4x128xf32>, vector<128x128xf32>, vector<4x128xf32> -> vector<4x128xf32>
    %233 = arith.addf %227, %232 : vector<4x128xf32>
    %c0_225 = arith.constant 0 : index
    %c2_226 = arith.constant 2 : index
    %c0_227 = arith.constant 0 : index
    %234 = vector.load %arg12[%c0_225, %c2_226, %c0_227] : memref<4x4x128xf32, #tpu.memory_space<vmem>>, vector<2x2x128xf32>
    %235 = vector.shape_cast %234 : vector<2x2x128xf32> to vector<4x128xf32>
    %c2_228 = arith.constant 2 : index
    %c0_229 = arith.constant 0 : index
    %c0_230 = arith.constant 0 : index
    %236 = vector.load %arg4[%c2_228, %c0_229, %c0_230] : memref<9x128x128xf32, #tpu.memory_space<vmem>>, vector<1x128x128xf32>
    %237 = vector.shape_cast %236 : vector<1x128x128xf32> to vector<128x128xf32>
    %cst_231 = arith.constant dense<0.000000e+00> : vector<4x128xf32>
    %238 = tpu.matmul %235, %237, %cst_231 {dimension_numbers = #tpu.dot_dimension_numbers<[1], [0], [0], [1], [0, 0, 1, 1], [], []>} : vector<4x128xf32>, vector<128x128xf32>, vector<4x128xf32> -> vector<4x128xf32>
    %239 = arith.addf %233, %238 : vector<4x128xf32>
    %c1_232 = arith.constant 1 : index
    %c0_233 = arith.constant 0 : index
    %c0_234 = arith.constant 0 : index
    %240 = vector.load %arg12[%c1_232, %c0_233, %c0_234] : memref<4x4x128xf32, #tpu.memory_space<vmem>>, vector<2x2x128xf32>
    %241 = vector.shape_cast %240 : vector<2x2x128xf32> to vector<4x128xf32>
    %c3_235 = arith.constant 3 : index
    %c0_236 = arith.constant 0 : index
    %c0_237 = arith.constant 0 : index
    %242 = vector.load %arg4[%c3_235, %c0_236, %c0_237] : memref<9x128x128xf32, #tpu.memory_space<vmem>>, vector<1x128x128xf32>
    %243 = vector.shape_cast %242 : vector<1x128x128xf32> to vector<128x128xf32>
    %cst_238 = arith.constant dense<0.000000e+00> : vector<4x128xf32>
    %244 = tpu.matmul %241, %243, %cst_238 {dimension_numbers = #tpu.dot_dimension_numbers<[1], [0], [0], [1], [0, 0, 1, 1], [], []>} : vector<4x128xf32>, vector<128x128xf32>, vector<4x128xf32> -> vector<4x128xf32>
    %245 = arith.addf %239, %244 : vector<4x128xf32>
    %c1_239 = arith.constant 1 : index
    %c1_240 = arith.constant 1 : index
    %c0_241 = arith.constant 0 : index
    %246 = vector.load %arg12[%c1_239, %c1_240, %c0_241] : memref<4x4x128xf32, #tpu.memory_space<vmem>>, vector<2x2x128xf32>
    %247 = vector.shape_cast %246 : vector<2x2x128xf32> to vector<4x128xf32>
    %c4_242 = arith.constant 4 : index
    %c0_243 = arith.constant 0 : index
    %c0_244 = arith.constant 0 : index
    %248 = vector.load %arg4[%c4_242, %c0_243, %c0_244] : memref<9x128x128xf32, #tpu.memory_space<vmem>>, vector<1x128x128xf32>
    %249 = vector.shape_cast %248 : vector<1x128x128xf32> to vector<128x128xf32>
    %cst_245 = arith.constant dense<0.000000e+00> : vector<4x128xf32>
    %250 = tpu.matmul %247, %249, %cst_245 {dimension_numbers = #tpu.dot_dimension_numbers<[1], [0], [0], [1], [0, 0, 1, 1], [], []>} : vector<4x128xf32>, vector<128x128xf32>, vector<4x128xf32> -> vector<4x128xf32>
    %251 = arith.addf %245, %250 : vector<4x128xf32>
    %c1_246 = arith.constant 1 : index
    %c2_247 = arith.constant 2 : index
    %c0_248 = arith.constant 0 : index
    %252 = vector.load %arg12[%c1_246, %c2_247, %c0_248] : memref<4x4x128xf32, #tpu.memory_space<vmem>>, vector<2x2x128xf32>
    %253 = vector.shape_cast %252 : vector<2x2x128xf32> to vector<4x128xf32>
    %c5_249 = arith.constant 5 : index
    %c0_250 = arith.constant 0 : index
    %c0_251 = arith.constant 0 : index
    %254 = vector.load %arg4[%c5_249, %c0_250, %c0_251] : memref<9x128x128xf32, #tpu.memory_space<vmem>>, vector<1x128x128xf32>
    %255 = vector.shape_cast %254 : vector<1x128x128xf32> to vector<128x128xf32>
    %cst_252 = arith.constant dense<0.000000e+00> : vector<4x128xf32>
    %256 = tpu.matmul %253, %255, %cst_252 {dimension_numbers = #tpu.dot_dimension_numbers<[1], [0], [0], [1], [0, 0, 1, 1], [], []>} : vector<4x128xf32>, vector<128x128xf32>, vector<4x128xf32> -> vector<4x128xf32>
    %257 = arith.addf %251, %256 : vector<4x128xf32>
    %c2_253 = arith.constant 2 : index
    %c0_254 = arith.constant 0 : index
    %c0_255 = arith.constant 0 : index
    %258 = vector.load %arg12[%c2_253, %c0_254, %c0_255] : memref<4x4x128xf32, #tpu.memory_space<vmem>>, vector<2x2x128xf32>
    %259 = vector.shape_cast %258 : vector<2x2x128xf32> to vector<4x128xf32>
    %c6_256 = arith.constant 6 : index
    %c0_257 = arith.constant 0 : index
    %c0_258 = arith.constant 0 : index
    %260 = vector.load %arg4[%c6_256, %c0_257, %c0_258] : memref<9x128x128xf32, #tpu.memory_space<vmem>>, vector<1x128x128xf32>
    %261 = vector.shape_cast %260 : vector<1x128x128xf32> to vector<128x128xf32>
    %cst_259 = arith.constant dense<0.000000e+00> : vector<4x128xf32>
    %262 = tpu.matmul %259, %261, %cst_259 {dimension_numbers = #tpu.dot_dimension_numbers<[1], [0], [0], [1], [0, 0, 1, 1], [], []>} : vector<4x128xf32>, vector<128x128xf32>, vector<4x128xf32> -> vector<4x128xf32>
    %263 = arith.addf %257, %262 : vector<4x128xf32>
    %c2_260 = arith.constant 2 : index
    %c1_261 = arith.constant 1 : index
    %c0_262 = arith.constant 0 : index
    %264 = vector.load %arg12[%c2_260, %c1_261, %c0_262] : memref<4x4x128xf32, #tpu.memory_space<vmem>>, vector<2x2x128xf32>
    %265 = vector.shape_cast %264 : vector<2x2x128xf32> to vector<4x128xf32>
    %c7_263 = arith.constant 7 : index
    %c0_264 = arith.constant 0 : index
    %c0_265 = arith.constant 0 : index
    %266 = vector.load %arg4[%c7_263, %c0_264, %c0_265] : memref<9x128x128xf32, #tpu.memory_space<vmem>>, vector<1x128x128xf32>
    %267 = vector.shape_cast %266 : vector<1x128x128xf32> to vector<128x128xf32>
    %cst_266 = arith.constant dense<0.000000e+00> : vector<4x128xf32>
    %268 = tpu.matmul %265, %267, %cst_266 {dimension_numbers = #tpu.dot_dimension_numbers<[1], [0], [0], [1], [0, 0, 1, 1], [], []>} : vector<4x128xf32>, vector<128x128xf32>, vector<4x128xf32> -> vector<4x128xf32>
    %269 = arith.addf %263, %268 : vector<4x128xf32>
    %c2_267 = arith.constant 2 : index
    %c2_268 = arith.constant 2 : index
    %c0_269 = arith.constant 0 : index
    %270 = vector.load %arg12[%c2_267, %c2_268, %c0_269] : memref<4x4x128xf32, #tpu.memory_space<vmem>>, vector<2x2x128xf32>
    %271 = vector.shape_cast %270 : vector<2x2x128xf32> to vector<4x128xf32>
    %c8_270 = arith.constant 8 : index
    %c0_271 = arith.constant 0 : index
    %c0_272 = arith.constant 0 : index
    %272 = vector.load %arg4[%c8_270, %c0_271, %c0_272] : memref<9x128x128xf32, #tpu.memory_space<vmem>>, vector<1x128x128xf32>
    %273 = vector.shape_cast %272 : vector<1x128x128xf32> to vector<128x128xf32>
    %cst_273 = arith.constant dense<0.000000e+00> : vector<4x128xf32>
    %274 = tpu.matmul %271, %273, %cst_273 {dimension_numbers = #tpu.dot_dimension_numbers<[1], [0], [0], [1], [0, 0, 1, 1], [], []>} : vector<4x128xf32>, vector<128x128xf32>, vector<4x128xf32> -> vector<4x128xf32>
    %275 = arith.addf %269, %274 : vector<4x128xf32>
    %c0_274 = arith.constant 0 : index
    %c0_275 = arith.constant 0 : index
    %276 = vector.load %arg5[%c0_274, %c0_275] : memref<1x128xf32, #tpu.memory_space<vmem>>, vector<1x128xf32>
    %277 = vector.broadcast %276 : vector<1x128xf32> to vector<4x128xf32>
    %278 = arith.addf %275, %277 : vector<4x128xf32>
    %cst_276 = arith.constant 0.000000e+00 : f32
    %279 = vector.broadcast %cst_276 : f32 to vector<4x128xf32>
    %280 = arith.maximumf %278, %279 : vector<4x128xf32>
    %281 = vector.shape_cast %280 : vector<4x128xf32> to vector<2x2x128xf32>
    %282 = vector.shape_cast %281 : vector<2x2x128xf32> to vector<1x2x2x128xf32>
    %cst_277 = arith.constant dense<0xFF800000> : vector<1x2x128xf32>
    %283 = vector.multi_reduction <maximumf>, %282, %cst_277 [1] : vector<1x2x2x128xf32> to vector<1x2x128xf32>
    %284 = vector.shape_cast %283 : vector<1x2x128xf32> to vector<1x1x2x128xf32>
    %cst_278 = arith.constant dense<0xFF800000> : vector<1x1x128xf32>
    %285 = vector.multi_reduction <maximumf>, %284, %cst_278 [2] : vector<1x1x2x128xf32> to vector<1x1x128xf32>
    %286 = vector.shape_cast %285 : vector<1x1x128xf32> to vector<1x128xf32>
    %c0_279 = arith.constant 0 : index
    %c0_280 = arith.constant 0 : index
    %287 = vector.load %arg6[%c0_279, %c0_280] : memref<128x2xf32, #tpu.memory_space<vmem>>, vector<128x2xf32>
    %cst_281 = arith.constant dense<0.000000e+00> : vector<1x2xf32>
    %288 = tpu.matmul %286, %287, %cst_281 {dimension_numbers = #tpu.dot_dimension_numbers<[1], [0], [0], [1], [0, 0, 1, 1], [], []>} : vector<1x128xf32>, vector<128x2xf32>, vector<1x2xf32> -> vector<1x2xf32>
    %c0_282 = arith.constant 0 : index
    %c0_283 = arith.constant 0 : index
    %289 = vector.load %arg7[%c0_282, %c0_283] : memref<1x2xf32, #tpu.memory_space<vmem>>, vector<1x2xf32>
    %290 = arith.addf %288, %289 : vector<1x2xf32>
    %cst_284 = arith.constant dense<0xFF800000> : vector<1xf32>
    %291 = vector.multi_reduction <maximumf>, %290, %cst_284 [1] : vector<1x2xf32> to vector<1xf32>
    %292 = vector.shape_cast %291 : vector<1xf32> to vector<1x1xf32>
    %293 = vector.broadcast %292 : vector<1x1xf32> to vector<1x2xf32>
    %294 = arith.subf %290, %293 : vector<1x2xf32>
    %295 = math.exp %294 : vector<1x2xf32>
    %cst_285 = arith.constant dense<0.000000e+00> : vector<1xf32>
    %296 = vector.multi_reduction <add>, %295, %cst_285 [1] : vector<1x2xf32> to vector<1xf32>
    %297 = vector.shape_cast %296 : vector<1xf32> to vector<1x1xf32>
    %298 = math.log %297 : vector<1x1xf32>
    %299 = vector.broadcast %298 : vector<1x1xf32> to vector<1x2xf32>
    %300 = arith.subf %294, %299 : vector<1x2xf32>
    %301 = vector.shape_cast %300 : vector<1x2xf32> to vector<1x1x2xf32>
    %c0_286 = arith.constant 0 : index
    %c0_287 = arith.constant 0 : index
    %c0_288 = arith.constant 0 : index
    %302 = vector.load %arg8[%c0_286, %c0_287, %c0_288] : memref<1x1x2xf32, #tpu.memory_space<vmem>>, vector<1x1x2xf32>
    tpu.vector_store %arg8[%c0_286, %c0_287, %c0_288], %301 {strides = array<i32>} : memref<1x1x2xf32, #tpu.memory_space<vmem>>, vector<1x1x2xf32>,
    return
  }
  func.func @transform_0(%arg0: i32) -> (i32, i32, i32) {
    %c0_i32 = arith.constant 0 : i32
    %c0_i32_0 = arith.constant 0 : i32
    %c0_i32_1 = arith.constant 0 : i32
    return %arg0, %c0_i32, %c0_i32_0 : i32, i32, i32
  }
  func.func @transform_1(%arg0: i32) -> (i32, i32) {
    %c0_i32 = arith.constant 0 : i32
    %c0_i32_0 = arith.constant 0 : i32
    %c0_i32_1 = arith.constant 0 : i32
    return %c0_i32, %c0_i32_0 : i32, i32
  }
  func.func @transform_2(%arg0: i32) -> (i32, i32) {
    %c0_i32 = arith.constant 0 : i32
    %c0_i32_0 = arith.constant 0 : i32
    %c0_i32_1 = arith.constant 0 : i32
    return %c0_i32, %c0_i32_0 : i32, i32
  }
  func.func @transform_3(%arg0: i32) -> (i32, i32, i32) {
    %c0_i32 = arith.constant 0 : i32
    %c0_i32_0 = arith.constant 0 : i32
    %c0_i32_1 = arith.constant 0 : i32
    %c0_i32_2 = arith.constant 0 : i32
    return %c0_i32, %c0_i32_0, %c0_i32_1 : i32, i32, i32
  }
  func.func @transform_4(%arg0: i32) -> (i32, i32) {
    %c0_i32 = arith.constant 0 : i32
    %c0_i32_0 = arith.constant 0 : i32
    %c0_i32_1 = arith.constant 0 : i32
    return %c0_i32, %c0_i32_0 : i32, i32
  }
  func.func @transform_5(%arg0: i32) -> (i32, i32) {
    %c0_i32 = arith.constant 0 : i32
    %c0_i32_0 = arith.constant 0 : i32
    %c0_i32_1 = arith.constant 0 : i32
    return %c0_i32, %c0_i32_0 : i32, i32
  }
  func.func @transform_6(%arg0: i32) -> (i32, i32) {
    %c0_i32 = arith.constant 0 : i32
    %c0_i32_0 = arith.constant 0 : i32
    %c0_i32_1 = arith.constant 0 : i32
    return %c0_i32, %c0_i32_0 : i32, i32
  }
  func.func @transform_7(%arg0: i32) -> (i32, i32, i32) {
    %c0_i32 = arith.constant 0 : i32
    %c0_i32_0 = arith.constant 0 : i32
    %c0_i32_1 = arith.constant 0 : i32
    return %arg0, %c0_i32, %c0_i32_0 : i32, i32, i32
  }
}

</mosaic_0001>

<llo_original>
// kernel: model_forward.1
$region0: #{model_forward.1}
  #allocation0 [shape = 'u32[]', space=smem, size = 0x4, offset = 0x4, fixed_abs, tag = 'smem constant byte address 0x4 - core index']
  #allocation1 [shape = 'u32[144,128]{1,0:T(1,128)}', space=vmem, size = 0x12000, scoped, tag = 'internal scratch']
  #allocation2 [shape = 'f32[18,18,128]{2,1,0:T(8,128)}', space=vmem, size = 0x36000, scoped, tag = 'scratch operand']
  #allocation3 [shape = 'f32[10,10,128]{2,1,0:T(8,128)}', space=vmem, size = 0x14000, scoped, tag = 'scratch operand']
  #allocation4 [shape = 'f32[6,6,128]{2,1,0:T(8,128)}', space=vmem, size = 0x6000, scoped, tag = 'scratch operand']
  #allocation5 [shape = 'f32[4,4,128]{2,1,0:T(4,128)}', space=vmem, size = 0x2000, scoped, tag = 'scratch operand']
  %s0 = inlined_call_operand.vmem [shape: f32[2,16,16], index: 0, kind: input, shape index: {}]
  %s1 = inlined_call_operand.vmem [shape: f32[9,128], index: 1, kind: input, shape index: {}]
  %s2 = inlined_call_operand.vmem [shape: f32[1,128], index: 2, kind: input, shape index: {}]
  %s3 = inlined_call_operand.hbm [shape: f32[9,128,128], index: 3, kind: input, shape index: {}]
  %s4 = inlined_call_operand.vmem [shape: f32[1,128], index: 4, kind: input, shape index: {}]
  %s5 = inlined_call_operand.vmem [shape: f32[128,2], index: 5, kind: input, shape index: {}]
  %s6 = inlined_call_operand.vmem [shape: f32[1,2], index: 6, kind: input, shape index: {}]
  %s7 = inlined_call_operand.hbm [shape: f32[2,1,2], index: 7, kind: output, shape index: {}]
  %s8 = sld [smem:[#allocation0]]
  $region65: #{model_forward.1} parent=0
    _
  %s10 = ssub.s32 1, %s8
  %s11 = scalar_select 0, %s10, %s8
  $region1: #{model_forward.1} parent=0
    #allocation6 [shape = 'u8[589824]{0}', space=vmem, size = 0x90000, scoped, tag = 'input window, operand 3, single buffered']
    #allocation7 [shape = 's32[2]{0}', space=sflag, size = 0x8, scoped, tag = 'scoped memory for model_forward.1']
    #allocation8 [shape = 's32[2]{0}', space=sflag, size = 0x8, scoped, tag = 'scoped memory for model_forward.1']
    #allocation9 [shape = 'u8[1024]{0}', space=vmem, size = 0x400, scoped, tag = 'output window, operand 0']
    %12 = vsyncpa [#allocation7], 0
    %13 = vsyncpa [#allocation8], 0
    %s14 = scalar_lea.sflag [#allocation8], 1
    %15 = vsyncpa %s14, 0
    loop: start=0, step=1, limit=4
    $region2: #{model_forward.1} parent=1 // loop_pre_header
      _
    $region3: #{model_forward.1} parent=1 // loop_header
      %s17 = sphi 0, %s21
      %p18 = scmp.ge.s32.totalorder %s17, 4
      %s27 = sphi 0, %s29
      %s30 = sphi 0, %s27
      %s31 = sphi 0, %s30
      %s47 = sphi 0, %s31
      %s51 = sphi 0, %s51
      %s53 = sphi 0, %s51
      %s54 = sphi 0, %s53
      %s68 = sphi 0, %s54
      %s72 = sphi 0, %s72
      %s74 = sphi 0, %s72
      %s75 = sphi 0, %s74
      %s89 = sphi 0, %s75
      %s93 = sphi 0, %s93
      %s95 = sphi 0, %s93
      %s96 = sphi 0, %s95
      %s110 = sphi 0, %s96
      %s114 = sphi 0, %s114
      %s116 = sphi 0, %s114
      %s117 = sphi 0, %s116
      %s131 = sphi 0, %s117
      %s135 = sphi 0, %s135
      %s137 = sphi 0, %s135
      %s138 = sphi 0, %s137
      %s152 = sphi 0, %s138
      %s156 = sphi 0, %s156
      %s158 = sphi 0, %s156
      %s159 = sphi 0, %s158
      %s173 = sphi 0, %s159
      %s179 = sphi 0, %s181
      %s182 = sphi 0, %s179
      %s183 = sphi 0, %s182
      %s199 = sphi 0, %s183
    $region4: #{model_forward.1} parent=1 // loop_header_branch
      %20 = sbr.rel (%p18) target = $region8
    $region5: #{model_forward.1} parent=1 // loop_body
      %s22 = ssub.s32 %s17, 1
      %s23 = ssub.s32 %s17, 2
      %s24 = sadd.s32 %s17, 1
      %s25 = ssub.s32 %s17, %s24
      %p26 = scmp.eq.s32.totalorder %s25, 0
      %s28 = sadd.s32 %s27, 1
      %s29 = scalar_select %p26, %s27, %s28
      %p32 = pneg %p26
      %p33 = scmp.eq.s32.totalorder %s17, 1
      %p34 = por %p32, %p33
      %p35 = scmp.ne.s32.totalorder %s27, %s30
      %p36 = scmp.eq.s32.totalorder %s17, 0
      %p37 = por %p35, %p36
      %p38 = scmp.ne.s32.totalorder %s27, %s30
      %p39 = scmp.eq.s32.totalorder %s22, 1
      %p40 = por %p38, %p39
      %p41 = scmp.ne.s32.totalorder %s30, %s31
      %p42 = scmp.eq.s32.totalorder %s22, 0
      %p43 = por %p41, %p42
      %p44 = scmp.ne.s32.totalorder %s30, %s31
      %p45 = scmp.eq.s32.totalorder %s23, 1
      %p46 = por %p44, %p45
      %p48 = scmp.ne.s32.totalorder %s31, %s47
      %p49 = scmp.eq.s32.totalorder %s23, 0
      %p50 = por %p48, %p49
      %s52 = sadd.s32 %s51, 1
      %p55 = scmp.eq.s32.totalorder %s17, 1
      %p56 = scmp.ne.s32.totalorder %s51, %s53
      %p57 = scmp.eq.s32.totalorder %s17, 0
      %p58 = por %p56, %p57
      %p59 = scmp.ne.s32.totalorder %s51, %s53
      %p60 = scmp.eq.s32.totalorder %s22, 1
      %p61 = por %p59, %p60
      %p62 = scmp.ne.s32.totalorder %s53, %s54
      %p63 = scmp.eq.s32.totalorder %s22, 0
      %p64 = por %p62, %p63
      %p65 = scmp.ne.s32.totalorder %s53, %s54
      %p66 = scmp.eq.s32.totalorder %s23, 1
      %p67 = por %p65, %p66
      %p69 = scmp.ne.s32.totalorder %s54, %s68
      %p70 = scmp.eq.s32.totalorder %s23, 0
      %p71 = por %p69, %p70
      %s73 = sadd.s32 %s72, 1
      %p76 = scmp.eq.s32.totalorder %s17, 1
      %p77 = scmp.ne.s32.totalorder %s72, %s74
      %p78 = scmp.eq.s32.totalorder %s17, 0
      %p79 = por %p77, %p78
      %p80 = scmp.ne.s32.totalorder %s72, %s74
      %p81 = scmp.eq.s32.totalorder %s22, 1
      %p82 = por %p80, %p81
      %p83 = scmp.ne.s32.totalorder %s74, %s75
      %p84 = scmp.eq.s32.totalorder %s22, 0
      %p85 = por %p83, %p84
      %p86 = scmp.ne.s32.totalorder %s74, %s75
      %p87 = scmp.eq.s32.totalorder %s23, 1
      %p88 = por %p86, %p87
      %p90 = scmp.ne.s32.totalorder %s75, %s89
      %p91 = scmp.eq.s32.totalorder %s23, 0
      %p92 = por %p90, %p91
      %s94 = sadd.s32 %s93, 1
      %p97 = scmp.eq.s32.totalorder %s17, 1
      %p98 = scmp.ne.s32.totalorder %s93, %s95
      %p99 = scmp.eq.s32.totalorder %s17, 0
      %p100 = por %p98, %p99
      %p101 = scmp.ne.s32.totalorder %s93, %s95
      %p102 = scmp.eq.s32.totalorder %s22, 1
      %p103 = por %p101, %p102
      %p104 = scmp.ne.s32.totalorder %s95, %s96
      %p105 = scmp.eq.s32.totalorder %s22, 0
      %p106 = por %p104, %p105
      %p107 = scmp.ne.s32.totalorder %s95, %s96
      %p108 = scmp.eq.s32.totalorder %s23, 1
      %p109 = por %p107, %p108
      %p111 = scmp.ne.s32.totalorder %s96, %s110
      %p112 = scmp.eq.s32.totalorder %s23, 0
      %p113 = por %p111, %p112
      %s115 = sadd.s32 %s114, 1
      %p118 = scmp.eq.s32.totalorder %s17, 1
      %p119 = scmp.ne.s32.totalorder %s114, %s116
      %p120 = scmp.eq.s32.totalorder %s17, 0
      %p121 = por %p119, %p120
      %p122 = scmp.ne.s32.totalorder %s114, %s116
      %p123 = scmp.eq.s32.totalorder %s22, 1
      %p124 = por %p122, %p123
      %p125 = scmp.ne.s32.totalorder %s116, %s117
      %p126 = scmp.eq.s32.totalorder %s22, 0
      %p127 = por %p125, %p126
      %p128 = scmp.ne.s32.totalorder %s116, %s117
      %p129 = scmp.eq.s32.totalorder %s23, 1
      %p130 = por %p128, %p129
      %p132 = scmp.ne.s32.totalorder %s117, %s131
      %p133 = scmp.eq.s32.totalorder %s23, 0
      %p134 = por %p132, %p133
      %s136 = sadd.s32 %s135, 1
      %p139 = scmp.eq.s32.totalorder %s17, 1
      %p140 = scmp.ne.s32.totalorder %s135, %s137
      %p141 = scmp.eq.s32.totalorder %s17, 0
      %p142 = por %p140, %p141
      %p143 = scmp.ne.s32.totalorder %s135, %s137
      %p144 = scmp.eq.s32.totalorder %s22, 1
      %p145 = por %p143, %p144
      %p146 = scmp.ne.s32.totalorder %s137, %s138
      %p147 = scmp.eq.s32.totalorder %s22, 0
      %p148 = por %p146, %p147
      %p149 = scmp.ne.s32.totalorder %s137, %s138
      %p150 = scmp.eq.s32.totalorder %s23, 1
      %p151 = por %p149, %p150
      %p153 = scmp.ne.s32.totalorder %s138, %s152
      %p154 = scmp.eq.s32.totalorder %s23, 0
      %p155 = por %p153, %p154
      %s157 = sadd.s32 %s156, 1
      %p160 = scmp.eq.s32.totalorder %s17, 1
      %p161 = scmp.ne.s32.totalorder %s156, %s158
      %p162 = scmp.eq.s32.totalorder %s17, 0
      %p163 = por %p161, %p162
      %p164 = scmp.ne.s32.totalorder %s156, %s158
      %p165 = scmp.eq.s32.totalorder %s22, 1
      %p166 = por %p164, %p165
      %p167 = scmp.ne.s32.totalorder %s158, %s159
      %p168 = scmp.eq.s32.totalorder %s22, 0
      %p169 = por %p167, %p168
      %p170 = scmp.ne.s32.totalorder %s158, %s159
      %p171 = scmp.eq.s32.totalorder %s23, 1
      %p172 = por %p170, %p171
      %p174 = scmp.ne.s32.totalorder %s159, %s173
      %p175 = scmp.eq.s32.totalorder %s23, 0
      %p176 = por %p174, %p175
      %s177 = ssub.s32 %s17, %s24
      %p178 = scmp.eq.s32.totalorder %s177, 0
      %s180 = sadd.s32 %s179, 1
      %s181 = scalar_select %p178, %s179, %s180
      %p184 = pneg %p178
      %p185 = scmp.eq.s32.totalorder %s17, 1
      %p186 = por %p184, %p185
      %p187 = scmp.ne.s32.totalorder %s179, %s182
      %p188 = scmp.eq.s32.totalorder %s17, 0
      %p189 = por %p187, %p188
      %p190 = scmp.ne.s32.totalorder %s179, %s182
      %p191 = scmp.eq.s32.totalorder %s22, 1
      %p192 = por %p190, %p191
      %p193 = scmp.ne.s32.totalorder %s182, %s183
      %p194 = scmp.eq.s32.totalorder %s22, 0
      %p195 = por %p193, %p194
      %p196 = scmp.ne.s32.totalorder %s182, %s183
      %p197 = scmp.eq.s32.totalorder %s23, 1
      %p198 = por %p196, %p197
      %p200 = scmp.ne.s32.totalorder %s183, %s199
      %p201 = scmp.eq.s32.totalorder %s23, 0
      %p202 = por %p200, %p201
      %p203 = scmp.le.s32.totalorder 1, %s17
      %p204 = scmp.lt.s32.totalorder %s17, 3
      %p205 = pnand %p203, %p204
      %p206 = pneg %p205
      // Predicated region
      $region9: #{model_forward.1} parent=5 // pred_check
        _
      $region10: #{model_forward.1} parent=5 // pred_check_branch
        %208 = sbr.rel (%p205) target = $region12
      $region11: #{model_forward.1} parent=5 // pred_region
        %s209 = ssub.s32 %s17, 1
        // Predicated region
        $region13: #{model_forward.1} parent=11 // pred_check
          %p210 = pneg %p64
        $region14: #{model_forward.1} parent=11 // pred_check_branch
          %212 = sbr.rel (%p210) target = $region16
        $region15: #{model_forward.1} parent=11 // pred_region
          _
        $region16: #{model_forward.1} parent=11 // pred_fallthru
          _
        // Predicated region
        $region17: #{model_forward.1} parent=11 // pred_check
          %p213 = pneg %p85
        $region18: #{model_forward.1} parent=11 // pred_check_branch
          %215 = sbr.rel (%p213) target = $region20
        $region19: #{model_forward.1} parent=11 // pred_region
          _
        $region20: #{model_forward.1} parent=11 // pred_fallthru
          _
        // Predicated region
        $region21: #{model_forward.1} parent=11 // pred_check
          %p216 = pneg %p106
        $region22: #{model_forward.1} parent=11 // pred_check_branch
          %218 = sbr.rel (%p216) target = $region24
        $region23: #{model_forward.1} parent=11 // pred_region
          %s220 = ssub.s32 18432, 18432
          %221 = vsyncadd [#allocation7], %s220
          %s222 = sshll.u32 [#allocation6], 4
          %s223 = int_to_ptr.vmem [resolvable:$true] %s222
          %228 = dma.hbm_to_vmem [thread:$0]  %s3, 18432, %s223, [#allocation7], 128, 128, 8
        $region24: #{model_forward.1} parent=11 // pred_fallthru
          _
        // Predicated region
        $region25: #{model_forward.1} parent=11 // pred_check
          %p229 = pneg %p127
        $region26: #{model_forward.1} parent=11 // pred_check_branch
          %231 = sbr.rel (%p229) target = $region28
        $region27: #{model_forward.1} parent=11 // pred_region
          _
        $region28: #{model_forward.1} parent=11 // pred_fallthru
          _
        // Predicated region
        $region29: #{model_forward.1} parent=11 // pred_check
          %p232 = pneg %p148
        $region30: #{model_forward.1} parent=11 // pred_check_branch
          %234 = sbr.rel (%p232) target = $region32
        $region31: #{model_forward.1} parent=11 // pred_region
          _
        $region32: #{model_forward.1} parent=11 // pred_fallthru
          _
        // Predicated region
        $region33: #{model_forward.1} parent=11 // pred_check
          %p235 = pneg %p169
        $region34: #{model_forward.1} parent=11 // pred_check_branch
          %237 = sbr.rel (%p235) target = $region36
        $region35: #{model_forward.1} parent=11 // pred_region
          _
        $region36: #{model_forward.1} parent=11 // pred_fallthru
          _
      $region12: #{model_forward.1} parent=5 // pred_fallthru
        _
      %p238 = scmp.lt.s32.totalorder %s17, 2
      // Predicated region
      $region37: #{model_forward.1} parent=5 // pred_check
        %p239 = pneg %p238
      $region38: #{model_forward.1} parent=5 // pred_check_branch
        %241 = sbr.rel (%p239) target = $region40
      $region39: #{model_forward.1} parent=5 // pred_region
        // Predicated region
        $region41: #{model_forward.1} parent=39 // pred_check
          %p242 = pneg %p37
        $region42: #{model_forward.1} parent=39 // pred_check_branch
          %244 = sbr.rel (%p242) target = $region44
        $region43: #{model_forward.1} parent=39 // pred_region
          %p245 = scmp.lt.s32.totalorder %s17, 1
          %s246 = scalar_select %p245, %s17, 1
          %s247 = smul.addr %s246, 2
          %s248 = smul.addr %s247, 8
          %s249 = scalar_lea.vmem %s0, %s248
        $region44: #{model_forward.1} parent=39 // pred_fallthru
          _
      $region40: #{model_forward.1} parent=5 // pred_fallthru
        _
      %p250 = scmp.le.s32.totalorder 1, %s17
      %p251 = scmp.lt.s32.totalorder %s17, 3
      %p252 = pnand %p250, %p251
      %p253 = pneg %p252
      // Predicated region
      $region45: #{model_forward.1} parent=5 // pred_check
        _
      $region46: #{model_forward.1} parent=5 // pred_check_branch
        %255 = sbr.rel (%p252) target = $region48
      $region47: #{model_forward.1} parent=5 // pred_region
        %s256 = ssub.s32 %s17, 1
        // Predicated region
        $region49: #{model_forward.1} parent=47 // pred_check
          %p257 = pneg %p106
        $region50: #{model_forward.1} parent=47 // pred_check_branch
          %259 = sbr.rel (%p257) target = $region52
        $region51: #{model_forward.1} parent=47 // pred_region
          %260 = dma.done [#allocation7], 18432
        $region52: #{model_forward.1} parent=47 // pred_fallthru
          _
        %p261 = scmp.lt.s32.totalorder %s22, 1
        %s262 = scalar_select %p261, %s22, 1
        %s263 = smul.addr %s262, 2
        %s264 = smul.addr %s263, 8
        %s265 = scalar_lea.vmem %s0, %s264
        %p266 = pneg %p43
        %p267 = pneg %p40
        %p268 = pneg %p64
        %p269 = pneg %p61
        %p270 = pneg %p85
        %p271 = pneg %p82
        %p272 = pneg %p106
        %p273 = pneg %p103
        %p274 = pneg %p127
        %p275 = pneg %p124
        %p276 = pneg %p148
        %p277 = pneg %p145
        %p278 = pneg %p169
        %p279 = pneg %p166
        %p280 = pneg %p195
        %p281 = pneg %p192
        %s282 = sand.u32 %s182, 1
        %s283 = scalar_lea.sflag [#allocation8], %s282
        %s284 = sand.u32 %s182, 1
        %s285 = scalar_lea.vmem [#allocation9], %s284
        %p286 = scmp.lt.s32.totalorder %s22, 1
        %s287 = scalar_select %p286, %s22, 1
        %s288 = smul.addr %s287, 2
        %s289 = smul.addr %s288, 8
        %s290 = scalar_lea.vmem %s0, %s289
        %291 = vst [vmem:[#allocation2] sm:$0xff] 0.0
        %292 = vst [vmem:[#allocation2 + $0x8] sm:$0xff] 0.0
        %293 = vst [vmem:[#allocation2 + $0x10] sm:$0x3] 0.0
        %294 = vst [vmem:[#allocation2 + $0x18] sm:$0xff] 0.0
        %295 = vst [vmem:[#allocation2 + $0x20] sm:$0xff] 0.0
        %296 = vst [vmem:[#allocation2 + $0x28] sm:$0x3] 0.0
        %297 = vst [vmem:[#allocation2 + $0x30] sm:$0xff] 0.0
        %298 = vst [vmem:[#allocation2 + $0x38] sm:$0xff] 0.0
        %299 = vst [vmem:[#allocation2 + $0x40] sm:$0x3] 0.0
        %300 = vst [vmem:[#allocation2 + $0x48] sm:$0xff] 0.0
        %301 = vst [vmem:[#allocation2 + $0x50] sm:$0xff] 0.0
        %302 = vst [vmem:[#allocation2 + $0x58] sm:$0x3] 0.0
        %303 = vst [vmem:[#allocation2 + $0x60] sm:$0xff] 0.0
        %304 = vst [vmem:[#allocation2 + $0x68] sm:$0xff] 0.0
        %305 = vst [vmem:[#allocation2 + $0x70] sm:$0x3] 0.0
        %306 = vst [vmem:[#allocation2 + $0x78] sm:$0xff] 0.0
        %307 = vst [vmem:[#allocation2 + $0x80] sm:$0xff] 0.0
        %308 = vst [vmem:[#allocation2 + $0x88] sm:$0x3] 0.0
        %309 = vst [vmem:[#allocation2 + $0x90] sm:$0xff] 0.0
        %310 = vst [vmem:[#allocation2 + $0x98] sm:$0xff] 0.0
        %311 = vst [vmem:[#allocation2 + $0xa0] sm:$0x3] 0.0
        %312 = vst [vmem:[#allocation2 + $0xa8] sm:$0xff] 0.0
        %313 = vst [vmem:[#allocation2 + $0xb0] sm:$0xff] 0.0
        %314 = vst [vmem:[#allocation2 + $0xb8] sm:$0x3] 0.0
        %315 = vst [vmem:[#allocation2 + $0xc0] sm:$0xff] 0.0
        %316 = vst [vmem:[#allocation2 + $0xc8] sm:$0xff] 0.0
        %317 = vst [vmem:[#allocation2 + $0xd0] sm:$0x3] 0.0
        %318 = vst [vmem:[#allocation2 + $0xd8] sm:$0xff] 0.0
        %319 = vst [vmem:[#allocation2 + $0xe0] sm:$0xff] 0.0
        %320 = vst [vmem:[#allocation2 + $0xe8] sm:$0x3] 0.0
        %321 = vst [vmem:[#allocation2 + $0xf0] sm:$0xff] 0.0
        %322 = vst [vmem:[#allocation2 + $0xf8] sm:$0xff] 0.0
        %323 = vst [vmem:[#allocation2 + $0x100] sm:$0x3] 0.0
        %324 = vst [vmem:[#allocation2 + $0x108] sm:$0xff] 0.0
        %325 = vst [vmem:[#allocation2 + $0x110] sm:$0xff] 0.0
        %326 = vst [vmem:[#allocation2 + $0x118] sm:$0x3] 0.0
        %327 = vst [vmem:[#allocation2 + $0x120] sm:$0xff] 0.0
        %328 = vst [vmem:[#allocation2 + $0x128] sm:$0xff] 0.0
        %329 = vst [vmem:[#allocation2 + $0x130] sm:$0x3] 0.0
        %330 = vst [vmem:[#allocation2 + $0x138] sm:$0xff] 0.0
        %331 = vst [vmem:[#allocation2 + $0x140] sm:$0xff] 0.0
        %332 = vst [vmem:[#allocation2 + $0x148] sm:$0x3] 0.0
        %333 = vst [vmem:[#allocation2 + $0x150] sm:$0xff] 0.0
        %334 = vst [vmem:[#allocation2 + $0x158] sm:$0xff] 0.0
        %335 = vst [vmem:[#allocation2 + $0x160] sm:$0x3] 0.0
        %336 = vst [vmem:[#allocation2 + $0x168] sm:$0xff] 0.0
        %337 = vst [vmem:[#allocation2 + $0x170] sm:$0xff] 0.0
        %338 = vst [vmem:[#allocation2 + $0x178] sm:$0x3] 0.0
        %339 = vst [vmem:[#allocation2 + $0x180] sm:$0xff] 0.0
        %340 = vst [vmem:[#allocation2 + $0x188] sm:$0xff] 0.0
        %341 = vst [vmem:[#allocation2 + $0x190] sm:$0x3] 0.0
        %342 = vst [vmem:[#allocation2 + $0x198] sm:$0xff] 0.0
        %343 = vst [vmem:[#allocation2 + $0x1a0] sm:$0xff] 0.0
        %344 = vst [vmem:[#allocation2 + $0x1a8] sm:$0x3] 0.0
        %v345 = vld [vmem:[%s290] sm:$0xff]
        %v346 = vld [vmem:[%s290 + $0x8] sm:$0xff]
        %v347 = vlaneseq
        %v348 = vshrl.u32 %v347, 7
        %v349 = vsub.s32 0, %v348
        %v350 = vrot.slane %v345, %v349
        %352 = vbcast.lane.b32.xlu0 %v350, 256
        %v353 = vpop.permute.xlu0 %352
        %s355 = sor.u32 256, 8
        %356 = vbcast.lane.b32.xlu0 %v350, %s355
        %v357 = vpop.permute.xlu0 %356
        %v358 = vlaneseq
        %v359 = vshrl.u32 %v358, 7
        %v360 = vsub.s32 1, %v359
        %v361 = vrot.slane %v345, %v360
        %363 = vbcast.lane.b32.xlu0 %v361, 256
        %v364 = vpop.permute.xlu0 %363
        %s366 = sor.u32 256, 8
        %367 = vbcast.lane.b32.xlu0 %v361, %s366
        %v368 = vpop.permute.xlu0 %367
        %v369 = vlaneseq
        %v370 = vshrl.u32 %v369, 7
        %v371 = vsub.s32 2, %v370
        %v372 = vrot.slane %v345, %v371
        %374 = vbcast.lane.b32.xlu0 %v372, 256
        %v375 = vpop.permute.xlu0 %374
        %s377 = sor.u32 256, 8
        %378 = vbcast.lane.b32.xlu0 %v372, %s377
        %v379 = vpop.permute.xlu0 %378
        %v380 = vlaneseq
        %v381 = vshrl.u32 %v380, 7
        %v382 = vsub.s32 3, %v381
        %v383 = vrot.slane %v345, %v382
        %385 = vbcast.lane.b32.xlu0 %v383, 256
        %v386 = vpop.permute.xlu0 %385
        %s388 = sor.u32 256, 8
        %389 = vbcast.lane.b32.xlu0 %v383, %s388
        %v390 = vpop.permute.xlu0 %389
        %v391 = vlaneseq
        %v392 = vshrl.u32 %v391, 7
        %v393 = vsub.s32 4, %v392
        %v394 = vrot.slane %v345, %v393
        %396 = vbcast.lane.b32.xlu0 %v394, 256
        %v397 = vpop.permute.xlu0 %396
        %s399 = sor.u32 256, 8
        %400 = vbcast.lane.b32.xlu0 %v394, %s399
        %v401 = vpop.permute.xlu0 %400
        %v402 = vlaneseq
        %v403 = vshrl.u32 %v402, 7
        %v404 = vsub.s32 5, %v403
        %v405 = vrot.slane %v345, %v404
        %407 = vbcast.lane.b32.xlu0 %v405, 256
        %v408 = vpop.permute.xlu0 %407
        %s410 = sor.u32 256, 8
        %411 = vbcast.lane.b32.xlu0 %v405, %s410
        %v412 = vpop.permute.xlu0 %411
        %v413 = vlaneseq
        %v414 = vshrl.u32 %v413, 7
        %v415 = vsub.s32 6, %v414
        %v416 = vrot.slane %v345, %v415
        %418 = vbcast.lane.b32.xlu0 %v416, 256
        %v419 = vpop.permute.xlu0 %418
        %s421 = sor.u32 256, 8
        %422 = vbcast.lane.b32.xlu0 %v416, %s421
        %v423 = vpop.permute.xlu0 %422
        %v424 = vlaneseq
        %v425 = vshrl.u32 %v424, 7
        %v426 = vsub.s32 7, %v425
        %v427 = vrot.slane %v345, %v426
        %429 = vbcast.lane.b32.xlu0 %v427, 256
        %v430 = vpop.permute.xlu0 %429
        %s432 = sor.u32 256, 8
        %433 = vbcast.lane.b32.xlu0 %v427, %s432
        %v434 = vpop.permute.xlu0 %433
        %v435 = vlaneseq
        %v436 = vshrl.u32 %v435, 7
        %v437 = vsub.s32 0, %v436
        %v438 = vrot.slane %v346, %v437
        %440 = vbcast.lane.b32.xlu0 %v438, 256
        %v441 = vpop.permute.xlu0 %440
        %s443 = sor.u32 256, 8
        %444 = vbcast.lane.b32.xlu0 %v438, %s443
        %v445 = vpop.permute.xlu0 %444
        %v446 = vlaneseq
        %v447 = vshrl.u32 %v446, 7
        %v448 = vsub.s32 1, %v447
        %v449 = vrot.slane %v346, %v448
        %451 = vbcast.lane.b32.xlu0 %v449, 256
        %v452 = vpop.permute.xlu0 %451
        %s454 = sor.u32 256, 8
        %455 = vbcast.lane.b32.xlu0 %v449, %s454
        %v456 = vpop.permute.xlu0 %455
        %v457 = vlaneseq
        %v458 = vshrl.u32 %v457, 7
        %v459 = vsub.s32 2, %v458
        %v460 = vrot.slane %v346, %v459
        %462 = vbcast.lane.b32.xlu0 %v460, 256
        %v463 = vpop.permute.xlu0 %462
        %s465 = sor.u32 256, 8
        %466 = vbcast.lane.b32.xlu0 %v460, %s465
        %v467 = vpop.permute.xlu0 %466
        %v468 = vlaneseq
        %v469 = vshrl.u32 %v468, 7
        %v470 = vsub.s32 3, %v469
        %v471 = vrot.slane %v346, %v470
        %473 = vbcast.lane.b32.xlu0 %v471, 256
        %v474 = vpop.permute.xlu0 %473
        %s476 = sor.u32 256, 8
        %477 = vbcast.lane.b32.xlu0 %v471, %s476
        %v478 = vpop.permute.xlu0 %477
        %v479 = vlaneseq
        %v480 = vshrl.u32 %v479, 7
        %v481 = vsub.s32 4, %v480
        %v482 = vrot.slane %v346, %v481
        %484 = vbcast.lane.b32.xlu0 %v482, 256
        %v485 = vpop.permute.xlu0 %484
        %s487 = sor.u32 256, 8
        %488 = vbcast.lane.b32.xlu0 %v482, %s487
        %v489 = vpop.permute.xlu0 %488
        %v490 = vlaneseq
        %v491 = vshrl.u32 %v490, 7
        %v492 = vsub.s32 5, %v491
        %v493 = vrot.slane %v346, %v492
        %495 = vbcast.lane.b32.xlu0 %v493, 256
        %v496 = vpop.permute.xlu0 %495
        %s498 = sor.u32 256, 8
        %499 = vbcast.lane.b32.xlu0 %v493, %s498
        %v500 = vpop.permute.xlu0 %499
        %v501 = vlaneseq
        %v502 = vshrl.u32 %v501, 7
        %v503 = vsub.s32 6, %v502
        %v504 = vrot.slane %v346, %v503
        %506 = vbcast.lane.b32.xlu0 %v504, 256
        %v507 = vpop.permute.xlu0 %506
        %s509 = sor.u32 256, 8
        %510 = vbcast.lane.b32.xlu0 %v504, %s509
        %v511 = vpop.permute.xlu0 %510
        %v512 = vlaneseq
        %v513 = vshrl.u32 %v512, 7
        %v514 = vsub.s32 7, %v513
        %v515 = vrot.slane %v346, %v514
        %517 = vbcast.lane.b32.xlu0 %v515, 256
        %v518 = vpop.permute.xlu0 %517
        %s520 = sor.u32 256, 8
        %521 = vbcast.lane.b32.xlu0 %v515, %s520
        %v522 = vpop.permute.xlu0 %521
        %s523 = scalar_lea.vmem [#allocation2], 24
        %524 = vst [vmem:[%s523 + $0x1] sm:$0xff] %v353
        %525 = vst [vmem:[%s523 + $0x9] sm:$0xff] %v357
        %526 = vst [vmem:[%s523 + $0x19] sm:$0xff] %v364
        %527 = vst [vmem:[%s523 + $0x21] sm:$0xff] %v368
        %528 = vst [vmem:[%s523 + $0x31] sm:$0xff] %v375
        %529 = vst [vmem:[%s523 + $0x39] sm:$0xff] %v379
        %530 = vst [vmem:[%s523 + $0x49] sm:$0xff] %v386
        %531 = vst [vmem:[%s523 + $0x51] sm:$0xff] %v390
        %532 = vst [vmem:[%s523 + $0x61] sm:$0xff] %v397
        %533 = vst [vmem:[%s523 + $0x69] sm:$0xff] %v401
        %534 = vst [vmem:[%s523 + $0x79] sm:$0xff] %v408
        %535 = vst [vmem:[%s523 + $0x81] sm:$0xff] %v412
        %536 = vst [vmem:[%s523 + $0x91] sm:$0xff] %v419
        %537 = vst [vmem:[%s523 + $0x99] sm:$0xff] %v423
        %538 = vst [vmem:[%s523 + $0xa9] sm:$0xff] %v430
        %539 = vst [vmem:[%s523 + $0xb1] sm:$0xff] %v434
        %540 = vst [vmem:[%s523 + $0xc1] sm:$0xff] %v441
        %541 = vst [vmem:[%s523 + $0xc9] sm:$0xff] %v445
        %542 = vst [vmem:[%s523 + $0xd9] sm:$0xff] %v452
        %543 = vst [vmem:[%s523 + $0xe1] sm:$0xff] %v456
        %544 = vst [vmem:[%s523 + $0xf1] sm:$0xff] %v463
        %545 = vst [vmem:[%s523 + $0xf9] sm:$0xff] %v467
        %546 = vst [vmem:[%s523 + $0x109] sm:$0xff] %v474
        %547 = vst [vmem:[%s523 + $0x111] sm:$0xff] %v478
        %548 = vst [vmem:[%s523 + $0x121] sm:$0xff] %v485
        %549 = vst [vmem:[%s523 + $0x129] sm:$0xff] %v489
        %550 = vst [vmem:[%s523 + $0x139] sm:$0xff] %v496
        %551 = vst [vmem:[%s523 + $0x141] sm:$0xff] %v500
        %552 = vst [vmem:[%s523 + $0x151] sm:$0xff] %v507
        %553 = vst [vmem:[%s523 + $0x159] sm:$0xff] %v511
        %554 = vst [vmem:[%s523 + $0x169] sm:$0xff] %v518
        %555 = vst [vmem:[%s523 + $0x171] sm:$0xff] %v522
        %v556 = vld [vmem:[#allocation2] sm:$0xff]
        %v557 = vld [vmem:[#allocation2 + $0x8] sm:$0xff]
        %v558 = vld [vmem:[#allocation2 + $0x18] sm:$0xff]
        %v559 = vld [vmem:[#allocation2 + $0x20] sm:$0xff]
        %v560 = vld [vmem:[#allocation2 + $0x30] sm:$0xff]
        %v561 = vld [vmem:[#allocation2 + $0x38] sm:$0xff]
        %v562 = vld [vmem:[#allocation2 + $0x48] sm:$0xff]
        %v563 = vld [vmem:[#allocation2 + $0x50] sm:$0xff]
        %v564 = vld [vmem:[#allocation2 + $0x60] sm:$0xff]
        %v565 = vld [vmem:[#allocation2 + $0x68] sm:$0xff]
        %v566 = vld [vmem:[#allocation2 + $0x78] sm:$0xff]
        %v567 = vld [vmem:[#allocation2 + $0x80] sm:$0xff]
        %v568 = vld [vmem:[#allocation2 + $0x90] sm:$0xff]
        %v569 = vld [vmem:[#allocation2 + $0x98] sm:$0xff]
        %v570 = vld [vmem:[#allocation2 + $0xa8] sm:$0xff]
        %v571 = vld [vmem:[#allocation2 + $0xb0] sm:$0xff]
        %v572 = vld [vmem:[#allocation2 + $0xc0] sm:$0xff]
        %v573 = vld [vmem:[#allocation2 + $0xc8] sm:$0xff]
        %v574 = vld [vmem:[#allocation2 + $0xd8] sm:$0xff]
        %v575 = vld [vmem:[#allocation2 + $0xe0] sm:$0xff]
        %v576 = vld [vmem:[#allocation2 + $0xf0] sm:$0xff]
        %v577 = vld [vmem:[#allocation2 + $0xf8] sm:$0xff]
        %v578 = vld [vmem:[#allocation2 + $0x108] sm:$0xff]
        %v579 = vld [vmem:[#allocation2 + $0x110] sm:$0xff]
        %v580 = vld [vmem:[#allocation2 + $0x120] sm:$0xff]
        %v581 = vld [vmem:[#allocation2 + $0x128] sm:$0xff]
        %v582 = vld [vmem:[#allocation2 + $0x138] sm:$0xff]
        %v583 = vld [vmem:[#allocation2 + $0x140] sm:$0xff]
        %v584 = vld [vmem:[#allocation2 + $0x150] sm:$0xff]
        %v585 = vld [vmem:[#allocation2 + $0x158] sm:$0xff]
        %v586 = vld [vmem:[#allocation2 + $0x168] sm:$0xff]
        %v587 = vld [vmem:[#allocation2 + $0x170] sm:$0xff]
        %v588 = vld [vmem:[%s1] sm:$0x1]
        %v589 = vlaneseq
        %v590 = vshrl.u32 %v589, 7
        %v591 = vsub.s32 0, %v590
        %v592 = vrot.slane %v588, %v591
        %v593 = vmul.f32 %v556, %v592
        %v594 = vmul.f32 %v557, %v592
        %v595 = vmul.f32 %v558, %v592
        %v596 = vmul.f32 %v559, %v592
        %v597 = vmul.f32 %v560, %v592
        %v598 = vmul.f32 %v561, %v592
        %v599 = vmul.f32 %v562, %v592
        %v600 = vmul.f32 %v563, %v592
        %v601 = vmul.f32 %v564, %v592
        %v602 = vmul.f32 %v565, %v592
        %v603 = vmul.f32 %v566, %v592
        %v604 = vmul.f32 %v567, %v592
        %v605 = vmul.f32 %v568, %v592
        %v606 = vmul.f32 %v569, %v592
        %v607 = vmul.f32 %v570, %v592
        %v608 = vmul.f32 %v571, %v592
        %v609 = vmul.f32 %v572, %v592
        %v610 = vmul.f32 %v573, %v592
        %v611 = vmul.f32 %v574, %v592
        %v612 = vmul.f32 %v575, %v592
        %v613 = vmul.f32 %v576, %v592
        %v614 = vmul.f32 %v577, %v592
        %v615 = vmul.f32 %v578, %v592
        %v616 = vmul.f32 %v579, %v592
        %v617 = vmul.f32 %v580, %v592
        %v618 = vmul.f32 %v581, %v592
        %v619 = vmul.f32 %v582, %v592
        %v620 = vmul.f32 %v583, %v592
        %v621 = vmul.f32 %v584, %v592
        %v622 = vmul.f32 %v585, %v592
        %v623 = vmul.f32 %v586, %v592
        %v624 = vmul.f32 %v587, %v592
        %v625 = vadd.f32 %v593, 0.0
        %v626 = vadd.f32 %v594, 0.0
        %v627 = vadd.f32 %v595, 0.0
        %v628 = vadd.f32 %v596, 0.0
        %v629 = vadd.f32 %v597, 0.0
        %v630 = vadd.f32 %v598, 0.0
        %v631 = vadd.f32 %v599, 0.0
        %v632 = vadd.f32 %v600, 0.0
        %v633 = vadd.f32 %v601, 0.0
        %v634 = vadd.f32 %v602, 0.0
        %v635 = vadd.f32 %v603, 0.0
        %v636 = vadd.f32 %v604, 0.0
        %v637 = vadd.f32 %v605, 0.0
        %v638 = vadd.f32 %v606, 0.0
        %v639 = vadd.f32 %v607, 0.0
        %v640 = vadd.f32 %v608, 0.0
        %v641 = vadd.f32 %v609, 0.0
        %v642 = vadd.f32 %v610, 0.0
        %v643 = vadd.f32 %v611, 0.0
        %v644 = vadd.f32 %v612, 0.0
        %v645 = vadd.f32 %v613, 0.0
        %v646 = vadd.f32 %v614, 0.0
        %v647 = vadd.f32 %v615, 0.0
        %v648 = vadd.f32 %v616, 0.0
        %v649 = vadd.f32 %v617, 0.0
        %v650 = vadd.f32 %v618, 0.0
        %v651 = vadd.f32 %v619, 0.0
        %v652 = vadd.f32 %v620, 0.0
        %v653 = vadd.f32 %v621, 0.0
        %v654 = vadd.f32 %v622, 0.0
        %v655 = vadd.f32 %v623, 0.0
        %v656 = vadd.f32 %v624, 0.0
        %v657 = vld [vmem:[#allocation2 + $0x1] sm:$0xff]
        %v658 = vld [vmem:[#allocation2 + $0x9] sm:$0xff]
        %v659 = vld [vmem:[#allocation2 + $0x19] sm:$0xff]
        %v660 = vld [vmem:[#allocation2 + $0x21] sm:$0xff]
        %v661 = vld [vmem:[#allocation2 + $0x31] sm:$0xff]
        %v662 = vld [vmem:[#allocation2 + $0x39] sm:$0xff]
        %v663 = vld [vmem:[#allocation2 + $0x49] sm:$0xff]
        %v664 = vld [vmem:[#allocation2 + $0x51] sm:$0xff]
        %v665 = vld [vmem:[#allocation2 + $0x61] sm:$0xff]
        %v666 = vld [vmem:[#allocation2 + $0x69] sm:$0xff]
        %v667 = vld [vmem:[#allocation2 + $0x79] sm:$0xff]
        %v668 = vld [vmem:[#allocation2 + $0x81] sm:$0xff]
        %v669 = vld [vmem:[#allocation2 + $0x91] sm:$0xff]
        %v670 = vld [vmem:[#allocation2 + $0x99] sm:$0xff]
        %v671 = vld [vmem:[#allocation2 + $0xa9] sm:$0xff]
        %v672 = vld [vmem:[#allocation2 + $0xb1] sm:$0xff]
        %v673 = vld [vmem:[#allocation2 + $0xc1] sm:$0xff]
        %v674 = vld [vmem:[#allocation2 + $0xc9] sm:$0xff]
        %v675 = vld [vmem:[#allocation2 + $0xd9] sm:$0xff]
        %v676 = vld [vmem:[#allocation2 + $0xe1] sm:$0xff]
        %v677 = vld [vmem:[#allocation2 + $0xf1] sm:$0xff]
        %v678 = vld [vmem:[#allocation2 + $0xf9] sm:$0xff]
        %v679 = vld [vmem:[#allocation2 + $0x109] sm:$0xff]
        %v680 = vld [vmem:[#allocation2 + $0x111] sm:$0xff]
        %v681 = vld [vmem:[#allocation2 + $0x121] sm:$0xff]
        %v682 = vld [vmem:[#allocation2 + $0x129] sm:$0xff]
        %v683 = vld [vmem:[#allocation2 + $0x139] sm:$0xff]
        %v684 = vld [vmem:[#allocation2 + $0x141] sm:$0xff]
        %v685 = vld [vmem:[#allocation2 + $0x151] sm:$0xff]
        %v686 = vld [vmem:[#allocation2 + $0x159] sm:$0xff]
        %v687 = vld [vmem:[#allocation2 + $0x169] sm:$0xff]
        %v688 = vld [vmem:[#allocation2 + $0x171] sm:$0xff]
        %v689 = vld [vmem:[%s1 + $0x1] sm:$0x1]
        %v690 = vlaneseq
        %v691 = vshrl.u32 %v690, 7
        %v692 = vsub.s32 0, %v691
        %v693 = vrot.slane %v689, %v692
        %v694 = vmul.f32 %v657, %v693
        %v695 = vmul.f32 %v658, %v693
        %v696 = vmul.f32 %v659, %v693
        %v697 = vmul.f32 %v660, %v693
        %v698 = vmul.f32 %v661, %v693
        %v699 = vmul.f32 %v662, %v693
        %v700 = vmul.f32 %v663, %v693
        %v701 = vmul.f32 %v664, %v693
        %v702 = vmul.f32 %v665, %v693
        %v703 = vmul.f32 %v666, %v693
        %v704 = vmul.f32 %v667, %v693
        %v705 = vmul.f32 %v668, %v693
        %v706 = vmul.f32 %v669, %v693
        %v707 = vmul.f32 %v670, %v693
        %v708 = vmul.f32 %v671, %v693
        %v709 = vmul.f32 %v672, %v693
        %v710 = vmul.f32 %v673, %v693
        %v711 = vmul.f32 %v674, %v693
        %v712 = vmul.f32 %v675, %v693
        %v713 = vmul.f32 %v676, %v693
        %v714 = vmul.f32 %v677, %v693
        %v715 = vmul.f32 %v678, %v693
        %v716 = vmul.f32 %v679, %v693
        %v717 = vmul.f32 %v680, %v693
        %v718 = vmul.f32 %v681, %v693
        %v719 = vmul.f32 %v682, %v693
        %v720 = vmul.f32 %v683, %v693
        %v721 = vmul.f32 %v684, %v693
        %v722 = vmul.f32 %v685, %v693
        %v723 = vmul.f32 %v686, %v693
        %v724 = vmul.f32 %v687, %v693
        %v725 = vmul.f32 %v688, %v693
        %v726 = vadd.f32 %v625, %v694
        %v727 = vadd.f32 %v626, %v695
        %v728 = vadd.f32 %v627, %v696
        %v729 = vadd.f32 %v628, %v697
        %v730 = vadd.f32 %v629, %v698
        %v731 = vadd.f32 %v630, %v699
        %v732 = vadd.f32 %v631, %v700
        %v733 = vadd.f32 %v632, %v701
        %v734 = vadd.f32 %v633, %v702
        %v735 = vadd.f32 %v634, %v703
        %v736 = vadd.f32 %v635, %v704
        %v737 = vadd.f32 %v636, %v705
        %v738 = vadd.f32 %v637, %v706
        %v739 = vadd.f32 %v638, %v707
        %v740 = vadd.f32 %v639, %v708
        %v741 = vadd.f32 %v640, %v709
        %v742 = vadd.f32 %v641, %v710
        %v743 = vadd.f32 %v642, %v711
        %v744 = vadd.f32 %v643, %v712
        %v745 = vadd.f32 %v644, %v713
        %v746 = vadd.f32 %v645, %v714
        %v747 = vadd.f32 %v646, %v715
        %v748 = vadd.f32 %v647, %v716
        %v749 = vadd.f32 %v648, %v717
        %v750 = vadd.f32 %v649, %v718
        %v751 = vadd.f32 %v650, %v719
        %v752 = vadd.f32 %v651, %v720
        %v753 = vadd.f32 %v652, %v721
        %v754 = vadd.f32 %v653, %v722
        %v755 = vadd.f32 %v654, %v723
        %v756 = vadd.f32 %v655, %v724
        %v757 = vadd.f32 %v656, %v725
        %v758 = vld [vmem:[#allocation2 + $0x2] sm:$0xff]
        %v759 = vld [vmem:[#allocation2 + $0xa] sm:$0xff]
        %v760 = vld [vmem:[#allocation2 + $0x1a] sm:$0xff]
        %v761 = vld [vmem:[#allocation2 + $0x22] sm:$0xff]
        %v762 = vld [vmem:[#allocation2 + $0x32] sm:$0xff]
        %v763 = vld [vmem:[#allocation2 + $0x3a] sm:$0xff]
        %v764 = vld [vmem:[#allocation2 + $0x4a] sm:$0xff]
        %v765 = vld [vmem:[#allocation2 + $0x52] sm:$0xff]
        %v766 = vld [vmem:[#allocation2 + $0x62] sm:$0xff]
        %v767 = vld [vmem:[#allocation2 + $0x6a] sm:$0xff]
        %v768 = vld [vmem:[#allocation2 + $0x7a] sm:$0xff]
        %v769 = vld [vmem:[#allocation2 + $0x82] sm:$0xff]
        %v770 = vld [vmem:[#allocation2 + $0x92] sm:$0xff]
        %v771 = vld [vmem:[#allocation2 + $0x9a] sm:$0xff]
        %v772 = vld [vmem:[#allocation2 + $0xaa] sm:$0xff]
        %v773 = vld [vmem:[#allocation2 + $0xb2] sm:$0xff]
        %v774 = vld [vmem:[#allocation2 + $0xc2] sm:$0xff]
        %v775 = vld [vmem:[#allocation2 + $0xca] sm:$0xff]
        %v776 = vld [vmem:[#allocation2 + $0xda] sm:$0xff]
        %v777 = vld [vmem:[#allocation2 + $0xe2] sm:$0xff]
        %v778 = vld [vmem:[#allocation2 + $0xf2] sm:$0xff]
        %v779 = vld [vmem:[#allocation2 + $0xfa] sm:$0xff]
        %v780 = vld [vmem:[#allocation2 + $0x10a] sm:$0xff]
        %v781 = vld [vmem:[#allocation2 + $0x112] sm:$0xff]
        %v782 = vld [vmem:[#allocation2 + $0x122] sm:$0xff]
        %v783 = vld [vmem:[#allocation2 + $0x12a] sm:$0xff]
        %v784 = vld [vmem:[#allocation2 + $0x13a] sm:$0xff]
        %v785 = vld [vmem:[#allocation2 + $0x142] sm:$0xff]
        %v786 = vld [vmem:[#allocation2 + $0x152] sm:$0xff]
        %v787 = vld [vmem:[#allocation2 + $0x15a] sm:$0xff]
        %v788 = vld [vmem:[#allocation2 + $0x16a] sm:$0xff]
        %v789 = vld [vmem:[#allocation2 + $0x172] sm:$0xff]
        %v790 = vld [vmem:[%s1 + $0x2] sm:$0x1]
        %v791 = vlaneseq
        %v792 = vshrl.u32 %v791, 7
        %v793 = vsub.s32 0, %v792
        %v794 = vrot.slane %v790, %v793
        %v795 = vmul.f32 %v758, %v794
        %v796 = vmul.f32 %v759, %v794
        %v797 = vmul.f32 %v760, %v794
        %v798 = vmul.f32 %v761, %v794
        %v799 = vmul.f32 %v762, %v794
        %v800 = vmul.f32 %v763, %v794
        %v801 = vmul.f32 %v764, %v794
        %v802 = vmul.f32 %v765, %v794
        %v803 = vmul.f32 %v766, %v794
        %v804 = vmul.f32 %v767, %v794
        %v805 = vmul.f32 %v768, %v794
        %v806 = vmul.f32 %v769, %v794
        %v807 = vmul.f32 %v770, %v794
        %v808 = vmul.f32 %v771, %v794
        %v809 = vmul.f32 %v772, %v794
        %v810 = vmul.f32 %v773, %v794
        %v811 = vmul.f32 %v774, %v794
        %v812 = vmul.f32 %v775, %v794
        %v813 = vmul.f32 %v776, %v794
        %v814 = vmul.f32 %v777, %v794
        %v815 = vmul.f32 %v778, %v794
        %v816 = vmul.f32 %v779, %v794
        %v817 = vmul.f32 %v780, %v794
        %v818 = vmul.f32 %v781, %v794
        %v819 = vmul.f32 %v782, %v794
        %v820 = vmul.f32 %v783, %v794
        %v821 = vmul.f32 %v784, %v794
        %v822 = vmul.f32 %v785, %v794
        %v823 = vmul.f32 %v786, %v794
        %v824 = vmul.f32 %v787, %v794
        %v825 = vmul.f32 %v788, %v794
        %v826 = vmul.f32 %v789, %v794
        %v827 = vadd.f32 %v726, %v795
        %v828 = vadd.f32 %v727, %v796
        %v829 = vadd.f32 %v728, %v797
        %v830 = vadd.f32 %v729, %v798
        %v831 = vadd.f32 %v730, %v799
        %v832 = vadd.f32 %v731, %v800
        %v833 = vadd.f32 %v732, %v801
        %v834 = vadd.f32 %v733, %v802
        %v835 = vadd.f32 %v734, %v803
        %v836 = vadd.f32 %v735, %v804
        %v837 = vadd.f32 %v736, %v805
        %v838 = vadd.f32 %v737, %v806
        %v839 = vadd.f32 %v738, %v807
        %v840 = vadd.f32 %v739, %v808
        %v841 = vadd.f32 %v740, %v809
        %v842 = vadd.f32 %v741, %v810
        %v843 = vadd.f32 %v742, %v811
        %v844 = vadd.f32 %v743, %v812
        %v845 = vadd.f32 %v744, %v813
        %v846 = vadd.f32 %v745, %v814
        %v847 = vadd.f32 %v746, %v815
        %v848 = vadd.f32 %v747, %v816
        %v849 = vadd.f32 %v748, %v817
        %v850 = vadd.f32 %v749, %v818
        %v851 = vadd.f32 %v750, %v819
        %v852 = vadd.f32 %v751, %v820
        %v853 = vadd.f32 %v752, %v821
        %v854 = vadd.f32 %v753, %v822
        %v855 = vadd.f32 %v754, %v823
        %v856 = vadd.f32 %v755, %v824
        %v857 = vadd.f32 %v756, %v825
        %v858 = vadd.f32 %v757, %v826
        %v859 = vld [vmem:[%s523] sm:$0xff]
        %v860 = vld [vmem:[%s523 + $0x8] sm:$0xff]
        %v861 = vld [vmem:[%s523 + $0x18] sm:$0xff]
        %v862 = vld [vmem:[%s523 + $0x20] sm:$0xff]
        %v863 = vld [vmem:[%s523 + $0x30] sm:$0xff]
        %v864 = vld [vmem:[%s523 + $0x38] sm:$0xff]
        %v865 = vld [vmem:[%s523 + $0x48] sm:$0xff]
        %v866 = vld [vmem:[%s523 + $0x50] sm:$0xff]
        %v867 = vld [vmem:[%s523 + $0x60] sm:$0xff]
        %v868 = vld [vmem:[%s523 + $0x68] sm:$0xff]
        %v869 = vld [vmem:[%s523 + $0x78] sm:$0xff]
        %v870 = vld [vmem:[%s523 + $0x80] sm:$0xff]
        %v871 = vld [vmem:[%s523 + $0x90] sm:$0xff]
        %v872 = vld [vmem:[%s523 + $0x98] sm:$0xff]
        %v873 = vld [vmem:[%s523 + $0xa8] sm:$0xff]
        %v874 = vld [vmem:[%s523 + $0xb0] sm:$0xff]
        %v875 = vld [vmem:[%s523 + $0xc0] sm:$0xff]
        %v876 = vld [vmem:[%s523 + $0xc8] sm:$0xff]
        %v877 = vld [vmem:[%s523 + $0xd8] sm:$0xff]
        %v878 = vld [vmem:[%s523 + $0xe0] sm:$0xff]
        %v879 = vld [vmem:[%s523 + $0xf0] sm:$0xff]
        %v880 = vld [vmem:[%s523 + $0xf8] sm:$0xff]
        %v881 = vld [vmem:[%s523 + $0x108] sm:$0xff]
        %v882 = vld [vmem:[%s523 + $0x110] sm:$0xff]
        %v883 = vld [vmem:[%s523 + $0x120] sm:$0xff]
        %v884 = vld [vmem:[%s523 + $0x128] sm:$0xff]
        %v885 = vld [vmem:[%s523 + $0x138] sm:$0xff]
        %v886 = vld [vmem:[%s523 + $0x140] sm:$0xff]
        %v887 = vld [vmem:[%s523 + $0x150] sm:$0xff]
        %v888 = vld [vmem:[%s523 + $0x158] sm:$0xff]
        %v889 = vld [vmem:[%s523 + $0x168] sm:$0xff]
        %v890 = vld [vmem:[%s523 + $0x170] sm:$0xff]
        %v891 = vld [vmem:[%s1 + $0x3] sm:$0x1]
        %v892 = vlaneseq
        %v893 = vshrl.u32 %v892, 7
        %v894 = vsub.s32 0, %v893
        %v895 = vrot.slane %v891, %v894
        %v896 = vmul.f32 %v859, %v895
        %v897 = vmul.f32 %v860, %v895
        %v898 = vmul.f32 %v861, %v895
        %v899 = vmul.f32 %v862, %v895
        %v900 = vmul.f32 %v863, %v895
        %v901 = vmul.f32 %v864, %v895
        %v902 = vmul.f32 %v865, %v895
        %v903 = vmul.f32 %v866, %v895
        %v904 = vmul.f32 %v867, %v895
        %v905 = vmul.f32 %v868, %v895
        %v906 = vmul.f32 %v869, %v895
        %v907 = vmul.f32 %v870, %v895
        %v908 = vmul.f32 %v871, %v895
        %v909 = vmul.f32 %v872, %v895
        %v910 = vmul.f32 %v873, %v895
        %v911 = vmul.f32 %v874, %v895
        %v912 = vmul.f32 %v875, %v895
        %v913 = vmul.f32 %v876, %v895
        %v914 = vmul.f32 %v877, %v895
        %v915 = vmul.f32 %v878, %v895
        %v916 = vmul.f32 %v879, %v895
        %v917 = vmul.f32 %v880, %v895
        %v918 = vmul.f32 %v881, %v895
        %v919 = vmul.f32 %v882, %v895
        %v920 = vmul.f32 %v883, %v895
        %v921 = vmul.f32 %v884, %v895
        %v922 = vmul.f32 %v885, %v895
        %v923 = vmul.f32 %v886, %v895
        %v924 = vmul.f32 %v887, %v895
        %v925 = vmul.f32 %v888, %v895
        %v926 = vmul.f32 %v889, %v895
        %v927 = vmul.f32 %v890, %v895
        %v928 = vadd.f32 %v827, %v896
        %v929 = vadd.f32 %v828, %v897
        %v930 = vadd.f32 %v829, %v898
        %v931 = vadd.f32 %v830, %v899
        %v932 = vadd.f32 %v831, %v900
        %v933 = vadd.f32 %v832, %v901
        %v934 = vadd.f32 %v833, %v902
        %v935 = vadd.f32 %v834, %v903
        %v936 = vadd.f32 %v835, %v904
        %v937 = vadd.f32 %v836, %v905
        %v938 = vadd.f32 %v837, %v906
        %v939 = vadd.f32 %v838, %v907
        %v940 = vadd.f32 %v839, %v908
        %v941 = vadd.f32 %v840, %v909
        %v942 = vadd.f32 %v841, %v910
        %v943 = vadd.f32 %v842, %v911
        %v944 = vadd.f32 %v843, %v912
        %v945 = vadd.f32 %v844, %v913
        %v946 = vadd.f32 %v845, %v914
        %v947 = vadd.f32 %v846, %v915
        %v948 = vadd.f32 %v847, %v916
        %v949 = vadd.f32 %v848, %v917
        %v950 = vadd.f32 %v849, %v918
        %v951 = vadd.f32 %v850, %v919
        %v952 = vadd.f32 %v851, %v920
        %v953 = vadd.f32 %v852, %v921
        %v954 = vadd.f32 %v853, %v922
        %v955 = vadd.f32 %v854, %v923
        %v956 = vadd.f32 %v855, %v924
        %v957 = vadd.f32 %v856, %v925
        %v958 = vadd.f32 %v857, %v926
        %v959 = vadd.f32 %v858, %v927
        %v960 = vld [vmem:[%s523 + $0x1] sm:$0xff]
        %v961 = vld [vmem:[%s523 + $0x9] sm:$0xff]
        %v962 = vld [vmem:[%s523 + $0x19] sm:$0xff]
        %v963 = vld [vmem:[%s523 + $0x21] sm:$0xff]
        %v964 = vld [vmem:[%s523 + $0x31] sm:$0xff]
        %v965 = vld [vmem:[%s523 + $0x39] sm:$0xff]
        %v966 = vld [vmem:[%s523 + $0x49] sm:$0xff]
        %v967 = vld [vmem:[%s523 + $0x51] sm:$0xff]
        %v968 = vld [vmem:[%s523 + $0x61] sm:$0xff]
        %v969 = vld [vmem:[%s523 + $0x69] sm:$0xff]
        %v970 = vld [vmem:[%s523 + $0x79] sm:$0xff]
        %v971 = vld [vmem:[%s523 + $0x81] sm:$0xff]
        %v972 = vld [vmem:[%s523 + $0x91] sm:$0xff]
        %v973 = vld [vmem:[%s523 + $0x99] sm:$0xff]
        %v974 = vld [vmem:[%s523 + $0xa9] sm:$0xff]
        %v975 = vld [vmem:[%s523 + $0xb1] sm:$0xff]
        %v976 = vld [vmem:[%s523 + $0xc1] sm:$0xff]
        %v977 = vld [vmem:[%s523 + $0xc9] sm:$0xff]
        %v978 = vld [vmem:[%s523 + $0xd9] sm:$0xff]
        %v979 = vld [vmem:[%s523 + $0xe1] sm:$0xff]
        %v980 = vld [vmem:[%s523 + $0xf1] sm:$0xff]
        %v981 = vld [vmem:[%s523 + $0xf9] sm:$0xff]
        %v982 = vld [vmem:[%s523 + $0x109] sm:$0xff]
        %v983 = vld [vmem:[%s523 + $0x111] sm:$0xff]
        %v984 = vld [vmem:[%s523 + $0x121] sm:$0xff]
        %v985 = vld [vmem:[%s523 + $0x129] sm:$0xff]
        %v986 = vld [vmem:[%s523 + $0x139] sm:$0xff]
        %v987 = vld [vmem:[%s523 + $0x141] sm:$0xff]
        %v988 = vld [vmem:[%s523 + $0x151] sm:$0xff]
        %v989 = vld [vmem:[%s523 + $0x159] sm:$0xff]
        %v990 = vld [vmem:[%s523 + $0x169] sm:$0xff]
        %v991 = vld [vmem:[%s523 + $0x171] sm:$0xff]
        %v992 = vld [vmem:[%s1 + $0x4] sm:$0x1]
        %v993 = vlaneseq
        %v994 = vshrl.u32 %v993, 7
        %v995 = vsub.s32 0, %v994
        %v996 = vrot.slane %v992, %v995
        %v997 = vmul.f32 %v960, %v996
        %v998 = vmul.f32 %v961, %v996
        %v999 = vmul.f32 %v962, %v996
        %v1000 = vmul.f32 %v963, %v996
        %v1001 = vmul.f32 %v964, %v996
        %v1002 = vmul.f32 %v965, %v996
        %v1003 = vmul.f32 %v966, %v996
        %v1004 = vmul.f32 %v967, %v996
        %v1005 = vmul.f32 %v968, %v996
        %v1006 = vmul.f32 %v969, %v996
        %v1007 = vmul.f32 %v970, %v996
        %v1008 = vmul.f32 %v971, %v996
        %v1009 = vmul.f32 %v972, %v996
        %v1010 = vmul.f32 %v973, %v996
        %v1011 = vmul.f32 %v974, %v996
        %v1012 = vmul.f32 %v975, %v996
        %v1013 = vmul.f32 %v976, %v996
        %v1014 = vmul.f32 %v977, %v996
        %v1015 = vmul.f32 %v978, %v996
        %v1016 = vmul.f32 %v979, %v996
        %v1017 = vmul.f32 %v980, %v996
        %v1018 = vmul.f32 %v981, %v996
        %v1019 = vmul.f32 %v982, %v996
        %v1020 = vmul.f32 %v983, %v996
        %v1021 = vmul.f32 %v984, %v996
        %v1022 = vmul.f32 %v985, %v996
        %v1023 = vmul.f32 %v986, %v996
        %v1024 = vmul.f32 %v987, %v996
        %v1025 = vmul.f32 %v988, %v996
        %v1026 = vmul.f32 %v989, %v996
        %v1027 = vmul.f32 %v990, %v996
        %v1028 = vmul.f32 %v991, %v996
        %v1029 = vadd.f32 %v928, %v997
        %v1030 = vadd.f32 %v929, %v998
        %v1031 = vadd.f32 %v930, %v999
        %v1032 = vadd.f32 %v931, %v1000
        %v1033 = vadd.f32 %v932, %v1001
        %v1034 = vadd.f32 %v933, %v1002
        %v1035 = vadd.f32 %v934, %v1003
        %v1036 = vadd.f32 %v935, %v1004
        %v1037 = vadd.f32 %v936, %v1005
        %v1038 = vadd.f32 %v937, %v1006
        %v1039 = vadd.f32 %v938, %v1007
        %v1040 = vadd.f32 %v939, %v1008
        %v1041 = vadd.f32 %v940, %v1009
        %v1042 = vadd.f32 %v941, %v1010
        %v1043 = vadd.f32 %v942, %v1011
        %v1044 = vadd.f32 %v943, %v1012
        %v1045 = vadd.f32 %v944, %v1013
        %v1046 = vadd.f32 %v945, %v1014
        %v1047 = vadd.f32 %v946, %v1015
        %v1048 = vadd.f32 %v947, %v1016
        %v1049 = vadd.f32 %v948, %v1017
        %v1050 = vadd.f32 %v949, %v1018
        %v1051 = vadd.f32 %v950, %v1019
        %v1052 = vadd.f32 %v951, %v1020
        %v1053 = vadd.f32 %v952, %v1021
        %v1054 = vadd.f32 %v953, %v1022
        %v1055 = vadd.f32 %v954, %v1023
        %v1056 = vadd.f32 %v955, %v1024
        %v1057 = vadd.f32 %v956, %v1025
        %v1058 = vadd.f32 %v957, %v1026
        %v1059 = vadd.f32 %v958, %v1027
        %v1060 = vadd.f32 %v959, %v1028
        %v1061 = vld [vmem:[%s523 + $0x2] sm:$0xff]
        %v1062 = vld [vmem:[%s523 + $0xa] sm:$0xff]
        %v1063 = vld [vmem:[%s523 + $0x1a] sm:$0xff]
        %v1064 = vld [vmem:[%s523 + $0x22] sm:$0xff]
        %v1065 = vld [vmem:[%s523 + $0x32] sm:$0xff]
        %v1066 = vld [vmem:[%s523 + $0x3a] sm:$0xff]
        %v1067 = vld [vmem:[%s523 + $0x4a] sm:$0xff]
        %v1068 = vld [vmem:[%s523 + $0x52] sm:$0xff]
        %v1069 = vld [vmem:[%s523 + $0x62] sm:$0xff]
        %v1070 = vld [vmem:[%s523 + $0x6a] sm:$0xff]
        %v1071 = vld [vmem:[%s523 + $0x7a] sm:$0xff]
        %v1072 = vld [vmem:[%s523 + $0x82] sm:$0xff]
        %v1073 = vld [vmem:[%s523 + $0x92] sm:$0xff]
        %v1074 = vld [vmem:[%s523 + $0x9a] sm:$0xff]
        %v1075 = vld [vmem:[%s523 + $0xaa] sm:$0xff]
        %v1076 = vld [vmem:[%s523 + $0xb2] sm:$0xff]
        %v1077 = vld [vmem:[%s523 + $0xc2] sm:$0xff]
        %v1078 = vld [vmem:[%s523 + $0xca] sm:$0xff]
        %v1079 = vld [vmem:[%s523 + $0xda] sm:$0xff]
        %v1080 = vld [vmem:[%s523 + $0xe2] sm:$0xff]
        %v1081 = vld [vmem:[%s523 + $0xf2] sm:$0xff]
        %v1082 = vld [vmem:[%s523 + $0xfa] sm:$0xff]
        %v1083 = vld [vmem:[%s523 + $0x10a] sm:$0xff]
        %v1084 = vld [vmem:[%s523 + $0x112] sm:$0xff]
        %v1085 = vld [vmem:[%s523 + $0x122] sm:$0xff]
        %v1086 = vld [vmem:[%s523 + $0x12a] sm:$0xff]
        %v1087 = vld [vmem:[%s523 + $0x13a] sm:$0xff]
        %v1088 = vld [vmem:[%s523 + $0x142] sm:$0xff]
        %v1089 = vld [vmem:[%s523 + $0x152] sm:$0xff]
        %v1090 = vld [vmem:[%s523 + $0x15a] sm:$0xff]
        %v1091 = vld [vmem:[%s523 + $0x16a] sm:$0xff]
        %v1092 = vld [vmem:[%s523 + $0x172] sm:$0xff]
        %v1093 = vld [vmem:[%s1 + $0x5] sm:$0x1]
        %v1094 = vlaneseq
        %v1095 = vshrl.u32 %v1094, 7
        %v1096 = vsub.s32 0, %v1095
        %v1097 = vrot.slane %v1093, %v1096
        %v1098 = vmul.f32 %v1061, %v1097
        %v1099 = vmul.f32 %v1062, %v1097
        %v1100 = vmul.f32 %v1063, %v1097
        %v1101 = vmul.f32 %v1064, %v1097
        %v1102 = vmul.f32 %v1065, %v1097
        %v1103 = vmul.f32 %v1066, %v1097
        %v1104 = vmul.f32 %v1067, %v1097
        %v1105 = vmul.f32 %v1068, %v1097
        %v1106 = vmul.f32 %v1069, %v1097
        %v1107 = vmul.f32 %v1070, %v1097
        %v1108 = vmul.f32 %v1071, %v1097
        %v1109 = vmul.f32 %v1072, %v1097
        %v1110 = vmul.f32 %v1073, %v1097
        %v1111 = vmul.f32 %v1074, %v1097
        %v1112 = vmul.f32 %v1075, %v1097
        %v1113 = vmul.f32 %v1076, %v1097
        %v1114 = vmul.f32 %v1077, %v1097
        %v1115 = vmul.f32 %v1078, %v1097
        %v1116 = vmul.f32 %v1079, %v1097
        %v1117 = vmul.f32 %v1080, %v1097
        %v1118 = vmul.f32 %v1081, %v1097
        %v1119 = vmul.f32 %v1082, %v1097
        %v1120 = vmul.f32 %v1083, %v1097
        %v1121 = vmul.f32 %v1084, %v1097
        %v1122 = vmul.f32 %v1085, %v1097
        %v1123 = vmul.f32 %v1086, %v1097
        %v1124 = vmul.f32 %v1087, %v1097
        %v1125 = vmul.f32 %v1088, %v1097
        %v1126 = vmul.f32 %v1089, %v1097
        %v1127 = vmul.f32 %v1090, %v1097
        %v1128 = vmul.f32 %v1091, %v1097
        %v1129 = vmul.f32 %v1092, %v1097
        %v1130 = vadd.f32 %v1029, %v1098
        %v1131 = vadd.f32 %v1030, %v1099
        %v1132 = vadd.f32 %v1031, %v1100
        %v1133 = vadd.f32 %v1032, %v1101
        %v1134 = vadd.f32 %v1033, %v1102
        %v1135 = vadd.f32 %v1034, %v1103
        %v1136 = vadd.f32 %v1035, %v1104
        %v1137 = vadd.f32 %v1036, %v1105
        %v1138 = vadd.f32 %v1037, %v1106
        %v1139 = vadd.f32 %v1038, %v1107
        %v1140 = vadd.f32 %v1039, %v1108
        %v1141 = vadd.f32 %v1040, %v1109
        %v1142 = vadd.f32 %v1041, %v1110
        %v1143 = vadd.f32 %v1042, %v1111
        %v1144 = vadd.f32 %v1043, %v1112
        %v1145 = vadd.f32 %v1044, %v1113
        %v1146 = vadd.f32 %v1045, %v1114
        %v1147 = vadd.f32 %v1046, %v1115
        %v1148 = vadd.f32 %v1047, %v1116
        %v1149 = vadd.f32 %v1048, %v1117
        %v1150 = vadd.f32 %v1049, %v1118
        %v1151 = vadd.f32 %v1050, %v1119
        %v1152 = vadd.f32 %v1051, %v1120
        %v1153 = vadd.f32 %v1052, %v1121
        %v1154 = vadd.f32 %v1053, %v1122
        %v1155 = vadd.f32 %v1054, %v1123
        %v1156 = vadd.f32 %v1055, %v1124
        %v1157 = vadd.f32 %v1056, %v1125
        %v1158 = vadd.f32 %v1057, %v1126
        %v1159 = vadd.f32 %v1058, %v1127
        %v1160 = vadd.f32 %v1059, %v1128
        %v1161 = vadd.f32 %v1060, %v1129
        %s1162 = scalar_lea.vmem [#allocation2], 48
        %v1163 = vld [vmem:[%s1162] sm:$0xff]
        %v1164 = vld [vmem:[%s1162 + $0x8] sm:$0xff]
        %v1165 = vld [vmem:[%s1162 + $0x18] sm:$0xff]
        %v1166 = vld [vmem:[%s1162 + $0x20] sm:$0xff]
        %v1167 = vld [vmem:[%s1162 + $0x30] sm:$0xff]
        %v1168 = vld [vmem:[%s1162 + $0x38] sm:$0xff]
        %v1169 = vld [vmem:[%s1162 + $0x48] sm:$0xff]
        %v1170 = vld [vmem:[%s1162 + $0x50] sm:$0xff]
        %v1171 = vld [vmem:[%s1162 + $0x60] sm:$0xff]
        %v1172 = vld [vmem:[%s1162 + $0x68] sm:$0xff]
        %v1173 = vld [vmem:[%s1162 + $0x78] sm:$0xff]
        %v1174 = vld [vmem:[%s1162 + $0x80] sm:$0xff]
        %v1175 = vld [vmem:[%s1162 + $0x90] sm:$0xff]
        %v1176 = vld [vmem:[%s1162 + $0x98] sm:$0xff]
        %v1177 = vld [vmem:[%s1162 + $0xa8] sm:$0xff]
        %v1178 = vld [vmem:[%s1162 + $0xb0] sm:$0xff]
        %v1179 = vld [vmem:[%s1162 + $0xc0] sm:$0xff]
        %v1180 = vld [vmem:[%s1162 + $0xc8] sm:$0xff]
        %v1181 = vld [vmem:[%s1162 + $0xd8] sm:$0xff]
        %v1182 = vld [vmem:[%s1162 + $0xe0] sm:$0xff]
        %v1183 = vld [vmem:[%s1162 + $0xf0] sm:$0xff]
        %v1184 = vld [vmem:[%s1162 + $0xf8] sm:$0xff]
        %v1185 = vld [vmem:[%s1162 + $0x108] sm:$0xff]
        %v1186 = vld [vmem:[%s1162 + $0x110] sm:$0xff]
        %v1187 = vld [vmem:[%s1162 + $0x120] sm:$0xff]
        %v1188 = vld [vmem:[%s1162 + $0x128] sm:$0xff]
        %v1189 = vld [vmem:[%s1162 + $0x138] sm:$0xff]
        %v1190 = vld [vmem:[%s1162 + $0x140] sm:$0xff]
        %v1191 = vld [vmem:[%s1162 + $0x150] sm:$0xff]
        %v1192 = vld [vmem:[%s1162 + $0x158] sm:$0xff]
        %v1193 = vld [vmem:[%s1162 + $0x168] sm:$0xff]
        %v1194 = vld [vmem:[%s1162 + $0x170] sm:$0xff]
        %v1195 = vld [vmem:[%s1 + $0x6] sm:$0x1]
        %v1196 = vlaneseq
        %v1197 = vshrl.u32 %v1196, 7
        %v1198 = vsub.s32 0, %v1197
        %v1199 = vrot.slane %v1195, %v1198
        %v1200 = vmul.f32 %v1163, %v1199
        %v1201 = vmul.f32 %v1164, %v1199
        %v1202 = vmul.f32 %v1165, %v1199
        %v1203 = vmul.f32 %v1166, %v1199
        %v1204 = vmul.f32 %v1167, %v1199
        %v1205 = vmul.f32 %v1168, %v1199
        %v1206 = vmul.f32 %v1169, %v1199
        %v1207 = vmul.f32 %v1170, %v1199
        %v1208 = vmul.f32 %v1171, %v1199
        %v1209 = vmul.f32 %v1172, %v1199
        %v1210 = vmul.f32 %v1173, %v1199
        %v1211 = vmul.f32 %v1174, %v1199
        %v1212 = vmul.f32 %v1175, %v1199
        %v1213 = vmul.f32 %v1176, %v1199
        %v1214 = vmul.f32 %v1177, %v1199
        %v1215 = vmul.f32 %v1178, %v1199
        %v1216 = vmul.f32 %v1179, %v1199
        %v1217 = vmul.f32 %v1180, %v1199
        %v1218 = vmul.f32 %v1181, %v1199
        %v1219 = vmul.f32 %v1182, %v1199
        %v1220 = vmul.f32 %v1183, %v1199
        %v1221 = vmul.f32 %v1184, %v1199
        %v1222 = vmul.f32 %v1185, %v1199
        %v1223 = vmul.f32 %v1186, %v1199
        %v1224 = vmul.f32 %v1187, %v1199
        %v1225 = vmul.f32 %v1188, %v1199
        %v1226 = vmul.f32 %v1189, %v1199
        %v1227 = vmul.f32 %v1190, %v1199
        %v1228 = vmul.f32 %v1191, %v1199
        %v1229 = vmul.f32 %v1192, %v1199
        %v1230 = vmul.f32 %v1193, %v1199
        %v1231 = vmul.f32 %v1194, %v1199
        %v1232 = vadd.f32 %v1130, %v1200
        %v1233 = vadd.f32 %v1131, %v1201
        %v1234 = vadd.f32 %v1132, %v1202
        %v1235 = vadd.f32 %v1133, %v1203
        %v1236 = vadd.f32 %v1134, %v1204
        %v1237 = vadd.f32 %v1135, %v1205
        %v1238 = vadd.f32 %v1136, %v1206
        %v1239 = vadd.f32 %v1137, %v1207
        %v1240 = vadd.f32 %v1138, %v1208
        %v1241 = vadd.f32 %v1139, %v1209
        %v1242 = vadd.f32 %v1140, %v1210
        %v1243 = vadd.f32 %v1141, %v1211
        %v1244 = vadd.f32 %v1142, %v1212
        %v1245 = vadd.f32 %v1143, %v1213
        %v1246 = vadd.f32 %v1144, %v1214
        %v1247 = vadd.f32 %v1145, %v1215
        %v1248 = vadd.f32 %v1146, %v1216
        %v1249 = vadd.f32 %v1147, %v1217
        %v1250 = vadd.f32 %v1148, %v1218
        %v1251 = vadd.f32 %v1149, %v1219
        %v1252 = vadd.f32 %v1150, %v1220
        %v1253 = vadd.f32 %v1151, %v1221
        %v1254 = vadd.f32 %v1152, %v1222
        %v1255 = vadd.f32 %v1153, %v1223
        %v1256 = vadd.f32 %v1154, %v1224
        %v1257 = vadd.f32 %v1155, %v1225
        %v1258 = vadd.f32 %v1156, %v1226
        %v1259 = vadd.f32 %v1157, %v1227
        %v1260 = vadd.f32 %v1158, %v1228
        %v1261 = vadd.f32 %v1159, %v1229
        %v1262 = vadd.f32 %v1160, %v1230
        %v1263 = vadd.f32 %v1161, %v1231
        %v1264 = vld [vmem:[%s1162 + $0x1] sm:$0xff]
        %v1265 = vld [vmem:[%s1162 + $0x9] sm:$0xff]
        %v1266 = vld [vmem:[%s1162 + $0x19] sm:$0xff]
        %v1267 = vld [vmem:[%s1162 + $0x21] sm:$0xff]
        %v1268 = vld [vmem:[%s1162 + $0x31] sm:$0xff]
        %v1269 = vld [vmem:[%s1162 + $0x39] sm:$0xff]
        %v1270 = vld [vmem:[%s1162 + $0x49] sm:$0xff]
        %v1271 = vld [vmem:[%s1162 + $0x51] sm:$0xff]
        %v1272 = vld [vmem:[%s1162 + $0x61] sm:$0xff]
        %v1273 = vld [vmem:[%s1162 + $0x69] sm:$0xff]
        %v1274 = vld [vmem:[%s1162 + $0x79] sm:$0xff]
        %v1275 = vld [vmem:[%s1162 + $0x81] sm:$0xff]
        %v1276 = vld [vmem:[%s1162 + $0x91] sm:$0xff]
        %v1277 = vld [vmem:[%s1162 + $0x99] sm:$0xff]
        %v1278 = vld [vmem:[%s1162 + $0xa9] sm:$0xff]
        %v1279 = vld [vmem:[%s1162 + $0xb1] sm:$0xff]
        %v1280 = vld [vmem:[%s1162 + $0xc1] sm:$0xff]
        %v1281 = vld [vmem:[%s1162 + $0xc9] sm:$0xff]
        %v1282 = vld [vmem:[%s1162 + $0xd9] sm:$0xff]
        %v1283 = vld [vmem:[%s1162 + $0xe1] sm:$0xff]
        %v1284 = vld [vmem:[%s1162 + $0xf1] sm:$0xff]
        %v1285 = vld [vmem:[%s1162 + $0xf9] sm:$0xff]
        %v1286 = vld [vmem:[%s1162 + $0x109] sm:$0xff]
        %v1287 = vld [vmem:[%s1162 + $0x111] sm:$0xff]
        %v1288 = vld [vmem:[%s1162 + $0x121] sm:$0xff]
        %v1289 = vld [vmem:[%s1162 + $0x129] sm:$0xff]
        %v1290 = vld [vmem:[%s1162 + $0x139] sm:$0xff]
        %v1291 = vld [vmem:[%s1162 + $0x141] sm:$0xff]
        %v1292 = vld [vmem:[%s1162 + $0x151] sm:$0xff]
        %v1293 = vld [vmem:[%s1162 + $0x159] sm:$0xff]
        %v1294 = vld [vmem:[%s1162 + $0x169] sm:$0xff]
        %v1295 = vld [vmem:[%s1162 + $0x171] sm:$0xff]
        %v1296 = vld [vmem:[%s1 + $0x7] sm:$0x1]
        %v1297 = vlaneseq
        %v1298 = vshrl.u32 %v1297, 7
        %v1299 = vsub.s32 0, %v1298
        %v1300 = vrot.slane %v1296, %v1299
        %v1301 = vmul.f32 %v1264, %v1300
        %v1302 = vmul.f32 %v1265, %v1300
        %v1303 = vmul.f32 %v1266, %v1300
        %v1304 = vmul.f32 %v1267, %v1300
        %v1305 = vmul.f32 %v1268, %v1300
        %v1306 = vmul.f32 %v1269, %v1300
        %v1307 = vmul.f32 %v1270, %v1300
        %v1308 = vmul.f32 %v1271, %v1300
        %v1309 = vmul.f32 %v1272, %v1300
        %v1310 = vmul.f32 %v1273, %v1300
        %v1311 = vmul.f32 %v1274, %v1300
        %v1312 = vmul.f32 %v1275, %v1300
        %v1313 = vmul.f32 %v1276, %v1300
        %v1314 = vmul.f32 %v1277, %v1300
        %v1315 = vmul.f32 %v1278, %v1300
        %v1316 = vmul.f32 %v1279, %v1300
        %v1317 = vmul.f32 %v1280, %v1300
        %v1318 = vmul.f32 %v1281, %v1300
        %v1319 = vmul.f32 %v1282, %v1300
        %v1320 = vmul.f32 %v1283, %v1300
        %v1321 = vmul.f32 %v1284, %v1300
        %v1322 = vmul.f32 %v1285, %v1300
        %v1323 = vmul.f32 %v1286, %v1300
        %v1324 = vmul.f32 %v1287, %v1300
        %v1325 = vmul.f32 %v1288, %v1300
        %v1326 = vmul.f32 %v1289, %v1300
        %v1327 = vmul.f32 %v1290, %v1300
        %v1328 = vmul.f32 %v1291, %v1300
        %v1329 = vmul.f32 %v1292, %v1300
        %v1330 = vmul.f32 %v1293, %v1300
        %v1331 = vmul.f32 %v1294, %v1300
        %v1332 = vmul.f32 %v1295, %v1300
        %v1333 = vadd.f32 %v1232, %v1301
        %v1334 = vadd.f32 %v1233, %v1302
        %v1335 = vadd.f32 %v1234, %v1303
        %v1336 = vadd.f32 %v1235, %v1304
        %v1337 = vadd.f32 %v1236, %v1305
        %v1338 = vadd.f32 %v1237, %v1306
        %v1339 = vadd.f32 %v1238, %v1307
        %v1340 = vadd.f32 %v1239, %v1308
        %v1341 = vadd.f32 %v1240, %v1309
        %v1342 = vadd.f32 %v1241, %v1310
        %v1343 = vadd.f32 %v1242, %v1311
        %v1344 = vadd.f32 %v1243, %v1312
        %v1345 = vadd.f32 %v1244, %v1313
        %v1346 = vadd.f32 %v1245, %v1314
        %v1347 = vadd.f32 %v1246, %v1315
        %v1348 = vadd.f32 %v1247, %v1316
        %v1349 = vadd.f32 %v1248, %v1317
        %v1350 = vadd.f32 %v1249, %v1318
        %v1351 = vadd.f32 %v1250, %v1319
        %v1352 = vadd.f32 %v1251, %v1320
        %v1353 = vadd.f32 %v1252, %v1321
        %v1354 = vadd.f32 %v1253, %v1322
        %v1355 = vadd.f32 %v1254, %v1323
        %v1356 = vadd.f32 %v1255, %v1324
        %v1357 = vadd.f32 %v1256, %v1325
        %v1358 = vadd.f32 %v1257, %v1326
        %v1359 = vadd.f32 %v1258, %v1327
        %v1360 = vadd.f32 %v1259, %v1328
        %v1361 = vadd.f32 %v1260, %v1329
        %v1362 = vadd.f32 %v1261, %v1330
        %v1363 = vadd.f32 %v1262, %v1331
        %v1364 = vadd.f32 %v1263, %v1332
        %v1365 = vld [vmem:[%s1162 + $0x2] sm:$0xff]
        %v1366 = vld [vmem:[%s1162 + $0xa] sm:$0xff]
        %v1367 = vld [vmem:[%s1162 + $0x1a] sm:$0xff]
        %v1368 = vld [vmem:[%s1162 + $0x22] sm:$0xff]
        %v1369 = vld [vmem:[%s1162 + $0x32] sm:$0xff]
        %v1370 = vld [vmem:[%s1162 + $0x3a] sm:$0xff]
        %v1371 = vld [vmem:[%s1162 + $0x4a] sm:$0xff]
        %v1372 = vld [vmem:[%s1162 + $0x52] sm:$0xff]
        %v1373 = vld [vmem:[%s1162 + $0x62] sm:$0xff]
        %v1374 = vld [vmem:[%s1162 + $0x6a] sm:$0xff]
        %v1375 = vld [vmem:[%s1162 + $0x7a] sm:$0xff]
        %v1376 = vld [vmem:[%s1162 + $0x82] sm:$0xff]
        %v1377 = vld [vmem:[%s1162 + $0x92] sm:$0xff]
        %v1378 = vld [vmem:[%s1162 + $0x9a] sm:$0xff]
        %v1379 = vld [vmem:[%s1162 + $0xaa] sm:$0xff]
        %v1380 = vld [vmem:[%s1162 + $0xb2] sm:$0xff]
        %v1381 = vld [vmem:[%s1162 + $0xc2] sm:$0xff]
        %v1382 = vld [vmem:[%s1162 + $0xca] sm:$0xff]
        %v1383 = vld [vmem:[%s1162 + $0xda] sm:$0xff]
        %v1384 = vld [vmem:[%s1162 + $0xe2] sm:$0xff]
        %v1385 = vld [vmem:[%s1162 + $0xf2] sm:$0xff]
        %v1386 = vld [vmem:[%s1162 + $0xfa] sm:$0xff]
        %v1387 = vld [vmem:[%s1162 + $0x10a] sm:$0xff]
        %v1388 = vld [vmem:[%s1162 + $0x112] sm:$0xff]
        %v1389 = vld [vmem:[%s1162 + $0x122] sm:$0xff]
        %v1390 = vld [vmem:[%s1162 + $0x12a] sm:$0xff]
        %v1391 = vld [vmem:[%s1162 + $0x13a] sm:$0xff]
        %v1392 = vld [vmem:[%s1162 + $0x142] sm:$0xff]
        %v1393 = vld [vmem:[%s1162 + $0x152] sm:$0xff]
        %v1394 = vld [vmem:[%s1162 + $0x15a] sm:$0xff]
        %v1395 = vld [vmem:[%s1162 + $0x16a] sm:$0xff]
        %v1396 = vld [vmem:[%s1162 + $0x172] sm:$0xff]
        %v1397 = vld [vmem:[%s1 + $0x8] sm:$0x1]
        %v1398 = vlaneseq
        %v1399 = vshrl.u32 %v1398, 7
        %v1400 = vsub.s32 0, %v1399
        %v1401 = vrot.slane %v1397, %v1400
        %v1402 = vmul.f32 %v1365, %v1401
        %v1403 = vmul.f32 %v1366, %v1401
        %v1404 = vmul.f32 %v1367, %v1401
        %v1405 = vmul.f32 %v1368, %v1401
        %v1406 = vmul.f32 %v1369, %v1401
        %v1407 = vmul.f32 %v1370, %v1401
        %v1408 = vmul.f32 %v1371, %v1401
        %v1409 = vmul.f32 %v1372, %v1401
        %v1410 = vmul.f32 %v1373, %v1401
        %v1411 = vmul.f32 %v1374, %v1401
        %v1412 = vmul.f32 %v1375, %v1401
        %v1413 = vmul.f32 %v1376, %v1401
        %v1414 = vmul.f32 %v1377, %v1401
        %v1415 = vmul.f32 %v1378, %v1401
        %v1416 = vmul.f32 %v1379, %v1401
        %v1417 = vmul.f32 %v1380, %v1401
        %v1418 = vmul.f32 %v1381, %v1401
        %v1419 = vmul.f32 %v1382, %v1401
        %v1420 = vmul.f32 %v1383, %v1401
        %v1421 = vmul.f32 %v1384, %v1401
        %v1422 = vmul.f32 %v1385, %v1401
        %v1423 = vmul.f32 %v1386, %v1401
        %v1424 = vmul.f32 %v1387, %v1401
        %v1425 = vmul.f32 %v1388, %v1401
        %v1426 = vmul.f32 %v1389, %v1401
        %v1427 = vmul.f32 %v1390, %v1401
        %v1428 = vmul.f32 %v1391, %v1401
        %v1429 = vmul.f32 %v1392, %v1401
        %v1430 = vmul.f32 %v1393, %v1401
        %v1431 = vmul.f32 %v1394, %v1401
        %v1432 = vmul.f32 %v1395, %v1401
        %v1433 = vmul.f32 %v1396, %v1401
        %v1434 = vadd.f32 %v1333, %v1402
        %v1435 = vadd.f32 %v1334, %v1403
        %v1436 = vadd.f32 %v1335, %v1404
        %v1437 = vadd.f32 %v1336, %v1405
        %v1438 = vadd.f32 %v1337, %v1406
        %v1439 = vadd.f32 %v1338, %v1407
        %v1440 = vadd.f32 %v1339, %v1408
        %v1441 = vadd.f32 %v1340, %v1409
        %v1442 = vadd.f32 %v1341, %v1410
        %v1443 = vadd.f32 %v1342, %v1411
        %v1444 = vadd.f32 %v1343, %v1412
        %v1445 = vadd.f32 %v1344, %v1413
        %v1446 = vadd.f32 %v1345, %v1414
        %v1447 = vadd.f32 %v1346, %v1415
        %v1448 = vadd.f32 %v1347, %v1416
        %v1449 = vadd.f32 %v1348, %v1417
        %v1450 = vadd.f32 %v1349, %v1418
        %v1451 = vadd.f32 %v1350, %v1419
        %v1452 = vadd.f32 %v1351, %v1420
        %v1453 = vadd.f32 %v1352, %v1421
        %v1454 = vadd.f32 %v1353, %v1422
        %v1455 = vadd.f32 %v1354, %v1423
        %v1456 = vadd.f32 %v1355, %v1424
        %v1457 = vadd.f32 %v1356, %v1425
        %v1458 = vadd.f32 %v1357, %v1426
        %v1459 = vadd.f32 %v1358, %v1427
        %v1460 = vadd.f32 %v1359, %v1428
        %v1461 = vadd.f32 %v1360, %v1429
        %v1462 = vadd.f32 %v1361, %v1430
        %v1463 = vadd.f32 %v1362, %v1431
        %v1464 = vadd.f32 %v1363, %v1432
        %v1465 = vadd.f32 %v1364, %v1433
        %v1466 = vld [vmem:[%s2] sm:$0x1]
        %v1468 = vlaneseq
        %v1469 = vshrl.u32 %v1468, 7
        %v1470 = vsub.s32 0, %v1469
        %v1471 = vrot.slane %v1466, %v1470
        %v1473 = vadd.f32 %v1434, %v1471
        %v1474 = vadd.f32 %v1435, %v1471
        %v1475 = vadd.f32 %v1436, %v1471
        %v1476 = vadd.f32 %v1437, %v1471
        %v1477 = vadd.f32 %v1438, %v1471
        %v1478 = vadd.f32 %v1439, %v1471
        %v1479 = vadd.f32 %v1440, %v1471
        %v1480 = vadd.f32 %v1441, %v1471
        %v1481 = vadd.f32 %v1442, %v1471
        %v1482 = vadd.f32 %v1443, %v1471
        %v1483 = vadd.f32 %v1444, %v1471
        %v1484 = vadd.f32 %v1445, %v1471
        %v1485 = vadd.f32 %v1446, %v1471
        %v1486 = vadd.f32 %v1447, %v1471
        %v1487 = vadd.f32 %v1448, %v1471
        %v1488 = vadd.f32 %v1449, %v1471
        %v1489 = vadd.f32 %v1450, %v1471
        %v1490 = vadd.f32 %v1451, %v1471
        %v1491 = vadd.f32 %v1452, %v1471
        %v1492 = vadd.f32 %v1453, %v1471
        %v1493 = vadd.f32 %v1454, %v1471
        %v1494 = vadd.f32 %v1455, %v1471
        %v1495 = vadd.f32 %v1456, %v1471
        %v1496 = vadd.f32 %v1457, %v1471
        %v1497 = vadd.f32 %v1458, %v1471
        %v1498 = vadd.f32 %v1459, %v1471
        %v1499 = vadd.f32 %v1460, %v1471
        %v1500 = vadd.f32 %v1461, %v1471
        %v1501 = vadd.f32 %v1462, %v1471
        %v1502 = vadd.f32 %v1463, %v1471
        %v1503 = vadd.f32 %v1464, %v1471
        %v1504 = vadd.f32 %v1465, %v1471
        %v1505 = vmax.f32 %v1473, 0.0
        %v1506 = vmax.f32 %v1474, 0.0
        %v1507 = vmax.f32 %v1475, 0.0
        %v1508 = vmax.f32 %v1476, 0.0
        %v1509 = vmax.f32 %v1477, 0.0
        %v1510 = vmax.f32 %v1478, 0.0
        %v1511 = vmax.f32 %v1479, 0.0
        %v1512 = vmax.f32 %v1480, 0.0
        %v1513 = vmax.f32 %v1481, 0.0
        %v1514 = vmax.f32 %v1482, 0.0
        %v1515 = vmax.f32 %v1483, 0.0
        %v1516 = vmax.f32 %v1484, 0.0
        %v1517 = vmax.f32 %v1485, 0.0
        %v1518 = vmax.f32 %v1486, 0.0
        %v1519 = vmax.f32 %v1487, 0.0
        %v1520 = vmax.f32 %v1488, 0.0
        %v1521 = vmax.f32 %v1489, 0.0
        %v1522 = vmax.f32 %v1490, 0.0
        %v1523 = vmax.f32 %v1491, 0.0
        %v1524 = vmax.f32 %v1492, 0.0
        %v1525 = vmax.f32 %v1493, 0.0
        %v1526 = vmax.f32 %v1494, 0.0
        %v1527 = vmax.f32 %v1495, 0.0
        %v1528 = vmax.f32 %v1496, 0.0
        %v1529 = vmax.f32 %v1497, 0.0
        %v1530 = vmax.f32 %v1498, 0.0
        %v1531 = vmax.f32 %v1499, 0.0
        %v1532 = vmax.f32 %v1500, 0.0
        %v1533 = vmax.f32 %v1501, 0.0
        %v1534 = vmax.f32 %v1502, 0.0
        %v1535 = vmax.f32 %v1503, 0.0
        %v1536 = vmax.f32 %v1504, 0.0
        %v1537 = vmax.f32 %v1505, %v1507
        %v1538 = vmax.f32 %v1506, %v1508
        %v1539 = vmax.f32 %v1509, %v1511
        %v1540 = vmax.f32 %v1510, %v1512
        %v1541 = vmax.f32 %v1513, %v1515
        %v1542 = vmax.f32 %v1514, %v1516
        %v1543 = vmax.f32 %v1517, %v1519
        %v1544 = vmax.f32 %v1518, %v1520
        %v1545 = vmax.f32 %v1521, %v1523
        %v1546 = vmax.f32 %v1522, %v1524
        %v1547 = vmax.f32 %v1525, %v1527
        %v1548 = vmax.f32 %v1526, %v1528
        %v1549 = vmax.f32 %v1529, %v1531
        %v1550 = vmax.f32 %v1530, %v1532
        %v1551 = vmax.f32 %v1533, %v1535
        %v1552 = vmax.f32 %v1534, %v1536
        %v1569 = vcombine.high %v1537, %v1537
        %v1571 = vunpack.c.l.s4 1983009808
        %v1572 = vunpack.c.0.s8 %v1571
        %v1573 = vlaneseq
        %v1574 = vshrl.u32 %v1573, 7
        %v1575 = vsub.s32 %v1572, %v1574
        %v1576 = vrot.slane %v1537, %v1575
        %v1578 = vunpack.c.l.s4 1983009808
        %v1579 = vunpack.c.0.s8 %v1578
        %v1580 = vlaneseq
        %v1581 = vshrl.u32 %v1580, 7
        %v1582 = vsub.s32 %v1579, %v1581
        %v1583 = vrot.slane %v1569, %v1582
        %v1584 = vcombine.high %v1576, %v1576
        %v1585 = vcombine.high %v1583, %v1583
        %v1586 = vcombine.high %v1538, %v1538
        %v1588 = vunpack.c.l.s4 1983009808
        %v1589 = vunpack.c.0.s8 %v1588
        %v1590 = vlaneseq
        %v1591 = vshrl.u32 %v1590, 7
        %v1592 = vsub.s32 %v1589, %v1591
        %v1593 = vrot.slane %v1538, %v1592
        %v1595 = vunpack.c.l.s4 1983009808
        %v1596 = vunpack.c.0.s8 %v1595
        %v1597 = vlaneseq
        %v1598 = vshrl.u32 %v1597, 7
        %v1599 = vsub.s32 %v1596, %v1598
        %v1600 = vrot.slane %v1586, %v1599
        %v1601 = vcombine.high %v1593, %v1593
        %v1602 = vcombine.high %v1600, %v1600
        %v1603 = vcombine.high %v1539, %v1539
        %v1605 = vunpack.c.l.s4 1983009808
        %v1606 = vunpack.c.0.s8 %v1605
        %v1607 = vlaneseq
        %v1608 = vshrl.u32 %v1607, 7
        %v1609 = vsub.s32 %v1606, %v1608
        %v1610 = vrot.slane %v1539, %v1609
        %v1612 = vunpack.c.l.s4 1983009808
        %v1613 = vunpack.c.0.s8 %v1612
        %v1614 = vlaneseq
        %v1615 = vshrl.u32 %v1614, 7
        %v1616 = vsub.s32 %v1613, %v1615
        %v1617 = vrot.slane %v1603, %v1616
        %v1618 = vcombine.high %v1610, %v1610
        %v1619 = vcombine.high %v1617, %v1617
        %v1620 = vcombine.high %v1540, %v1540
        %v1622 = vunpack.c.l.s4 1983009808
        %v1623 = vunpack.c.0.s8 %v1622
        %v1624 = vlaneseq
        %v1625 = vshrl.u32 %v1624, 7
        %v1626 = vsub.s32 %v1623, %v1625
        %v1627 = vrot.slane %v1540, %v1626
        %v1629 = vunpack.c.l.s4 1983009808
        %v1630 = vunpack.c.0.s8 %v1629
        %v1631 = vlaneseq
        %v1632 = vshrl.u32 %v1631, 7
        %v1633 = vsub.s32 %v1630, %v1632
        %v1634 = vrot.slane %v1620, %v1633
        %v1635 = vcombine.high %v1627, %v1627
        %v1636 = vcombine.high %v1634, %v1634
        %v1637 = vcombine.high %v1541, %v1541
        %v1639 = vunpack.c.l.s4 1983009808
        %v1640 = vunpack.c.0.s8 %v1639
        %v1641 = vlaneseq
        %v1642 = vshrl.u32 %v1641, 7
        %v1643 = vsub.s32 %v1640, %v1642
        %v1644 = vrot.slane %v1541, %v1643
        %v1646 = vunpack.c.l.s4 1983009808
        %v1647 = vunpack.c.0.s8 %v1646
        %v1648 = vlaneseq
        %v1649 = vshrl.u32 %v1648, 7
        %v1650 = vsub.s32 %v1647, %v1649
        %v1651 = vrot.slane %v1637, %v1650
        %v1652 = vcombine.high %v1644, %v1644
        %v1653 = vcombine.high %v1651, %v1651
        %v1654 = vcombine.high %v1542, %v1542
        %v1656 = vunpack.c.l.s4 1983009808
        %v1657 = vunpack.c.0.s8 %v1656
        %v1658 = vlaneseq
        %v1659 = vshrl.u32 %v1658, 7
        %v1660 = vsub.s32 %v1657, %v1659
        %v1661 = vrot.slane %v1542, %v1660
        %v1663 = vunpack.c.l.s4 1983009808
        %v1664 = vunpack.c.0.s8 %v1663
        %v1665 = vlaneseq
        %v1666 = vshrl.u32 %v1665, 7
        %v1667 = vsub.s32 %v1664, %v1666
        %v1668 = vrot.slane %v1654, %v1667
        %v1669 = vcombine.high %v1661, %v1661
        %v1670 = vcombine.high %v1668, %v1668
        %v1671 = vcombine.high %v1543, %v1543
        %v1673 = vunpack.c.l.s4 1983009808
        %v1674 = vunpack.c.0.s8 %v1673
        %v1675 = vlaneseq
        %v1676 = vshrl.u32 %v1675, 7
        %v1677 = vsub.s32 %v1674, %v1676
        %v1678 = vrot.slane %v1543, %v1677
        %v1680 = vunpack.c.l.s4 1983009808
        %v1681 = vunpack.c.0.s8 %v1680
        %v1682 = vlaneseq
        %v1683 = vshrl.u32 %v1682, 7
        %v1684 = vsub.s32 %v1681, %v1683
        %v1685 = vrot.slane %v1671, %v1684
        %v1686 = vcombine.high %v1678, %v1678
        %v1687 = vcombine.high %v1685, %v1685
        %v1688 = vcombine.high %v1544, %v1544
        %v1690 = vunpack.c.l.s4 1983009808
        %v1691 = vunpack.c.0.s8 %v1690
        %v1692 = vlaneseq
        %v1693 = vshrl.u32 %v1692, 7
        %v1694 = vsub.s32 %v1691, %v1693
        %v1695 = vrot.slane %v1544, %v1694
        %v1697 = vunpack.c.l.s4 1983009808
        %v1698 = vunpack.c.0.s8 %v1697
        %v1699 = vlaneseq
        %v1700 = vshrl.u32 %v1699, 7
        %v1701 = vsub.s32 %v1698, %v1700
        %v1702 = vrot.slane %v1688, %v1701
        %v1703 = vcombine.high %v1695, %v1695
        %v1704 = vcombine.high %v1702, %v1702
        %v1705 = vcombine.high %v1545, %v1545
        %v1707 = vunpack.c.l.s4 1983009808
        %v1708 = vunpack.c.0.s8 %v1707
        %v1709 = vlaneseq
        %v1710 = vshrl.u32 %v1709, 7
        %v1711 = vsub.s32 %v1708, %v1710
        %v1712 = vrot.slane %v1545, %v1711
        %v1714 = vunpack.c.l.s4 1983009808
        %v1715 = vunpack.c.0.s8 %v1714
        %v1716 = vlaneseq
        %v1717 = vshrl.u32 %v1716, 7
        %v1718 = vsub.s32 %v1715, %v1717
        %v1719 = vrot.slane %v1705, %v1718
        %v1720 = vcombine.high %v1712, %v1712
        %v1721 = vcombine.high %v1719, %v1719
        %v1722 = vcombine.high %v1546, %v1546
        %v1724 = vunpack.c.l.s4 1983009808
        %v1725 = vunpack.c.0.s8 %v1724
        %v1726 = vlaneseq
        %v1727 = vshrl.u32 %v1726, 7
        %v1728 = vsub.s32 %v1725, %v1727
        %v1729 = vrot.slane %v1546, %v1728
        %v1731 = vunpack.c.l.s4 1983009808
        %v1732 = vunpack.c.0.s8 %v1731
        %v1733 = vlaneseq
        %v1734 = vshrl.u32 %v1733, 7
        %v1735 = vsub.s32 %v1732, %v1734
        %v1736 = vrot.slane %v1722, %v1735
        %v1737 = vcombine.high %v1729, %v1729
        %v1738 = vcombine.high %v1736, %v1736
        %v1739 = vcombine.high %v1547, %v1547
        %v1741 = vunpack.c.l.s4 1983009808
        %v1742 = vunpack.c.0.s8 %v1741
        %v1743 = vlaneseq
        %v1744 = vshrl.u32 %v1743, 7
        %v1745 = vsub.s32 %v1742, %v1744
        %v1746 = vrot.slane %v1547, %v1745
        %v1748 = vunpack.c.l.s4 1983009808
        %v1749 = vunpack.c.0.s8 %v1748
        %v1750 = vlaneseq
        %v1751 = vshrl.u32 %v1750, 7
        %v1752 = vsub.s32 %v1749, %v1751
        %v1753 = vrot.slane %v1739, %v1752
        %v1754 = vcombine.high %v1746, %v1746
        %v1755 = vcombine.high %v1753, %v1753
        %v1756 = vcombine.high %v1548, %v1548
        %v1758 = vunpack.c.l.s4 1983009808
        %v1759 = vunpack.c.0.s8 %v1758
        %v1760 = vlaneseq
        %v1761 = vshrl.u32 %v1760, 7
        %v1762 = vsub.s32 %v1759, %v1761
        %v1763 = vrot.slane %v1548, %v1762
        %v1765 = vunpack.c.l.s4 1983009808
        %v1766 = vunpack.c.0.s8 %v1765
        %v1767 = vlaneseq
        %v1768 = vshrl.u32 %v1767, 7
        %v1769 = vsub.s32 %v1766, %v1768
        %v1770 = vrot.slane %v1756, %v1769
        %v1771 = vcombine.high %v1763, %v1763
        %v1772 = vcombine.high %v1770, %v1770
        %v1773 = vcombine.high %v1549, %v1549
        %v1775 = vunpack.c.l.s4 1983009808
        %v1776 = vunpack.c.0.s8 %v1775
        %v1777 = vlaneseq
        %v1778 = vshrl.u32 %v1777, 7
        %v1779 = vsub.s32 %v1776, %v1778
        %v1780 = vrot.slane %v1549, %v1779
        %v1782 = vunpack.c.l.s4 1983009808
        %v1783 = vunpack.c.0.s8 %v1782
        %v1784 = vlaneseq
        %v1785 = vshrl.u32 %v1784, 7
        %v1786 = vsub.s32 %v1783, %v1785
        %v1787 = vrot.slane %v1773, %v1786
        %v1788 = vcombine.high %v1780, %v1780
        %v1789 = vcombine.high %v1787, %v1787
        %v1790 = vcombine.high %v1550, %v1550
        %v1792 = vunpack.c.l.s4 1983009808
        %v1793 = vunpack.c.0.s8 %v1792
        %v1794 = vlaneseq
        %v1795 = vshrl.u32 %v1794, 7
        %v1796 = vsub.s32 %v1793, %v1795
        %v1797 = vrot.slane %v1550, %v1796
        %v1799 = vunpack.c.l.s4 1983009808
        %v1800 = vunpack.c.0.s8 %v1799
        %v1801 = vlaneseq
        %v1802 = vshrl.u32 %v1801, 7
        %v1803 = vsub.s32 %v1800, %v1802
        %v1804 = vrot.slane %v1790, %v1803
        %v1805 = vcombine.high %v1797, %v1797
        %v1806 = vcombine.high %v1804, %v1804
        %v1807 = vcombine.high %v1551, %v1551
        %v1809 = vunpack.c.l.s4 1983009808
        %v1810 = vunpack.c.0.s8 %v1809
        %v1811 = vlaneseq
        %v1812 = vshrl.u32 %v1811, 7
        %v1813 = vsub.s32 %v1810, %v1812
        %v1814 = vrot.slane %v1551, %v1813
        %v1816 = vunpack.c.l.s4 1983009808
        %v1817 = vunpack.c.0.s8 %v1816
        %v1818 = vlaneseq
        %v1819 = vshrl.u32 %v1818, 7
        %v1820 = vsub.s32 %v1817, %v1819
        %v1821 = vrot.slane %v1807, %v1820
        %v1822 = vcombine.high %v1814, %v1814
        %v1823 = vcombine.high %v1821, %v1821
        %v1824 = vcombine.high %v1552, %v1552
        %v1826 = vunpack.c.l.s4 1983009808
        %v1827 = vunpack.c.0.s8 %v1826
        %v1828 = vlaneseq
        %v1829 = vshrl.u32 %v1828, 7
        %v1830 = vsub.s32 %v1827, %v1829
        %v1831 = vrot.slane %v1552, %v1830
        %v1833 = vunpack.c.l.s4 1983009808
        %v1834 = vunpack.c.0.s8 %v1833
        %v1835 = vlaneseq
        %v1836 = vshrl.u32 %v1835, 7
        %v1837 = vsub.s32 %v1834, %v1836
        %v1838 = vrot.slane %v1824, %v1837
        %v1839 = vcombine.high %v1831, %v1831
        %v1840 = vcombine.high %v1838, %v1838
        %vm1905 = vcmask 1041408
        %v1906 = vsel %vm1905, %v1576, -inf
        %v1907 = vrot.slane %v1906, 4
        %v1908 = vmax.f32 %v1906, %v1907
        %v1909 = vrot.slane %v1908, 2
        %v1910 = vmax.f32 %v1908, %v1909
        %v1911 = vrot.slane %v1910, 1
        %v1912 = vmax.f32 %v1910, %v1911
        %v1913 = vsel %vm1905, %v1584, -inf
        %v1914 = vrot.slane %v1913, 4
        %v1915 = vmax.f32 %v1913, %v1914
        %v1916 = vrot.slane %v1915, 2
        %v1917 = vmax.f32 %v1915, %v1916
        %v1918 = vrot.slane %v1917, 1
        %v1919 = vmax.f32 %v1917, %v1918
        %v1920 = vsel %vm1905, %v1583, -inf
        %v1921 = vrot.slane %v1920, 4
        %v1922 = vmax.f32 %v1920, %v1921
        %v1923 = vrot.slane %v1922, 2
        %v1924 = vmax.f32 %v1922, %v1923
        %v1925 = vrot.slane %v1924, 1
        %v1926 = vmax.f32 %v1924, %v1925
        %v1927 = vsel %vm1905, %v1585, -inf
        %v1928 = vrot.slane %v1927, 4
        %v1929 = vmax.f32 %v1927, %v1928
        %v1930 = vrot.slane %v1929, 2
        %v1931 = vmax.f32 %v1929, %v1930
        %v1932 = vrot.slane %v1931, 1
        %v1933 = vmax.f32 %v1931, %v1932
        %v1934 = vsel %vm1905, %v1593, -inf
        %v1935 = vrot.slane %v1934, 4
        %v1936 = vmax.f32 %v1934, %v1935
        %v1937 = vrot.slane %v1936, 2
        %v1938 = vmax.f32 %v1936, %v1937
        %v1939 = vrot.slane %v1938, 1
        %v1940 = vmax.f32 %v1938, %v1939
        %v1941 = vsel %vm1905, %v1601, -inf
        %v1942 = vrot.slane %v1941, 4
        %v1943 = vmax.f32 %v1941, %v1942
        %v1944 = vrot.slane %v1943, 2
        %v1945 = vmax.f32 %v1943, %v1944
        %v1946 = vrot.slane %v1945, 1
        %v1947 = vmax.f32 %v1945, %v1946
        %v1948 = vsel %vm1905, %v1600, -inf
        %v1949 = vrot.slane %v1948, 4
        %v1950 = vmax.f32 %v1948, %v1949
        %v1951 = vrot.slane %v1950, 2
        %v1952 = vmax.f32 %v1950, %v1951
        %v1953 = vrot.slane %v1952, 1
        %v1954 = vmax.f32 %v1952, %v1953
        %v1955 = vsel %vm1905, %v1602, -inf
        %v1956 = vrot.slane %v1955, 4
        %v1957 = vmax.f32 %v1955, %v1956
        %v1958 = vrot.slane %v1957, 2
        %v1959 = vmax.f32 %v1957, %v1958
        %v1960 = vrot.slane %v1959, 1
        %v1961 = vmax.f32 %v1959, %v1960
        %v1962 = vsel %vm1905, %v1610, -inf
        %v1963 = vrot.slane %v1962, 4
        %v1964 = vmax.f32 %v1962, %v1963
        %v1965 = vrot.slane %v1964, 2
        %v1966 = vmax.f32 %v1964, %v1965
        %v1967 = vrot.slane %v1966, 1
        %v1968 = vmax.f32 %v1966, %v1967
        %v1969 = vsel %vm1905, %v1618, -inf
        %v1970 = vrot.slane %v1969, 4
        %v1971 = vmax.f32 %v1969, %v1970
        %v1972 = vrot.slane %v1971, 2
        %v1973 = vmax.f32 %v1971, %v1972
        %v1974 = vrot.slane %v1973, 1
        %v1975 = vmax.f32 %v1973, %v1974
        %v1976 = vsel %vm1905, %v1617, -inf
        %v1977 = vrot.slane %v1976, 4
        %v1978 = vmax.f32 %v1976, %v1977
        %v1979 = vrot.slane %v1978, 2
        %v1980 = vmax.f32 %v1978, %v1979
        %v1981 = vrot.slane %v1980, 1
        %v1982 = vmax.f32 %v1980, %v1981
        %v1983 = vsel %vm1905, %v1619, -inf
        %v1984 = vrot.slane %v1983, 4
        %v1985 = vmax.f32 %v1983, %v1984
        %v1986 = vrot.slane %v1985, 2
        %v1987 = vmax.f32 %v1985, %v1986
        %v1988 = vrot.slane %v1987, 1
        %v1989 = vmax.f32 %v1987, %v1988
        %v1990 = vsel %vm1905, %v1627, -inf
        %v1991 = vrot.slane %v1990, 4
        %v1992 = vmax.f32 %v1990, %v1991
        %v1993 = vrot.slane %v1992, 2
        %v1994 = vmax.f32 %v1992, %v1993
        %v1995 = vrot.slane %v1994, 1
        %v1996 = vmax.f32 %v1994, %v1995
        %v1997 = vsel %vm1905, %v1635, -inf
        %v1998 = vrot.slane %v1997, 4
        %v1999 = vmax.f32 %v1997, %v1998
        %v2000 = vrot.slane %v1999, 2
        %v2001 = vmax.f32 %v1999, %v2000
        %v2002 = vrot.slane %v2001, 1
        %v2003 = vmax.f32 %v2001, %v2002
        %v2004 = vsel %vm1905, %v1634, -inf
        %v2005 = vrot.slane %v2004, 4
        %v2006 = vmax.f32 %v2004, %v2005
        %v2007 = vrot.slane %v2006, 2
        %v2008 = vmax.f32 %v2006, %v2007
        %v2009 = vrot.slane %v2008, 1
        %v2010 = vmax.f32 %v2008, %v2009
        %v2011 = vsel %vm1905, %v1636, -inf
        %v2012 = vrot.slane %v2011, 4
        %v2013 = vmax.f32 %v2011, %v2012
        %v2014 = vrot.slane %v2013, 2
        %v2015 = vmax.f32 %v2013, %v2014
        %v2016 = vrot.slane %v2015, 1
        %v2017 = vmax.f32 %v2015, %v2016
        %v2018 = vsel %vm1905, %v1644, -inf
        %v2019 = vrot.slane %v2018, 4
        %v2020 = vmax.f32 %v2018, %v2019
        %v2021 = vrot.slane %v2020, 2
        %v2022 = vmax.f32 %v2020, %v2021
        %v2023 = vrot.slane %v2022, 1
        %v2024 = vmax.f32 %v2022, %v2023
        %v2025 = vsel %vm1905, %v1652, -inf
        %v2026 = vrot.slane %v2025, 4
        %v2027 = vmax.f32 %v2025, %v2026
        %v2028 = vrot.slane %v2027, 2
        %v2029 = vmax.f32 %v2027, %v2028
        %v2030 = vrot.slane %v2029, 1
        %v2031 = vmax.f32 %v2029, %v2030
        %v2032 = vsel %vm1905, %v1651, -inf
        %v2033 = vrot.slane %v2032, 4
        %v2034 = vmax.f32 %v2032, %v2033
        %v2035 = vrot.slane %v2034, 2
        %v2036 = vmax.f32 %v2034, %v2035
        %v2037 = vrot.slane %v2036, 1
        %v2038 = vmax.f32 %v2036, %v2037
        %v2039 = vsel %vm1905, %v1653, -inf
        %v2040 = vrot.slane %v2039, 4
        %v2041 = vmax.f32 %v2039, %v2040
        %v2042 = vrot.slane %v2041, 2
        %v2043 = vmax.f32 %v2041, %v2042
        %v2044 = vrot.slane %v2043, 1
        %v2045 = vmax.f32 %v2043, %v2044
        %v2046 = vsel %vm1905, %v1661, -inf
        %v2047 = vrot.slane %v2046, 4
        %v2048 = vmax.f32 %v2046, %v2047
        %v2049 = vrot.slane %v2048, 2
        %v2050 = vmax.f32 %v2048, %v2049
        %v2051 = vrot.slane %v2050, 1
        %v2052 = vmax.f32 %v2050, %v2051
        %v2053 = vsel %vm1905, %v1669, -inf
        %v2054 = vrot.slane %v2053, 4
        %v2055 = vmax.f32 %v2053, %v2054
        %v2056 = vrot.slane %v2055, 2
        %v2057 = vmax.f32 %v2055, %v2056
        %v2058 = vrot.slane %v2057, 1
        %v2059 = vmax.f32 %v2057, %v2058
        %v2060 = vsel %vm1905, %v1668, -inf
        %v2061 = vrot.slane %v2060, 4
        %v2062 = vmax.f32 %v2060, %v2061
        %v2063 = vrot.slane %v2062, 2
        %v2064 = vmax.f32 %v2062, %v2063
        %v2065 = vrot.slane %v2064, 1
        %v2066 = vmax.f32 %v2064, %v2065
        %v2067 = vsel %vm1905, %v1670, -inf
        %v2068 = vrot.slane %v2067, 4
        %v2069 = vmax.f32 %v2067, %v2068
        %v2070 = vrot.slane %v2069, 2
        %v2071 = vmax.f32 %v2069, %v2070
        %v2072 = vrot.slane %v2071, 1
        %v2073 = vmax.f32 %v2071, %v2072
        %v2074 = vsel %vm1905, %v1678, -inf
        %v2075 = vrot.slane %v2074, 4
        %v2076 = vmax.f32 %v2074, %v2075
        %v2077 = vrot.slane %v2076, 2
        %v2078 = vmax.f32 %v2076, %v2077
        %v2079 = vrot.slane %v2078, 1
        %v2080 = vmax.f32 %v2078, %v2079
        %v2081 = vsel %vm1905, %v1686, -inf
        %v2082 = vrot.slane %v2081, 4
        %v2083 = vmax.f32 %v2081, %v2082
        %v2084 = vrot.slane %v2083, 2
        %v2085 = vmax.f32 %v2083, %v2084
        %v2086 = vrot.slane %v2085, 1
        %v2087 = vmax.f32 %v2085, %v2086
        %v2088 = vsel %vm1905, %v1685, -inf
        %v2089 = vrot.slane %v2088, 4
        %v2090 = vmax.f32 %v2088, %v2089
        %v2091 = vrot.slane %v2090, 2
        %v2092 = vmax.f32 %v2090, %v2091
        %v2093 = vrot.slane %v2092, 1
        %v2094 = vmax.f32 %v2092, %v2093
        %v2095 = vsel %vm1905, %v1687, -inf
        %v2096 = vrot.slane %v2095, 4
        %v2097 = vmax.f32 %v2095, %v2096
        %v2098 = vrot.slane %v2097, 2
        %v2099 = vmax.f32 %v2097, %v2098
        %v2100 = vrot.slane %v2099, 1
        %v2101 = vmax.f32 %v2099, %v2100
        %v2102 = vsel %vm1905, %v1695, -inf
        %v2103 = vrot.slane %v2102, 4
        %v2104 = vmax.f32 %v2102, %v2103
        %v2105 = vrot.slane %v2104, 2
        %v2106 = vmax.f32 %v2104, %v2105
        %v2107 = vrot.slane %v2106, 1
        %v2108 = vmax.f32 %v2106, %v2107
        %v2109 = vsel %vm1905, %v1703, -inf
        %v2110 = vrot.slane %v2109, 4
        %v2111 = vmax.f32 %v2109, %v2110
        %v2112 = vrot.slane %v2111, 2
        %v2113 = vmax.f32 %v2111, %v2112
        %v2114 = vrot.slane %v2113, 1
        %v2115 = vmax.f32 %v2113, %v2114
        %v2116 = vsel %vm1905, %v1702, -inf
        %v2117 = vrot.slane %v2116, 4
        %v2118 = vmax.f32 %v2116, %v2117
        %v2119 = vrot.slane %v2118, 2
        %v2120 = vmax.f32 %v2118, %v2119
        %v2121 = vrot.slane %v2120, 1
        %v2122 = vmax.f32 %v2120, %v2121
        %v2123 = vsel %vm1905, %v1704, -inf
        %v2124 = vrot.slane %v2123, 4
        %v2125 = vmax.f32 %v2123, %v2124
        %v2126 = vrot.slane %v2125, 2
        %v2127 = vmax.f32 %v2125, %v2126
        %v2128 = vrot.slane %v2127, 1
        %v2129 = vmax.f32 %v2127, %v2128
        %v2130 = vsel %vm1905, %v1712, -inf
        %v2131 = vrot.slane %v2130, 4
        %v2132 = vmax.f32 %v2130, %v2131
        %v2133 = vrot.slane %v2132, 2
        %v2134 = vmax.f32 %v2132, %v2133
        %v2135 = vrot.slane %v2134, 1
        %v2136 = vmax.f32 %v2134, %v2135
        %v2137 = vsel %vm1905, %v1720, -inf
        %v2138 = vrot.slane %v2137, 4
        %v2139 = vmax.f32 %v2137, %v2138
        %v2140 = vrot.slane %v2139, 2
        %v2141 = vmax.f32 %v2139, %v2140
        %v2142 = vrot.slane %v2141, 1
        %v2143 = vmax.f32 %v2141, %v2142
        %v2144 = vsel %vm1905, %v1719, -inf
        %v2145 = vrot.slane %v2144, 4
        %v2146 = vmax.f32 %v2144, %v2145
        %v2147 = vrot.slane %v2146, 2
        %v2148 = vmax.f32 %v2146, %v2147
        %v2149 = vrot.slane %v2148, 1
        %v2150 = vmax.f32 %v2148, %v2149
        %v2151 = vsel %vm1905, %v1721, -inf
        %v2152 = vrot.slane %v2151, 4
        %v2153 = vmax.f32 %v2151, %v2152
        %v2154 = vrot.slane %v2153, 2
        %v2155 = vmax.f32 %v2153, %v2154
        %v2156 = vrot.slane %v2155, 1
        %v2157 = vmax.f32 %v2155, %v2156
        %v2158 = vsel %vm1905, %v1729, -inf
        %v2159 = vrot.slane %v2158, 4
        %v2160 = vmax.f32 %v2158, %v2159
        %v2161 = vrot.slane %v2160, 2
        %v2162 = vmax.f32 %v2160, %v2161
        %v2163 = vrot.slane %v2162, 1
        %v2164 = vmax.f32 %v2162, %v2163
        %v2165 = vsel %vm1905, %v1737, -inf
        %v2166 = vrot.slane %v2165, 4
        %v2167 = vmax.f32 %v2165, %v2166
        %v2168 = vrot.slane %v2167, 2
        %v2169 = vmax.f32 %v2167, %v2168
        %v2170 = vrot.slane %v2169, 1
        %v2171 = vmax.f32 %v2169, %v2170
        %v2172 = vsel %vm1905, %v1736, -inf
        %v2173 = vrot.slane %v2172, 4
        %v2174 = vmax.f32 %v2172, %v2173
        %v2175 = vrot.slane %v2174, 2
        %v2176 = vmax.f32 %v2174, %v2175
        %v2177 = vrot.slane %v2176, 1
        %v2178 = vmax.f32 %v2176, %v2177
        %v2179 = vsel %vm1905, %v1738, -inf
        %v2180 = vrot.slane %v2179, 4
        %v2181 = vmax.f32 %v2179, %v2180
        %v2182 = vrot.slane %v2181, 2
        %v2183 = vmax.f32 %v2181, %v2182
        %v2184 = vrot.slane %v2183, 1
        %v2185 = vmax.f32 %v2183, %v2184
        %v2186 = vsel %vm1905, %v1746, -inf
        %v2187 = vrot.slane %v2186, 4
        %v2188 = vmax.f32 %v2186, %v2187
        %v2189 = vrot.slane %v2188, 2
        %v2190 = vmax.f32 %v2188, %v2189
        %v2191 = vrot.slane %v2190, 1
        %v2192 = vmax.f32 %v2190, %v2191
        %v2193 = vsel %vm1905, %v1754, -inf
        %v2194 = vrot.slane %v2193, 4
        %v2195 = vmax.f32 %v2193, %v2194
        %v2196 = vrot.slane %v2195, 2
        %v2197 = vmax.f32 %v2195, %v2196
        %v2198 = vrot.slane %v2197, 1
        %v2199 = vmax.f32 %v2197, %v2198
        %v2200 = vsel %vm1905, %v1753, -inf
        %v2201 = vrot.slane %v2200, 4
        %v2202 = vmax.f32 %v2200, %v2201
        %v2203 = vrot.slane %v2202, 2
        %v2204 = vmax.f32 %v2202, %v2203
        %v2205 = vrot.slane %v2204, 1
        %v2206 = vmax.f32 %v2204, %v2205
        %v2207 = vsel %vm1905, %v1755, -inf
        %v2208 = vrot.slane %v2207, 4
        %v2209 = vmax.f32 %v2207, %v2208
        %v2210 = vrot.slane %v2209, 2
        %v2211 = vmax.f32 %v2209, %v2210
        %v2212 = vrot.slane %v2211, 1
        %v2213 = vmax.f32 %v2211, %v2212
        %v2214 = vsel %vm1905, %v1763, -inf
        %v2215 = vrot.slane %v2214, 4
        %v2216 = vmax.f32 %v2214, %v2215
        %v2217 = vrot.slane %v2216, 2
        %v2218 = vmax.f32 %v2216, %v2217
        %v2219 = vrot.slane %v2218, 1
        %v2220 = vmax.f32 %v2218, %v2219
        %v2221 = vsel %vm1905, %v1771, -inf
        %v2222 = vrot.slane %v2221, 4
        %v2223 = vmax.f32 %v2221, %v2222
        %v2224 = vrot.slane %v2223, 2
        %v2225 = vmax.f32 %v2223, %v2224
        %v2226 = vrot.slane %v2225, 1
        %v2227 = vmax.f32 %v2225, %v2226
        %v2228 = vsel %vm1905, %v1770, -inf
        %v2229 = vrot.slane %v2228, 4
        %v2230 = vmax.f32 %v2228, %v2229
        %v2231 = vrot.slane %v2230, 2
        %v2232 = vmax.f32 %v2230, %v2231
        %v2233 = vrot.slane %v2232, 1
        %v2234 = vmax.f32 %v2232, %v2233
        %v2235 = vsel %vm1905, %v1772, -inf
        %v2236 = vrot.slane %v2235, 4
        %v2237 = vmax.f32 %v2235, %v2236
        %v2238 = vrot.slane %v2237, 2
        %v2239 = vmax.f32 %v2237, %v2238
        %v2240 = vrot.slane %v2239, 1
        %v2241 = vmax.f32 %v2239, %v2240
        %v2242 = vsel %vm1905, %v1780, -inf
        %v2243 = vrot.slane %v2242, 4
        %v2244 = vmax.f32 %v2242, %v2243
        %v2245 = vrot.slane %v2244, 2
        %v2246 = vmax.f32 %v2244, %v2245
        %v2247 = vrot.slane %v2246, 1
        %v2248 = vmax.f32 %v2246, %v2247
        %v2249 = vsel %vm1905, %v1788, -inf
        %v2250 = vrot.slane %v2249, 4
        %v2251 = vmax.f32 %v2249, %v2250
        %v2252 = vrot.slane %v2251, 2
        %v2253 = vmax.f32 %v2251, %v2252
        %v2254 = vrot.slane %v2253, 1
        %v2255 = vmax.f32 %v2253, %v2254
        %v2256 = vsel %vm1905, %v1787, -inf
        %v2257 = vrot.slane %v2256, 4
        %v2258 = vmax.f32 %v2256, %v2257
        %v2259 = vrot.slane %v2258, 2
        %v2260 = vmax.f32 %v2258, %v2259
        %v2261 = vrot.slane %v2260, 1
        %v2262 = vmax.f32 %v2260, %v2261
        %v2263 = vsel %vm1905, %v1789, -inf
        %v2264 = vrot.slane %v2263, 4
        %v2265 = vmax.f32 %v2263, %v2264
        %v2266 = vrot.slane %v2265, 2
        %v2267 = vmax.f32 %v2265, %v2266
        %v2268 = vrot.slane %v2267, 1
        %v2269 = vmax.f32 %v2267, %v2268
        %v2270 = vsel %vm1905, %v1797, -inf
        %v2271 = vrot.slane %v2270, 4
        %v2272 = vmax.f32 %v2270, %v2271
        %v2273 = vrot.slane %v2272, 2
        %v2274 = vmax.f32 %v2272, %v2273
        %v2275 = vrot.slane %v2274, 1
        %v2276 = vmax.f32 %v2274, %v2275
        %v2277 = vsel %vm1905, %v1805, -inf
        %v2278 = vrot.slane %v2277, 4
        %v2279 = vmax.f32 %v2277, %v2278
        %v2280 = vrot.slane %v2279, 2
        %v2281 = vmax.f32 %v2279, %v2280
        %v2282 = vrot.slane %v2281, 1
        %v2283 = vmax.f32 %v2281, %v2282
        %v2284 = vsel %vm1905, %v1804, -inf
        %v2285 = vrot.slane %v2284, 4
        %v2286 = vmax.f32 %v2284, %v2285
        %v2287 = vrot.slane %v2286, 2
        %v2288 = vmax.f32 %v2286, %v2287
        %v2289 = vrot.slane %v2288, 1
        %v2290 = vmax.f32 %v2288, %v2289
        %v2291 = vsel %vm1905, %v1806, -inf
        %v2292 = vrot.slane %v2291, 4
        %v2293 = vmax.f32 %v2291, %v2292
        %v2294 = vrot.slane %v2293, 2
        %v2295 = vmax.f32 %v2293, %v2294
        %v2296 = vrot.slane %v2295, 1
        %v2297 = vmax.f32 %v2295, %v2296
        %v2298 = vsel %vm1905, %v1814, -inf
        %v2299 = vrot.slane %v2298, 4
        %v2300 = vmax.f32 %v2298, %v2299
        %v2301 = vrot.slane %v2300, 2
        %v2302 = vmax.f32 %v2300, %v2301
        %v2303 = vrot.slane %v2302, 1
        %v2304 = vmax.f32 %v2302, %v2303
        %v2305 = vsel %vm1905, %v1822, -inf
        %v2306 = vrot.slane %v2305, 4
        %v2307 = vmax.f32 %v2305, %v2306
        %v2308 = vrot.slane %v2307, 2
        %v2309 = vmax.f32 %v2307, %v2308
        %v2310 = vrot.slane %v2309, 1
        %v2311 = vmax.f32 %v2309, %v2310
        %v2312 = vsel %vm1905, %v1821, -inf
        %v2313 = vrot.slane %v2312, 4
        %v2314 = vmax.f32 %v2312, %v2313
        %v2315 = vrot.slane %v2314, 2
        %v2316 = vmax.f32 %v2314, %v2315
        %v2317 = vrot.slane %v2316, 1
        %v2318 = vmax.f32 %v2316, %v2317
        %v2319 = vsel %vm1905, %v1823, -inf
        %v2320 = vrot.slane %v2319, 4
        %v2321 = vmax.f32 %v2319, %v2320
        %v2322 = vrot.slane %v2321, 2
        %v2323 = vmax.f32 %v2321, %v2322
        %v2324 = vrot.slane %v2323, 1
        %v2325 = vmax.f32 %v2323, %v2324
        %v2326 = vsel %vm1905, %v1831, -inf
        %v2327 = vrot.slane %v2326, 4
        %v2328 = vmax.f32 %v2326, %v2327
        %v2329 = vrot.slane %v2328, 2
        %v2330 = vmax.f32 %v2328, %v2329
        %v2331 = vrot.slane %v2330, 1
        %v2332 = vmax.f32 %v2330, %v2331
        %v2333 = vsel %vm1905, %v1839, -inf
        %v2334 = vrot.slane %v2333, 4
        %v2335 = vmax.f32 %v2333, %v2334
        %v2336 = vrot.slane %v2335, 2
        %v2337 = vmax.f32 %v2335, %v2336
        %v2338 = vrot.slane %v2337, 1
        %v2339 = vmax.f32 %v2337, %v2338
        %v2340 = vsel %vm1905, %v1838, -inf
        %v2341 = vrot.slane %v2340, 4
        %v2342 = vmax.f32 %v2340, %v2341
        %v2343 = vrot.slane %v2342, 2
        %v2344 = vmax.f32 %v2342, %v2343
        %v2345 = vrot.slane %v2344, 1
        %v2346 = vmax.f32 %v2344, %v2345
        %v2347 = vsel %vm1905, %v1840, -inf
        %v2348 = vrot.slane %v2347, 4
        %v2349 = vmax.f32 %v2347, %v2348
        %v2350 = vrot.slane %v2349, 2
        %v2351 = vmax.f32 %v2349, %v2350
        %v2352 = vrot.slane %v2351, 1
        %v2353 = vmax.f32 %v2351, %v2352
        %2354 = vst [vmem:[#allocation3] sm:$0xff] 0.0
        %2355 = vst [vmem:[#allocation3 + $0x8] sm:$0x3] 0.0
        %2356 = vst [vmem:[#allocation3 + $0x10] sm:$0xff] 0.0
        %2357 = vst [vmem:[#allocation3 + $0x18] sm:$0x3] 0.0
        %2358 = vst [vmem:[#allocation3 + $0x20] sm:$0xff] 0.0
        %2359 = vst [vmem:[#allocation3 + $0x28] sm:$0x3] 0.0
        %2360 = vst [vmem:[#allocation3 + $0x30] sm:$0xff] 0.0
        %2361 = vst [vmem:[#allocation3 + $0x38] sm:$0x3] 0.0
        %2362 = vst [vmem:[#allocation3 + $0x40] sm:$0xff] 0.0
        %2363 = vst [vmem:[#allocation3 + $0x48] sm:$0x3] 0.0
        %2364 = vst [vmem:[#allocation3 + $0x50] sm:$0xff] 0.0
        %2365 = vst [vmem:[#allocation3 + $0x58] sm:$0x3] 0.0
        %2366 = vst [vmem:[#allocation3 + $0x60] sm:$0xff] 0.0
        %2367 = vst [vmem:[#allocation3 + $0x68] sm:$0x3] 0.0
        %2368 = vst [vmem:[#allocation3 + $0x70] sm:$0xff] 0.0
        %2369 = vst [vmem:[#allocation3 + $0x78] sm:$0x3] 0.0
        %2370 = vst [vmem:[#allocation3 + $0x80] sm:$0xff] 0.0
        %2371 = vst [vmem:[#allocation3 + $0x88] sm:$0x3] 0.0
        %2372 = vst [vmem:[#allocation3 + $0x90] sm:$0xff] 0.0
        %2373 = vst [vmem:[#allocation3 + $0x98] sm:$0x3] 0.0
        %vm2438 = vcmask 1041409
        %v2439 = vsel %vm2438, %v1919, %v1912
        %vm2440 = vcmask 1042434
        %v2441 = vsel %vm2440, %v1926, %v2439
        %vm2442 = vcmask 1043459
        %v2443 = vsel %vm2442, %v1933, %v2441
        %vm2444 = vcmask 1044484
        %v2445 = vsel %vm2444, %v1940, %v2443
        %vm2446 = vcmask 1045509
        %v2447 = vsel %vm2446, %v1947, %v2445
        %vm2448 = vcmask 1046534
        %v2449 = vsel %vm2448, %v1954, %v2447
        %vm2450 = vcmask 1047559
        %v2451 = vsel %vm2450, %v1961, %v2449
        %v2452 = vsel %vm2438, %v1975, %v1968
        %v2453 = vsel %vm2440, %v1982, %v2452
        %v2454 = vsel %vm2442, %v1989, %v2453
        %v2455 = vsel %vm2444, %v1996, %v2454
        %v2456 = vsel %vm2446, %v2003, %v2455
        %v2457 = vsel %vm2448, %v2010, %v2456
        %v2458 = vsel %vm2450, %v2017, %v2457
        %v2459 = vsel %vm2438, %v2031, %v2024
        %v2460 = vsel %vm2440, %v2038, %v2459
        %v2461 = vsel %vm2442, %v2045, %v2460
        %v2462 = vsel %vm2444, %v2052, %v2461
        %v2463 = vsel %vm2446, %v2059, %v2462
        %v2464 = vsel %vm2448, %v2066, %v2463
        %v2465 = vsel %vm2450, %v2073, %v2464
        %v2466 = vsel %vm2438, %v2087, %v2080
        %v2467 = vsel %vm2440, %v2094, %v2466
        %v2468 = vsel %vm2442, %v2101, %v2467
        %v2469 = vsel %vm2444, %v2108, %v2468
        %v2470 = vsel %vm2446, %v2115, %v2469
        %v2471 = vsel %vm2448, %v2122, %v2470
        %v2472 = vsel %vm2450, %v2129, %v2471
        %v2473 = vsel %vm2438, %v2143, %v2136
        %v2474 = vsel %vm2440, %v2150, %v2473
        %v2475 = vsel %vm2442, %v2157, %v2474
        %v2476 = vsel %vm2444, %v2164, %v2475
        %v2477 = vsel %vm2446, %v2171, %v2476
        %v2478 = vsel %vm2448, %v2178, %v2477
        %v2479 = vsel %vm2450, %v2185, %v2478
        %v2480 = vsel %vm2438, %v2199, %v2192
        %v2481 = vsel %vm2440, %v2206, %v2480
        %v2482 = vsel %vm2442, %v2213, %v2481
        %v2483 = vsel %vm2444, %v2220, %v2482
        %v2484 = vsel %vm2446, %v2227, %v2483
        %v2485 = vsel %vm2448, %v2234, %v2484
        %v2486 = vsel %vm2450, %v2241, %v2485
        %v2487 = vsel %vm2438, %v2255, %v2248
        %v2488 = vsel %vm2440, %v2262, %v2487
        %v2489 = vsel %vm2442, %v2269, %v2488
        %v2490 = vsel %vm2444, %v2276, %v2489
        %v2491 = vsel %vm2446, %v2283, %v2490
        %v2492 = vsel %vm2448, %v2290, %v2491
        %v2493 = vsel %vm2450, %v2297, %v2492
        %v2494 = vsel %vm2438, %v2311, %v2304
        %v2495 = vsel %vm2440, %v2318, %v2494
        %v2496 = vsel %vm2442, %v2325, %v2495
        %v2497 = vsel %vm2444, %v2332, %v2496
        %v2498 = vsel %vm2446, %v2339, %v2497
        %v2499 = vsel %vm2448, %v2346, %v2498
        %v2500 = vsel %vm2450, %v2353, %v2499
        %s2509 = scalar_lea.vmem [#allocation3], 16
        %2510 = vst [vmem:[%s2509 + $0x1] sm:$0xff] %v2451
        %2511 = vst [vmem:[%s2509 + $0x11] sm:$0xff] %v2458
        %2512 = vst [vmem:[%s2509 + $0x21] sm:$0xff] %v2465
        %2513 = vst [vmem:[%s2509 + $0x31] sm:$0xff] %v2472
        %2514 = vst [vmem:[%s2509 + $0x41] sm:$0xff] %v2479
        %2515 = vst [vmem:[%s2509 + $0x51] sm:$0xff] %v2486
        %2516 = vst [vmem:[%s2509 + $0x61] sm:$0xff] %v2493
        %2517 = vst [vmem:[%s2509 + $0x71] sm:$0xff] %v2500
        %v2518 = vld [vmem:[#allocation3] sm:$0xff]
        %v2519 = vld [vmem:[#allocation3 + $0x10] sm:$0xff]
        %v2520 = vld [vmem:[#allocation3 + $0x20] sm:$0xff]
        %v2521 = vld [vmem:[#allocation3 + $0x30] sm:$0xff]
        %v2522 = vld [vmem:[#allocation3 + $0x40] sm:$0xff]
        %v2523 = vld [vmem:[#allocation3 + $0x50] sm:$0xff]
        %v2524 = vld [vmem:[#allocation3 + $0x60] sm:$0xff]
        %v2525 = vld [vmem:[#allocation3 + $0x70] sm:$0xff]
        %v2526 = vld [vmem:[#allocation6] sm:$0xff]
        %v2527 = vld [vmem:[#allocation6 + $0x8] sm:$0xff]
        %v2528 = vld [vmem:[#allocation6 + $0x10] sm:$0xff]
        %v2529 = vld [vmem:[#allocation6 + $0x18] sm:$0xff]
        %v2530 = vld [vmem:[#allocation6 + $0x20] sm:$0xff]
        %v2531 = vld [vmem:[#allocation6 + $0x28] sm:$0xff]
        %v2532 = vld [vmem:[#allocation6 + $0x30] sm:$0xff]
        %v2533 = vld [vmem:[#allocation6 + $0x38] sm:$0xff]
        %v2534 = vld [vmem:[#allocation6 + $0x40] sm:$0xff]
        %v2535 = vld [vmem:[#allocation6 + $0x48] sm:$0xff]
        %v2536 = vld [vmem:[#allocation6 + $0x50] sm:$0xff]
        %v2537 = vld [vmem:[#allocation6 + $0x58] sm:$0xff]
        %v2538 = vld [vmem:[#allocation6 + $0x60] sm:$0xff]
        %v2539 = vld [vmem:[#allocation6 + $0x68] sm:$0xff]
        %v2540 = vld [vmem:[#allocation6 + $0x70] sm:$0xff]
        %v2541 = vld [vmem:[#allocation6 + $0x78] sm:$0xff]
        %v2542 = vld [vmem:[#allocation3 + $0x1] sm:$0xff]
        %v2543 = vld [vmem:[#allocation3 + $0x11] sm:$0xff]
        %v2544 = vld [vmem:[#allocation3 + $0x21] sm:$0xff]
        %v2545 = vld [vmem:[#allocation3 + $0x31] sm:$0xff]
        %v2546 = vld [vmem:[#allocation3 + $0x41] sm:$0xff]
        %v2547 = vld [vmem:[#allocation3 + $0x51] sm:$0xff]
        %v2548 = vld [vmem:[#allocation3 + $0x61] sm:$0xff]
        %v2549 = vld [vmem:[#allocation3 + $0x71] sm:$0xff]
        %s2550 = scalar_lea.vmem [#allocation6], 128
        %v2551 = vld [vmem:[%s2550] sm:$0xff]
        %v2552 = vld [vmem:[%s2550 + $0x8] sm:$0xff]
        %v2553 = vld [vmem:[%s2550 + $0x10] sm:$0xff]
        %v2554 = vld [vmem:[%s2550 + $0x18] sm:$0xff]
        %v2555 = vld [vmem:[%s2550 + $0x20] sm:$0xff]
        %v2556 = vld [vmem:[%s2550 + $0x28] sm:$0xff]
        %v2557 = vld [vmem:[%s2550 + $0x30] sm:$0xff]
        %v2558 = vld [vmem:[%s2550 + $0x38] sm:$0xff]
        %v2559 = vld [vmem:[%s2550 + $0x40] sm:$0xff]
        %v2560 = vld [vmem:[%s2550 + $0x48] sm:$0xff]
        %v2561 = vld [vmem:[%s2550 + $0x50] sm:$0xff]
        %v2562 = vld [vmem:[%s2550 + $0x58] sm:$0xff]
        %v2563 = vld [vmem:[%s2550 + $0x60] sm:$0xff]
        %v2564 = vld [vmem:[%s2550 + $0x68] sm:$0xff]
        %v2565 = vld [vmem:[%s2550 + $0x70] sm:$0xff]
        %v2566 = vld [vmem:[%s2550 + $0x78] sm:$0xff]
        %2567 = vmatprep.subr.mxu0 0.0
        %2568 = vmatpush1.msra.mxu0 %v2551
        %2569 = vmatprep.subr.mxu0 0.0
        %2570 = vmatpush1.msra.mxu0 %v2552
        %2571 = vmatprep.subr.mxu0 0.0
        %2572 = vmatpush1.msra.mxu0 %v2553
        %2573 = vmatprep.subr.mxu0 0.0
        %2574 = vmatpush1.msra.mxu0 %v2554
        %2575 = vmatprep.subr.mxu0 0.0
        %2576 = vmatpush1.msra.mxu0 %v2555
        %2577 = vmatprep.subr.mxu0 0.0
        %2578 = vmatpush1.msra.mxu0 %v2556
        %2579 = vmatprep.subr.mxu0 0.0
        %2580 = vmatpush1.msra.mxu0 %v2557
        %2581 = vmatprep.subr.mxu0 0.0
        %2582 = vmatpush1.msra.mxu0 %v2558
        %2583 = vmatprep.subr.mxu0 0.0
        %2584 = vmatpush1.msra.mxu0 %v2559
        %2585 = vmatprep.subr.mxu0 0.0
        %2586 = vmatpush1.msra.mxu0 %v2560
        %2587 = vmatprep.subr.mxu0 0.0
        %2588 = vmatpush1.msra.mxu0 %v2561
        %2589 = vmatprep.subr.mxu0 0.0
        %2590 = vmatpush1.msra.mxu0 %v2562
        %2591 = vmatprep.subr.mxu0 0.0
        %2592 = vmatpush1.msra.mxu0 %v2563
        %2593 = vmatprep.subr.mxu0 0.0
        %2594 = vmatpush1.msra.mxu0 %v2564
        %2595 = vmatprep.subr.mxu0 0.0
        %2596 = vmatpush1.msra.mxu0 %v2565
        %2597 = vmatprep.subr.mxu0 0.0
        %2598 = vmatpush1.msra.mxu0 %v2566
        %2599 = vmatprep.subr.mxu0 0.0
        %2600 = vmatpush1.msra.mxu0 0.0
        %2601 = vmatprep.subr.mxu0 0.0
        %2602 = vmatpush1.msra.mxu0 0.0
        %2603 = vmatprep.subr.mxu0 0.0
        %2604 = vmatpush1.msra.mxu0 0.0
        %2605 = vmatprep.subr.mxu0 0.0
        %2606 = vmatpush1.msra.mxu0 0.0
        %2607 = vmatprep.subr.mxu0 0.0
        %2608 = vmatpush1.msra.mxu0 0.0
        %2609 = vmatprep.subr.mxu0 0.0
        %2610 = vmatpush1.msra.mxu0 0.0
        %2611 = vmatprep.subr.mxu0 0.0
        %2612 = vmatpush1.msra.mxu0 0.0
        %2613 = vmatprep.subr.mxu0 0.0
        %2614 = vmatpush1.msra.mxu0 0.0
        %2615 = vmatprep.subr.mxu0 0.0
        %2616 = vmatpush1.msra.mxu0 0.0
        %2617 = vmatprep.subr.mxu0 0.0
        %2618 = vmatpush1.msra.mxu0 0.0
        %2619 = vmatprep.subr.mxu0 0.0
        %2620 = vmatpush1.msra.mxu0 0.0
        %2621 = vmatprep.subr.mxu0 0.0
        %2622 = vmatpush1.msra.mxu0 0.0
        %2623 = vmatprep.subr.mxu0 0.0
        %2624 = vmatpush1.msra.mxu0 0.0
        %2625 = vmatprep.subr.mxu0 0.0
        %2626 = vmatpush1.msra.mxu0 0.0
        %2627 = vmatprep.subr.mxu0 0.0
        %2628 = vmatpush1.msra.mxu0 0.0
        %2629 = vmatprep.subr.mxu0 0.0
        %2630 = vmatpush1.msra.mxu0 0.0
        %2631 = vmatprep.mubr.f32.mxu0 0.0
        %2632 = vmatmul.mubr.f32.gmra.mrb[0].mxu0 %v2542
        %v2633 = vpop.f32.mrb[0].mxu0
        %v2634 = vadd.f32 0.0, %v2633
        %v2635 = vpop.f32.mrb[0].mxu0
        %2636 = vmatprep.mubr.f32.mxu0 0.0
        %2637 = vmatmul.mubr.f32.gmra.mrb[0].mxu0 %v2543
        %v2638 = vpop.f32.mrb[0].mxu0
        %v2639 = vadd.f32 0.0, %v2638
        %v2640 = vpop.f32.mrb[0].mxu0
        %2641 = vmatprep.mubr.f32.mxu0 0.0
        %2642 = vmatmul.mubr.f32.gmra.mrb[0].mxu0 %v2544
        %v2643 = vpop.f32.mrb[0].mxu0
        %v2644 = vadd.f32 0.0, %v2643
        %v2645 = vpop.f32.mrb[0].mxu0
        %2646 = vmatprep.mubr.f32.mxu0 0.0
        %2647 = vmatmul.mubr.f32.gmra.mrb[0].mxu0 %v2545
        %v2648 = vpop.f32.mrb[0].mxu0
        %v2649 = vadd.f32 0.0, %v2648
        %v2650 = vpop.f32.mrb[0].mxu0
        %2651 = vmatprep.mubr.f32.mxu0 0.0
        %2652 = vmatmul.mubr.f32.gmra.mrb[0].mxu0 %v2546
        %v2653 = vpop.f32.mrb[0].mxu0
        %v2654 = vadd.f32 0.0, %v2653
        %v2655 = vpop.f32.mrb[0].mxu0
        %2656 = vmatprep.mubr.f32.mxu0 0.0
        %2657 = vmatmul.mubr.f32.gmra.mrb[0].mxu0 %v2547
        %v2658 = vpop.f32.mrb[0].mxu0
        %v2659 = vadd.f32 0.0, %v2658
        %v2660 = vpop.f32.mrb[0].mxu0
        %2661 = vmatprep.mubr.f32.mxu0 0.0
        %2662 = vmatmul.mubr.f32.gmra.mrb[0].mxu0 %v2548
        %v2663 = vpop.f32.mrb[0].mxu0
        %v2664 = vadd.f32 0.0, %v2663
        %v2665 = vpop.f32.mrb[0].mxu0
        %2666 = vmatprep.mubr.f32.mxu0 0.0
        %2667 = vmatmul.mubr.f32.gmra.mrb[0].mxu0 %v2549
        %v2668 = vpop.f32.mrb[0].mxu0
        %v2669 = vadd.f32 0.0, %v2668
        %v2670 = vpop.f32.mrb[0].mxu0
        %2671 = vdwg.mxu0
        %2672 = vmatprep.subr.mxu0 0.0
        %2673 = vmatpush1.msra.mxu0 %v2526
        %2674 = vmatprep.subr.mxu0 0.0
        %2675 = vmatpush1.msra.mxu0 %v2527
        %2676 = vmatprep.subr.mxu0 0.0
        %2677 = vmatpush1.msra.mxu0 %v2528
        %2678 = vmatprep.subr.mxu0 0.0
        %2679 = vmatpush1.msra.mxu0 %v2529
        %2680 = vmatprep.subr.mxu0 0.0
        %2681 = vmatpush1.msra.mxu0 %v2530
        %2682 = vmatprep.subr.mxu0 0.0
        %2683 = vmatpush1.msra.mxu0 %v2531
        %2684 = vmatprep.subr.mxu0 0.0
        %2685 = vmatpush1.msra.mxu0 %v2532
        %2686 = vmatprep.subr.mxu0 0.0
        %2687 = vmatpush1.msra.mxu0 %v2533
        %2688 = vmatprep.subr.mxu0 0.0
        %2689 = vmatpush1.msra.mxu0 %v2534
        %2690 = vmatprep.subr.mxu0 0.0
        %2691 = vmatpush1.msra.mxu0 %v2535
        %2692 = vmatprep.subr.mxu0 0.0
        %2693 = vmatpush1.msra.mxu0 %v2536
        %2694 = vmatprep.subr.mxu0 0.0
        %2695 = vmatpush1.msra.mxu0 %v2537
        %2696 = vmatprep.subr.mxu0 0.0
        %2697 = vmatpush1.msra.mxu0 %v2538
        %2698 = vmatprep.subr.mxu0 0.0
        %2699 = vmatpush1.msra.mxu0 %v2539
        %2700 = vmatprep.subr.mxu0 0.0
        %2701 = vmatpush1.msra.mxu0 %v2540
        %2702 = vmatprep.subr.mxu0 0.0
        %2703 = vmatpush1.msra.mxu0 %v2541
        %2704 = vmatprep.subr.mxu0 0.0
        %2705 = vmatpush1.msra.mxu0 0.0
        %2706 = vmatprep.subr.mxu0 0.0
        %2707 = vmatpush1.msra.mxu0 0.0
        %2708 = vmatprep.subr.mxu0 0.0
        %2709 = vmatpush1.msra.mxu0 0.0
        %2710 = vmatprep.subr.mxu0 0.0
        %2711 = vmatpush1.msra.mxu0 0.0
        %2712 = vmatprep.subr.mxu0 0.0
        %2713 = vmatpush1.msra.mxu0 0.0
        %2714 = vmatprep.subr.mxu0 0.0
        %2715 = vmatpush1.msra.mxu0 0.0
        %2716 = vmatprep.subr.mxu0 0.0
        %2717 = vmatpush1.msra.mxu0 0.0
        %2718 = vmatprep.subr.mxu0 0.0
        %2719 = vmatpush1.msra.mxu0 0.0
        %2720 = vmatprep.subr.mxu0 0.0
        %2721 = vmatpush1.msra.mxu0 0.0
        %2722 = vmatprep.subr.mxu0 0.0
        %2723 = vmatpush1.msra.mxu0 0.0
        %2724 = vmatprep.subr.mxu0 0.0
        %2725 = vmatpush1.msra.mxu0 0.0
        %2726 = vmatprep.subr.mxu0 0.0
        %2727 = vmatpush1.msra.mxu0 0.0
        %2728 = vmatprep.subr.mxu0 0.0
        %2729 = vmatpush1.msra.mxu0 0.0
        %2730 = vmatprep.subr.mxu0 0.0
        %2731 = vmatpush1.msra.mxu0 0.0
        %2732 = vmatprep.subr.mxu0 0.0
        %2733 = vmatpush1.msra.mxu0 0.0
        %2734 = vmatprep.subr.mxu0 0.0
        %2735 = vmatpush1.msra.mxu0 0.0
        %2736 = vmatprep.mubr.f32.mxu0 0.0
        %2737 = vmatmul.mubr.f32.gmra.mrb[0].mxu0 %v2518
        %v2738 = vpop.f32.mrb[0].mxu0
        %v2739 = vadd.f32 %v2634, %v2738
        %v2740 = vpop.f32.mrb[0].mxu0
        %2741 = vmatprep.mubr.f32.mxu0 0.0
        %2742 = vmatmul.mubr.f32.gmra.mrb[0].mxu0 %v2519
        %v2743 = vpop.f32.mrb[0].mxu0
        %v2744 = vadd.f32 %v2639, %v2743
        %v2745 = vpop.f32.mrb[0].mxu0
        %2746 = vmatprep.mubr.f32.mxu0 0.0
        %2747 = vmatmul.mubr.f32.gmra.mrb[0].mxu0 %v2520
        %v2748 = vpop.f32.mrb[0].mxu0
        %v2749 = vadd.f32 %v2644, %v2748
        %v2750 = vpop.f32.mrb[0].mxu0
        %2751 = vmatprep.mubr.f32.mxu0 0.0
        %2752 = vmatmul.mubr.f32.gmra.mrb[0].mxu0 %v2521
        %v2753 = vpop.f32.mrb[0].mxu0
        %v2754 = vadd.f32 %v2649, %v2753
        %v2755 = vpop.f32.mrb[0].mxu0
        %2756 = vmatprep.mubr.f32.mxu0 0.0
        %2757 = vmatmul.mubr.f32.gmra.mrb[0].mxu0 %v2522
        %v2758 = vpop.f32.mrb[0].mxu0
        %v2759 = vadd.f32 %v2654, %v2758
        %v2760 = vpop.f32.mrb[0].mxu0
        %2761 = vmatprep.mubr.f32.mxu0 0.0
        %2762 = vmatmul.mubr.f32.gmra.mrb[0].mxu0 %v2523
        %v2763 = vpop.f32.mrb[0].mxu0
        %v2764 = vadd.f32 %v2659, %v2763
        %v2765 = vpop.f32.mrb[0].mxu0
        %2766 = vmatprep.mubr.f32.mxu0 0.0
        %2767 = vmatmul.mubr.f32.gmra.mrb[0].mxu0 %v2524
        %v2768 = vpop.f32.mrb[0].mxu0
        %v2769 = vadd.f32 %v2664, %v2768
        %v2770 = vpop.f32.mrb[0].mxu0
        %2771 = vmatprep.mubr.f32.mxu0 0.0
        %2772 = vmatmul.mubr.f32.gmra.mrb[0].mxu0 %v2525
        %v2773 = vpop.f32.mrb[0].mxu0
        %v2774 = vadd.f32 %v2669, %v2773
        %v2775 = vpop.f32.mrb[0].mxu0
        %2776 = vdwg.mxu0
        %v2777 = vld [vmem:[#allocation3 + $0x2] sm:$0xff]
        %v2778 = vld [vmem:[#allocation3 + $0x12] sm:$0xff]
        %v2779 = vld [vmem:[#allocation3 + $0x22] sm:$0xff]
        %v2780 = vld [vmem:[#allocation3 + $0x32] sm:$0xff]
        %v2781 = vld [vmem:[#allocation3 + $0x42] sm:$0xff]
        %v2782 = vld [vmem:[#allocation3 + $0x52] sm:$0xff]
        %v2783 = vld [vmem:[#allocation3 + $0x62] sm:$0xff]
        %v2784 = vld [vmem:[#allocation3 + $0x72] sm:$0xff]
        %s2785 = scalar_lea.vmem [#allocation6], 256
        %v2786 = vld [vmem:[%s2785] sm:$0xff]
        %v2787 = vld [vmem:[%s2785 + $0x8] sm:$0xff]
        %v2788 = vld [vmem:[%s2785 + $0x10] sm:$0xff]
        %v2789 = vld [vmem:[%s2785 + $0x18] sm:$0xff]
        %v2790 = vld [vmem:[%s2785 + $0x20] sm:$0xff]
        %v2791 = vld [vmem:[%s2785 + $0x28] sm:$0xff]
        %v2792 = vld [vmem:[%s2785 + $0x30] sm:$0xff]
        %v2793 = vld [vmem:[%s2785 + $0x38] sm:$0xff]
        %v2794 = vld [vmem:[%s2785 + $0x40] sm:$0xff]
        %v2795 = vld [vmem:[%s2785 + $0x48] sm:$0xff]
        %v2796 = vld [vmem:[%s2785 + $0x50] sm:$0xff]
        %v2797 = vld [vmem:[%s2785 + $0x58] sm:$0xff]
        %v2798 = vld [vmem:[%s2785 + $0x60] sm:$0xff]
        %v2799 = vld [vmem:[%s2785 + $0x68] sm:$0xff]
        %v2800 = vld [vmem:[%s2785 + $0x70] sm:$0xff]
        %v2801 = vld [vmem:[%s2785 + $0x78] sm:$0xff]
        %2802 = vmatprep.subr.mxu0 0.0
        %2803 = vmatpush1.msra.mxu0 %v2786
        %2804 = vmatprep.subr.mxu0 0.0
        %2805 = vmatpush1.msra.mxu0 %v2787
        %2806 = vmatprep.subr.mxu0 0.0
        %2807 = vmatpush1.msra.mxu0 %v2788
        %2808 = vmatprep.subr.mxu0 0.0
        %2809 = vmatpush1.msra.mxu0 %v2789
        %2810 = vmatprep.subr.mxu0 0.0
        %2811 = vmatpush1.msra.mxu0 %v2790
        %2812 = vmatprep.subr.mxu0 0.0
        %2813 = vmatpush1.msra.mxu0 %v2791
        %2814 = vmatprep.subr.mxu0 0.0
        %2815 = vmatpush1.msra.mxu0 %v2792
        %2816 = vmatprep.subr.mxu0 0.0
        %2817 = vmatpush1.msra.mxu0 %v2793
        %2818 = vmatprep.subr.mxu0 0.0
        %2819 = vmatpush1.msra.mxu0 %v2794
        %2820 = vmatprep.subr.mxu0 0.0
        %2821 = vmatpush1.msra.mxu0 %v2795
        %2822 = vmatprep.subr.mxu0 0.0
        %2823 = vmatpush1.msra.mxu0 %v2796
        %2824 = vmatprep.subr.mxu0 0.0
        %2825 = vmatpush1.msra.mxu0 %v2797
        %2826 = vmatprep.subr.mxu0 0.0
        %2827 = vmatpush1.msra.mxu0 %v2798
        %2828 = vmatprep.subr.mxu0 0.0
        %2829 = vmatpush1.msra.mxu0 %v2799
        %2830 = vmatprep.subr.mxu0 0.0
        %2831 = vmatpush1.msra.mxu0 %v2800
        %2832 = vmatprep.subr.mxu0 0.0
        %2833 = vmatpush1.msra.mxu0 %v2801
        %2834 = vmatprep.subr.mxu0 0.0
        %2835 = vmatpush1.msra.mxu0 0.0
        %2836 = vmatprep.subr.mxu0 0.0
        %2837 = vmatpush1.msra.mxu0 0.0
        %2838 = vmatprep.subr.mxu0 0.0
        %2839 = vmatpush1.msra.mxu0 0.0
        %2840 = vmatprep.subr.mxu0 0.0
        %2841 = vmatpush1.msra.mxu0 0.0
        %2842 = vmatprep.subr.mxu0 0.0
        %2843 = vmatpush1.msra.mxu0 0.0
        %2844 = vmatprep.subr.mxu0 0.0
        %2845 = vmatpush1.msra.mxu0 0.0
        %2846 = vmatprep.subr.mxu0 0.0
        %2847 = vmatpush1.msra.mxu0 0.0
        %2848 = vmatprep.subr.mxu0 0.0
        %2849 = vmatpush1.msra.mxu0 0.0
        %2850 = vmatprep.subr.mxu0 0.0
        %2851 = vmatpush1.msra.mxu0 0.0
        %2852 = vmatprep.subr.mxu0 0.0
        %2853 = vmatpush1.msra.mxu0 0.0
        %2854 = vmatprep.subr.mxu0 0.0
        %2855 = vmatpush1.msra.mxu0 0.0
        %2856 = vmatprep.subr.mxu0 0.0
        %2857 = vmatpush1.msra.mxu0 0.0
        %2858 = vmatprep.subr.mxu0 0.0
        %2859 = vmatpush1.msra.mxu0 0.0
        %2860 = vmatprep.subr.mxu0 0.0
        %2861 = vmatpush1.msra.mxu0 0.0
        %2862 = vmatprep.subr.mxu0 0.0
        %2863 = vmatpush1.msra.mxu0 0.0
        %2864 = vmatprep.subr.mxu0 0.0
        %2865 = vmatpush1.msra.mxu0 0.0
        %2866 = vmatprep.mubr.f32.mxu0 0.0
        %2867 = vmatmul.mubr.f32.gmra.mrb[0].mxu0 %v2777
        %v2868 = vpop.f32.mrb[0].mxu0
        %v2869 = vadd.f32 0.0, %v2868
        %v2870 = vpop.f32.mrb[0].mxu0
        %2871 = vmatprep.mubr.f32.mxu0 0.0
        %2872 = vmatmul.mubr.f32.gmra.mrb[0].mxu0 %v2778
        %v2873 = vpop.f32.mrb[0].mxu0
        %v2874 = vadd.f32 0.0, %v2873
        %v2875 = vpop.f32.mrb[0].mxu0
        %2876 = vmatprep.mubr.f32.mxu0 0.0
        %2877 = vmatmul.mubr.f32.gmra.mrb[0].mxu0 %v2779
        %v2878 = vpop.f32.mrb[0].mxu0
        %v2879 = vadd.f32 0.0, %v2878
        %v2880 = vpop.f32.mrb[0].mxu0
        %2881 = vmatprep.mubr.f32.mxu0 0.0
        %2882 = vmatmul.mubr.f32.gmra.mrb[0].mxu0 %v2780
        %v2883 = vpop.f32.mrb[0].mxu0
        %v2884 = vadd.f32 0.0, %v2883
        %v2885 = vpop.f32.mrb[0].mxu0
        %2886 = vmatprep.mubr.f32.mxu0 0.0
        %2887 = vmatmul.mubr.f32.gmra.mrb[0].mxu0 %v2781
        %v2888 = vpop.f32.mrb[0].mxu0
        %v2889 = vadd.f32 0.0, %v2888
        %v2890 = vpop.f32.mrb[0].mxu0
        %2891 = vmatprep.mubr.f32.mxu0 0.0
        %2892 = vmatmul.mubr.f32.gmra.mrb[0].mxu0 %v2782
        %v2893 = vpop.f32.mrb[0].mxu0
        %v2894 = vadd.f32 0.0, %v2893
        %v2895 = vpop.f32.mrb[0].mxu0
        %2896 = vmatprep.mubr.f32.mxu0 0.0
        %2897 = vmatmul.mubr.f32.gmra.mrb[0].mxu0 %v2783
        %v2898 = vpop.f32.mrb[0].mxu0
        %v2899 = vadd.f32 0.0, %v2898
        %v2900 = vpop.f32.mrb[0].mxu0
        %2901 = vmatprep.mubr.f32.mxu0 0.0
        %2902 = vmatmul.mubr.f32.gmra.mrb[0].mxu0 %v2784
        %v2903 = vpop.f32.mrb[0].mxu0
        %v2904 = vadd.f32 0.0, %v2903
        %v2905 = vpop.f32.mrb[0].mxu0
        %2906 = vdwg.mxu0
        %v2907 = vadd.f32 %v2739, %v2869
        %v2908 = vadd.f32 %v2744, %v2874
        %v2909 = vadd.f32 %v2749, %v2879
        %v2910 = vadd.f32 %v2754, %v2884
        %v2911 = vadd.f32 %v2759, %v2889
        %v2912 = vadd.f32 %v2764, %v2894
        %v2913 = vadd.f32 %v2769, %v2899
        %v2914 = vadd.f32 %v2774, %v2904
        %v2915 = vld [vmem:[%s2509] sm:$0xff]
        %v2916 = vld [vmem:[%s2509 + $0x10] sm:$0xff]
        %v2917 = vld [vmem:[%s2509 + $0x20] sm:$0xff]
        %v2918 = vld [vmem:[%s2509 + $0x30] sm:$0xff]
        %v2919 = vld [vmem:[%s2509 + $0x40] sm:$0xff]
        %v2920 = vld [vmem:[%s2509 + $0x50] sm:$0xff]
        %v2921 = vld [vmem:[%s2509 + $0x60] sm:$0xff]
        %v2922 = vld [vmem:[%s2509 + $0x70] sm:$0xff]
        %s2923 = scalar_lea.vmem [#allocation6], 384
        %v2924 = vld [vmem:[%s2923] sm:$0xff]
        %v2925 = vld [vmem:[%s2923 + $0x8] sm:$0xff]
        %v2926 = vld [vmem:[%s2923 + $0x10] sm:$0xff]
        %v2927 = vld [vmem:[%s2923 + $0x18] sm:$0xff]
        %v2928 = vld [vmem:[%s2923 + $0x20] sm:$0xff]
        %v2929 = vld [vmem:[%s2923 + $0x28] sm:$0xff]
        %v2930 = vld [vmem:[%s2923 + $0x30] sm:$0xff]
        %v2931 = vld [vmem:[%s2923 + $0x38] sm:$0xff]
        %v2932 = vld [vmem:[%s2923 + $0x40] sm:$0xff]
        %v2933 = vld [vmem:[%s2923 + $0x48] sm:$0xff]
        %v2934 = vld [vmem:[%s2923 + $0x50] sm:$0xff]
        %v2935 = vld [vmem:[%s2923 + $0x58] sm:$0xff]
        %v2936 = vld [vmem:[%s2923 + $0x60] sm:$0xff]
        %v2937 = vld [vmem:[%s2923 + $0x68] sm:$0xff]
        %v2938 = vld [vmem:[%s2923 + $0x70] sm:$0xff]
        %v2939 = vld [vmem:[%s2923 + $0x78] sm:$0xff]
        %2940 = vmatprep.subr.mxu0 0.0
        %2941 = vmatpush1.msra.mxu0 %v2924
        %2942 = vmatprep.subr.mxu0 0.0
        %2943 = vmatpush1.msra.mxu0 %v2925
        %2944 = vmatprep.subr.mxu0 0.0
        %2945 = vmatpush1.msra.mxu0 %v2926
        %2946 = vmatprep.subr.mxu0 0.0
        %2947 = vmatpush1.msra.mxu0 %v2927
        %2948 = vmatprep.subr.mxu0 0.0
        %2949 = vmatpush1.msra.mxu0 %v2928
        %2950 = vmatprep.subr.mxu0 0.0
        %2951 = vmatpush1.msra.mxu0 %v2929
        %2952 = vmatprep.subr.mxu0 0.0
        %2953 = vmatpush1.msra.mxu0 %v2930
        %2954 = vmatprep.subr.mxu0 0.0
        %2955 = vmatpush1.msra.mxu0 %v2931
        %2956 = vmatprep.subr.mxu0 0.0
        %2957 = vmatpush1.msra.mxu0 %v2932
        %2958 = vmatprep.subr.mxu0 0.0
        %2959 = vmatpush1.msra.mxu0 %v2933
        %2960 = vmatprep.subr.mxu0 0.0
        %2961 = vmatpush1.msra.mxu0 %v2934
        %2962 = vmatprep.subr.mxu0 0.0
        %2963 = vmatpush1.msra.mxu0 %v2935
        %2964 = vmatprep.subr.mxu0 0.0
        %2965 = vmatpush1.msra.mxu0 %v2936
        %2966 = vmatprep.subr.mxu0 0.0
        %2967 = vmatpush1.msra.mxu0 %v2937
        %2968 = vmatprep.subr.mxu0 0.0
        %2969 = vmatpush1.msra.mxu0 %v2938
        %2970 = vmatprep.subr.mxu0 0.0
        %2971 = vmatpush1.msra.mxu0 %v2939
        %2972 = vmatprep.subr.mxu0 0.0
        %2973 = vmatpush1.msra.mxu0 0.0
        %2974 = vmatprep.subr.mxu0 0.0
        %2975 = vmatpush1.msra.mxu0 0.0
        %2976 = vmatprep.subr.mxu0 0.0
        %2977 = vmatpush1.msra.mxu0 0.0
        %2978 = vmatprep.subr.mxu0 0.0
        %2979 = vmatpush1.msra.mxu0 0.0
        %2980 = vmatprep.subr.mxu0 0.0
        %2981 = vmatpush1.msra.mxu0 0.0
        %2982 = vmatprep.subr.mxu0 0.0
        %2983 = vmatpush1.msra.mxu0 0.0
        %2984 = vmatprep.subr.mxu0 0.0
        %2985 = vmatpush1.msra.mxu0 0.0
        %2986 = vmatprep.subr.mxu0 0.0
        %2987 = vmatpush1.msra.mxu0 0.0
        %2988 = vmatprep.subr.mxu0 0.0
        %2989 = vmatpush1.msra.mxu0 0.0
        %2990 = vmatprep.subr.mxu0 0.0
        %2991 = vmatpush1.msra.mxu0 0.0
        %2992 = vmatprep.subr.mxu0 0.0
        %2993 = vmatpush1.msra.mxu0 0.0
        %2994 = vmatprep.subr.mxu0 0.0
        %2995 = vmatpush1.msra.mxu0 0.0
        %2996 = vmatprep.subr.mxu0 0.0
        %2997 = vmatpush1.msra.mxu0 0.0
        %2998 = vmatprep.subr.mxu0 0.0
        %2999 = vmatpush1.msra.mxu0 0.0
        %3000 = vmatprep.subr.mxu0 0.0
        %3001 = vmatpush1.msra.mxu0 0.0
        %3002 = vmatprep.subr.mxu0 0.0
        %3003 = vmatpush1.msra.mxu0 0.0
        %3004 = vmatprep.mubr.f32.mxu0 0.0
        %3005 = vmatmul.mubr.f32.gmra.mrb[0].mxu0 %v2915
        %v3006 = vpop.f32.mrb[0].mxu0
        %v3007 = vadd.f32 0.0, %v3006
        %v3008 = vpop.f32.mrb[0].mxu0
        %3009 = vmatprep.mubr.f32.mxu0 0.0
        %3010 = vmatmul.mubr.f32.gmra.mrb[0].mxu0 %v2916
        %v3011 = vpop.f32.mrb[0].mxu0
        %v3012 = vadd.f32 0.0, %v3011
        %v3013 = vpop.f32.mrb[0].mxu0
        %3014 = vmatprep.mubr.f32.mxu0 0.0
        %3015 = vmatmul.mubr.f32.gmra.mrb[0].mxu0 %v2917
        %v3016 = vpop.f32.mrb[0].mxu0
        %v3017 = vadd.f32 0.0, %v3016
        %v3018 = vpop.f32.mrb[0].mxu0
        %3019 = vmatprep.mubr.f32.mxu0 0.0
        %3020 = vmatmul.mubr.f32.gmra.mrb[0].mxu0 %v2918
        %v3021 = vpop.f32.mrb[0].mxu0
        %v3022 = vadd.f32 0.0, %v3021
        %v3023 = vpop.f32.mrb[0].mxu0
        %3024 = vmatprep.mubr.f32.mxu0 0.0
        %3025 = vmatmul.mubr.f32.gmra.mrb[0].mxu0 %v2919
        %v3026 = vpop.f32.mrb[0].mxu0
        %v3027 = vadd.f32 0.0, %v3026
        %v3028 = vpop.f32.mrb[0].mxu0
        %3029 = vmatprep.mubr.f32.mxu0 0.0
        %3030 = vmatmul.mubr.f32.gmra.mrb[0].mxu0 %v2920
        %v3031 = vpop.f32.mrb[0].mxu0
        %v3032 = vadd.f32 0.0, %v3031
        %v3033 = vpop.f32.mrb[0].mxu0
        %3034 = vmatprep.mubr.f32.mxu0 0.0
        %3035 = vmatmul.mubr.f32.gmra.mrb[0].mxu0 %v2921
        %v3036 = vpop.f32.mrb[0].mxu0
        %v3037 = vadd.f32 0.0, %v3036
        %v3038 = vpop.f32.mrb[0].mxu0
        %3039 = vmatprep.mubr.f32.mxu0 0.0
        %3040 = vmatmul.mubr.f32.gmra.mrb[0].mxu0 %v2922
        %v3041 = vpop.f32.mrb[0].mxu0
        %v3042 = vadd.f32 0.0, %v3041
        %v3043 = vpop.f32.mrb[0].mxu0
        %3044 = vdwg.mxu0
        %v3045 = vadd.f32 %v2907, %v3007
        %v3046 = vadd.f32 %v2908, %v3012
        %v3047 = vadd.f32 %v2909, %v3017
        %v3048 = vadd.f32 %v2910, %v3022
        %v3049 = vadd.f32 %v2911, %v3027
        %v3050 = vadd.f32 %v2912, %v3032
        %v3051 = vadd.f32 %v2913, %v3037
        %v3052 = vadd.f32 %v2914, %v3042
        %v3053 = vld [vmem:[%s2509 + $0x1] sm:$0xff]
        %v3054 = vld [vmem:[%s2509 + $0x11] sm:$0xff]
        %v3055 = vld [vmem:[%s2509 + $0x21] sm:$0xff]
        %v3056 = vld [vmem:[%s2509 + $0x31] sm:$0xff]
        %v3057 = vld [vmem:[%s2509 + $0x41] sm:$0xff]
        %v3058 = vld [vmem:[%s2509 + $0x51] sm:$0xff]
        %v3059 = vld [vmem:[%s2509 + $0x61] sm:$0xff]
        %v3060 = vld [vmem:[%s2509 + $0x71] sm:$0xff]
        %s3061 = scalar_lea.vmem [#allocation6], 512
        %v3062 = vld [vmem:[%s3061] sm:$0xff]
        %v3063 = vld [vmem:[%s3061 + $0x8] sm:$0xff]
        %v3064 = vld [vmem:[%s3061 + $0x10] sm:$0xff]
        %v3065 = vld [vmem:[%s3061 + $0x18] sm:$0xff]
        %v3066 = vld [vmem:[%s3061 + $0x20] sm:$0xff]
        %v3067 = vld [vmem:[%s3061 + $0x28] sm:$0xff]
        %v3068 = vld [vmem:[%s3061 + $0x30] sm:$0xff]
        %v3069 = vld [vmem:[%s3061 + $0x38] sm:$0xff]
        %v3070 = vld [vmem:[%s3061 + $0x40] sm:$0xff]
        %v3071 = vld [vmem:[%s3061 + $0x48] sm:$0xff]
        %v3072 = vld [vmem:[%s3061 + $0x50] sm:$0xff]
        %v3073 = vld [vmem:[%s3061 + $0x58] sm:$0xff]
        %v3074 = vld [vmem:[%s3061 + $0x60] sm:$0xff]
        %v3075 = vld [vmem:[%s3061 + $0x68] sm:$0xff]
        %v3076 = vld [vmem:[%s3061 + $0x70] sm:$0xff]
        %v3077 = vld [vmem:[%s3061 + $0x78] sm:$0xff]
        %3078 = vmatprep.subr.mxu0 0.0
        %3079 = vmatpush1.msra.mxu0 %v3062
        %3080 = vmatprep.subr.mxu0 0.0
        %3081 = vmatpush1.msra.mxu0 %v3063
        %3082 = vmatprep.subr.mxu0 0.0
        %3083 = vmatpush1.msra.mxu0 %v3064
        %3084 = vmatprep.subr.mxu0 0.0
        %3085 = vmatpush1.msra.mxu0 %v3065
        %3086 = vmatprep.subr.mxu0 0.0
        %3087 = vmatpush1.msra.mxu0 %v3066
        %3088 = vmatprep.subr.mxu0 0.0
        %3089 = vmatpush1.msra.mxu0 %v3067
        %3090 = vmatprep.subr.mxu0 0.0
        %3091 = vmatpush1.msra.mxu0 %v3068
        %3092 = vmatprep.subr.mxu0 0.0
        %3093 = vmatpush1.msra.mxu0 %v3069
        %3094 = vmatprep.subr.mxu0 0.0
        %3095 = vmatpush1.msra.mxu0 %v3070
        %3096 = vmatprep.subr.mxu0 0.0
        %3097 = vmatpush1.msra.mxu0 %v3071
        %3098 = vmatprep.subr.mxu0 0.0
        %3099 = vmatpush1.msra.mxu0 %v3072
        %3100 = vmatprep.subr.mxu0 0.0
        %3101 = vmatpush1.msra.mxu0 %v3073
        %3102 = vmatprep.subr.mxu0 0.0
        %3103 = vmatpush1.msra.mxu0 %v3074
        %3104 = vmatprep.subr.mxu0 0.0
        %3105 = vmatpush1.msra.mxu0 %v3075
        %3106 = vmatprep.subr.mxu0 0.0
        %3107 = vmatpush1.msra.mxu0 %v3076
        %3108 = vmatprep.subr.mxu0 0.0
        %3109 = vmatpush1.msra.mxu0 %v3077
        %3110 = vmatprep.subr.mxu0 0.0
        %3111 = vmatpush1.msra.mxu0 0.0
        %3112 = vmatprep.subr.mxu0 0.0
        %3113 = vmatpush1.msra.mxu0 0.0
        %3114 = vmatprep.subr.mxu0 0.0
        %3115 = vmatpush1.msra.mxu0 0.0
        %3116 = vmatprep.subr.mxu0 0.0
        %3117 = vmatpush1.msra.mxu0 0.0
        %3118 = vmatprep.subr.mxu0 0.0
        %3119 = vmatpush1.msra.mxu0 0.0
        %3120 = vmatprep.subr.mxu0 0.0
        %3121 = vmatpush1.msra.mxu0 0.0
        %3122 = vmatprep.subr.mxu0 0.0
        %3123 = vmatpush1.msra.mxu0 0.0
        %3124 = vmatprep.subr.mxu0 0.0
        %3125 = vmatpush1.msra.mxu0 0.0
        %3126 = vmatprep.subr.mxu0 0.0
        %3127 = vmatpush1.msra.mxu0 0.0
        %3128 = vmatprep.subr.mxu0 0.0
        %3129 = vmatpush1.msra.mxu0 0.0
        %3130 = vmatprep.subr.mxu0 0.0
        %3131 = vmatpush1.msra.mxu0 0.0
        %3132 = vmatprep.subr.mxu0 0.0
        %3133 = vmatpush1.msra.mxu0 0.0
        %3134 = vmatprep.subr.mxu0 0.0
        %3135 = vmatpush1.msra.mxu0 0.0
        %3136 = vmatprep.subr.mxu0 0.0
        %3137 = vmatpush1.msra.mxu0 0.0
        %3138 = vmatprep.subr.mxu0 0.0
        %3139 = vmatpush1.msra.mxu0 0.0
        %3140 = vmatprep.subr.mxu0 0.0
        %3141 = vmatpush1.msra.mxu0 0.0
        %3142 = vmatprep.mubr.f32.mxu0 0.0
        %3143 = vmatmul.mubr.f32.gmra.mrb[0].mxu0 %v3053
        %v3144 = vpop.f32.mrb[0].mxu0
        %v3145 = vadd.f32 0.0, %v3144
        %v3146 = vpop.f32.mrb[0].mxu0
        %3147 = vmatprep.mubr.f32.mxu0 0.0
        %3148 = vmatmul.mubr.f32.gmra.mrb[0].mxu0 %v3054
        %v3149 = vpop.f32.mrb[0].mxu0
        %v3150 = vadd.f32 0.0, %v3149
        %v3151 = vpop.f32.mrb[0].mxu0
        %3152 = vmatprep.mubr.f32.mxu0 0.0
        %3153 = vmatmul.mubr.f32.gmra.mrb[0].mxu0 %v3055
        %v3154 = vpop.f32.mrb[0].mxu0
        %v3155 = vadd.f32 0.0, %v3154
        %v3156 = vpop.f32.mrb[0].mxu0
        %3157 = vmatprep.mubr.f32.mxu0 0.0
        %3158 = vmatmul.mubr.f32.gmra.mrb[0].mxu0 %v3056
        %v3159 = vpop.f32.mrb[0].mxu0
        %v3160 = vadd.f32 0.0, %v3159
        %v3161 = vpop.f32.mrb[0].mxu0
        %3162 = vmatprep.mubr.f32.mxu0 0.0
        %3163 = vmatmul.mubr.f32.gmra.mrb[0].mxu0 %v3057
        %v3164 = vpop.f32.mrb[0].mxu0
        %v3165 = vadd.f32 0.0, %v3164
        %v3166 = vpop.f32.mrb[0].mxu0
        %3167 = vmatprep.mubr.f32.mxu0 0.0
        %3168 = vmatmul.mubr.f32.gmra.mrb[0].mxu0 %v3058
        %v3169 = vpop.f32.mrb[0].mxu0
        %v3170 = vadd.f32 0.0, %v3169
        %v3171 = vpop.f32.mrb[0].mxu0
        %3172 = vmatprep.mubr.f32.mxu0 0.0
        %3173 = vmatmul.mubr.f32.gmra.mrb[0].mxu0 %v3059
        %v3174 = vpop.f32.mrb[0].mxu0
        %v3175 = vadd.f32 0.0, %v3174
        %v3176 = vpop.f32.mrb[0].mxu0
        %3177 = vmatprep.mubr.f32.mxu0 0.0
        %3178 = vmatmul.mubr.f32.gmra.mrb[0].mxu0 %v3060
        %v3179 = vpop.f32.mrb[0].mxu0
        %v3180 = vadd.f32 0.0, %v3179
        %v3181 = vpop.f32.mrb[0].mxu0
        %3182 = vdwg.mxu0
        %v3183 = vadd.f32 %v3045, %v3145
        %v3184 = vadd.f32 %v3046, %v3150
        %v3185 = vadd.f32 %v3047, %v3155
        %v3186 = vadd.f32 %v3048, %v3160
        %v3187 = vadd.f32 %v3049, %v3165
        %v3188 = vadd.f32 %v3050, %v3170
        %v3189 = vadd.f32 %v3051, %v3175
        %v3190 = vadd.f32 %v3052, %v3180
        %v3191 = vld [vmem:[%s2509 + $0x2] sm:$0xff]
        %v3192 = vld [vmem:[%s2509 + $0x12] sm:$0xff]
        %v3193 = vld [vmem:[%s2509 + $0x22] sm:$0xff]
        %v3194 = vld [vmem:[%s2509 + $0x32] sm:$0xff]
        %v3195 = vld [vmem:[%s2509 + $0x42] sm:$0xff]
        %v3196 = vld [vmem:[%s2509 + $0x52] sm:$0xff]
        %v3197 = vld [vmem:[%s2509 + $0x62] sm:$0xff]
        %v3198 = vld [vmem:[%s2509 + $0x72] sm:$0xff]
        %s3199 = scalar_lea.vmem [#allocation6], 640
        %v3200 = vld [vmem:[%s3199] sm:$0xff]
        %v3201 = vld [vmem:[%s3199 + $0x8] sm:$0xff]
        %v3202 = vld [vmem:[%s3199 + $0x10] sm:$0xff]
        %v3203 = vld [vmem:[%s3199 + $0x18] sm:$0xff]
        %v3204 = vld [vmem:[%s3199 + $0x20] sm:$0xff]
        %v3205 = vld [vmem:[%s3199 + $0x28] sm:$0xff]
        %v3206 = vld [vmem:[%s3199 + $0x30] sm:$0xff]
        %v3207 = vld [vmem:[%s3199 + $0x38] sm:$0xff]
        %v3208 = vld [vmem:[%s3199 + $0x40] sm:$0xff]
        %v3209 = vld [vmem:[%s3199 + $0x48] sm:$0xff]
        %v3210 = vld [vmem:[%s3199 + $0x50] sm:$0xff]
        %v3211 = vld [vmem:[%s3199 + $0x58] sm:$0xff]
        %v3212 = vld [vmem:[%s3199 + $0x60] sm:$0xff]
        %v3213 = vld [vmem:[%s3199 + $0x68] sm:$0xff]
        %v3214 = vld [vmem:[%s3199 + $0x70] sm:$0xff]
        %v3215 = vld [vmem:[%s3199 + $0x78] sm:$0xff]
        %3216 = vmatprep.subr.mxu0 0.0
        %3217 = vmatpush1.msra.mxu0 %v3200
        %3218 = vmatprep.subr.mxu0 0.0
        %3219 = vmatpush1.msra.mxu0 %v3201
        %3220 = vmatprep.subr.mxu0 0.0
        %3221 = vmatpush1.msra.mxu0 %v3202
        %3222 = vmatprep.subr.mxu0 0.0
        %3223 = vmatpush1.msra.mxu0 %v3203
        %3224 = vmatprep.subr.mxu0 0.0
        %3225 = vmatpush1.msra.mxu0 %v3204
        %3226 = vmatprep.subr.mxu0 0.0
        %3227 = vmatpush1.msra.mxu0 %v3205
        %3228 = vmatprep.subr.mxu0 0.0
        %3229 = vmatpush1.msra.mxu0 %v3206
        %3230 = vmatprep.subr.mxu0 0.0
        %3231 = vmatpush1.msra.mxu0 %v3207
        %3232 = vmatprep.subr.mxu0 0.0
        %3233 = vmatpush1.msra.mxu0 %v3208
        %3234 = vmatprep.subr.mxu0 0.0
        %3235 = vmatpush1.msra.mxu0 %v3209
        %3236 = vmatprep.subr.mxu0 0.0
        %3237 = vmatpush1.msra.mxu0 %v3210
        %3238 = vmatprep.subr.mxu0 0.0
        %3239 = vmatpush1.msra.mxu0 %v3211
        %3240 = vmatprep.subr.mxu0 0.0
        %3241 = vmatpush1.msra.mxu0 %v3212
        %3242 = vmatprep.subr.mxu0 0.0
        %3243 = vmatpush1.msra.mxu0 %v3213
        %3244 = vmatprep.subr.mxu0 0.0
        %3245 = vmatpush1.msra.mxu0 %v3214
        %3246 = vmatprep.subr.mxu0 0.0
        %3247 = vmatpush1.msra.mxu0 %v3215
        %3248 = vmatprep.subr.mxu0 0.0
        %3249 = vmatpush1.msra.mxu0 0.0
        %3250 = vmatprep.subr.mxu0 0.0
        %3251 = vmatpush1.msra.mxu0 0.0
        %3252 = vmatprep.subr.mxu0 0.0
        %3253 = vmatpush1.msra.mxu0 0.0
        %3254 = vmatprep.subr.mxu0 0.0
        %3255 = vmatpush1.msra.mxu0 0.0
        %3256 = vmatprep.subr.mxu0 0.0
        %3257 = vmatpush1.msra.mxu0 0.0
        %3258 = vmatprep.subr.mxu0 0.0
        %3259 = vmatpush1.msra.mxu0 0.0
        %3260 = vmatprep.subr.mxu0 0.0
        %3261 = vmatpush1.msra.mxu0 0.0
        %3262 = vmatprep.subr.mxu0 0.0
        %3263 = vmatpush1.msra.mxu0 0.0
        %3264 = vmatprep.subr.mxu0 0.0
        %3265 = vmatpush1.msra.mxu0 0.0
        %3266 = vmatprep.subr.mxu0 0.0
        %3267 = vmatpush1.msra.mxu0 0.0
        %3268 = vmatprep.subr.mxu0 0.0
        %3269 = vmatpush1.msra.mxu0 0.0
        %3270 = vmatprep.subr.mxu0 0.0
        %3271 = vmatpush1.msra.mxu0 0.0
        %3272 = vmatprep.subr.mxu0 0.0
        %3273 = vmatpush1.msra.mxu0 0.0
        %3274 = vmatprep.subr.mxu0 0.0
        %3275 = vmatpush1.msra.mxu0 0.0
        %3276 = vmatprep.subr.mxu0 0.0
        %3277 = vmatpush1.msra.mxu0 0.0
        %3278 = vmatprep.subr.mxu0 0.0
        %3279 = vmatpush1.msra.mxu0 0.0
        %3280 = vmatprep.mubr.f32.mxu0 0.0
        %3281 = vmatmul.mubr.f32.gmra.mrb[0].mxu0 %v3191
        %v3282 = vpop.f32.mrb[0].mxu0
        %v3283 = vadd.f32 0.0, %v3282
        %v3284 = vpop.f32.mrb[0].mxu0
        %3285 = vmatprep.mubr.f32.mxu0 0.0
        %3286 = vmatmul.mubr.f32.gmra.mrb[0].mxu0 %v3192
        %v3287 = vpop.f32.mrb[0].mxu0
        %v3288 = vadd.f32 0.0, %v3287
        %v3289 = vpop.f32.mrb[0].mxu0
        %3290 = vmatprep.mubr.f32.mxu0 0.0
        %3291 = vmatmul.mubr.f32.gmra.mrb[0].mxu0 %v3193
        %v3292 = vpop.f32.mrb[0].mxu0
        %v3293 = vadd.f32 0.0, %v3292
        %v3294 = vpop.f32.mrb[0].mxu0
        %3295 = vmatprep.mubr.f32.mxu0 0.0
        %3296 = vmatmul.mubr.f32.gmra.mrb[0].mxu0 %v3194
        %v3297 = vpop.f32.mrb[0].mxu0
        %v3298 = vadd.f32 0.0, %v3297
        %v3299 = vpop.f32.mrb[0].mxu0
        %3300 = vmatprep.mubr.f32.mxu0 0.0
        %3301 = vmatmul.mubr.f32.gmra.mrb[0].mxu0 %v3195
        %v3302 = vpop.f32.mrb[0].mxu0
        %v3303 = vadd.f32 0.0, %v3302
        %v3304 = vpop.f32.mrb[0].mxu0
        %3305 = vmatprep.mubr.f32.mxu0 0.0
        %3306 = vmatmul.mubr.f32.gmra.mrb[0].mxu0 %v3196
        %v3307 = vpop.f32.mrb[0].mxu0
        %v3308 = vadd.f32 0.0, %v3307
        %v3309 = vpop.f32.mrb[0].mxu0
        %3310 = vmatprep.mubr.f32.mxu0 0.0
        %3311 = vmatmul.mubr.f32.gmra.mrb[0].mxu0 %v3197
        %v3312 = vpop.f32.mrb[0].mxu0
        %v3313 = vadd.f32 0.0, %v3312
        %v3314 = vpop.f32.mrb[0].mxu0
        %3315 = vmatprep.mubr.f32.mxu0 0.0
        %3316 = vmatmul.mubr.f32.gmra.mrb[0].mxu0 %v3198
        %v3317 = vpop.f32.mrb[0].mxu0
        %v3318 = vadd.f32 0.0, %v3317
        %v3319 = vpop.f32.mrb[0].mxu0
        %3320 = vdwg.mxu0
        %v3321 = vadd.f32 %v3183, %v3283
        %v3322 = vadd.f32 %v3184, %v3288
        %v3323 = vadd.f32 %v3185, %v3293
        %v3324 = vadd.f32 %v3186, %v3298
        %v3325 = vadd.f32 %v3187, %v3303
        %v3326 = vadd.f32 %v3188, %v3308
        %v3327 = vadd.f32 %v3189, %v3313
        %v3328 = vadd.f32 %v3190, %v3318
        %s3329 = scalar_lea.vmem [#allocation3], 32
        %v3330 = vld [vmem:[%s3329] sm:$0xff]
        %v3331 = vld [vmem:[%s3329 + $0x10] sm:$0xff]
        %v3332 = vld [vmem:[%s3329 + $0x20] sm:$0xff]
        %v3333 = vld [vmem:[%s3329 + $0x30] sm:$0xff]
        %v3334 = vld [vmem:[%s3329 + $0x40] sm:$0xff]
        %v3335 = vld [vmem:[%s3329 + $0x50] sm:$0xff]
        %v3336 = vld [vmem:[%s3329 + $0x60] sm:$0xff]
        %v3337 = vld [vmem:[%s3329 + $0x70] sm:$0xff]
        %s3338 = scalar_lea.vmem [#allocation6], 768
        %v3339 = vld [vmem:[%s3338] sm:$0xff]
        %v3340 = vld [vmem:[%s3338 + $0x8] sm:$0xff]
        %v3341 = vld [vmem:[%s3338 + $0x10] sm:$0xff]
        %v3342 = vld [vmem:[%s3338 + $0x18] sm:$0xff]
        %v3343 = vld [vmem:[%s3338 + $0x20] sm:$0xff]
        %v3344 = vld [vmem:[%s3338 + $0x28] sm:$0xff]
        %v3345 = vld [vmem:[%s3338 + $0x30] sm:$0xff]
        %v3346 = vld [vmem:[%s3338 + $0x38] sm:$0xff]
        %v3347 = vld [vmem:[%s3338 + $0x40] sm:$0xff]
        %v3348 = vld [vmem:[%s3338 + $0x48] sm:$0xff]
        %v3349 = vld [vmem:[%s3338 + $0x50] sm:$0xff]
        %v3350 = vld [vmem:[%s3338 + $0x58] sm:$0xff]
        %v3351 = vld [vmem:[%s3338 + $0x60] sm:$0xff]
        %v3352 = vld [vmem:[%s3338 + $0x68] sm:$0xff]
        %v3353 = vld [vmem:[%s3338 + $0x70] sm:$0xff]
        %v3354 = vld [vmem:[%s3338 + $0x78] sm:$0xff]
        %3355 = vmatprep.subr.mxu0 0.0
        %3356 = vmatpush1.msra.mxu0 %v3339
        %3357 = vmatprep.subr.mxu0 0.0
        %3358 = vmatpush1.msra.mxu0 %v3340
        %3359 = vmatprep.subr.mxu0 0.0
        %3360 = vmatpush1.msra.mxu0 %v3341
        %3361 = vmatprep.subr.mxu0 0.0
        %3362 = vmatpush1.msra.mxu0 %v3342
        %3363 = vmatprep.subr.mxu0 0.0
        %3364 = vmatpush1.msra.mxu0 %v3343
        %3365 = vmatprep.subr.mxu0 0.0
        %3366 = vmatpush1.msra.mxu0 %v3344
        %3367 = vmatprep.subr.mxu0 0.0
        %3368 = vmatpush1.msra.mxu0 %v3345
        %3369 = vmatprep.subr.mxu0 0.0
        %3370 = vmatpush1.msra.mxu0 %v3346
        %3371 = vmatprep.subr.mxu0 0.0
        %3372 = vmatpush1.msra.mxu0 %v3347
        %3373 = vmatprep.subr.mxu0 0.0
        %3374 = vmatpush1.msra.mxu0 %v3348
        %3375 = vmatprep.subr.mxu0 0.0
        %3376 = vmatpush1.msra.mxu0 %v3349
        %3377 = vmatprep.subr.mxu0 0.0
        %3378 = vmatpush1.msra.mxu0 %v3350
        %3379 = vmatprep.subr.mxu0 0.0
        %3380 = vmatpush1.msra.mxu0 %v3351
        %3381 = vmatprep.subr.mxu0 0.0
        %3382 = vmatpush1.msra.mxu0 %v3352
        %3383 = vmatprep.subr.mxu0 0.0
        %3384 = vmatpush1.msra.mxu0 %v3353
        %3385 = vmatprep.subr.mxu0 0.0
        %3386 = vmatpush1.msra.mxu0 %v3354
        %3387 = vmatprep.subr.mxu0 0.0
        %3388 = vmatpush1.msra.mxu0 0.0
        %3389 = vmatprep.subr.mxu0 0.0
        %3390 = vmatpush1.msra.mxu0 0.0
        %3391 = vmatprep.subr.mxu0 0.0
        %3392 = vmatpush1.msra.mxu0 0.0
        %3393 = vmatprep.subr.mxu0 0.0
        %3394 = vmatpush1.msra.mxu0 0.0
        %3395 = vmatprep.subr.mxu0 0.0
        %3396 = vmatpush1.msra.mxu0 0.0
        %3397 = vmatprep.subr.mxu0 0.0
        %3398 = vmatpush1.msra.mxu0 0.0
        %3399 = vmatprep.subr.mxu0 0.0
        %3400 = vmatpush1.msra.mxu0 0.0
        %3401 = vmatprep.subr.mxu0 0.0
        %3402 = vmatpush1.msra.mxu0 0.0
        %3403 = vmatprep.subr.mxu0 0.0
        %3404 = vmatpush1.msra.mxu0 0.0
        %3405 = vmatprep.subr.mxu0 0.0
        %3406 = vmatpush1.msra.mxu0 0.0
        %3407 = vmatprep.subr.mxu0 0.0
        %3408 = vmatpush1.msra.mxu0 0.0
        %3409 = vmatprep.subr.mxu0 0.0
        %3410 = vmatpush1.msra.mxu0 0.0
        %3411 = vmatprep.subr.mxu0 0.0
        %3412 = vmatpush1.msra.mxu0 0.0
        %3413 = vmatprep.subr.mxu0 0.0
        %3414 = vmatpush1.msra.mxu0 0.0
        %3415 = vmatprep.subr.mxu0 0.0
        %3416 = vmatpush1.msra.mxu0 0.0
        %3417 = vmatprep.subr.mxu0 0.0
        %3418 = vmatpush1.msra.mxu0 0.0
        %3419 = vmatprep.mubr.f32.mxu0 0.0
        %3420 = vmatmul.mubr.f32.gmra.mrb[0].mxu0 %v3330
        %v3421 = vpop.f32.mrb[0].mxu0
        %v3422 = vadd.f32 0.0, %v3421
        %v3423 = vpop.f32.mrb[0].mxu0
        %3424 = vmatprep.mubr.f32.mxu0 0.0
        %3425 = vmatmul.mubr.f32.gmra.mrb[0].mxu0 %v3331
        %v3426 = vpop.f32.mrb[0].mxu0
        %v3427 = vadd.f32 0.0, %v3426
        %v3428 = vpop.f32.mrb[0].mxu0
        %3429 = vmatprep.mubr.f32.mxu0 0.0
        %3430 = vmatmul.mubr.f32.gmra.mrb[0].mxu0 %v3332
        %v3431 = vpop.f32.mrb[0].mxu0
        %v3432 = vadd.f32 0.0, %v3431
        %v3433 = vpop.f32.mrb[0].mxu0
        %3434 = vmatprep.mubr.f32.mxu0 0.0
        %3435 = vmatmul.mubr.f32.gmra.mrb[0].mxu0 %v3333
        %v3436 = vpop.f32.mrb[0].mxu0
        %v3437 = vadd.f32 0.0, %v3436
        %v3438 = vpop.f32.mrb[0].mxu0
        %3439 = vmatprep.mubr.f32.mxu0 0.0
        %3440 = vmatmul.mubr.f32.gmra.mrb[0].mxu0 %v3334
        %v3441 = vpop.f32.mrb[0].mxu0
        %v3442 = vadd.f32 0.0, %v3441
        %v3443 = vpop.f32.mrb[0].mxu0
        %3444 = vmatprep.mubr.f32.mxu0 0.0
        %3445 = vmatmul.mubr.f32.gmra.mrb[0].mxu0 %v3335
        %v3446 = vpop.f32.mrb[0].mxu0
        %v3447 = vadd.f32 0.0, %v3446
        %v3448 = vpop.f32.mrb[0].mxu0
        %3449 = vmatprep.mubr.f32.mxu0 0.0
        %3450 = vmatmul.mubr.f32.gmra.mrb[0].mxu0 %v3336
        %v3451 = vpop.f32.mrb[0].mxu0
        %v3452 = vadd.f32 0.0, %v3451
        %v3453 = vpop.f32.mrb[0].mxu0
        %3454 = vmatprep.mubr.f32.mxu0 0.0
        %3455 = vmatmul.mubr.f32.gmra.mrb[0].mxu0 %v3337
        %v3456 = vpop.f32.mrb[0].mxu0
        %v3457 = vadd.f32 0.0, %v3456
        %v3458 = vpop.f32.mrb[0].mxu0
        %3459 = vdwg.mxu0
        %v3460 = vadd.f32 %v3321, %v3422
        %v3461 = vadd.f32 %v3322, %v3427
        %v3462 = vadd.f32 %v3323, %v3432
        %v3463 = vadd.f32 %v3324, %v3437
        %v3464 = vadd.f32 %v3325, %v3442
        %v3465 = vadd.f32 %v3326, %v3447
        %v3466 = vadd.f32 %v3327, %v3452
        %v3467 = vadd.f32 %v3328, %v3457
        %v3468 = vld [vmem:[%s3329 + $0x1] sm:$0xff]
        %v3469 = vld [vmem:[%s3329 + $0x11] sm:$0xff]
        %v3470 = vld [vmem:[%s3329 + $0x21] sm:$0xff]
        %v3471 = vld [vmem:[%s3329 + $0x31] sm:$0xff]
        %v3472 = vld [vmem:[%s3329 + $0x41] sm:$0xff]
        %v3473 = vld [vmem:[%s3329 + $0x51] sm:$0xff]
        %v3474 = vld [vmem:[%s3329 + $0x61] sm:$0xff]
        %v3475 = vld [vmem:[%s3329 + $0x71] sm:$0xff]
        %s3476 = scalar_lea.vmem [#allocation6], 896
        %v3477 = vld [vmem:[%s3476] sm:$0xff]
        %v3478 = vld [vmem:[%s3476 + $0x8] sm:$0xff]
        %v3479 = vld [vmem:[%s3476 + $0x10] sm:$0xff]
        %v3480 = vld [vmem:[%s3476 + $0x18] sm:$0xff]
        %v3481 = vld [vmem:[%s3476 + $0x20] sm:$0xff]
        %v3482 = vld [vmem:[%s3476 + $0x28] sm:$0xff]
        %v3483 = vld [vmem:[%s3476 + $0x30] sm:$0xff]
        %v3484 = vld [vmem:[%s3476 + $0x38] sm:$0xff]
        %v3485 = vld [vmem:[%s3476 + $0x40] sm:$0xff]
        %v3486 = vld [vmem:[%s3476 + $0x48] sm:$0xff]
        %v3487 = vld [vmem:[%s3476 + $0x50] sm:$0xff]
        %v3488 = vld [vmem:[%s3476 + $0x58] sm:$0xff]
        %v3489 = vld [vmem:[%s3476 + $0x60] sm:$0xff]
        %v3490 = vld [vmem:[%s3476 + $0x68] sm:$0xff]
        %v3491 = vld [vmem:[%s3476 + $0x70] sm:$0xff]
        %v3492 = vld [vmem:[%s3476 + $0x78] sm:$0xff]
        %3493 = vmatprep.subr.mxu0 0.0
        %3494 = vmatpush1.msra.mxu0 %v3477
        %3495 = vmatprep.subr.mxu0 0.0
        %3496 = vmatpush1.msra.mxu0 %v3478
        %3497 = vmatprep.subr.mxu0 0.0
        %3498 = vmatpush1.msra.mxu0 %v3479
        %3499 = vmatprep.subr.mxu0 0.0
        %3500 = vmatpush1.msra.mxu0 %v3480
        %3501 = vmatprep.subr.mxu0 0.0
        %3502 = vmatpush1.msra.mxu0 %v3481
        %3503 = vmatprep.subr.mxu0 0.0
        %3504 = vmatpush1.msra.mxu0 %v3482
        %3505 = vmatprep.subr.mxu0 0.0
        %3506 = vmatpush1.msra.mxu0 %v3483
        %3507 = vmatprep.subr.mxu0 0.0
        %3508 = vmatpush1.msra.mxu0 %v3484
        %3509 = vmatprep.subr.mxu0 0.0
        %3510 = vmatpush1.msra.mxu0 %v3485
        %3511 = vmatprep.subr.mxu0 0.0
        %3512 = vmatpush1.msra.mxu0 %v3486
        %3513 = vmatprep.subr.mxu0 0.0
        %3514 = vmatpush1.msra.mxu0 %v3487
        %3515 = vmatprep.subr.mxu0 0.0
        %3516 = vmatpush1.msra.mxu0 %v3488
        %3517 = vmatprep.subr.mxu0 0.0
        %3518 = vmatpush1.msra.mxu0 %v3489
        %3519 = vmatprep.subr.mxu0 0.0
        %3520 = vmatpush1.msra.mxu0 %v3490
        %3521 = vmatprep.subr.mxu0 0.0
        %3522 = vmatpush1.msra.mxu0 %v3491
        %3523 = vmatprep.subr.mxu0 0.0
        %3524 = vmatpush1.msra.mxu0 %v3492
        %3525 = vmatprep.subr.mxu0 0.0
        %3526 = vmatpush1.msra.mxu0 0.0
        %3527 = vmatprep.subr.mxu0 0.0
        %3528 = vmatpush1.msra.mxu0 0.0
        %3529 = vmatprep.subr.mxu0 0.0
        %3530 = vmatpush1.msra.mxu0 0.0
        %3531 = vmatprep.subr.mxu0 0.0
        %3532 = vmatpush1.msra.mxu0 0.0
        %3533 = vmatprep.subr.mxu0 0.0
        %3534 = vmatpush1.msra.mxu0 0.0
        %3535 = vmatprep.subr.mxu0 0.0
        %3536 = vmatpush1.msra.mxu0 0.0
        %3537 = vmatprep.subr.mxu0 0.0
        %3538 = vmatpush1.msra.mxu0 0.0
        %3539 = vmatprep.subr.mxu0 0.0
        %3540 = vmatpush1.msra.mxu0 0.0
        %3541 = vmatprep.subr.mxu0 0.0
        %3542 = vmatpush1.msra.mxu0 0.0
        %3543 = vmatprep.subr.mxu0 0.0
        %3544 = vmatpush1.msra.mxu0 0.0
        %3545 = vmatprep.subr.mxu0 0.0
        %3546 = vmatpush1.msra.mxu0 0.0
        %3547 = vmatprep.subr.mxu0 0.0
        %3548 = vmatpush1.msra.mxu0 0.0
        %3549 = vmatprep.subr.mxu0 0.0
        %3550 = vmatpush1.msra.mxu0 0.0
        %3551 = vmatprep.subr.mxu0 0.0
        %3552 = vmatpush1.msra.mxu0 0.0
        %3553 = vmatprep.subr.mxu0 0.0
        %3554 = vmatpush1.msra.mxu0 0.0
        %3555 = vmatprep.subr.mxu0 0.0
        %3556 = vmatpush1.msra.mxu0 0.0
        %3557 = vmatprep.mubr.f32.mxu0 0.0
        %3558 = vmatmul.mubr.f32.gmra.mrb[0].mxu0 %v3468
        %v3559 = vpop.f32.mrb[0].mxu0
        %v3560 = vadd.f32 0.0, %v3559
        %v3561 = vpop.f32.mrb[0].mxu0
        %3562 = vmatprep.mubr.f32.mxu0 0.0
        %3563 = vmatmul.mubr.f32.gmra.mrb[0].mxu0 %v3469
        %v3564 = vpop.f32.mrb[0].mxu0
        %v3565 = vadd.f32 0.0, %v3564
        %v3566 = vpop.f32.mrb[0].mxu0
        %3567 = vmatprep.mubr.f32.mxu0 0.0
        %3568 = vmatmul.mubr.f32.gmra.mrb[0].mxu0 %v3470
        %v3569 = vpop.f32.mrb[0].mxu0
        %v3570 = vadd.f32 0.0, %v3569
        %v3571 = vpop.f32.mrb[0].mxu0
        %3572 = vmatprep.mubr.f32.mxu0 0.0
        %3573 = vmatmul.mubr.f32.gmra.mrb[0].mxu0 %v3471
        %v3574 = vpop.f32.mrb[0].mxu0
        %v3575 = vadd.f32 0.0, %v3574
        %v3576 = vpop.f32.mrb[0].mxu0
        %3577 = vmatprep.mubr.f32.mxu0 0.0
        %3578 = vmatmul.mubr.f32.gmra.mrb[0].mxu0 %v3472
        %v3579 = vpop.f32.mrb[0].mxu0
        %v3580 = vadd.f32 0.0, %v3579
        %v3581 = vpop.f32.mrb[0].mxu0
        %3582 = vmatprep.mubr.f32.mxu0 0.0
        %3583 = vmatmul.mubr.f32.gmra.mrb[0].mxu0 %v3473
        %v3584 = vpop.f32.mrb[0].mxu0
        %v3585 = vadd.f32 0.0, %v3584
        %v3586 = vpop.f32.mrb[0].mxu0
        %3587 = vmatprep.mubr.f32.mxu0 0.0
        %3588 = vmatmul.mubr.f32.gmra.mrb[0].mxu0 %v3474
        %v3589 = vpop.f32.mrb[0].mxu0
        %v3590 = vadd.f32 0.0, %v3589
        %v3591 = vpop.f32.mrb[0].mxu0
        %3592 = vmatprep.mubr.f32.mxu0 0.0
        %3593 = vmatmul.mubr.f32.gmra.mrb[0].mxu0 %v3475
        %v3594 = vpop.f32.mrb[0].mxu0
        %v3595 = vadd.f32 0.0, %v3594
        %v3596 = vpop.f32.mrb[0].mxu0
        %3597 = vdwg.mxu0
        %v3598 = vadd.f32 %v3460, %v3560
        %v3599 = vadd.f32 %v3461, %v3565
        %v3600 = vadd.f32 %v3462, %v3570
        %v3601 = vadd.f32 %v3463, %v3575
        %v3602 = vadd.f32 %v3464, %v3580
        %v3603 = vadd.f32 %v3465, %v3585
        %v3604 = vadd.f32 %v3466, %v3590
        %v3605 = vadd.f32 %v3467, %v3595
        %v3606 = vld [vmem:[%s3329 + $0x2] sm:$0xff]
        %v3607 = vld [vmem:[%s3329 + $0x12] sm:$0xff]
        %v3608 = vld [vmem:[%s3329 + $0x22] sm:$0xff]
        %v3609 = vld [vmem:[%s3329 + $0x32] sm:$0xff]
        %v3610 = vld [vmem:[%s3329 + $0x42] sm:$0xff]
        %v3611 = vld [vmem:[%s3329 + $0x52] sm:$0xff]
        %v3612 = vld [vmem:[%s3329 + $0x62] sm:$0xff]
        %v3613 = vld [vmem:[%s3329 + $0x72] sm:$0xff]
        %s3614 = scalar_lea.vmem [#allocation6], 1024
        %v3615 = vld [vmem:[%s3614] sm:$0xff]
        %v3616 = vld [vmem:[%s3614 + $0x8] sm:$0xff]
        %v3617 = vld [vmem:[%s3614 + $0x10] sm:$0xff]
        %v3618 = vld [vmem:[%s3614 + $0x18] sm:$0xff]
        %v3619 = vld [vmem:[%s3614 + $0x20] sm:$0xff]
        %v3620 = vld [vmem:[%s3614 + $0x28] sm:$0xff]
        %v3621 = vld [vmem:[%s3614 + $0x30] sm:$0xff]
        %v3622 = vld [vmem:[%s3614 + $0x38] sm:$0xff]
        %v3623 = vld [vmem:[%s3614 + $0x40] sm:$0xff]
        %v3624 = vld [vmem:[%s3614 + $0x48] sm:$0xff]
        %v3625 = vld [vmem:[%s3614 + $0x50] sm:$0xff]
        %v3626 = vld [vmem:[%s3614 + $0x58] sm:$0xff]
        %v3627 = vld [vmem:[%s3614 + $0x60] sm:$0xff]
        %v3628 = vld [vmem:[%s3614 + $0x68] sm:$0xff]
        %v3629 = vld [vmem:[%s3614 + $0x70] sm:$0xff]
        %v3630 = vld [vmem:[%s3614 + $0x78] sm:$0xff]
        %3631 = vmatprep.subr.mxu0 0.0
        %3632 = vmatpush1.msra.mxu0 %v3615
        %3633 = vmatprep.subr.mxu0 0.0
        %3634 = vmatpush1.msra.mxu0 %v3616
        %3635 = vmatprep.subr.mxu0 0.0
        %3636 = vmatpush1.msra.mxu0 %v3617
        %3637 = vmatprep.subr.mxu0 0.0
        %3638 = vmatpush1.msra.mxu0 %v3618
        %3639 = vmatprep.subr.mxu0 0.0
        %3640 = vmatpush1.msra.mxu0 %v3619
        %3641 = vmatprep.subr.mxu0 0.0
        %3642 = vmatpush1.msra.mxu0 %v3620
        %3643 = vmatprep.subr.mxu0 0.0
        %3644 = vmatpush1.msra.mxu0 %v3621
        %3645 = vmatprep.subr.mxu0 0.0
        %3646 = vmatpush1.msra.mxu0 %v3622
        %3647 = vmatprep.subr.mxu0 0.0
        %3648 = vmatpush1.msra.mxu0 %v3623
        %3649 = vmatprep.subr.mxu0 0.0
        %3650 = vmatpush1.msra.mxu0 %v3624
        %3651 = vmatprep.subr.mxu0 0.0
        %3652 = vmatpush1.msra.mxu0 %v3625
        %3653 = vmatprep.subr.mxu0 0.0
        %3654 = vmatpush1.msra.mxu0 %v3626
        %3655 = vmatprep.subr.mxu0 0.0
        %3656 = vmatpush1.msra.mxu0 %v3627
        %3657 = vmatprep.subr.mxu0 0.0
        %3658 = vmatpush1.msra.mxu0 %v3628
        %3659 = vmatprep.subr.mxu0 0.0
        %3660 = vmatpush1.msra.mxu0 %v3629
        %3661 = vmatprep.subr.mxu0 0.0
        %3662 = vmatpush1.msra.mxu0 %v3630
        %3663 = vmatprep.subr.mxu0 0.0
        %3664 = vmatpush1.msra.mxu0 0.0
        %3665 = vmatprep.subr.mxu0 0.0
        %3666 = vmatpush1.msra.mxu0 0.0
        %3667 = vmatprep.subr.mxu0 0.0
        %3668 = vmatpush1.msra.mxu0 0.0
        %3669 = vmatprep.subr.mxu0 0.0
        %3670 = vmatpush1.msra.mxu0 0.0
        %3671 = vmatprep.subr.mxu0 0.0
        %3672 = vmatpush1.msra.mxu0 0.0
        %3673 = vmatprep.subr.mxu0 0.0
        %3674 = vmatpush1.msra.mxu0 0.0
        %3675 = vmatprep.subr.mxu0 0.0
        %3676 = vmatpush1.msra.mxu0 0.0
        %3677 = vmatprep.subr.mxu0 0.0
        %3678 = vmatpush1.msra.mxu0 0.0
        %3679 = vmatprep.subr.mxu0 0.0
        %3680 = vmatpush1.msra.mxu0 0.0
        %3681 = vmatprep.subr.mxu0 0.0
        %3682 = vmatpush1.msra.mxu0 0.0
        %3683 = vmatprep.subr.mxu0 0.0
        %3684 = vmatpush1.msra.mxu0 0.0
        %3685 = vmatprep.subr.mxu0 0.0
        %3686 = vmatpush1.msra.mxu0 0.0
        %3687 = vmatprep.subr.mxu0 0.0
        %3688 = vmatpush1.msra.mxu0 0.0
        %3689 = vmatprep.subr.mxu0 0.0
        %3690 = vmatpush1.msra.mxu0 0.0
        %3691 = vmatprep.subr.mxu0 0.0
        %3692 = vmatpush1.msra.mxu0 0.0
        %3693 = vmatprep.subr.mxu0 0.0
        %3694 = vmatpush1.msra.mxu0 0.0
        %3695 = vmatprep.mubr.f32.mxu0 0.0
        %3696 = vmatmul.mubr.f32.gmra.mrb[0].mxu0 %v3606
        %v3697 = vpop.f32.mrb[0].mxu0
        %v3698 = vadd.f32 0.0, %v3697
        %v3699 = vpop.f32.mrb[0].mxu0
        %3700 = vmatprep.mubr.f32.mxu0 0.0
        %3701 = vmatmul.mubr.f32.gmra.mrb[0].mxu0 %v3607
        %v3702 = vpop.f32.mrb[0].mxu0
        %v3703 = vadd.f32 0.0, %v3702
        %v3704 = vpop.f32.mrb[0].mxu0
        %3705 = vmatprep.mubr.f32.mxu0 0.0
        %3706 = vmatmul.mubr.f32.gmra.mrb[0].mxu0 %v3608
        %v3707 = vpop.f32.mrb[0].mxu0
        %v3708 = vadd.f32 0.0, %v3707
        %v3709 = vpop.f32.mrb[0].mxu0
        %3710 = vmatprep.mubr.f32.mxu0 0.0
        %3711 = vmatmul.mubr.f32.gmra.mrb[0].mxu0 %v3609
        %v3712 = vpop.f32.mrb[0].mxu0
        %v3713 = vadd.f32 0.0, %v3712
        %v3714 = vpop.f32.mrb[0].mxu0
        %3715 = vmatprep.mubr.f32.mxu0 0.0
        %3716 = vmatmul.mubr.f32.gmra.mrb[0].mxu0 %v3610
        %v3717 = vpop.f32.mrb[0].mxu0
        %v3718 = vadd.f32 0.0, %v3717
        %v3719 = vpop.f32.mrb[0].mxu0
        %3720 = vmatprep.mubr.f32.mxu0 0.0
        %3721 = vmatmul.mubr.f32.gmra.mrb[0].mxu0 %v3611
        %v3722 = vpop.f32.mrb[0].mxu0
        %v3723 = vadd.f32 0.0, %v3722
        %v3724 = vpop.f32.mrb[0].mxu0
        %3725 = vmatprep.mubr.f32.mxu0 0.0
        %3726 = vmatmul.mubr.f32.gmra.mrb[0].mxu0 %v3612
        %v3727 = vpop.f32.mrb[0].mxu0
        %v3728 = vadd.f32 0.0, %v3727
        %v3729 = vpop.f32.mrb[0].mxu0
        %3730 = vmatprep.mubr.f32.mxu0 0.0
        %3731 = vmatmul.mubr.f32.gmra.mrb[0].mxu0 %v3613
        %v3732 = vpop.f32.mrb[0].mxu0
        %v3733 = vadd.f32 0.0, %v3732
        %v3734 = vpop.f32.mrb[0].mxu0
        %3735 = vdwg.mxu0
        %v3736 = vadd.f32 %v3598, %v3698
        %v3737 = vadd.f32 %v3599, %v3703
        %v3738 = vadd.f32 %v3600, %v3708
        %v3739 = vadd.f32 %v3601, %v3713
        %v3740 = vadd.f32 %v3602, %v3718
        %v3741 = vadd.f32 %v3603, %v3723
        %v3742 = vadd.f32 %v3604, %v3728
        %v3743 = vadd.f32 %v3605, %v3733
        %v3744 = vld [vmem:[%s4] sm:$0x1]
        %v3746 = vlaneseq
        %v3747 = vshrl.u32 %v3746, 7
        %v3748 = vsub.s32 0, %v3747
        %v3749 = vrot.slane %v3744, %v3748
        %v3751 = vadd.f32 %v3736, %v3749
        %v3752 = vadd.f32 %v3737, %v3749
        %v3753 = vadd.f32 %v3738, %v3749
        %v3754 = vadd.f32 %v3739, %v3749
        %v3755 = vadd.f32 %v3740, %v3749
        %v3756 = vadd.f32 %v3741, %v3749
        %v3757 = vadd.f32 %v3742, %v3749
        %v3758 = vadd.f32 %v3743, %v3749
        %v3759 = vmax.f32 %v3751, 0.0
        %v3760 = vmax.f32 %v3752, 0.0
        %v3761 = vmax.f32 %v3753, 0.0
        %v3762 = vmax.f32 %v3754, 0.0
        %v3763 = vmax.f32 %v3755, 0.0
        %v3764 = vmax.f32 %v3756, 0.0
        %v3765 = vmax.f32 %v3757, 0.0
        %v3766 = vmax.f32 %v3758, 0.0
        %v3767 = vmax.f32 %v3759, %v3760
        %v3768 = vmax.f32 %v3761, %v3762
        %v3769 = vmax.f32 %v3763, %v3764
        %v3770 = vmax.f32 %v3765, %v3766
        %v3775 = vcombine.high %v3767, %v3767
        %v3777 = vunpack.c.l.s4 1983009808
        %v3778 = vunpack.c.0.s8 %v3777
        %v3779 = vlaneseq
        %v3780 = vshrl.u32 %v3779, 7
        %v3781 = vsub.s32 %v3778, %v3780
        %v3782 = vrot.slane %v3767, %v3781
        %v3784 = vunpack.c.l.s4 1983009808
        %v3785 = vunpack.c.0.s8 %v3784
        %v3786 = vlaneseq
        %v3787 = vshrl.u32 %v3786, 7
        %v3788 = vsub.s32 %v3785, %v3787
        %v3789 = vrot.slane %v3775, %v3788
        %v3790 = vcombine.high %v3782, %v3782
        %v3791 = vcombine.high %v3789, %v3789
        %v3792 = vcombine.high %v3768, %v3768
        %v3794 = vunpack.c.l.s4 1983009808
        %v3795 = vunpack.c.0.s8 %v3794
        %v3796 = vlaneseq
        %v3797 = vshrl.u32 %v3796, 7
        %v3798 = vsub.s32 %v3795, %v3797
        %v3799 = vrot.slane %v3768, %v3798
        %v3801 = vunpack.c.l.s4 1983009808
        %v3802 = vunpack.c.0.s8 %v3801
        %v3803 = vlaneseq
        %v3804 = vshrl.u32 %v3803, 7
        %v3805 = vsub.s32 %v3802, %v3804
        %v3806 = vrot.slane %v3792, %v3805
        %v3807 = vcombine.high %v3799, %v3799
        %v3808 = vcombine.high %v3806, %v3806
        %v3809 = vcombine.high %v3769, %v3769
        %v3811 = vunpack.c.l.s4 1983009808
        %v3812 = vunpack.c.0.s8 %v3811
        %v3813 = vlaneseq
        %v3814 = vshrl.u32 %v3813, 7
        %v3815 = vsub.s32 %v3812, %v3814
        %v3816 = vrot.slane %v3769, %v3815
        %v3818 = vunpack.c.l.s4 1983009808
        %v3819 = vunpack.c.0.s8 %v3818
        %v3820 = vlaneseq
        %v3821 = vshrl.u32 %v3820, 7
        %v3822 = vsub.s32 %v3819, %v3821
        %v3823 = vrot.slane %v3809, %v3822
        %v3824 = vcombine.high %v3816, %v3816
        %v3825 = vcombine.high %v3823, %v3823
        %v3826 = vcombine.high %v3770, %v3770
        %v3828 = vunpack.c.l.s4 1983009808
        %v3829 = vunpack.c.0.s8 %v3828
        %v3830 = vlaneseq
        %v3831 = vshrl.u32 %v3830, 7
        %v3832 = vsub.s32 %v3829, %v3831
        %v3833 = vrot.slane %v3770, %v3832
        %v3835 = vunpack.c.l.s4 1983009808
        %v3836 = vunpack.c.0.s8 %v3835
        %v3837 = vlaneseq
        %v3838 = vshrl.u32 %v3837, 7
        %v3839 = vsub.s32 %v3836, %v3838
        %v3840 = vrot.slane %v3826, %v3839
        %v3841 = vcombine.high %v3833, %v3833
        %v3842 = vcombine.high %v3840, %v3840
        %v3859 = vsel %vm1905, %v3782, -inf
        %v3860 = vrot.slane %v3859, 4
        %v3861 = vmax.f32 %v3859, %v3860
        %v3862 = vrot.slane %v3861, 2
        %v3863 = vmax.f32 %v3861, %v3862
        %v3864 = vrot.slane %v3863, 1
        %v3865 = vmax.f32 %v3863, %v3864
        %v3866 = vsel %vm1905, %v3790, -inf
        %v3867 = vrot.slane %v3866, 4
        %v3868 = vmax.f32 %v3866, %v3867
        %v3869 = vrot.slane %v3868, 2
        %v3870 = vmax.f32 %v3868, %v3869
        %v3871 = vrot.slane %v3870, 1
        %v3872 = vmax.f32 %v3870, %v3871
        %v3873 = vsel %vm1905, %v3789, -inf
        %v3874 = vrot.slane %v3873, 4
        %v3875 = vmax.f32 %v3873, %v3874
        %v3876 = vrot.slane %v3875, 2
        %v3877 = vmax.f32 %v3875, %v3876
        %v3878 = vrot.slane %v3877, 1
        %v3879 = vmax.f32 %v3877, %v3878
        %v3880 = vsel %vm1905, %v3791, -inf
        %v3881 = vrot.slane %v3880, 4
        %v3882 = vmax.f32 %v3880, %v3881
        %v3883 = vrot.slane %v3882, 2
        %v3884 = vmax.f32 %v3882, %v3883
        %v3885 = vrot.slane %v3884, 1
        %v3886 = vmax.f32 %v3884, %v3885
        %v3887 = vsel %vm1905, %v3799, -inf
        %v3888 = vrot.slane %v3887, 4
        %v3889 = vmax.f32 %v3887, %v3888
        %v3890 = vrot.slane %v3889, 2
        %v3891 = vmax.f32 %v3889, %v3890
        %v3892 = vrot.slane %v3891, 1
        %v3893 = vmax.f32 %v3891, %v3892
        %v3894 = vsel %vm1905, %v3807, -inf
        %v3895 = vrot.slane %v3894, 4
        %v3896 = vmax.f32 %v3894, %v3895
        %v3897 = vrot.slane %v3896, 2
        %v3898 = vmax.f32 %v3896, %v3897
        %v3899 = vrot.slane %v3898, 1
        %v3900 = vmax.f32 %v3898, %v3899
        %v3901 = vsel %vm1905, %v3806, -inf
        %v3902 = vrot.slane %v3901, 4
        %v3903 = vmax.f32 %v3901, %v3902
        %v3904 = vrot.slane %v3903, 2
        %v3905 = vmax.f32 %v3903, %v3904
        %v3906 = vrot.slane %v3905, 1
        %v3907 = vmax.f32 %v3905, %v3906
        %v3908 = vsel %vm1905, %v3808, -inf
        %v3909 = vrot.slane %v3908, 4
        %v3910 = vmax.f32 %v3908, %v3909
        %v3911 = vrot.slane %v3910, 2
        %v3912 = vmax.f32 %v3910, %v3911
        %v3913 = vrot.slane %v3912, 1
        %v3914 = vmax.f32 %v3912, %v3913
        %v3915 = vsel %vm1905, %v3816, -inf
        %v3916 = vrot.slane %v3915, 4
        %v3917 = vmax.f32 %v3915, %v3916
        %v3918 = vrot.slane %v3917, 2
        %v3919 = vmax.f32 %v3917, %v3918
        %v3920 = vrot.slane %v3919, 1
        %v3921 = vmax.f32 %v3919, %v3920
        %v3922 = vsel %vm1905, %v3824, -inf
        %v3923 = vrot.slane %v3922, 4
        %v3924 = vmax.f32 %v3922, %v3923
        %v3925 = vrot.slane %v3924, 2
        %v3926 = vmax.f32 %v3924, %v3925
        %v3927 = vrot.slane %v3926, 1
        %v3928 = vmax.f32 %v3926, %v3927
        %v3929 = vsel %vm1905, %v3823, -inf
        %v3930 = vrot.slane %v3929, 4
        %v3931 = vmax.f32 %v3929, %v3930
        %v3932 = vrot.slane %v3931, 2
        %v3933 = vmax.f32 %v3931, %v3932
        %v3934 = vrot.slane %v3933, 1
        %v3935 = vmax.f32 %v3933, %v3934
        %v3936 = vsel %vm1905, %v3825, -inf
        %v3937 = vrot.slane %v3936, 4
        %v3938 = vmax.f32 %v3936, %v3937
        %v3939 = vrot.slane %v3938, 2
        %v3940 = vmax.f32 %v3938, %v3939
        %v3941 = vrot.slane %v3940, 1
        %v3942 = vmax.f32 %v3940, %v3941
        %v3943 = vsel %vm1905, %v3833, -inf
        %v3944 = vrot.slane %v3943, 4
        %v3945 = vmax.f32 %v3943, %v3944
        %v3946 = vrot.slane %v3945, 2
        %v3947 = vmax.f32 %v3945, %v3946
        %v3948 = vrot.slane %v3947, 1
        %v3949 = vmax.f32 %v3947, %v3948
        %v3950 = vsel %vm1905, %v3841, -inf
        %v3951 = vrot.slane %v3950, 4
        %v3952 = vmax.f32 %v3950, %v3951
        %v3953 = vrot.slane %v3952, 2
        %v3954 = vmax.f32 %v3952, %v3953
        %v3955 = vrot.slane %v3954, 1
        %v3956 = vmax.f32 %v3954, %v3955
        %v3957 = vsel %vm1905, %v3840, -inf
        %v3958 = vrot.slane %v3957, 4
        %v3959 = vmax.f32 %v3957, %v3958
        %v3960 = vrot.slane %v3959, 2
        %v3961 = vmax.f32 %v3959, %v3960
        %v3962 = vrot.slane %v3961, 1
        %v3963 = vmax.f32 %v3961, %v3962
        %v3964 = vsel %vm1905, %v3842, -inf
        %v3965 = vrot.slane %v3964, 4
        %v3966 = vmax.f32 %v3964, %v3965
        %v3967 = vrot.slane %v3966, 2
        %v3968 = vmax.f32 %v3966, %v3967
        %v3969 = vrot.slane %v3968, 1
        %v3970 = vmax.f32 %v3968, %v3969
        %3971 = vst [vmem:[#allocation4] sm:$0x3f] 0.0
        %3972 = vst [vmem:[#allocation4 + $0x8] sm:$0x3f] 0.0
        %3973 = vst [vmem:[#allocation4 + $0x10] sm:$0x3f] 0.0
        %3974 = vst [vmem:[#allocation4 + $0x18] sm:$0x3f] 0.0
        %3975 = vst [vmem:[#allocation4 + $0x20] sm:$0x3f] 0.0
        %3976 = vst [vmem:[#allocation4 + $0x28] sm:$0x3f] 0.0
        %v3993 = vsel %vm2438, %v3872, %v3865
        %v3994 = vsel %vm2440, %v3879, %v3993
        %v3995 = vsel %vm2442, %v3886, %v3994
        %v3996 = vsel %vm2438, %v3900, %v3893
        %v3997 = vsel %vm2440, %v3907, %v3996
        %v3998 = vsel %vm2442, %v3914, %v3997
        %v3999 = vsel %vm2438, %v3928, %v3921
        %v4000 = vsel %vm2440, %v3935, %v3999
        %v4001 = vsel %vm2442, %v3942, %v4000
        %v4002 = vsel %vm2438, %v3956, %v3949
        %v4003 = vsel %vm2440, %v3963, %v4002
        %v4004 = vsel %vm2442, %v3970, %v4003
        %s4009 = scalar_lea.vmem [#allocation4], 8
        %4010 = vst [vmem:[%s4009 + $0x1] sm:$0xf] %v3995
        %4011 = vst [vmem:[%s4009 + $0x9] sm:$0xf] %v3998
        %4012 = vst [vmem:[%s4009 + $0x11] sm:$0xf] %v4001
        %4013 = vst [vmem:[%s4009 + $0x19] sm:$0xf] %v4004
        %v4014 = vld [vmem:[#allocation4] sm:$0xf]
        %v4015 = vld [vmem:[#allocation4 + $0x8] sm:$0xf]
        %v4016 = vld [vmem:[#allocation4 + $0x10] sm:$0xf]
        %v4017 = vld [vmem:[#allocation4 + $0x18] sm:$0xf]
        %v4018 = vld [vmem:[#allocation6] sm:$0xff]
        %v4019 = vld [vmem:[#allocation6 + $0x8] sm:$0xff]
        %v4020 = vld [vmem:[#allocation6 + $0x10] sm:$0xff]
        %v4021 = vld [vmem:[#allocation6 + $0x18] sm:$0xff]
        %v4022 = vld [vmem:[#allocation6 + $0x20] sm:$0xff]
        %v4023 = vld [vmem:[#allocation6 + $0x28] sm:$0xff]
        %v4024 = vld [vmem:[#allocation6 + $0x30] sm:$0xff]
        %v4025 = vld [vmem:[#allocation6 + $0x38] sm:$0xff]
        %v4026 = vld [vmem:[#allocation6 + $0x40] sm:$0xff]
        %v4027 = vld [vmem:[#allocation6 + $0x48] sm:$0xff]
        %v4028 = vld [vmem:[#allocation6 + $0x50] sm:$0xff]
        %v4029 = vld [vmem:[#allocation6 + $0x58] sm:$0xff]
        %v4030 = vld [vmem:[#allocation6 + $0x60] sm:$0xff]
        %v4031 = vld [vmem:[#allocation6 + $0x68] sm:$0xff]
        %v4032 = vld [vmem:[#allocation6 + $0x70] sm:$0xff]
        %v4033 = vld [vmem:[#allocation6 + $0x78] sm:$0xff]
        %v4034 = vld [vmem:[#allocation4 + $0x1] sm:$0xf]
        %v4035 = vld [vmem:[#allocation4 + $0x9] sm:$0xf]
        %v4036 = vld [vmem:[#allocation4 + $0x11] sm:$0xf]
        %v4037 = vld [vmem:[#allocation4 + $0x19] sm:$0xf]
        %v4038 = vld [vmem:[%s2550] sm:$0xff]
        %v4039 = vld [vmem:[%s2550 + $0x8] sm:$0xff]
        %v4040 = vld [vmem:[%s2550 + $0x10] sm:$0xff]
        %v4041 = vld [vmem:[%s2550 + $0x18] sm:$0xff]
        %v4042 = vld [vmem:[%s2550 + $0x20] sm:$0xff]
        %v4043 = vld [vmem:[%s2550 + $0x28] sm:$0xff]
        %v4044 = vld [vmem:[%s2550 + $0x30] sm:$0xff]
        %v4045 = vld [vmem:[%s2550 + $0x38] sm:$0xff]
        %v4046 = vld [vmem:[%s2550 + $0x40] sm:$0xff]
        %v4047 = vld [vmem:[%s2550 + $0x48] sm:$0xff]
        %v4048 = vld [vmem:[%s2550 + $0x50] sm:$0xff]
        %v4049 = vld [vmem:[%s2550 + $0x58] sm:$0xff]
        %v4050 = vld [vmem:[%s2550 + $0x60] sm:$0xff]
        %v4051 = vld [vmem:[%s2550 + $0x68] sm:$0xff]
        %v4052 = vld [vmem:[%s2550 + $0x70] sm:$0xff]
        %v4053 = vld [vmem:[%s2550 + $0x78] sm:$0xff]
        %v4058 = vcombine.low %v4034, %v4035
        %v4059 = vcombine.low %v4036, %v4037
        %4062 = vmatprep.subr.mxu0 0.0
        %4063 = vmatpush1.msra.mxu0 %v4038
        %4064 = vmatprep.subr.mxu0 0.0
        %4065 = vmatpush1.msra.mxu0 %v4039
        %4066 = vmatprep.subr.mxu0 0.0
        %4067 = vmatpush1.msra.mxu0 %v4040
        %4068 = vmatprep.subr.mxu0 0.0
        %4069 = vmatpush1.msra.mxu0 %v4041
        %4070 = vmatprep.subr.mxu0 0.0
        %4071 = vmatpush1.msra.mxu0 %v4042
        %4072 = vmatprep.subr.mxu0 0.0
        %4073 = vmatpush1.msra.mxu0 %v4043
        %4074 = vmatprep.subr.mxu0 0.0
        %4075 = vmatpush1.msra.mxu0 %v4044
        %4076 = vmatprep.subr.mxu0 0.0
        %4077 = vmatpush1.msra.mxu0 %v4045
        %4078 = vmatprep.subr.mxu0 0.0
        %4079 = vmatpush1.msra.mxu0 %v4046
        %4080 = vmatprep.subr.mxu0 0.0
        %4081 = vmatpush1.msra.mxu0 %v4047
        %4082 = vmatprep.subr.mxu0 0.0
        %4083 = vmatpush1.msra.mxu0 %v4048
        %4084 = vmatprep.subr.mxu0 0.0
        %4085 = vmatpush1.msra.mxu0 %v4049
        %4086 = vmatprep.subr.mxu0 0.0
        %4087 = vmatpush1.msra.mxu0 %v4050
        %4088 = vmatprep.subr.mxu0 0.0
        %4089 = vmatpush1.msra.mxu0 %v4051
        %4090 = vmatprep.subr.mxu0 0.0
        %4091 = vmatpush1.msra.mxu0 %v4052
        %4092 = vmatprep.subr.mxu0 0.0
        %4093 = vmatpush1.msra.mxu0 %v4053
        %4094 = vmatprep.subr.mxu0 0.0
        %4095 = vmatpush1.msra.mxu0 0.0
        %4096 = vmatprep.subr.mxu0 0.0
        %4097 = vmatpush1.msra.mxu0 0.0
        %4098 = vmatprep.subr.mxu0 0.0
        %4099 = vmatpush1.msra.mxu0 0.0
        %4100 = vmatprep.subr.mxu0 0.0
        %4101 = vmatpush1.msra.mxu0 0.0
        %4102 = vmatprep.subr.mxu0 0.0
        %4103 = vmatpush1.msra.mxu0 0.0
        %4104 = vmatprep.subr.mxu0 0.0
        %4105 = vmatpush1.msra.mxu0 0.0
        %4106 = vmatprep.subr.mxu0 0.0
        %4107 = vmatpush1.msra.mxu0 0.0
        %4108 = vmatprep.subr.mxu0 0.0
        %4109 = vmatpush1.msra.mxu0 0.0
        %4110 = vmatprep.subr.mxu0 0.0
        %4111 = vmatpush1.msra.mxu0 0.0
        %4112 = vmatprep.subr.mxu0 0.0
        %4113 = vmatpush1.msra.mxu0 0.0
        %4114 = vmatprep.subr.mxu0 0.0
        %4115 = vmatpush1.msra.mxu0 0.0
        %4116 = vmatprep.subr.mxu0 0.0
        %4117 = vmatpush1.msra.mxu0 0.0
        %4118 = vmatprep.subr.mxu0 0.0
        %4119 = vmatpush1.msra.mxu0 0.0
        %4120 = vmatprep.subr.mxu0 0.0
        %4121 = vmatpush1.msra.mxu0 0.0
        %4122 = vmatprep.subr.mxu0 0.0
        %4123 = vmatpush1.msra.mxu0 0.0
        %4124 = vmatprep.subr.mxu0 0.0
        %4125 = vmatpush1.msra.mxu0 0.0
        %4126 = vmatprep.mubr.f32.mxu0 0.0
        %4127 = vmatmul.mubr.f32.gmra.mrb[0].mxu0 %v4058
        %v4128 = vpop.f32.mrb[0].mxu0
        %v4129 = vadd.f32 0.0, %v4128
        %v4130 = vpop.f32.mrb[0].mxu0
        %4131 = vmatprep.mubr.f32.mxu0 0.0
        %4132 = vmatmul.mubr.f32.gmra.mrb[0].mxu0 %v4059
        %v4133 = vpop.f32.mrb[0].mxu0
        %v4134 = vadd.f32 0.0, %v4133
        %v4135 = vpop.f32.mrb[0].mxu0
        %4136 = vdwg.mxu0
        %v4141 = vcombine.low %v4014, %v4015
        %v4142 = vcombine.low %v4016, %v4017
        %4145 = vmatprep.subr.mxu0 0.0
        %4146 = vmatpush1.msra.mxu0 %v4018
        %4147 = vmatprep.subr.mxu0 0.0
        %4148 = vmatpush1.msra.mxu0 %v4019
        %4149 = vmatprep.subr.mxu0 0.0
        %4150 = vmatpush1.msra.mxu0 %v4020
        %4151 = vmatprep.subr.mxu0 0.0
        %4152 = vmatpush1.msra.mxu0 %v4021
        %4153 = vmatprep.subr.mxu0 0.0
        %4154 = vmatpush1.msra.mxu0 %v4022
        %4155 = vmatprep.subr.mxu0 0.0
        %4156 = vmatpush1.msra.mxu0 %v4023
        %4157 = vmatprep.subr.mxu0 0.0
        %4158 = vmatpush1.msra.mxu0 %v4024
        %4159 = vmatprep.subr.mxu0 0.0
        %4160 = vmatpush1.msra.mxu0 %v4025
        %4161 = vmatprep.subr.mxu0 0.0
        %4162 = vmatpush1.msra.mxu0 %v4026
        %4163 = vmatprep.subr.mxu0 0.0
        %4164 = vmatpush1.msra.mxu0 %v4027
        %4165 = vmatprep.subr.mxu0 0.0
        %4166 = vmatpush1.msra.mxu0 %v4028
        %4167 = vmatprep.subr.mxu0 0.0
        %4168 = vmatpush1.msra.mxu0 %v4029
        %4169 = vmatprep.subr.mxu0 0.0
        %4170 = vmatpush1.msra.mxu0 %v4030
        %4171 = vmatprep.subr.mxu0 0.0
        %4172 = vmatpush1.msra.mxu0 %v4031
        %4173 = vmatprep.subr.mxu0 0.0
        %4174 = vmatpush1.msra.mxu0 %v4032
        %4175 = vmatprep.subr.mxu0 0.0
        %4176 = vmatpush1.msra.mxu0 %v4033
        %4177 = vmatprep.subr.mxu0 0.0
        %4178 = vmatpush1.msra.mxu0 0.0
        %4179 = vmatprep.subr.mxu0 0.0
        %4180 = vmatpush1.msra.mxu0 0.0
        %4181 = vmatprep.subr.mxu0 0.0
        %4182 = vmatpush1.msra.mxu0 0.0
        %4183 = vmatprep.subr.mxu0 0.0
        %4184 = vmatpush1.msra.mxu0 0.0
        %4185 = vmatprep.subr.mxu0 0.0
        %4186 = vmatpush1.msra.mxu0 0.0
        %4187 = vmatprep.subr.mxu0 0.0
        %4188 = vmatpush1.msra.mxu0 0.0
        %4189 = vmatprep.subr.mxu0 0.0
        %4190 = vmatpush1.msra.mxu0 0.0
        %4191 = vmatprep.subr.mxu0 0.0
        %4192 = vmatpush1.msra.mxu0 0.0
        %4193 = vmatprep.subr.mxu0 0.0
        %4194 = vmatpush1.msra.mxu0 0.0
        %4195 = vmatprep.subr.mxu0 0.0
        %4196 = vmatpush1.msra.mxu0 0.0
        %4197 = vmatprep.subr.mxu0 0.0
        %4198 = vmatpush1.msra.mxu0 0.0
        %4199 = vmatprep.subr.mxu0 0.0
        %4200 = vmatpush1.msra.mxu0 0.0
        %4201 = vmatprep.subr.mxu0 0.0
        %4202 = vmatpush1.msra.mxu0 0.0
        %4203 = vmatprep.subr.mxu0 0.0
        %4204 = vmatpush1.msra.mxu0 0.0
        %4205 = vmatprep.subr.mxu0 0.0
        %4206 = vmatpush1.msra.mxu0 0.0
        %4207 = vmatprep.subr.mxu0 0.0
        %4208 = vmatpush1.msra.mxu0 0.0
        %4209 = vmatprep.mubr.f32.mxu0 0.0
        %4210 = vmatmul.mubr.f32.gmra.mrb[0].mxu0 %v4141
        %v4211 = vpop.f32.mrb[0].mxu0
        %v4212 = vadd.f32 %v4129, %v4211
        %v4213 = vpop.f32.mrb[0].mxu0
        %4214 = vmatprep.mubr.f32.mxu0 0.0
        %4215 = vmatmul.mubr.f32.gmra.mrb[0].mxu0 %v4142
        %v4216 = vpop.f32.mrb[0].mxu0
        %v4217 = vadd.f32 %v4134, %v4216
        %v4218 = vpop.f32.mrb[0].mxu0
        %4219 = vdwg.mxu0
        %v4220 = vld [vmem:[#allocation4 + $0x2] sm:$0xf]
        %v4221 = vld [vmem:[#allocation4 + $0xa] sm:$0xf]
        %v4222 = vld [vmem:[#allocation4 + $0x12] sm:$0xf]
        %v4223 = vld [vmem:[#allocation4 + $0x1a] sm:$0xf]
        %v4224 = vld [vmem:[%s2785] sm:$0xff]
        %v4225 = vld [vmem:[%s2785 + $0x8] sm:$0xff]
        %v4226 = vld [vmem:[%s2785 + $0x10] sm:$0xff]
        %v4227 = vld [vmem:[%s2785 + $0x18] sm:$0xff]
        %v4228 = vld [vmem:[%s2785 + $0x20] sm:$0xff]
        %v4229 = vld [vmem:[%s2785 + $0x28] sm:$0xff]
        %v4230 = vld [vmem:[%s2785 + $0x30] sm:$0xff]
        %v4231 = vld [vmem:[%s2785 + $0x38] sm:$0xff]
        %v4232 = vld [vmem:[%s2785 + $0x40] sm:$0xff]
        %v4233 = vld [vmem:[%s2785 + $0x48] sm:$0xff]
        %v4234 = vld [vmem:[%s2785 + $0x50] sm:$0xff]
        %v4235 = vld [vmem:[%s2785 + $0x58] sm:$0xff]
        %v4236 = vld [vmem:[%s2785 + $0x60] sm:$0xff]
        %v4237 = vld [vmem:[%s2785 + $0x68] sm:$0xff]
        %v4238 = vld [vmem:[%s2785 + $0x70] sm:$0xff]
        %v4239 = vld [vmem:[%s2785 + $0x78] sm:$0xff]
        %v4244 = vcombine.low %v4220, %v4221
        %v4245 = vcombine.low %v4222, %v4223
        %4248 = vmatprep.subr.mxu0 0.0
        %4249 = vmatpush1.msra.mxu0 %v4224
        %4250 = vmatprep.subr.mxu0 0.0
        %4251 = vmatpush1.msra.mxu0 %v4225
        %4252 = vmatprep.subr.mxu0 0.0
        %4253 = vmatpush1.msra.mxu0 %v4226
        %4254 = vmatprep.subr.mxu0 0.0
        %4255 = vmatpush1.msra.mxu0 %v4227
        %4256 = vmatprep.subr.mxu0 0.0
        %4257 = vmatpush1.msra.mxu0 %v4228
        %4258 = vmatprep.subr.mxu0 0.0
        %4259 = vmatpush1.msra.mxu0 %v4229
        %4260 = vmatprep.subr.mxu0 0.0
        %4261 = vmatpush1.msra.mxu0 %v4230
        %4262 = vmatprep.subr.mxu0 0.0
        %4263 = vmatpush1.msra.mxu0 %v4231
        %4264 = vmatprep.subr.mxu0 0.0
        %4265 = vmatpush1.msra.mxu0 %v4232
        %4266 = vmatprep.subr.mxu0 0.0
        %4267 = vmatpush1.msra.mxu0 %v4233
        %4268 = vmatprep.subr.mxu0 0.0
        %4269 = vmatpush1.msra.mxu0 %v4234
        %4270 = vmatprep.subr.mxu0 0.0
        %4271 = vmatpush1.msra.mxu0 %v4235
        %4272 = vmatprep.subr.mxu0 0.0
        %4273 = vmatpush1.msra.mxu0 %v4236
        %4274 = vmatprep.subr.mxu0 0.0
        %4275 = vmatpush1.msra.mxu0 %v4237
        %4276 = vmatprep.subr.mxu0 0.0
        %4277 = vmatpush1.msra.mxu0 %v4238
        %4278 = vmatprep.subr.mxu0 0.0
        %4279 = vmatpush1.msra.mxu0 %v4239
        %4280 = vmatprep.subr.mxu0 0.0
        %4281 = vmatpush1.msra.mxu0 0.0
        %4282 = vmatprep.subr.mxu0 0.0
        %4283 = vmatpush1.msra.mxu0 0.0
        %4284 = vmatprep.subr.mxu0 0.0
        %4285 = vmatpush1.msra.mxu0 0.0
        %4286 = vmatprep.subr.mxu0 0.0
        %4287 = vmatpush1.msra.mxu0 0.0
        %4288 = vmatprep.subr.mxu0 0.0
        %4289 = vmatpush1.msra.mxu0 0.0
        %4290 = vmatprep.subr.mxu0 0.0
        %4291 = vmatpush1.msra.mxu0 0.0
        %4292 = vmatprep.subr.mxu0 0.0
        %4293 = vmatpush1.msra.mxu0 0.0
        %4294 = vmatprep.subr.mxu0 0.0
        %4295 = vmatpush1.msra.mxu0 0.0
        %4296 = vmatprep.subr.mxu0 0.0
        %4297 = vmatpush1.msra.mxu0 0.0
        %4298 = vmatprep.subr.mxu0 0.0
        %4299 = vmatpush1.msra.mxu0 0.0
        %4300 = vmatprep.subr.mxu0 0.0
        %4301 = vmatpush1.msra.mxu0 0.0
        %4302 = vmatprep.subr.mxu0 0.0
        %4303 = vmatpush1.msra.mxu0 0.0
        %4304 = vmatprep.subr.mxu0 0.0
        %4305 = vmatpush1.msra.mxu0 0.0
        %4306 = vmatprep.subr.mxu0 0.0
        %4307 = vmatpush1.msra.mxu0 0.0
        %4308 = vmatprep.subr.mxu0 0.0
        %4309 = vmatpush1.msra.mxu0 0.0
        %4310 = vmatprep.subr.mxu0 0.0
        %4311 = vmatpush1.msra.mxu0 0.0
        %4312 = vmatprep.mubr.f32.mxu0 0.0
        %4313 = vmatmul.mubr.f32.gmra.mrb[0].mxu0 %v4244
        %v4314 = vpop.f32.mrb[0].mxu0
        %v4315 = vadd.f32 0.0, %v4314
        %v4316 = vpop.f32.mrb[0].mxu0
        %4317 = vmatprep.mubr.f32.mxu0 0.0
        %4318 = vmatmul.mubr.f32.gmra.mrb[0].mxu0 %v4245
        %v4319 = vpop.f32.mrb[0].mxu0
        %v4320 = vadd.f32 0.0, %v4319
        %v4321 = vpop.f32.mrb[0].mxu0
        %4322 = vdwg.mxu0
        %v4323 = vadd.f32 %v4212, %v4315
        %v4324 = vadd.f32 %v4217, %v4320
        %v4325 = vld [vmem:[%s4009] sm:$0xf]
        %v4326 = vld [vmem:[%s4009 + $0x8] sm:$0xf]
        %v4327 = vld [vmem:[%s4009 + $0x10] sm:$0xf]
        %v4328 = vld [vmem:[%s4009 + $0x18] sm:$0xf]
        %v4329 = vld [vmem:[%s2923] sm:$0xff]
        %v4330 = vld [vmem:[%s2923 + $0x8] sm:$0xff]
        %v4331 = vld [vmem:[%s2923 + $0x10] sm:$0xff]
        %v4332 = vld [vmem:[%s2923 + $0x18] sm:$0xff]
        %v4333 = vld [vmem:[%s2923 + $0x20] sm:$0xff]
        %v4334 = vld [vmem:[%s2923 + $0x28] sm:$0xff]
        %v4335 = vld [vmem:[%s2923 + $0x30] sm:$0xff]
        %v4336 = vld [vmem:[%s2923 + $0x38] sm:$0xff]
        %v4337 = vld [vmem:[%s2923 + $0x40] sm:$0xff]
        %v4338 = vld [vmem:[%s2923 + $0x48] sm:$0xff]
        %v4339 = vld [vmem:[%s2923 + $0x50] sm:$0xff]
        %v4340 = vld [vmem:[%s2923 + $0x58] sm:$0xff]
        %v4341 = vld [vmem:[%s2923 + $0x60] sm:$0xff]
        %v4342 = vld [vmem:[%s2923 + $0x68] sm:$0xff]
        %v4343 = vld [vmem:[%s2923 + $0x70] sm:$0xff]
        %v4344 = vld [vmem:[%s2923 + $0x78] sm:$0xff]
        %v4349 = vcombine.low %v4325, %v4326
        %v4350 = vcombine.low %v4327, %v4328
        %4353 = vmatprep.subr.mxu0 0.0
        %4354 = vmatpush1.msra.mxu0 %v4329
        %4355 = vmatprep.subr.mxu0 0.0
        %4356 = vmatpush1.msra.mxu0 %v4330
        %4357 = vmatprep.subr.mxu0 0.0
        %4358 = vmatpush1.msra.mxu0 %v4331
        %4359 = vmatprep.subr.mxu0 0.0
        %4360 = vmatpush1.msra.mxu0 %v4332
        %4361 = vmatprep.subr.mxu0 0.0
        %4362 = vmatpush1.msra.mxu0 %v4333
        %4363 = vmatprep.subr.mxu0 0.0
        %4364 = vmatpush1.msra.mxu0 %v4334
        %4365 = vmatprep.subr.mxu0 0.0
        %4366 = vmatpush1.msra.mxu0 %v4335
        %4367 = vmatprep.subr.mxu0 0.0
        %4368 = vmatpush1.msra.mxu0 %v4336
        %4369 = vmatprep.subr.mxu0 0.0
        %4370 = vmatpush1.msra.mxu0 %v4337
        %4371 = vmatprep.subr.mxu0 0.0
        %4372 = vmatpush1.msra.mxu0 %v4338
        %4373 = vmatprep.subr.mxu0 0.0
        %4374 = vmatpush1.msra.mxu0 %v4339
        %4375 = vmatprep.subr.mxu0 0.0
        %4376 = vmatpush1.msra.mxu0 %v4340
        %4377 = vmatprep.subr.mxu0 0.0
        %4378 = vmatpush1.msra.mxu0 %v4341
        %4379 = vmatprep.subr.mxu0 0.0
        %4380 = vmatpush1.msra.mxu0 %v4342
        %4381 = vmatprep.subr.mxu0 0.0
        %4382 = vmatpush1.msra.mxu0 %v4343
        %4383 = vmatprep.subr.mxu0 0.0
        %4384 = vmatpush1.msra.mxu0 %v4344
        %4385 = vmatprep.subr.mxu0 0.0
        %4386 = vmatpush1.msra.mxu0 0.0
        %4387 = vmatprep.subr.mxu0 0.0
        %4388 = vmatpush1.msra.mxu0 0.0
        %4389 = vmatprep.subr.mxu0 0.0
        %4390 = vmatpush1.msra.mxu0 0.0
        %4391 = vmatprep.subr.mxu0 0.0
        %4392 = vmatpush1.msra.mxu0 0.0
        %4393 = vmatprep.subr.mxu0 0.0
        %4394 = vmatpush1.msra.mxu0 0.0
        %4395 = vmatprep.subr.mxu0 0.0
        %4396 = vmatpush1.msra.mxu0 0.0
        %4397 = vmatprep.subr.mxu0 0.0
        %4398 = vmatpush1.msra.mxu0 0.0
        %4399 = vmatprep.subr.mxu0 0.0
        %4400 = vmatpush1.msra.mxu0 0.0
        %4401 = vmatprep.subr.mxu0 0.0
        %4402 = vmatpush1.msra.mxu0 0.0
        %4403 = vmatprep.subr.mxu0 0.0
        %4404 = vmatpush1.msra.mxu0 0.0
        %4405 = vmatprep.subr.mxu0 0.0
        %4406 = vmatpush1.msra.mxu0 0.0
        %4407 = vmatprep.subr.mxu0 0.0
        %4408 = vmatpush1.msra.mxu0 0.0
        %4409 = vmatprep.subr.mxu0 0.0
        %4410 = vmatpush1.msra.mxu0 0.0
        %4411 = vmatprep.subr.mxu0 0.0
        %4412 = vmatpush1.msra.mxu0 0.0
        %4413 = vmatprep.subr.mxu0 0.0
        %4414 = vmatpush1.msra.mxu0 0.0
        %4415 = vmatprep.subr.mxu0 0.0
        %4416 = vmatpush1.msra.mxu0 0.0
        %4417 = vmatprep.mubr.f32.mxu0 0.0
        %4418 = vmatmul.mubr.f32.gmra.mrb[0].mxu0 %v4349
        %v4419 = vpop.f32.mrb[0].mxu0
        %v4420 = vadd.f32 0.0, %v4419
        %v4421 = vpop.f32.mrb[0].mxu0
        %4422 = vmatprep.mubr.f32.mxu0 0.0
        %4423 = vmatmul.mubr.f32.gmra.mrb[0].mxu0 %v4350
        %v4424 = vpop.f32.mrb[0].mxu0
        %v4425 = vadd.f32 0.0, %v4424
        %v4426 = vpop.f32.mrb[0].mxu0
        %4427 = vdwg.mxu0
        %v4428 = vadd.f32 %v4323, %v4420
        %v4429 = vadd.f32 %v4324, %v4425
        %v4430 = vld [vmem:[%s4009 + $0x1] sm:$0xf]
        %v4431 = vld [vmem:[%s4009 + $0x9] sm:$0xf]
        %v4432 = vld [vmem:[%s4009 + $0x11] sm:$0xf]
        %v4433 = vld [vmem:[%s4009 + $0x19] sm:$0xf]
        %v4434 = vld [vmem:[%s3061] sm:$0xff]
        %v4435 = vld [vmem:[%s3061 + $0x8] sm:$0xff]
        %v4436 = vld [vmem:[%s3061 + $0x10] sm:$0xff]
        %v4437 = vld [vmem:[%s3061 + $0x18] sm:$0xff]
        %v4438 = vld [vmem:[%s3061 + $0x20] sm:$0xff]
        %v4439 = vld [vmem:[%s3061 + $0x28] sm:$0xff]
        %v4440 = vld [vmem:[%s3061 + $0x30] sm:$0xff]
        %v4441 = vld [vmem:[%s3061 + $0x38] sm:$0xff]
        %v4442 = vld [vmem:[%s3061 + $0x40] sm:$0xff]
        %v4443 = vld [vmem:[%s3061 + $0x48] sm:$0xff]
        %v4444 = vld [vmem:[%s3061 + $0x50] sm:$0xff]
        %v4445 = vld [vmem:[%s3061 + $0x58] sm:$0xff]
        %v4446 = vld [vmem:[%s3061 + $0x60] sm:$0xff]
        %v4447 = vld [vmem:[%s3061 + $0x68] sm:$0xff]
        %v4448 = vld [vmem:[%s3061 + $0x70] sm:$0xff]
        %v4449 = vld [vmem:[%s3061 + $0x78] sm:$0xff]
        %v4454 = vcombine.low %v4430, %v4431
        %v4455 = vcombine.low %v4432, %v4433
        %4458 = vmatprep.subr.mxu0 0.0
        %4459 = vmatpush1.msra.mxu0 %v4434
        %4460 = vmatprep.subr.mxu0 0.0
        %4461 = vmatpush1.msra.mxu0 %v4435
        %4462 = vmatprep.subr.mxu0 0.0
        %4463 = vmatpush1.msra.mxu0 %v4436
        %4464 = vmatprep.subr.mxu0 0.0
        %4465 = vmatpush1.msra.mxu0 %v4437
        %4466 = vmatprep.subr.mxu0 0.0
        %4467 = vmatpush1.msra.mxu0 %v4438
        %4468 = vmatprep.subr.mxu0 0.0
        %4469 = vmatpush1.msra.mxu0 %v4439
        %4470 = vmatprep.subr.mxu0 0.0
        %4471 = vmatpush1.msra.mxu0 %v4440
        %4472 = vmatprep.subr.mxu0 0.0
        %4473 = vmatpush1.msra.mxu0 %v4441
        %4474 = vmatprep.subr.mxu0 0.0
        %4475 = vmatpush1.msra.mxu0 %v4442
        %4476 = vmatprep.subr.mxu0 0.0
        %4477 = vmatpush1.msra.mxu0 %v4443
        %4478 = vmatprep.subr.mxu0 0.0
        %4479 = vmatpush1.msra.mxu0 %v4444
        %4480 = vmatprep.subr.mxu0 0.0
        %4481 = vmatpush1.msra.mxu0 %v4445
        %4482 = vmatprep.subr.mxu0 0.0
        %4483 = vmatpush1.msra.mxu0 %v4446
        %4484 = vmatprep.subr.mxu0 0.0
        %4485 = vmatpush1.msra.mxu0 %v4447
        %4486 = vmatprep.subr.mxu0 0.0
        %4487 = vmatpush1.msra.mxu0 %v4448
        %4488 = vmatprep.subr.mxu0 0.0
        %4489 = vmatpush1.msra.mxu0 %v4449
        %4490 = vmatprep.subr.mxu0 0.0
        %4491 = vmatpush1.msra.mxu0 0.0
        %4492 = vmatprep.subr.mxu0 0.0
        %4493 = vmatpush1.msra.mxu0 0.0
        %4494 = vmatprep.subr.mxu0 0.0
        %4495 = vmatpush1.msra.mxu0 0.0
        %4496 = vmatprep.subr.mxu0 0.0
        %4497 = vmatpush1.msra.mxu0 0.0
        %4498 = vmatprep.subr.mxu0 0.0
        %4499 = vmatpush1.msra.mxu0 0.0
        %4500 = vmatprep.subr.mxu0 0.0
        %4501 = vmatpush1.msra.mxu0 0.0
        %4502 = vmatprep.subr.mxu0 0.0
        %4503 = vmatpush1.msra.mxu0 0.0
        %4504 = vmatprep.subr.mxu0 0.0
        %4505 = vmatpush1.msra.mxu0 0.0
        %4506 = vmatprep.subr.mxu0 0.0
        %4507 = vmatpush1.msra.mxu0 0.0
        %4508 = vmatprep.subr.mxu0 0.0
        %4509 = vmatpush1.msra.mxu0 0.0
        %4510 = vmatprep.subr.mxu0 0.0
        %4511 = vmatpush1.msra.mxu0 0.0
        %4512 = vmatprep.subr.mxu0 0.0
        %4513 = vmatpush1.msra.mxu0 0.0
        %4514 = vmatprep.subr.mxu0 0.0
        %4515 = vmatpush1.msra.mxu0 0.0
        %4516 = vmatprep.subr.mxu0 0.0
        %4517 = vmatpush1.msra.mxu0 0.0
        %4518 = vmatprep.subr.mxu0 0.0
        %4519 = vmatpush1.msra.mxu0 0.0
        %4520 = vmatprep.subr.mxu0 0.0
        %4521 = vmatpush1.msra.mxu0 0.0
        %4522 = vmatprep.mubr.f32.mxu0 0.0
        %4523 = vmatmul.mubr.f32.gmra.mrb[0].mxu0 %v4454
        %v4524 = vpop.f32.mrb[0].mxu0
        %v4525 = vadd.f32 0.0, %v4524
        %v4526 = vpop.f32.mrb[0].mxu0
        %4527 = vmatprep.mubr.f32.mxu0 0.0
        %4528 = vmatmul.mubr.f32.gmra.mrb[0].mxu0 %v4455
        %v4529 = vpop.f32.mrb[0].mxu0
        %v4530 = vadd.f32 0.0, %v4529
        %v4531 = vpop.f32.mrb[0].mxu0
        %4532 = vdwg.mxu0
        %v4533 = vadd.f32 %v4428, %v4525
        %v4534 = vadd.f32 %v4429, %v4530
        %v4535 = vld [vmem:[%s4009 + $0x2] sm:$0xf]
        %v4536 = vld [vmem:[%s4009 + $0xa] sm:$0xf]
        %v4537 = vld [vmem:[%s4009 + $0x12] sm:$0xf]
        %v4538 = vld [vmem:[%s4009 + $0x1a] sm:$0xf]
        %v4539 = vld [vmem:[%s3199] sm:$0xff]
        %v4540 = vld [vmem:[%s3199 + $0x8] sm:$0xff]
        %v4541 = vld [vmem:[%s3199 + $0x10] sm:$0xff]
        %v4542 = vld [vmem:[%s3199 + $0x18] sm:$0xff]
        %v4543 = vld [vmem:[%s3199 + $0x20] sm:$0xff]
        %v4544 = vld [vmem:[%s3199 + $0x28] sm:$0xff]
        %v4545 = vld [vmem:[%s3199 + $0x30] sm:$0xff]
        %v4546 = vld [vmem:[%s3199 + $0x38] sm:$0xff]
        %v4547 = vld [vmem:[%s3199 + $0x40] sm:$0xff]
        %v4548 = vld [vmem:[%s3199 + $0x48] sm:$0xff]
        %v4549 = vld [vmem:[%s3199 + $0x50] sm:$0xff]
        %v4550 = vld [vmem:[%s3199 + $0x58] sm:$0xff]
        %v4551 = vld [vmem:[%s3199 + $0x60] sm:$0xff]
        %v4552 = vld [vmem:[%s3199 + $0x68] sm:$0xff]
        %v4553 = vld [vmem:[%s3199 + $0x70] sm:$0xff]
        %v4554 = vld [vmem:[%s3199 + $0x78] sm:$0xff]
        %v4559 = vcombine.low %v4535, %v4536
        %v4560 = vcombine.low %v4537, %v4538
        %4563 = vmatprep.subr.mxu0 0.0
        %4564 = vmatpush1.msra.mxu0 %v4539
        %4565 = vmatprep.subr.mxu0 0.0
        %4566 = vmatpush1.msra.mxu0 %v4540
        %4567 = vmatprep.subr.mxu0 0.0
        %4568 = vmatpush1.msra.mxu0 %v4541
        %4569 = vmatprep.subr.mxu0 0.0
        %4570 = vmatpush1.msra.mxu0 %v4542
        %4571 = vmatprep.subr.mxu0 0.0
        %4572 = vmatpush1.msra.mxu0 %v4543
        %4573 = vmatprep.subr.mxu0 0.0
        %4574 = vmatpush1.msra.mxu0 %v4544
        %4575 = vmatprep.subr.mxu0 0.0
        %4576 = vmatpush1.msra.mxu0 %v4545
        %4577 = vmatprep.subr.mxu0 0.0
        %4578 = vmatpush1.msra.mxu0 %v4546
        %4579 = vmatprep.subr.mxu0 0.0
        %4580 = vmatpush1.msra.mxu0 %v4547
        %4581 = vmatprep.subr.mxu0 0.0
        %4582 = vmatpush1.msra.mxu0 %v4548
        %4583 = vmatprep.subr.mxu0 0.0
        %4584 = vmatpush1.msra.mxu0 %v4549
        %4585 = vmatprep.subr.mxu0 0.0
        %4586 = vmatpush1.msra.mxu0 %v4550
        %4587 = vmatprep.subr.mxu0 0.0
        %4588 = vmatpush1.msra.mxu0 %v4551
        %4589 = vmatprep.subr.mxu0 0.0
        %4590 = vmatpush1.msra.mxu0 %v4552
        %4591 = vmatprep.subr.mxu0 0.0
        %4592 = vmatpush1.msra.mxu0 %v4553
        %4593 = vmatprep.subr.mxu0 0.0
        %4594 = vmatpush1.msra.mxu0 %v4554
        %4595 = vmatprep.subr.mxu0 0.0
        %4596 = vmatpush1.msra.mxu0 0.0
        %4597 = vmatprep.subr.mxu0 0.0
        %4598 = vmatpush1.msra.mxu0 0.0
        %4599 = vmatprep.subr.mxu0 0.0
        %4600 = vmatpush1.msra.mxu0 0.0
        %4601 = vmatprep.subr.mxu0 0.0
        %4602 = vmatpush1.msra.mxu0 0.0
        %4603 = vmatprep.subr.mxu0 0.0
        %4604 = vmatpush1.msra.mxu0 0.0
        %4605 = vmatprep.subr.mxu0 0.0
        %4606 = vmatpush1.msra.mxu0 0.0
        %4607 = vmatprep.subr.mxu0 0.0
        %4608 = vmatpush1.msra.mxu0 0.0
        %4609 = vmatprep.subr.mxu0 0.0
        %4610 = vmatpush1.msra.mxu0 0.0
        %4611 = vmatprep.subr.mxu0 0.0
        %4612 = vmatpush1.msra.mxu0 0.0
        %4613 = vmatprep.subr.mxu0 0.0
        %4614 = vmatpush1.msra.mxu0 0.0
        %4615 = vmatprep.subr.mxu0 0.0
        %4616 = vmatpush1.msra.mxu0 0.0
        %4617 = vmatprep.subr.mxu0 0.0
        %4618 = vmatpush1.msra.mxu0 0.0
        %4619 = vmatprep.subr.mxu0 0.0
        %4620 = vmatpush1.msra.mxu0 0.0
        %4621 = vmatprep.subr.mxu0 0.0
        %4622 = vmatpush1.msra.mxu0 0.0
        %4623 = vmatprep.subr.mxu0 0.0
        %4624 = vmatpush1.msra.mxu0 0.0
        %4625 = vmatprep.subr.mxu0 0.0
        %4626 = vmatpush1.msra.mxu0 0.0
        %4627 = vmatprep.mubr.f32.mxu0 0.0
        %4628 = vmatmul.mubr.f32.gmra.mrb[0].mxu0 %v4559
        %v4629 = vpop.f32.mrb[0].mxu0
        %v4630 = vadd.f32 0.0, %v4629
        %v4631 = vpop.f32.mrb[0].mxu0
        %4632 = vmatprep.mubr.f32.mxu0 0.0
        %4633 = vmatmul.mubr.f32.gmra.mrb[0].mxu0 %v4560
        %v4634 = vpop.f32.mrb[0].mxu0
        %v4635 = vadd.f32 0.0, %v4634
        %v4636 = vpop.f32.mrb[0].mxu0
        %4637 = vdwg.mxu0
        %v4638 = vadd.f32 %v4533, %v4630
        %v4639 = vadd.f32 %v4534, %v4635
        %s4640 = scalar_lea.vmem [#allocation4], 16
        %v4641 = vld [vmem:[%s4640] sm:$0xf]
        %v4642 = vld [vmem:[%s4640 + $0x8] sm:$0xf]
        %v4643 = vld [vmem:[%s4640 + $0x10] sm:$0xf]
        %v4644 = vld [vmem:[%s4640 + $0x18] sm:$0xf]
        %v4645 = vld [vmem:[%s3338] sm:$0xff]
        %v4646 = vld [vmem:[%s3338 + $0x8] sm:$0xff]
        %v4647 = vld [vmem:[%s3338 + $0x10] sm:$0xff]
        %v4648 = vld [vmem:[%s3338 + $0x18] sm:$0xff]
        %v4649 = vld [vmem:[%s3338 + $0x20] sm:$0xff]
        %v4650 = vld [vmem:[%s3338 + $0x28] sm:$0xff]
        %v4651 = vld [vmem:[%s3338 + $0x30] sm:$0xff]
        %v4652 = vld [vmem:[%s3338 + $0x38] sm:$0xff]
        %v4653 = vld [vmem:[%s3338 + $0x40] sm:$0xff]
        %v4654 = vld [vmem:[%s3338 + $0x48] sm:$0xff]
        %v4655 = vld [vmem:[%s3338 + $0x50] sm:$0xff]
        %v4656 = vld [vmem:[%s3338 + $0x58] sm:$0xff]
        %v4657 = vld [vmem:[%s3338 + $0x60] sm:$0xff]
        %v4658 = vld [vmem:[%s3338 + $0x68] sm:$0xff]
        %v4659 = vld [vmem:[%s3338 + $0x70] sm:$0xff]
        %v4660 = vld [vmem:[%s3338 + $0x78] sm:$0xff]
        %v4665 = vcombine.low %v4641, %v4642
        %v4666 = vcombine.low %v4643, %v4644
        %4669 = vmatprep.subr.mxu0 0.0
        %4670 = vmatpush1.msra.mxu0 %v4645
        %4671 = vmatprep.subr.mxu0 0.0
        %4672 = vmatpush1.msra.mxu0 %v4646
        %4673 = vmatprep.subr.mxu0 0.0
        %4674 = vmatpush1.msra.mxu0 %v4647
        %4675 = vmatprep.subr.mxu0 0.0
        %4676 = vmatpush1.msra.mxu0 %v4648
        %4677 = vmatprep.subr.mxu0 0.0
        %4678 = vmatpush1.msra.mxu0 %v4649
        %4679 = vmatprep.subr.mxu0 0.0
        %4680 = vmatpush1.msra.mxu0 %v4650
        %4681 = vmatprep.subr.mxu0 0.0
        %4682 = vmatpush1.msra.mxu0 %v4651
        %4683 = vmatprep.subr.mxu0 0.0
        %4684 = vmatpush1.msra.mxu0 %v4652
        %4685 = vmatprep.subr.mxu0 0.0
        %4686 = vmatpush1.msra.mxu0 %v4653
        %4687 = vmatprep.subr.mxu0 0.0
        %4688 = vmatpush1.msra.mxu0 %v4654
        %4689 = vmatprep.subr.mxu0 0.0
        %4690 = vmatpush1.msra.mxu0 %v4655
        %4691 = vmatprep.subr.mxu0 0.0
        %4692 = vmatpush1.msra.mxu0 %v4656
        %4693 = vmatprep.subr.mxu0 0.0
        %4694 = vmatpush1.msra.mxu0 %v4657
        %4695 = vmatprep.subr.mxu0 0.0
        %4696 = vmatpush1.msra.mxu0 %v4658
        %4697 = vmatprep.subr.mxu0 0.0
        %4698 = vmatpush1.msra.mxu0 %v4659
        %4699 = vmatprep.subr.mxu0 0.0
        %4700 = vmatpush1.msra.mxu0 %v4660
        %4701 = vmatprep.subr.mxu0 0.0
        %4702 = vmatpush1.msra.mxu0 0.0
        %4703 = vmatprep.subr.mxu0 0.0
        %4704 = vmatpush1.msra.mxu0 0.0
        %4705 = vmatprep.subr.mxu0 0.0
        %4706 = vmatpush1.msra.mxu0 0.0
        %4707 = vmatprep.subr.mxu0 0.0
        %4708 = vmatpush1.msra.mxu0 0.0
        %4709 = vmatprep.subr.mxu0 0.0
        %4710 = vmatpush1.msra.mxu0 0.0
        %4711 = vmatprep.subr.mxu0 0.0
        %4712 = vmatpush1.msra.mxu0 0.0
        %4713 = vmatprep.subr.mxu0 0.0
        %4714 = vmatpush1.msra.mxu0 0.0
        %4715 = vmatprep.subr.mxu0 0.0
        %4716 = vmatpush1.msra.mxu0 0.0
        %4717 = vmatprep.subr.mxu0 0.0
        %4718 = vmatpush1.msra.mxu0 0.0
        %4719 = vmatprep.subr.mxu0 0.0
        %4720 = vmatpush1.msra.mxu0 0.0
        %4721 = vmatprep.subr.mxu0 0.0
        %4722 = vmatpush1.msra.mxu0 0.0
        %4723 = vmatprep.subr.mxu0 0.0
        %4724 = vmatpush1.msra.mxu0 0.0
        %4725 = vmatprep.subr.mxu0 0.0
        %4726 = vmatpush1.msra.mxu0 0.0
        %4727 = vmatprep.subr.mxu0 0.0
        %4728 = vmatpush1.msra.mxu0 0.0
        %4729 = vmatprep.subr.mxu0 0.0
        %4730 = vmatpush1.msra.mxu0 0.0
        %4731 = vmatprep.subr.mxu0 0.0
        %4732 = vmatpush1.msra.mxu0 0.0
        %4733 = vmatprep.mubr.f32.mxu0 0.0
        %4734 = vmatmul.mubr.f32.gmra.mrb[0].mxu0 %v4665
        %v4735 = vpop.f32.mrb[0].mxu0
        %v4736 = vadd.f32 0.0, %v4735
        %v4737 = vpop.f32.mrb[0].mxu0
        %4738 = vmatprep.mubr.f32.mxu0 0.0
        %4739 = vmatmul.mubr.f32.gmra.mrb[0].mxu0 %v4666
        %v4740 = vpop.f32.mrb[0].mxu0
        %v4741 = vadd.f32 0.0, %v4740
        %v4742 = vpop.f32.mrb[0].mxu0
        %4743 = vdwg.mxu0
        %v4744 = vadd.f32 %v4638, %v4736
        %v4745 = vadd.f32 %v4639, %v4741
        %v4746 = vld [vmem:[%s4640 + $0x1] sm:$0xf]
        %v4747 = vld [vmem:[%s4640 + $0x9] sm:$0xf]
        %v4748 = vld [vmem:[%s4640 + $0x11] sm:$0xf]
        %v4749 = vld [vmem:[%s4640 + $0x19] sm:$0xf]
        %v4750 = vld [vmem:[%s3476] sm:$0xff]
        %v4751 = vld [vmem:[%s3476 + $0x8] sm:$0xff]
        %v4752 = vld [vmem:[%s3476 + $0x10] sm:$0xff]
        %v4753 = vld [vmem:[%s3476 + $0x18] sm:$0xff]
        %v4754 = vld [vmem:[%s3476 + $0x20] sm:$0xff]
        %v4755 = vld [vmem:[%s3476 + $0x28] sm:$0xff]
        %v4756 = vld [vmem:[%s3476 + $0x30] sm:$0xff]
        %v4757 = vld [vmem:[%s3476 + $0x38] sm:$0xff]
        %v4758 = vld [vmem:[%s3476 + $0x40] sm:$0xff]
        %v4759 = vld [vmem:[%s3476 + $0x48] sm:$0xff]
        %v4760 = vld [vmem:[%s3476 + $0x50] sm:$0xff]
        %v4761 = vld [vmem:[%s3476 + $0x58] sm:$0xff]
        %v4762 = vld [vmem:[%s3476 + $0x60] sm:$0xff]
        %v4763 = vld [vmem:[%s3476 + $0x68] sm:$0xff]
        %v4764 = vld [vmem:[%s3476 + $0x70] sm:$0xff]
        %v4765 = vld [vmem:[%s3476 + $0x78] sm:$0xff]
        %v4770 = vcombine.low %v4746, %v4747
        %v4771 = vcombine.low %v4748, %v4749
        %4774 = vmatprep.subr.mxu0 0.0
        %4775 = vmatpush1.msra.mxu0 %v4750
        %4776 = vmatprep.subr.mxu0 0.0
        %4777 = vmatpush1.msra.mxu0 %v4751
        %4778 = vmatprep.subr.mxu0 0.0
        %4779 = vmatpush1.msra.mxu0 %v4752
        %4780 = vmatprep.subr.mxu0 0.0
        %4781 = vmatpush1.msra.mxu0 %v4753
        %4782 = vmatprep.subr.mxu0 0.0
        %4783 = vmatpush1.msra.mxu0 %v4754
        %4784 = vmatprep.subr.mxu0 0.0
        %4785 = vmatpush1.msra.mxu0 %v4755
        %4786 = vmatprep.subr.mxu0 0.0
        %4787 = vmatpush1.msra.mxu0 %v4756
        %4788 = vmatprep.subr.mxu0 0.0
        %4789 = vmatpush1.msra.mxu0 %v4757
        %4790 = vmatprep.subr.mxu0 0.0
        %4791 = vmatpush1.msra.mxu0 %v4758
        %4792 = vmatprep.subr.mxu0 0.0
        %4793 = vmatpush1.msra.mxu0 %v4759
        %4794 = vmatprep.subr.mxu0 0.0
        %4795 = vmatpush1.msra.mxu0 %v4760
        %4796 = vmatprep.subr.mxu0 0.0
        %4797 = vmatpush1.msra.mxu0 %v4761
        %4798 = vmatprep.subr.mxu0 0.0
        %4799 = vmatpush1.msra.mxu0 %v4762
        %4800 = vmatprep.subr.mxu0 0.0
        %4801 = vmatpush1.msra.mxu0 %v4763
        %4802 = vmatprep.subr.mxu0 0.0
        %4803 = vmatpush1.msra.mxu0 %v4764
        %4804 = vmatprep.subr.mxu0 0.0
        %4805 = vmatpush1.msra.mxu0 %v4765
        %4806 = vmatprep.subr.mxu0 0.0
        %4807 = vmatpush1.msra.mxu0 0.0
        %4808 = vmatprep.subr.mxu0 0.0
        %4809 = vmatpush1.msra.mxu0 0.0
        %4810 = vmatprep.subr.mxu0 0.0
        %4811 = vmatpush1.msra.mxu0 0.0
        %4812 = vmatprep.subr.mxu0 0.0
        %4813 = vmatpush1.msra.mxu0 0.0
        %4814 = vmatprep.subr.mxu0 0.0
        %4815 = vmatpush1.msra.mxu0 0.0
        %4816 = vmatprep.subr.mxu0 0.0
        %4817 = vmatpush1.msra.mxu0 0.0
        %4818 = vmatprep.subr.mxu0 0.0
        %4819 = vmatpush1.msra.mxu0 0.0
        %4820 = vmatprep.subr.mxu0 0.0
        %4821 = vmatpush1.msra.mxu0 0.0
        %4822 = vmatprep.subr.mxu0 0.0
        %4823 = vmatpush1.msra.mxu0 0.0
        %4824 = vmatprep.subr.mxu0 0.0
        %4825 = vmatpush1.msra.mxu0 0.0
        %4826 = vmatprep.subr.mxu0 0.0
        %4827 = vmatpush1.msra.mxu0 0.0
        %4828 = vmatprep.subr.mxu0 0.0
        %4829 = vmatpush1.msra.mxu0 0.0
        %4830 = vmatprep.subr.mxu0 0.0
        %4831 = vmatpush1.msra.mxu0 0.0
        %4832 = vmatprep.subr.mxu0 0.0
        %4833 = vmatpush1.msra.mxu0 0.0
        %4834 = vmatprep.subr.mxu0 0.0
        %4835 = vmatpush1.msra.mxu0 0.0
        %4836 = vmatprep.subr.mxu0 0.0
        %4837 = vmatpush1.msra.mxu0 0.0
        %4838 = vmatprep.mubr.f32.mxu0 0.0
        %4839 = vmatmul.mubr.f32.gmra.mrb[0].mxu0 %v4770
        %v4840 = vpop.f32.mrb[0].mxu0
        %v4841 = vadd.f32 0.0, %v4840
        %v4842 = vpop.f32.mrb[0].mxu0
        %4843 = vmatprep.mubr.f32.mxu0 0.0
        %4844 = vmatmul.mubr.f32.gmra.mrb[0].mxu0 %v4771
        %v4845 = vpop.f32.mrb[0].mxu0
        %v4846 = vadd.f32 0.0, %v4845
        %v4847 = vpop.f32.mrb[0].mxu0
        %4848 = vdwg.mxu0
        %v4849 = vadd.f32 %v4744, %v4841
        %v4850 = vadd.f32 %v4745, %v4846
        %v4851 = vld [vmem:[%s4640 + $0x2] sm:$0xf]
        %v4852 = vld [vmem:[%s4640 + $0xa] sm:$0xf]
        %v4853 = vld [vmem:[%s4640 + $0x12] sm:$0xf]
        %v4854 = vld [vmem:[%s4640 + $0x1a] sm:$0xf]
        %v4855 = vld [vmem:[%s3614] sm:$0xff]
        %v4856 = vld [vmem:[%s3614 + $0x8] sm:$0xff]
        %v4857 = vld [vmem:[%s3614 + $0x10] sm:$0xff]
        %v4858 = vld [vmem:[%s3614 + $0x18] sm:$0xff]
        %v4859 = vld [vmem:[%s3614 + $0x20] sm:$0xff]
        %v4860 = vld [vmem:[%s3614 + $0x28] sm:$0xff]
        %v4861 = vld [vmem:[%s3614 + $0x30] sm:$0xff]
        %v4862 = vld [vmem:[%s3614 + $0x38] sm:$0xff]
        %v4863 = vld [vmem:[%s3614 + $0x40] sm:$0xff]
        %v4864 = vld [vmem:[%s3614 + $0x48] sm:$0xff]
        %v4865 = vld [vmem:[%s3614 + $0x50] sm:$0xff]
        %v4866 = vld [vmem:[%s3614 + $0x58] sm:$0xff]
        %v4867 = vld [vmem:[%s3614 + $0x60] sm:$0xff]
        %v4868 = vld [vmem:[%s3614 + $0x68] sm:$0xff]
        %v4869 = vld [vmem:[%s3614 + $0x70] sm:$0xff]
        %v4870 = vld [vmem:[%s3614 + $0x78] sm:$0xff]
        %v4875 = vcombine.low %v4851, %v4852
        %v4876 = vcombine.low %v4853, %v4854
        %4879 = vmatprep.subr.mxu0 0.0
        %4880 = vmatpush1.msra.mxu0 %v4855
        %4881 = vmatprep.subr.mxu0 0.0
        %4882 = vmatpush1.msra.mxu0 %v4856
        %4883 = vmatprep.subr.mxu0 0.0
        %4884 = vmatpush1.msra.mxu0 %v4857
        %4885 = vmatprep.subr.mxu0 0.0
        %4886 = vmatpush1.msra.mxu0 %v4858
        %4887 = vmatprep.subr.mxu0 0.0
        %4888 = vmatpush1.msra.mxu0 %v4859
        %4889 = vmatprep.subr.mxu0 0.0
        %4890 = vmatpush1.msra.mxu0 %v4860
        %4891 = vmatprep.subr.mxu0 0.0
        %4892 = vmatpush1.msra.mxu0 %v4861
        %4893 = vmatprep.subr.mxu0 0.0
        %4894 = vmatpush1.msra.mxu0 %v4862
        %4895 = vmatprep.subr.mxu0 0.0
        %4896 = vmatpush1.msra.mxu0 %v4863
        %4897 = vmatprep.subr.mxu0 0.0
        %4898 = vmatpush1.msra.mxu0 %v4864
        %4899 = vmatprep.subr.mxu0 0.0
        %4900 = vmatpush1.msra.mxu0 %v4865
        %4901 = vmatprep.subr.mxu0 0.0
        %4902 = vmatpush1.msra.mxu0 %v4866
        %4903 = vmatprep.subr.mxu0 0.0
        %4904 = vmatpush1.msra.mxu0 %v4867
        %4905 = vmatprep.subr.mxu0 0.0
        %4906 = vmatpush1.msra.mxu0 %v4868
        %4907 = vmatprep.subr.mxu0 0.0
        %4908 = vmatpush1.msra.mxu0 %v4869
        %4909 = vmatprep.subr.mxu0 0.0
        %4910 = vmatpush1.msra.mxu0 %v4870
        %4911 = vmatprep.subr.mxu0 0.0
        %4912 = vmatpush1.msra.mxu0 0.0
        %4913 = vmatprep.subr.mxu0 0.0
        %4914 = vmatpush1.msra.mxu0 0.0
        %4915 = vmatprep.subr.mxu0 0.0
        %4916 = vmatpush1.msra.mxu0 0.0
        %4917 = vmatprep.subr.mxu0 0.0
        %4918 = vmatpush1.msra.mxu0 0.0
        %4919 = vmatprep.subr.mxu0 0.0
        %4920 = vmatpush1.msra.mxu0 0.0
        %4921 = vmatprep.subr.mxu0 0.0
        %4922 = vmatpush1.msra.mxu0 0.0
        %4923 = vmatprep.subr.mxu0 0.0
        %4924 = vmatpush1.msra.mxu0 0.0
        %4925 = vmatprep.subr.mxu0 0.0
        %4926 = vmatpush1.msra.mxu0 0.0
        %4927 = vmatprep.subr.mxu0 0.0
        %4928 = vmatpush1.msra.mxu0 0.0
        %4929 = vmatprep.subr.mxu0 0.0
        %4930 = vmatpush1.msra.mxu0 0.0
        %4931 = vmatprep.subr.mxu0 0.0
        %4932 = vmatpush1.msra.mxu0 0.0
        %4933 = vmatprep.subr.mxu0 0.0
        %4934 = vmatpush1.msra.mxu0 0.0
        %4935 = vmatprep.subr.mxu0 0.0
        %4936 = vmatpush1.msra.mxu0 0.0
        %4937 = vmatprep.subr.mxu0 0.0
        %4938 = vmatpush1.msra.mxu0 0.0
        %4939 = vmatprep.subr.mxu0 0.0
        %4940 = vmatpush1.msra.mxu0 0.0
        %4941 = vmatprep.subr.mxu0 0.0
        %4942 = vmatpush1.msra.mxu0 0.0
        %4943 = vmatprep.mubr.f32.mxu0 0.0
        %4944 = vmatmul.mubr.f32.gmra.mrb[0].mxu0 %v4875
        %v4945 = vpop.f32.mrb[0].mxu0
        %v4946 = vadd.f32 0.0, %v4945
        %v4947 = vpop.f32.mrb[0].mxu0
        %4948 = vmatprep.mubr.f32.mxu0 0.0
        %4949 = vmatmul.mubr.f32.gmra.mrb[0].mxu0 %v4876
        %v4950 = vpop.f32.mrb[0].mxu0
        %v4951 = vadd.f32 0.0, %v4950
        %v4952 = vpop.f32.mrb[0].mxu0
        %4953 = vdwg.mxu0
        %v4954 = vadd.f32 %v4849, %v4946
        %v4955 = vadd.f32 %v4850, %v4951
        %v4956 = vld [vmem:[%s4] sm:$0x1]
        %v4958 = vlaneseq
        %v4959 = vshrl.u32 %v4958, 7
        %v4960 = vsub.s32 0, %v4959
        %v4961 = vrot.slane %v4956, %v4960
        %v4963 = vadd.f32 %v4954, %v4961
        %v4964 = vadd.f32 %v4955, %v4961
        %v4965 = vmax.f32 %v4963, 0.0
        %v4966 = vmax.f32 %v4964, 0.0
        %v4969 = vcombine.high %v4965, %v4965
        %v4970 = vcombine.high %v4966, %v4966
        %vm4973 = vcmask 1043456
        %v4974 = vsel %vm4973, %v4965, -inf
        %v4975 = vsel %vm4973, %v4969, -inf
        %v4976 = vmax.f32 %v4974, %v4975
        %v4977 = vsel %vm4973, %v4966, -inf
        %v4978 = vsel %vm4973, %v4970, -inf
        %v4979 = vmax.f32 %v4977, %v4978
        %v4983 = vunpack.c.l.s4 1983009808
        %v4984 = vunpack.c.0.s8 %v4983
        %v4985 = vlaneseq
        %v4986 = vshrl.u32 %v4985, 7
        %v4987 = vsub.s32 %v4984, %v4986
        %v4988 = vrot.slane %v4976, %v4987
        %v4989 = vcombine.high %v4988, %v4988
        %v4991 = vunpack.c.l.s4 1983009808
        %v4992 = vunpack.c.0.s8 %v4991
        %v4993 = vlaneseq
        %v4994 = vshrl.u32 %v4993, 7
        %v4995 = vsub.s32 %v4992, %v4994
        %v4996 = vrot.slane %v4979, %v4995
        %v4997 = vcombine.high %v4996, %v4996
        %v5002 = vsel %vm1905, %v4988, -inf
        %v5003 = vrot.slane %v5002, 4
        %v5004 = vmax.f32 %v5002, %v5003
        %v5005 = vrot.slane %v5004, 2
        %v5006 = vmax.f32 %v5004, %v5005
        %v5007 = vrot.slane %v5006, 1
        %v5008 = vmax.f32 %v5006, %v5007
        %v5009 = vsel %vm1905, %v4989, -inf
        %v5010 = vrot.slane %v5009, 4
        %v5011 = vmax.f32 %v5009, %v5010
        %v5012 = vrot.slane %v5011, 2
        %v5013 = vmax.f32 %v5011, %v5012
        %v5014 = vrot.slane %v5013, 1
        %v5015 = vmax.f32 %v5013, %v5014
        %v5016 = vsel %vm1905, %v4996, -inf
        %v5017 = vrot.slane %v5016, 4
        %v5018 = vmax.f32 %v5016, %v5017
        %v5019 = vrot.slane %v5018, 2
        %v5020 = vmax.f32 %v5018, %v5019
        %v5021 = vrot.slane %v5020, 1
        %v5022 = vmax.f32 %v5020, %v5021
        %v5023 = vsel %vm1905, %v4997, -inf
        %v5024 = vrot.slane %v5023, 4
        %v5025 = vmax.f32 %v5023, %v5024
        %v5026 = vrot.slane %v5025, 2
        %v5027 = vmax.f32 %v5025, %v5026
        %v5028 = vrot.slane %v5027, 1
        %v5029 = vmax.f32 %v5027, %v5028
        %5030 = vst [vmem:[#allocation5] sm:$0xf] 0.0
        %5031 = vst [vmem:[#allocation5 + $0x4] sm:$0xf] 0.0
        %5032 = vst [vmem:[#allocation5 + $0x8] sm:$0xf] 0.0
        %5033 = vst [vmem:[#allocation5 + $0xc] sm:$0xf] 0.0
        %v5038 = vsel %vm2438, %v5015, %v5008
        %v5039 = vsel %vm2438, %v5029, %v5022
        %s5042 = scalar_lea.vmem [#allocation5], 4
        %5043 = vst [vmem:[%s5042 + $0x1] sm:$0x3] %v5038
        %5044 = vst [vmem:[%s5042 + $0x5] sm:$0x3] %v5039
        %v5045 = vld [vmem:[#allocation5] sm:$0x3]
        %v5046 = vld [vmem:[#allocation5 + $0x4] sm:$0x3]
        %v5047 = vld [vmem:[#allocation6] sm:$0xff]
        %v5048 = vld [vmem:[#allocation6 + $0x8] sm:$0xff]
        %v5049 = vld [vmem:[#allocation6 + $0x10] sm:$0xff]
        %v5050 = vld [vmem:[#allocation6 + $0x18] sm:$0xff]
        %v5051 = vld [vmem:[#allocation6 + $0x20] sm:$0xff]
        %v5052 = vld [vmem:[#allocation6 + $0x28] sm:$0xff]
        %v5053 = vld [vmem:[#allocation6 + $0x30] sm:$0xff]
        %v5054 = vld [vmem:[#allocation6 + $0x38] sm:$0xff]
        %v5055 = vld [vmem:[#allocation6 + $0x40] sm:$0xff]
        %v5056 = vld [vmem:[#allocation6 + $0x48] sm:$0xff]
        %v5057 = vld [vmem:[#allocation6 + $0x50] sm:$0xff]
        %v5058 = vld [vmem:[#allocation6 + $0x58] sm:$0xff]
        %v5059 = vld [vmem:[#allocation6 + $0x60] sm:$0xff]
        %v5060 = vld [vmem:[#allocation6 + $0x68] sm:$0xff]
        %v5061 = vld [vmem:[#allocation6 + $0x70] sm:$0xff]
        %v5062 = vld [vmem:[#allocation6 + $0x78] sm:$0xff]
        %v5063 = vld [vmem:[#allocation5 + $0x1] sm:$0x3]
        %v5064 = vld [vmem:[#allocation5 + $0x5] sm:$0x3]
        %v5065 = vld [vmem:[%s2550] sm:$0xff]
        %v5066 = vld [vmem:[%s2550 + $0x8] sm:$0xff]
        %v5067 = vld [vmem:[%s2550 + $0x10] sm:$0xff]
        %v5068 = vld [vmem:[%s2550 + $0x18] sm:$0xff]
        %v5069 = vld [vmem:[%s2550 + $0x20] sm:$0xff]
        %v5070 = vld [vmem:[%s2550 + $0x28] sm:$0xff]
        %v5071 = vld [vmem:[%s2550 + $0x30] sm:$0xff]
        %v5072 = vld [vmem:[%s2550 + $0x38] sm:$0xff]
        %v5073 = vld [vmem:[%s2550 + $0x40] sm:$0xff]
        %v5074 = vld [vmem:[%s2550 + $0x48] sm:$0xff]
        %v5075 = vld [vmem:[%s2550 + $0x50] sm:$0xff]
        %v5076 = vld [vmem:[%s2550 + $0x58] sm:$0xff]
        %v5077 = vld [vmem:[%s2550 + $0x60] sm:$0xff]
        %v5078 = vld [vmem:[%s2550 + $0x68] sm:$0xff]
        %v5079 = vld [vmem:[%s2550 + $0x70] sm:$0xff]
        %v5080 = vld [vmem:[%s2550 + $0x78] sm:$0xff]
        %v5083 = vcombine.low %v5063, %v5064
        %v5085 = vunpack.c.l.s4 1983009808
        %v5086 = vunpack.c.0.s8 %v5085
        %v5087 = vlaneseq
        %v5088 = vshrl.u32 %v5087, 7
        %v5089 = vsub.s32 %v5086, %v5088
        %v5090 = vrot.slane %v5083, %v5089
        %5092 = vmatprep.subr.mxu0 0.0
        %5093 = vmatpush1.msra.mxu0 %v5065
        %5094 = vmatprep.subr.mxu0 0.0
        %5095 = vmatpush1.msra.mxu0 %v5066
        %5096 = vmatprep.subr.mxu0 0.0
        %5097 = vmatpush1.msra.mxu0 %v5067
        %5098 = vmatprep.subr.mxu0 0.0
        %5099 = vmatpush1.msra.mxu0 %v5068
        %5100 = vmatprep.subr.mxu0 0.0
        %5101 = vmatpush1.msra.mxu0 %v5069
        %5102 = vmatprep.subr.mxu0 0.0
        %5103 = vmatpush1.msra.mxu0 %v5070
        %5104 = vmatprep.subr.mxu0 0.0
        %5105 = vmatpush1.msra.mxu0 %v5071
        %5106 = vmatprep.subr.mxu0 0.0
        %5107 = vmatpush1.msra.mxu0 %v5072
        %5108 = vmatprep.subr.mxu0 0.0
        %5109 = vmatpush1.msra.mxu0 %v5073
        %5110 = vmatprep.subr.mxu0 0.0
        %5111 = vmatpush1.msra.mxu0 %v5074
        %5112 = vmatprep.subr.mxu0 0.0
        %5113 = vmatpush1.msra.mxu0 %v5075
        %5114 = vmatprep.subr.mxu0 0.0
        %5115 = vmatpush1.msra.mxu0 %v5076
        %5116 = vmatprep.subr.mxu0 0.0
        %5117 = vmatpush1.msra.mxu0 %v5077
        %5118 = vmatprep.subr.mxu0 0.0
        %5119 = vmatpush1.msra.mxu0 %v5078
        %5120 = vmatprep.subr.mxu0 0.0
        %5121 = vmatpush1.msra.mxu0 %v5079
        %5122 = vmatprep.subr.mxu0 0.0
        %5123 = vmatpush1.msra.mxu0 %v5080
        %5124 = vmatprep.subr.mxu0 0.0
        %5125 = vmatpush1.msra.mxu0 0.0
        %5126 = vmatprep.subr.mxu0 0.0
        %5127 = vmatpush1.msra.mxu0 0.0
        %5128 = vmatprep.subr.mxu0 0.0
        %5129 = vmatpush1.msra.mxu0 0.0
        %5130 = vmatprep.subr.mxu0 0.0
        %5131 = vmatpush1.msra.mxu0 0.0
        %5132 = vmatprep.subr.mxu0 0.0
        %5133 = vmatpush1.msra.mxu0 0.0
        %5134 = vmatprep.subr.mxu0 0.0
        %5135 = vmatpush1.msra.mxu0 0.0
        %5136 = vmatprep.subr.mxu0 0.0
        %5137 = vmatpush1.msra.mxu0 0.0
        %5138 = vmatprep.subr.mxu0 0.0
        %5139 = vmatpush1.msra.mxu0 0.0
        %5140 = vmatprep.subr.mxu0 0.0
        %5141 = vmatpush1.msra.mxu0 0.0
        %5142 = vmatprep.subr.mxu0 0.0
        %5143 = vmatpush1.msra.mxu0 0.0
        %5144 = vmatprep.subr.mxu0 0.0
        %5145 = vmatpush1.msra.mxu0 0.0
        %5146 = vmatprep.subr.mxu0 0.0
        %5147 = vmatpush1.msra.mxu0 0.0
        %5148 = vmatprep.subr.mxu0 0.0
        %5149 = vmatpush1.msra.mxu0 0.0
        %5150 = vmatprep.subr.mxu0 0.0
        %5151 = vmatpush1.msra.mxu0 0.0
        %5152 = vmatprep.subr.mxu0 0.0
        %5153 = vmatpush1.msra.mxu0 0.0
        %5154 = vmatprep.subr.mxu0 0.0
        %5155 = vmatpush1.msra.mxu0 0.0
        %5156 = vmatprep.mubr.f32.mxu0 0.0
        %5157 = vmatmul.mubr.f32.gmra.mrb[0].mxu0 %v5090
        %v5158 = vpop.f32.mrb[0].mxu0
        %v5159 = vadd.f32 0.0, %v5158
        %v5160 = vpop.f32.mrb[0].mxu0
        %5161 = vdwg.mxu0
        %v5164 = vcombine.low %v5045, %v5046
        %v5166 = vunpack.c.l.s4 1983009808
        %v5167 = vunpack.c.0.s8 %v5166
        %v5168 = vlaneseq
        %v5169 = vshrl.u32 %v5168, 7
        %v5170 = vsub.s32 %v5167, %v5169
        %v5171 = vrot.slane %v5164, %v5170
        %5173 = vmatprep.subr.mxu0 0.0
        %5174 = vmatpush1.msra.mxu0 %v5047
        %5175 = vmatprep.subr.mxu0 0.0
        %5176 = vmatpush1.msra.mxu0 %v5048
        %5177 = vmatprep.subr.mxu0 0.0
        %5178 = vmatpush1.msra.mxu0 %v5049
        %5179 = vmatprep.subr.mxu0 0.0
        %5180 = vmatpush1.msra.mxu0 %v5050
        %5181 = vmatprep.subr.mxu0 0.0
        %5182 = vmatpush1.msra.mxu0 %v5051
        %5183 = vmatprep.subr.mxu0 0.0
        %5184 = vmatpush1.msra.mxu0 %v5052
        %5185 = vmatprep.subr.mxu0 0.0
        %5186 = vmatpush1.msra.mxu0 %v5053
        %5187 = vmatprep.subr.mxu0 0.0
        %5188 = vmatpush1.msra.mxu0 %v5054
        %5189 = vmatprep.subr.mxu0 0.0
        %5190 = vmatpush1.msra.mxu0 %v5055
        %5191 = vmatprep.subr.mxu0 0.0
        %5192 = vmatpush1.msra.mxu0 %v5056
        %5193 = vmatprep.subr.mxu0 0.0
        %5194 = vmatpush1.msra.mxu0 %v5057
        %5195 = vmatprep.subr.mxu0 0.0
        %5196 = vmatpush1.msra.mxu0 %v5058
        %5197 = vmatprep.subr.mxu0 0.0
        %5198 = vmatpush1.msra.mxu0 %v5059
        %5199 = vmatprep.subr.mxu0 0.0
        %5200 = vmatpush1.msra.mxu0 %v5060
        %5201 = vmatprep.subr.mxu0 0.0
        %5202 = vmatpush1.msra.mxu0 %v5061
        %5203 = vmatprep.subr.mxu0 0.0
        %5204 = vmatpush1.msra.mxu0 %v5062
        %5205 = vmatprep.subr.mxu0 0.0
        %5206 = vmatpush1.msra.mxu0 0.0
        %5207 = vmatprep.subr.mxu0 0.0
        %5208 = vmatpush1.msra.mxu0 0.0
        %5209 = vmatprep.subr.mxu0 0.0
        %5210 = vmatpush1.msra.mxu0 0.0
        %5211 = vmatprep.subr.mxu0 0.0
        %5212 = vmatpush1.msra.mxu0 0.0
        %5213 = vmatprep.subr.mxu0 0.0
        %5214 = vmatpush1.msra.mxu0 0.0
        %5215 = vmatprep.subr.mxu0 0.0
        %5216 = vmatpush1.msra.mxu0 0.0
        %5217 = vmatprep.subr.mxu0 0.0
        %5218 = vmatpush1.msra.mxu0 0.0
        %5219 = vmatprep.subr.mxu0 0.0
        %5220 = vmatpush1.msra.mxu0 0.0
        %5221 = vmatprep.subr.mxu0 0.0
        %5222 = vmatpush1.msra.mxu0 0.0
        %5223 = vmatprep.subr.mxu0 0.0
        %5224 = vmatpush1.msra.mxu0 0.0
        %5225 = vmatprep.subr.mxu0 0.0
        %5226 = vmatpush1.msra.mxu0 0.0
        %5227 = vmatprep.subr.mxu0 0.0
        %5228 = vmatpush1.msra.mxu0 0.0
        %5229 = vmatprep.subr.mxu0 0.0
        %5230 = vmatpush1.msra.mxu0 0.0
        %5231 = vmatprep.subr.mxu0 0.0
        %5232 = vmatpush1.msra.mxu0 0.0
        %5233 = vmatprep.subr.mxu0 0.0
        %5234 = vmatpush1.msra.mxu0 0.0
        %5235 = vmatprep.subr.mxu0 0.0
        %5236 = vmatpush1.msra.mxu0 0.0
        %5237 = vmatprep.mubr.f32.mxu0 0.0
        %5238 = vmatmul.mubr.f32.gmra.mrb[0].mxu0 %v5171
        %v5239 = vpop.f32.mrb[0].mxu0
        %v5240 = vadd.f32 %v5159, %v5239
        %v5241 = vpop.f32.mrb[0].mxu0
        %5242 = vdwg.mxu0
        %v5243 = vld [vmem:[#allocation5 + $0x2] sm:$0x3]
        %v5244 = vld [vmem:[#allocation5 + $0x6] sm:$0x3]
        %v5245 = vld [vmem:[%s2785] sm:$0xff]
        %v5246 = vld [vmem:[%s2785 + $0x8] sm:$0xff]
        %v5247 = vld [vmem:[%s2785 + $0x10] sm:$0xff]
        %v5248 = vld [vmem:[%s2785 + $0x18] sm:$0xff]
        %v5249 = vld [vmem:[%s2785 + $0x20] sm:$0xff]
        %v5250 = vld [vmem:[%s2785 + $0x28] sm:$0xff]
        %v5251 = vld [vmem:[%s2785 + $0x30] sm:$0xff]
        %v5252 = vld [vmem:[%s2785 + $0x38] sm:$0xff]
        %v5253 = vld [vmem:[%s2785 + $0x40] sm:$0xff]
        %v5254 = vld [vmem:[%s2785 + $0x48] sm:$0xff]
        %v5255 = vld [vmem:[%s2785 + $0x50] sm:$0xff]
        %v5256 = vld [vmem:[%s2785 + $0x58] sm:$0xff]
        %v5257 = vld [vmem:[%s2785 + $0x60] sm:$0xff]
        %v5258 = vld [vmem:[%s2785 + $0x68] sm:$0xff]
        %v5259 = vld [vmem:[%s2785 + $0x70] sm:$0xff]
        %v5260 = vld [vmem:[%s2785 + $0x78] sm:$0xff]
        %v5263 = vcombine.low %v5243, %v5244
        %v5265 = vunpack.c.l.s4 1983009808
        %v5266 = vunpack.c.0.s8 %v5265
        %v5267 = vlaneseq
        %v5268 = vshrl.u32 %v5267, 7
        %v5269 = vsub.s32 %v5266, %v5268
        %v5270 = vrot.slane %v5263, %v5269
        %5272 = vmatprep.subr.mxu0 0.0
        %5273 = vmatpush1.msra.mxu0 %v5245
        %5274 = vmatprep.subr.mxu0 0.0
        %5275 = vmatpush1.msra.mxu0 %v5246
        %5276 = vmatprep.subr.mxu0 0.0
        %5277 = vmatpush1.msra.mxu0 %v5247
        %5278 = vmatprep.subr.mxu0 0.0
        %5279 = vmatpush1.msra.mxu0 %v5248
        %5280 = vmatprep.subr.mxu0 0.0
        %5281 = vmatpush1.msra.mxu0 %v5249
        %5282 = vmatprep.subr.mxu0 0.0
        %5283 = vmatpush1.msra.mxu0 %v5250
        %5284 = vmatprep.subr.mxu0 0.0
        %5285 = vmatpush1.msra.mxu0 %v5251
        %5286 = vmatprep.subr.mxu0 0.0
        %5287 = vmatpush1.msra.mxu0 %v5252
        %5288 = vmatprep.subr.mxu0 0.0
        %5289 = vmatpush1.msra.mxu0 %v5253
        %5290 = vmatprep.subr.mxu0 0.0
        %5291 = vmatpush1.msra.mxu0 %v5254
        %5292 = vmatprep.subr.mxu0 0.0
        %5293 = vmatpush1.msra.mxu0 %v5255
        %5294 = vmatprep.subr.mxu0 0.0
        %5295 = vmatpush1.msra.mxu0 %v5256
        %5296 = vmatprep.subr.mxu0 0.0
        %5297 = vmatpush1.msra.mxu0 %v5257
        %5298 = vmatprep.subr.mxu0 0.0
        %5299 = vmatpush1.msra.mxu0 %v5258
        %5300 = vmatprep.subr.mxu0 0.0
        %5301 = vmatpush1.msra.mxu0 %v5259
        %5302 = vmatprep.subr.mxu0 0.0
        %5303 = vmatpush1.msra.mxu0 %v5260
        %5304 = vmatprep.subr.mxu0 0.0
        %5305 = vmatpush1.msra.mxu0 0.0
        %5306 = vmatprep.subr.mxu0 0.0
        %5307 = vmatpush1.msra.mxu0 0.0
        %5308 = vmatprep.subr.mxu0 0.0
        %5309 = vmatpush1.msra.mxu0 0.0
        %5310 = vmatprep.subr.mxu0 0.0
        %5311 = vmatpush1.msra.mxu0 0.0
        %5312 = vmatprep.subr.mxu0 0.0
        %5313 = vmatpush1.msra.mxu0 0.0
        %5314 = vmatprep.subr.mxu0 0.0
        %5315 = vmatpush1.msra.mxu0 0.0
        %5316 = vmatprep.subr.mxu0 0.0
        %5317 = vmatpush1.msra.mxu0 0.0
        %5318 = vmatprep.subr.mxu0 0.0
        %5319 = vmatpush1.msra.mxu0 0.0
        %5320 = vmatprep.subr.mxu0 0.0
        %5321 = vmatpush1.msra.mxu0 0.0
        %5322 = vmatprep.subr.mxu0 0.0
        %5323 = vmatpush1.msra.mxu0 0.0
        %5324 = vmatprep.subr.mxu0 0.0
        %5325 = vmatpush1.msra.mxu0 0.0
        %5326 = vmatprep.subr.mxu0 0.0
        %5327 = vmatpush1.msra.mxu0 0.0
        %5328 = vmatprep.subr.mxu0 0.0
        %5329 = vmatpush1.msra.mxu0 0.0
        %5330 = vmatprep.subr.mxu0 0.0
        %5331 = vmatpush1.msra.mxu0 0.0
        %5332 = vmatprep.subr.mxu0 0.0
        %5333 = vmatpush1.msra.mxu0 0.0
        %5334 = vmatprep.subr.mxu0 0.0
        %5335 = vmatpush1.msra.mxu0 0.0
        %5336 = vmatprep.mubr.f32.mxu0 0.0
        %5337 = vmatmul.mubr.f32.gmra.mrb[0].mxu0 %v5270
        %v5338 = vpop.f32.mrb[0].mxu0
        %v5339 = vadd.f32 0.0, %v5338
        %v5340 = vpop.f32.mrb[0].mxu0
        %5341 = vdwg.mxu0
        %v5342 = vadd.f32 %v5240, %v5339
        %v5343 = vld [vmem:[%s5042] sm:$0x3]
        %v5344 = vld [vmem:[%s5042 + $0x4] sm:$0x3]
        %v5345 = vld [vmem:[%s2923] sm:$0xff]
        %v5346 = vld [vmem:[%s2923 + $0x8] sm:$0xff]
        %v5347 = vld [vmem:[%s2923 + $0x10] sm:$0xff]
        %v5348 = vld [vmem:[%s2923 + $0x18] sm:$0xff]
        %v5349 = vld [vmem:[%s2923 + $0x20] sm:$0xff]
        %v5350 = vld [vmem:[%s2923 + $0x28] sm:$0xff]
        %v5351 = vld [vmem:[%s2923 + $0x30] sm:$0xff]
        %v5352 = vld [vmem:[%s2923 + $0x38] sm:$0xff]
        %v5353 = vld [vmem:[%s2923 + $0x40] sm:$0xff]
        %v5354 = vld [vmem:[%s2923 + $0x48] sm:$0xff]
        %v5355 = vld [vmem:[%s2923 + $0x50] sm:$0xff]
        %v5356 = vld [vmem:[%s2923 + $0x58] sm:$0xff]
        %v5357 = vld [vmem:[%s2923 + $0x60] sm:$0xff]
        %v5358 = vld [vmem:[%s2923 + $0x68] sm:$0xff]
        %v5359 = vld [vmem:[%s2923 + $0x70] sm:$0xff]
        %v5360 = vld [vmem:[%s2923 + $0x78] sm:$0xff]
        %v5363 = vcombine.low %v5343, %v5344
        %v5365 = vunpack.c.l.s4 1983009808
        %v5366 = vunpack.c.0.s8 %v5365
        %v5367 = vlaneseq
        %v5368 = vshrl.u32 %v5367, 7
        %v5369 = vsub.s32 %v5366, %v5368
        %v5370 = vrot.slane %v5363, %v5369
        %5372 = vmatprep.subr.mxu0 0.0
        %5373 = vmatpush1.msra.mxu0 %v5345
        %5374 = vmatprep.subr.mxu0 0.0
        %5375 = vmatpush1.msra.mxu0 %v5346
        %5376 = vmatprep.subr.mxu0 0.0
        %5377 = vmatpush1.msra.mxu0 %v5347
        %5378 = vmatprep.subr.mxu0 0.0
        %5379 = vmatpush1.msra.mxu0 %v5348
        %5380 = vmatprep.subr.mxu0 0.0
        %5381 = vmatpush1.msra.mxu0 %v5349
        %5382 = vmatprep.subr.mxu0 0.0
        %5383 = vmatpush1.msra.mxu0 %v5350
        %5384 = vmatprep.subr.mxu0 0.0
        %5385 = vmatpush1.msra.mxu0 %v5351
        %5386 = vmatprep.subr.mxu0 0.0
        %5387 = vmatpush1.msra.mxu0 %v5352
        %5388 = vmatprep.subr.mxu0 0.0
        %5389 = vmatpush1.msra.mxu0 %v5353
        %5390 = vmatprep.subr.mxu0 0.0
        %5391 = vmatpush1.msra.mxu0 %v5354
        %5392 = vmatprep.subr.mxu0 0.0
        %5393 = vmatpush1.msra.mxu0 %v5355
        %5394 = vmatprep.subr.mxu0 0.0
        %5395 = vmatpush1.msra.mxu0 %v5356
        %5396 = vmatprep.subr.mxu0 0.0
        %5397 = vmatpush1.msra.mxu0 %v5357
        %5398 = vmatprep.subr.mxu0 0.0
        %5399 = vmatpush1.msra.mxu0 %v5358
        %5400 = vmatprep.subr.mxu0 0.0
        %5401 = vmatpush1.msra.mxu0 %v5359
        %5402 = vmatprep.subr.mxu0 0.0
        %5403 = vmatpush1.msra.mxu0 %v5360
        %5404 = vmatprep.subr.mxu0 0.0
        %5405 = vmatpush1.msra.mxu0 0.0
        %5406 = vmatprep.subr.mxu0 0.0
        %5407 = vmatpush1.msra.mxu0 0.0
        %5408 = vmatprep.subr.mxu0 0.0
        %5409 = vmatpush1.msra.mxu0 0.0
        %5410 = vmatprep.subr.mxu0 0.0
        %5411 = vmatpush1.msra.mxu0 0.0
        %5412 = vmatprep.subr.mxu0 0.0
        %5413 = vmatpush1.msra.mxu0 0.0
        %5414 = vmatprep.subr.mxu0 0.0
        %5415 = vmatpush1.msra.mxu0 0.0
        %5416 = vmatprep.subr.mxu0 0.0
        %5417 = vmatpush1.msra.mxu0 0.0
        %5418 = vmatprep.subr.mxu0 0.0
        %5419 = vmatpush1.msra.mxu0 0.0
        %5420 = vmatprep.subr.mxu0 0.0
        %5421 = vmatpush1.msra.mxu0 0.0
        %5422 = vmatprep.subr.mxu0 0.0
        %5423 = vmatpush1.msra.mxu0 0.0
        %5424 = vmatprep.subr.mxu0 0.0
        %5425 = vmatpush1.msra.mxu0 0.0
        %5426 = vmatprep.subr.mxu0 0.0
        %5427 = vmatpush1.msra.mxu0 0.0
        %5428 = vmatprep.subr.mxu0 0.0
        %5429 = vmatpush1.msra.mxu0 0.0
        %5430 = vmatprep.subr.mxu0 0.0
        %5431 = vmatpush1.msra.mxu0 0.0
        %5432 = vmatprep.subr.mxu0 0.0
        %5433 = vmatpush1.msra.mxu0 0.0
        %5434 = vmatprep.subr.mxu0 0.0
        %5435 = vmatpush1.msra.mxu0 0.0
        %5436 = vmatprep.mubr.f32.mxu0 0.0
        %5437 = vmatmul.mubr.f32.gmra.mrb[0].mxu0 %v5370
        %v5438 = vpop.f32.mrb[0].mxu0
        %v5439 = vadd.f32 0.0, %v5438
        %v5440 = vpop.f32.mrb[0].mxu0
        %5441 = vdwg.mxu0
        %v5442 = vadd.f32 %v5342, %v5439
        %v5443 = vld [vmem:[%s5042 + $0x1] sm:$0x3]
        %v5444 = vld [vmem:[%s5042 + $0x5] sm:$0x3]
        %v5445 = vld [vmem:[%s3061] sm:$0xff]
        %v5446 = vld [vmem:[%s3061 + $0x8] sm:$0xff]
        %v5447 = vld [vmem:[%s3061 + $0x10] sm:$0xff]
        %v5448 = vld [vmem:[%s3061 + $0x18] sm:$0xff]
        %v5449 = vld [vmem:[%s3061 + $0x20] sm:$0xff]
        %v5450 = vld [vmem:[%s3061 + $0x28] sm:$0xff]
        %v5451 = vld [vmem:[%s3061 + $0x30] sm:$0xff]
        %v5452 = vld [vmem:[%s3061 + $0x38] sm:$0xff]
        %v5453 = vld [vmem:[%s3061 + $0x40] sm:$0xff]
        %v5454 = vld [vmem:[%s3061 + $0x48] sm:$0xff]
        %v5455 = vld [vmem:[%s3061 + $0x50] sm:$0xff]
        %v5456 = vld [vmem:[%s3061 + $0x58] sm:$0xff]
        %v5457 = vld [vmem:[%s3061 + $0x60] sm:$0xff]
        %v5458 = vld [vmem:[%s3061 + $0x68] sm:$0xff]
        %v5459 = vld [vmem:[%s3061 + $0x70] sm:$0xff]
        %v5460 = vld [vmem:[%s3061 + $0x78] sm:$0xff]
        %v5463 = vcombine.low %v5443, %v5444
        %v5465 = vunpack.c.l.s4 1983009808
        %v5466 = vunpack.c.0.s8 %v5465
        %v5467 = vlaneseq
        %v5468 = vshrl.u32 %v5467, 7
        %v5469 = vsub.s32 %v5466, %v5468
        %v5470 = vrot.slane %v5463, %v5469
        %5472 = vmatprep.subr.mxu0 0.0
        %5473 = vmatpush1.msra.mxu0 %v5445
        %5474 = vmatprep.subr.mxu0 0.0
        %5475 = vmatpush1.msra.mxu0 %v5446
        %5476 = vmatprep.subr.mxu0 0.0
        %5477 = vmatpush1.msra.mxu0 %v5447
        %5478 = vmatprep.subr.mxu0 0.0
        %5479 = vmatpush1.msra.mxu0 %v5448
        %5480 = vmatprep.subr.mxu0 0.0
        %5481 = vmatpush1.msra.mxu0 %v5449
        %5482 = vmatprep.subr.mxu0 0.0
        %5483 = vmatpush1.msra.mxu0 %v5450
        %5484 = vmatprep.subr.mxu0 0.0
        %5485 = vmatpush1.msra.mxu0 %v5451
        %5486 = vmatprep.subr.mxu0 0.0
        %5487 = vmatpush1.msra.mxu0 %v5452
        %5488 = vmatprep.subr.mxu0 0.0
        %5489 = vmatpush1.msra.mxu0 %v5453
        %5490 = vmatprep.subr.mxu0 0.0
        %5491 = vmatpush1.msra.mxu0 %v5454
        %5492 = vmatprep.subr.mxu0 0.0
        %5493 = vmatpush1.msra.mxu0 %v5455
        %5494 = vmatprep.subr.mxu0 0.0
        %5495 = vmatpush1.msra.mxu0 %v5456
        %5496 = vmatprep.subr.mxu0 0.0
        %5497 = vmatpush1.msra.mxu0 %v5457
        %5498 = vmatprep.subr.mxu0 0.0
        %5499 = vmatpush1.msra.mxu0 %v5458
        %5500 = vmatprep.subr.mxu0 0.0
        %5501 = vmatpush1.msra.mxu0 %v5459
        %5502 = vmatprep.subr.mxu0 0.0
        %5503 = vmatpush1.msra.mxu0 %v5460
        %5504 = vmatprep.subr.mxu0 0.0
        %5505 = vmatpush1.msra.mxu0 0.0
        %5506 = vmatprep.subr.mxu0 0.0
        %5507 = vmatpush1.msra.mxu0 0.0
        %5508 = vmatprep.subr.mxu0 0.0
        %5509 = vmatpush1.msra.mxu0 0.0
        %5510 = vmatprep.subr.mxu0 0.0
        %5511 = vmatpush1.msra.mxu0 0.0
        %5512 = vmatprep.subr.mxu0 0.0
        %5513 = vmatpush1.msra.mxu0 0.0
        %5514 = vmatprep.subr.mxu0 0.0
        %5515 = vmatpush1.msra.mxu0 0.0
        %5516 = vmatprep.subr.mxu0 0.0
        %5517 = vmatpush1.msra.mxu0 0.0
        %5518 = vmatprep.subr.mxu0 0.0
        %5519 = vmatpush1.msra.mxu0 0.0
        %5520 = vmatprep.subr.mxu0 0.0
        %5521 = vmatpush1.msra.mxu0 0.0
        %5522 = vmatprep.subr.mxu0 0.0
        %5523 = vmatpush1.msra.mxu0 0.0
        %5524 = vmatprep.subr.mxu0 0.0
        %5525 = vmatpush1.msra.mxu0 0.0
        %5526 = vmatprep.subr.mxu0 0.0
        %5527 = vmatpush1.msra.mxu0 0.0
        %5528 = vmatprep.subr.mxu0 0.0
        %5529 = vmatpush1.msra.mxu0 0.0
        %5530 = vmatprep.subr.mxu0 0.0
        %5531 = vmatpush1.msra.mxu0 0.0
        %5532 = vmatprep.subr.mxu0 0.0
        %5533 = vmatpush1.msra.mxu0 0.0
        %5534 = vmatprep.subr.mxu0 0.0
        %5535 = vmatpush1.msra.mxu0 0.0
        %5536 = vmatprep.mubr.f32.mxu0 0.0
        %5537 = vmatmul.mubr.f32.gmra.mrb[0].mxu0 %v5470
        %v5538 = vpop.f32.mrb[0].mxu0
        %v5539 = vadd.f32 0.0, %v5538
        %v5540 = vpop.f32.mrb[0].mxu0
        %5541 = vdwg.mxu0
        %v5542 = vadd.f32 %v5442, %v5539
        %v5543 = vld [vmem:[%s5042 + $0x2] sm:$0x3]
        %v5544 = vld [vmem:[%s5042 + $0x6] sm:$0x3]
        %v5545 = vld [vmem:[%s3199] sm:$0xff]
        %v5546 = vld [vmem:[%s3199 + $0x8] sm:$0xff]
        %v5547 = vld [vmem:[%s3199 + $0x10] sm:$0xff]
        %v5548 = vld [vmem:[%s3199 + $0x18] sm:$0xff]
        %v5549 = vld [vmem:[%s3199 + $0x20] sm:$0xff]
        %v5550 = vld [vmem:[%s3199 + $0x28] sm:$0xff]
        %v5551 = vld [vmem:[%s3199 + $0x30] sm:$0xff]
        %v5552 = vld [vmem:[%s3199 + $0x38] sm:$0xff]
        %v5553 = vld [vmem:[%s3199 + $0x40] sm:$0xff]
        %v5554 = vld [vmem:[%s3199 + $0x48] sm:$0xff]
        %v5555 = vld [vmem:[%s3199 + $0x50] sm:$0xff]
        %v5556 = vld [vmem:[%s3199 + $0x58] sm:$0xff]
        %v5557 = vld [vmem:[%s3199 + $0x60] sm:$0xff]
        %v5558 = vld [vmem:[%s3199 + $0x68] sm:$0xff]
        %v5559 = vld [vmem:[%s3199 + $0x70] sm:$0xff]
        %v5560 = vld [vmem:[%s3199 + $0x78] sm:$0xff]
        %v5563 = vcombine.low %v5543, %v5544
        %v5565 = vunpack.c.l.s4 1983009808
        %v5566 = vunpack.c.0.s8 %v5565
        %v5567 = vlaneseq
        %v5568 = vshrl.u32 %v5567, 7
        %v5569 = vsub.s32 %v5566, %v5568
        %v5570 = vrot.slane %v5563, %v5569
        %5572 = vmatprep.subr.mxu0 0.0
        %5573 = vmatpush1.msra.mxu0 %v5545
        %5574 = vmatprep.subr.mxu0 0.0
        %5575 = vmatpush1.msra.mxu0 %v5546
        %5576 = vmatprep.subr.mxu0 0.0
        %5577 = vmatpush1.msra.mxu0 %v5547
        %5578 = vmatprep.subr.mxu0 0.0
        %5579 = vmatpush1.msra.mxu0 %v5548
        %5580 = vmatprep.subr.mxu0 0.0
        %5581 = vmatpush1.msra.mxu0 %v5549
        %5582 = vmatprep.subr.mxu0 0.0
        %5583 = vmatpush1.msra.mxu0 %v5550
        %5584 = vmatprep.subr.mxu0 0.0
        %5585 = vmatpush1.msra.mxu0 %v5551
        %5586 = vmatprep.subr.mxu0 0.0
        %5587 = vmatpush1.msra.mxu0 %v5552
        %5588 = vmatprep.subr.mxu0 0.0
        %5589 = vmatpush1.msra.mxu0 %v5553
        %5590 = vmatprep.subr.mxu0 0.0
        %5591 = vmatpush1.msra.mxu0 %v5554
        %5592 = vmatprep.subr.mxu0 0.0
        %5593 = vmatpush1.msra.mxu0 %v5555
        %5594 = vmatprep.subr.mxu0 0.0
        %5595 = vmatpush1.msra.mxu0 %v5556
        %5596 = vmatprep.subr.mxu0 0.0
        %5597 = vmatpush1.msra.mxu0 %v5557
        %5598 = vmatprep.subr.mxu0 0.0
        %5599 = vmatpush1.msra.mxu0 %v5558
        %5600 = vmatprep.subr.mxu0 0.0
        %5601 = vmatpush1.msra.mxu0 %v5559
        %5602 = vmatprep.subr.mxu0 0.0
        %5603 = vmatpush1.msra.mxu0 %v5560
        %5604 = vmatprep.subr.mxu0 0.0
        %5605 = vmatpush1.msra.mxu0 0.0
        %5606 = vmatprep.subr.mxu0 0.0
        %5607 = vmatpush1.msra.mxu0 0.0
        %5608 = vmatprep.subr.mxu0 0.0
        %5609 = vmatpush1.msra.mxu0 0.0
        %5610 = vmatprep.subr.mxu0 0.0
        %5611 = vmatpush1.msra.mxu0 0.0
        %5612 = vmatprep.subr.mxu0 0.0
        %5613 = vmatpush1.msra.mxu0 0.0
        %5614 = vmatprep.subr.mxu0 0.0
        %5615 = vmatpush1.msra.mxu0 0.0
        %5616 = vmatprep.subr.mxu0 0.0
        %5617 = vmatpush1.msra.mxu0 0.0
        %5618 = vmatprep.subr.mxu0 0.0
        %5619 = vmatpush1.msra.mxu0 0.0
        %5620 = vmatprep.subr.mxu0 0.0
        %5621 = vmatpush1.msra.mxu0 0.0
        %5622 = vmatprep.subr.mxu0 0.0
        %5623 = vmatpush1.msra.mxu0 0.0
        %5624 = vmatprep.subr.mxu0 0.0
        %5625 = vmatpush1.msra.mxu0 0.0
        %5626 = vmatprep.subr.mxu0 0.0
        %5627 = vmatpush1.msra.mxu0 0.0
        %5628 = vmatprep.subr.mxu0 0.0
        %5629 = vmatpush1.msra.mxu0 0.0
        %5630 = vmatprep.subr.mxu0 0.0
        %5631 = vmatpush1.msra.mxu0 0.0
        %5632 = vmatprep.subr.mxu0 0.0
        %5633 = vmatpush1.msra.mxu0 0.0
        %5634 = vmatprep.subr.mxu0 0.0
        %5635 = vmatpush1.msra.mxu0 0.0
        %5636 = vmatprep.mubr.f32.mxu0 0.0
        %5637 = vmatmul.mubr.f32.gmra.mrb[0].mxu0 %v5570
        %v5638 = vpop.f32.mrb[0].mxu0
        %v5639 = vadd.f32 0.0, %v5638
        %v5640 = vpop.f32.mrb[0].mxu0
        %5641 = vdwg.mxu0
        %v5642 = vadd.f32 %v5542, %v5639
        %s5643 = scalar_lea.vmem [#allocation5], 8
        %v5644 = vld [vmem:[%s5643] sm:$0x3]
        %v5645 = vld [vmem:[%s5643 + $0x4] sm:$0x3]
        %v5646 = vld [vmem:[%s3338] sm:$0xff]
        %v5647 = vld [vmem:[%s3338 + $0x8] sm:$0xff]
        %v5648 = vld [vmem:[%s3338 + $0x10] sm:$0xff]
        %v5649 = vld [vmem:[%s3338 + $0x18] sm:$0xff]
        %v5650 = vld [vmem:[%s3338 + $0x20] sm:$0xff]
        %v5651 = vld [vmem:[%s3338 + $0x28] sm:$0xff]
        %v5652 = vld [vmem:[%s3338 + $0x30] sm:$0xff]
        %v5653 = vld [vmem:[%s3338 + $0x38] sm:$0xff]
        %v5654 = vld [vmem:[%s3338 + $0x40] sm:$0xff]
        %v5655 = vld [vmem:[%s3338 + $0x48] sm:$0xff]
        %v5656 = vld [vmem:[%s3338 + $0x50] sm:$0xff]
        %v5657 = vld [vmem:[%s3338 + $0x58] sm:$0xff]
        %v5658 = vld [vmem:[%s3338 + $0x60] sm:$0xff]
        %v5659 = vld [vmem:[%s3338 + $0x68] sm:$0xff]
        %v5660 = vld [vmem:[%s3338 + $0x70] sm:$0xff]
        %v5661 = vld [vmem:[%s3338 + $0x78] sm:$0xff]
        %v5664 = vcombine.low %v5644, %v5645
        %v5666 = vunpack.c.l.s4 1983009808
        %v5667 = vunpack.c.0.s8 %v5666
        %v5668 = vlaneseq
        %v5669 = vshrl.u32 %v5668, 7
        %v5670 = vsub.s32 %v5667, %v5669
        %v5671 = vrot.slane %v5664, %v5670
        %5673 = vmatprep.subr.mxu0 0.0
        %5674 = vmatpush1.msra.mxu0 %v5646
        %5675 = vmatprep.subr.mxu0 0.0
        %5676 = vmatpush1.msra.mxu0 %v5647
        %5677 = vmatprep.subr.mxu0 0.0
        %5678 = vmatpush1.msra.mxu0 %v5648
        %5679 = vmatprep.subr.mxu0 0.0
        %5680 = vmatpush1.msra.mxu0 %v5649
        %5681 = vmatprep.subr.mxu0 0.0
        %5682 = vmatpush1.msra.mxu0 %v5650
        %5683 = vmatprep.subr.mxu0 0.0
        %5684 = vmatpush1.msra.mxu0 %v5651
        %5685 = vmatprep.subr.mxu0 0.0
        %5686 = vmatpush1.msra.mxu0 %v5652
        %5687 = vmatprep.subr.mxu0 0.0
        %5688 = vmatpush1.msra.mxu0 %v5653
        %5689 = vmatprep.subr.mxu0 0.0
        %5690 = vmatpush1.msra.mxu0 %v5654
        %5691 = vmatprep.subr.mxu0 0.0
        %5692 = vmatpush1.msra.mxu0 %v5655
        %5693 = vmatprep.subr.mxu0 0.0
        %5694 = vmatpush1.msra.mxu0 %v5656
        %5695 = vmatprep.subr.mxu0 0.0
        %5696 = vmatpush1.msra.mxu0 %v5657
        %5697 = vmatprep.subr.mxu0 0.0
        %5698 = vmatpush1.msra.mxu0 %v5658
        %5699 = vmatprep.subr.mxu0 0.0
        %5700 = vmatpush1.msra.mxu0 %v5659
        %5701 = vmatprep.subr.mxu0 0.0
        %5702 = vmatpush1.msra.mxu0 %v5660
        %5703 = vmatprep.subr.mxu0 0.0
        %5704 = vmatpush1.msra.mxu0 %v5661
        %5705 = vmatprep.subr.mxu0 0.0
        %5706 = vmatpush1.msra.mxu0 0.0
        %5707 = vmatprep.subr.mxu0 0.0
        %5708 = vmatpush1.msra.mxu0 0.0
        %5709 = vmatprep.subr.mxu0 0.0
        %5710 = vmatpush1.msra.mxu0 0.0
        %5711 = vmatprep.subr.mxu0 0.0
        %5712 = vmatpush1.msra.mxu0 0.0
        %5713 = vmatprep.subr.mxu0 0.0
        %5714 = vmatpush1.msra.mxu0 0.0
        %5715 = vmatprep.subr.mxu0 0.0
        %5716 = vmatpush1.msra.mxu0 0.0
        %5717 = vmatprep.subr.mxu0 0.0
        %5718 = vmatpush1.msra.mxu0 0.0
        %5719 = vmatprep.subr.mxu0 0.0
        %5720 = vmatpush1.msra.mxu0 0.0
        %5721 = vmatprep.subr.mxu0 0.0
        %5722 = vmatpush1.msra.mxu0 0.0
        %5723 = vmatprep.subr.mxu0 0.0
        %5724 = vmatpush1.msra.mxu0 0.0
        %5725 = vmatprep.subr.mxu0 0.0
        %5726 = vmatpush1.msra.mxu0 0.0
        %5727 = vmatprep.subr.mxu0 0.0
        %5728 = vmatpush1.msra.mxu0 0.0
        %5729 = vmatprep.subr.mxu0 0.0
        %5730 = vmatpush1.msra.mxu0 0.0
        %5731 = vmatprep.subr.mxu0 0.0
        %5732 = vmatpush1.msra.mxu0 0.0
        %5733 = vmatprep.subr.mxu0 0.0
        %5734 = vmatpush1.msra.mxu0 0.0
        %5735 = vmatprep.subr.mxu0 0.0
        %5736 = vmatpush1.msra.mxu0 0.0
        %5737 = vmatprep.mubr.f32.mxu0 0.0
        %5738 = vmatmul.mubr.f32.gmra.mrb[0].mxu0 %v5671
        %v5739 = vpop.f32.mrb[0].mxu0
        %v5740 = vadd.f32 0.0, %v5739
        %v5741 = vpop.f32.mrb[0].mxu0
        %5742 = vdwg.mxu0
        %v5743 = vadd.f32 %v5642, %v5740
        %v5744 = vld [vmem:[%s5643 + $0x1] sm:$0x3]
        %v5745 = vld [vmem:[%s5643 + $0x5] sm:$0x3]
        %v5746 = vld [vmem:[%s3476] sm:$0xff]
        %v5747 = vld [vmem:[%s3476 + $0x8] sm:$0xff]
        %v5748 = vld [vmem:[%s3476 + $0x10] sm:$0xff]
        %v5749 = vld [vmem:[%s3476 + $0x18] sm:$0xff]
        %v5750 = vld [vmem:[%s3476 + $0x20] sm:$0xff]
        %v5751 = vld [vmem:[%s3476 + $0x28] sm:$0xff]
        %v5752 = vld [vmem:[%s3476 + $0x30] sm:$0xff]
        %v5753 = vld [vmem:[%s3476 + $0x38] sm:$0xff]
        %v5754 = vld [vmem:[%s3476 + $0x40] sm:$0xff]
        %v5755 = vld [vmem:[%s3476 + $0x48] sm:$0xff]
        %v5756 = vld [vmem:[%s3476 + $0x50] sm:$0xff]
        %v5757 = vld [vmem:[%s3476 + $0x58] sm:$0xff]
        %v5758 = vld [vmem:[%s3476 + $0x60] sm:$0xff]
        %v5759 = vld [vmem:[%s3476 + $0x68] sm:$0xff]
        %v5760 = vld [vmem:[%s3476 + $0x70] sm:$0xff]
        %v5761 = vld [vmem:[%s3476 + $0x78] sm:$0xff]
        %v5764 = vcombine.low %v5744, %v5745
        %v5766 = vunpack.c.l.s4 1983009808
        %v5767 = vunpack.c.0.s8 %v5766
        %v5768 = vlaneseq
        %v5769 = vshrl.u32 %v5768, 7
        %v5770 = vsub.s32 %v5767, %v5769
        %v5771 = vrot.slane %v5764, %v5770
        %5773 = vmatprep.subr.mxu0 0.0
        %5774 = vmatpush1.msra.mxu0 %v5746
        %5775 = vmatprep.subr.mxu0 0.0
        %5776 = vmatpush1.msra.mxu0 %v5747
        %5777 = vmatprep.subr.mxu0 0.0
        %5778 = vmatpush1.msra.mxu0 %v5748
        %5779 = vmatprep.subr.mxu0 0.0
        %5780 = vmatpush1.msra.mxu0 %v5749
        %5781 = vmatprep.subr.mxu0 0.0
        %5782 = vmatpush1.msra.mxu0 %v5750
        %5783 = vmatprep.subr.mxu0 0.0
        %5784 = vmatpush1.msra.mxu0 %v5751
        %5785 = vmatprep.subr.mxu0 0.0
        %5786 = vmatpush1.msra.mxu0 %v5752
        %5787 = vmatprep.subr.mxu0 0.0
        %5788 = vmatpush1.msra.mxu0 %v5753
        %5789 = vmatprep.subr.mxu0 0.0
        %5790 = vmatpush1.msra.mxu0 %v5754
        %5791 = vmatprep.subr.mxu0 0.0
        %5792 = vmatpush1.msra.mxu0 %v5755
        %5793 = vmatprep.subr.mxu0 0.0
        %5794 = vmatpush1.msra.mxu0 %v5756
        %5795 = vmatprep.subr.mxu0 0.0
        %5796 = vmatpush1.msra.mxu0 %v5757
        %5797 = vmatprep.subr.mxu0 0.0
        %5798 = vmatpush1.msra.mxu0 %v5758
        %5799 = vmatprep.subr.mxu0 0.0
        %5800 = vmatpush1.msra.mxu0 %v5759
        %5801 = vmatprep.subr.mxu0 0.0
        %5802 = vmatpush1.msra.mxu0 %v5760
        %5803 = vmatprep.subr.mxu0 0.0
        %5804 = vmatpush1.msra.mxu0 %v5761
        %5805 = vmatprep.subr.mxu0 0.0
        %5806 = vmatpush1.msra.mxu0 0.0
        %5807 = vmatprep.subr.mxu0 0.0
        %5808 = vmatpush1.msra.mxu0 0.0
        %5809 = vmatprep.subr.mxu0 0.0
        %5810 = vmatpush1.msra.mxu0 0.0
        %5811 = vmatprep.subr.mxu0 0.0
        %5812 = vmatpush1.msra.mxu0 0.0
        %5813 = vmatprep.subr.mxu0 0.0
        %5814 = vmatpush1.msra.mxu0 0.0
        %5815 = vmatprep.subr.mxu0 0.0
        %5816 = vmatpush1.msra.mxu0 0.0
        %5817 = vmatprep.subr.mxu0 0.0
        %5818 = vmatpush1.msra.mxu0 0.0
        %5819 = vmatprep.subr.mxu0 0.0
        %5820 = vmatpush1.msra.mxu0 0.0
        %5821 = vmatprep.subr.mxu0 0.0
        %5822 = vmatpush1.msra.mxu0 0.0
        %5823 = vmatprep.subr.mxu0 0.0
        %5824 = vmatpush1.msra.mxu0 0.0
        %5825 = vmatprep.subr.mxu0 0.0
        %5826 = vmatpush1.msra.mxu0 0.0
        %5827 = vmatprep.subr.mxu0 0.0
        %5828 = vmatpush1.msra.mxu0 0.0
        %5829 = vmatprep.subr.mxu0 0.0
        %5830 = vmatpush1.msra.mxu0 0.0
        %5831 = vmatprep.subr.mxu0 0.0
        %5832 = vmatpush1.msra.mxu0 0.0
        %5833 = vmatprep.subr.mxu0 0.0
        %5834 = vmatpush1.msra.mxu0 0.0
        %5835 = vmatprep.subr.mxu0 0.0
        %5836 = vmatpush1.msra.mxu0 0.0
        %5837 = vmatprep.mubr.f32.mxu0 0.0
        %5838 = vmatmul.mubr.f32.gmra.mrb[0].mxu0 %v5771
        %v5839 = vpop.f32.mrb[0].mxu0
        %v5840 = vadd.f32 0.0, %v5839
        %v5841 = vpop.f32.mrb[0].mxu0
        %5842 = vdwg.mxu0
        %v5843 = vadd.f32 %v5743, %v5840
        %v5844 = vld [vmem:[%s5643 + $0x2] sm:$0x3]
        %v5845 = vld [vmem:[%s5643 + $0x6] sm:$0x3]
        %v5846 = vld [vmem:[%s3614] sm:$0xff]
        %v5847 = vld [vmem:[%s3614 + $0x8] sm:$0xff]
        %v5848 = vld [vmem:[%s3614 + $0x10] sm:$0xff]
        %v5849 = vld [vmem:[%s3614 + $0x18] sm:$0xff]
        %v5850 = vld [vmem:[%s3614 + $0x20] sm:$0xff]
        %v5851 = vld [vmem:[%s3614 + $0x28] sm:$0xff]
        %v5852 = vld [vmem:[%s3614 + $0x30] sm:$0xff]
        %v5853 = vld [vmem:[%s3614 + $0x38] sm:$0xff]
        %v5854 = vld [vmem:[%s3614 + $0x40] sm:$0xff]
        %v5855 = vld [vmem:[%s3614 + $0x48] sm:$0xff]
        %v5856 = vld [vmem:[%s3614 + $0x50] sm:$0xff]
        %v5857 = vld [vmem:[%s3614 + $0x58] sm:$0xff]
        %v5858 = vld [vmem:[%s3614 + $0x60] sm:$0xff]
        %v5859 = vld [vmem:[%s3614 + $0x68] sm:$0xff]
        %v5860 = vld [vmem:[%s3614 + $0x70] sm:$0xff]
        %v5861 = vld [vmem:[%s3614 + $0x78] sm:$0xff]
        %v5864 = vcombine.low %v5844, %v5845
        %v5866 = vunpack.c.l.s4 1983009808
        %v5867 = vunpack.c.0.s8 %v5866
        %v5868 = vlaneseq
        %v5869 = vshrl.u32 %v5868, 7
        %v5870 = vsub.s32 %v5867, %v5869
        %v5871 = vrot.slane %v5864, %v5870
        %5873 = vmatprep.subr.mxu0 0.0
        %5874 = vmatpush1.msra.mxu0 %v5846
        %5875 = vmatprep.subr.mxu0 0.0
        %5876 = vmatpush1.msra.mxu0 %v5847
        %5877 = vmatprep.subr.mxu0 0.0
        %5878 = vmatpush1.msra.mxu0 %v5848
        %5879 = vmatprep.subr.mxu0 0.0
        %5880 = vmatpush1.msra.mxu0 %v5849
        %5881 = vmatprep.subr.mxu0 0.0
        %5882 = vmatpush1.msra.mxu0 %v5850
        %5883 = vmatprep.subr.mxu0 0.0
        %5884 = vmatpush1.msra.mxu0 %v5851
        %5885 = vmatprep.subr.mxu0 0.0
        %5886 = vmatpush1.msra.mxu0 %v5852
        %5887 = vmatprep.subr.mxu0 0.0
        %5888 = vmatpush1.msra.mxu0 %v5853
        %5889 = vmatprep.subr.mxu0 0.0
        %5890 = vmatpush1.msra.mxu0 %v5854
        %5891 = vmatprep.subr.mxu0 0.0
        %5892 = vmatpush1.msra.mxu0 %v5855
        %5893 = vmatprep.subr.mxu0 0.0
        %5894 = vmatpush1.msra.mxu0 %v5856
        %5895 = vmatprep.subr.mxu0 0.0
        %5896 = vmatpush1.msra.mxu0 %v5857
        %5897 = vmatprep.subr.mxu0 0.0
        %5898 = vmatpush1.msra.mxu0 %v5858
        %5899 = vmatprep.subr.mxu0 0.0
        %5900 = vmatpush1.msra.mxu0 %v5859
        %5901 = vmatprep.subr.mxu0 0.0
        %5902 = vmatpush1.msra.mxu0 %v5860
        %5903 = vmatprep.subr.mxu0 0.0
        %5904 = vmatpush1.msra.mxu0 %v5861
        %5905 = vmatprep.subr.mxu0 0.0
        %5906 = vmatpush1.msra.mxu0 0.0
        %5907 = vmatprep.subr.mxu0 0.0
        %5908 = vmatpush1.msra.mxu0 0.0
        %5909 = vmatprep.subr.mxu0 0.0
        %5910 = vmatpush1.msra.mxu0 0.0
        %5911 = vmatprep.subr.mxu0 0.0
        %5912 = vmatpush1.msra.mxu0 0.0
        %5913 = vmatprep.subr.mxu0 0.0
        %5914 = vmatpush1.msra.mxu0 0.0
        %5915 = vmatprep.subr.mxu0 0.0
        %5916 = vmatpush1.msra.mxu0 0.0
        %5917 = vmatprep.subr.mxu0 0.0
        %5918 = vmatpush1.msra.mxu0 0.0
        %5919 = vmatprep.subr.mxu0 0.0
        %5920 = vmatpush1.msra.mxu0 0.0
        %5921 = vmatprep.subr.mxu0 0.0
        %5922 = vmatpush1.msra.mxu0 0.0
        %5923 = vmatprep.subr.mxu0 0.0
        %5924 = vmatpush1.msra.mxu0 0.0
        %5925 = vmatprep.subr.mxu0 0.0
        %5926 = vmatpush1.msra.mxu0 0.0
        %5927 = vmatprep.subr.mxu0 0.0
        %5928 = vmatpush1.msra.mxu0 0.0
        %5929 = vmatprep.subr.mxu0 0.0
        %5930 = vmatpush1.msra.mxu0 0.0
        %5931 = vmatprep.subr.mxu0 0.0
        %5932 = vmatpush1.msra.mxu0 0.0
        %5933 = vmatprep.subr.mxu0 0.0
        %5934 = vmatpush1.msra.mxu0 0.0
        %5935 = vmatprep.subr.mxu0 0.0
        %5936 = vmatpush1.msra.mxu0 0.0
        %5937 = vmatprep.mubr.f32.mxu0 0.0
        %5938 = vmatmul.mubr.f32.gmra.mrb[0].mxu0 %v5871
        %v5939 = vpop.f32.mrb[0].mxu0
        %v5940 = vadd.f32 0.0, %v5939
        %v5941 = vpop.f32.mrb[0].mxu0
        %5942 = vdwg.mxu0
        %v5943 = vadd.f32 %v5843, %v5940
        %v5944 = vld [vmem:[%s4] sm:$0x1]
        %v5946 = vlaneseq
        %v5947 = vshrl.u32 %v5946, 7
        %v5948 = vsub.s32 0, %v5947
        %v5949 = vrot.slane %v5944, %v5948
        %v5951 = vadd.f32 %v5943, %v5949
        %v5952 = vmax.f32 %v5951, 0.0
        %v5955 = vunpack.c.l.s4 1983009808
        %v5956 = vunpack.c.0.s8 %v5955
        %v5957 = vlaneseq
        %v5958 = vshrl.u32 %v5957, 7
        %v5959 = vsub.s32 %v5956, %v5958
        %v5960 = vrot.slane %v5952, %v5959
        %v5961 = vcombine.high %v5960, %v5960
        %v5964 = vsel %vm1905, %v5960, -inf
        %v5965 = vsel %vm1905, %v5961, -inf
        %v5966 = vmax.f32 %v5964, %v5965
        %v5967 = vsel %vm1905, %v5966, -inf
        %v5968 = vrot.slane %v5967, 4
        %v5969 = vmax.f32 %v5967, %v5968
        %v5970 = vrot.slane %v5969, 2
        %v5971 = vmax.f32 %v5969, %v5970
        %v5972 = vrot.slane %v5971, 1
        %v5973 = vmax.f32 %v5971, %v5972
        %v5974 = vld [vmem:[%s5] sm:$0xff]
        %v5975 = vld [vmem:[%s5 + $0x8] sm:$0xff]
        %v5976 = vld [vmem:[%s5 + $0x10] sm:$0xff]
        %v5977 = vld [vmem:[%s5 + $0x18] sm:$0xff]
        %v5978 = vld [vmem:[%s5 + $0x20] sm:$0xff]
        %v5979 = vld [vmem:[%s5 + $0x28] sm:$0xff]
        %v5980 = vld [vmem:[%s5 + $0x30] sm:$0xff]
        %v5981 = vld [vmem:[%s5 + $0x38] sm:$0xff]
        %v5982 = vld [vmem:[%s5 + $0x40] sm:$0xff]
        %v5983 = vld [vmem:[%s5 + $0x48] sm:$0xff]
        %v5984 = vld [vmem:[%s5 + $0x50] sm:$0xff]
        %v5985 = vld [vmem:[%s5 + $0x58] sm:$0xff]
        %v5986 = vld [vmem:[%s5 + $0x60] sm:$0xff]
        %v5987 = vld [vmem:[%s5 + $0x68] sm:$0xff]
        %v5988 = vld [vmem:[%s5 + $0x70] sm:$0xff]
        %v5989 = vld [vmem:[%s5 + $0x78] sm:$0xff]
        %v5990 = vld [vmem:[%s6] sm:$0x1]
        %5991 = vmatprep.subr.mxu0 0.0
        %5992 = vmatpush1.msra.mxu0 %v5974
        %5993 = vmatprep.subr.mxu0 0.0
        %5994 = vmatpush1.msra.mxu0 %v5975
        %5995 = vmatprep.subr.mxu0 0.0
        %5996 = vmatpush1.msra.mxu0 %v5976
        %5997 = vmatprep.subr.mxu0 0.0
        %5998 = vmatpush1.msra.mxu0 %v5977
        %5999 = vmatprep.subr.mxu0 0.0
        %6000 = vmatpush1.msra.mxu0 %v5978
        %6001 = vmatprep.subr.mxu0 0.0
        %6002 = vmatpush1.msra.mxu0 %v5979
        %6003 = vmatprep.subr.mxu0 0.0
        %6004 = vmatpush1.msra.mxu0 %v5980
        %6005 = vmatprep.subr.mxu0 0.0
        %6006 = vmatpush1.msra.mxu0 %v5981
        %6007 = vmatprep.subr.mxu0 0.0
        %6008 = vmatpush1.msra.mxu0 %v5982
        %6009 = vmatprep.subr.mxu0 0.0
        %6010 = vmatpush1.msra.mxu0 %v5983
        %6011 = vmatprep.subr.mxu0 0.0
        %6012 = vmatpush1.msra.mxu0 %v5984
        %6013 = vmatprep.subr.mxu0 0.0
        %6014 = vmatpush1.msra.mxu0 %v5985
        %6015 = vmatprep.subr.mxu0 0.0
        %6016 = vmatpush1.msra.mxu0 %v5986
        %6017 = vmatprep.subr.mxu0 0.0
        %6018 = vmatpush1.msra.mxu0 %v5987
        %6019 = vmatprep.subr.mxu0 0.0
        %6020 = vmatpush1.msra.mxu0 %v5988
        %6021 = vmatprep.subr.mxu0 0.0
        %6022 = vmatpush1.msra.mxu0 %v5989
        %6023 = vmatprep.subr.mxu0 0.0
        %6024 = vmatpush1.msra.mxu0 0.0
        %6025 = vmatprep.subr.mxu0 0.0
        %6026 = vmatpush1.msra.mxu0 0.0
        %6027 = vmatprep.subr.mxu0 0.0
        %6028 = vmatpush1.msra.mxu0 0.0
        %6029 = vmatprep.subr.mxu0 0.0
        %6030 = vmatpush1.msra.mxu0 0.0
        %6031 = vmatprep.subr.mxu0 0.0
        %6032 = vmatpush1.msra.mxu0 0.0
        %6033 = vmatprep.subr.mxu0 0.0
        %6034 = vmatpush1.msra.mxu0 0.0
        %6035 = vmatprep.subr.mxu0 0.0
        %6036 = vmatpush1.msra.mxu0 0.0
        %6037 = vmatprep.subr.mxu0 0.0
        %6038 = vmatpush1.msra.mxu0 0.0
        %6039 = vmatprep.subr.mxu0 0.0
        %6040 = vmatpush1.msra.mxu0 0.0
        %6041 = vmatprep.subr.mxu0 0.0
        %6042 = vmatpush1.msra.mxu0 0.0
        %6043 = vmatprep.subr.mxu0 0.0
        %6044 = vmatpush1.msra.mxu0 0.0
        %6045 = vmatprep.subr.mxu0 0.0
        %6046 = vmatpush1.msra.mxu0 0.0
        %6047 = vmatprep.subr.mxu0 0.0
        %6048 = vmatpush1.msra.mxu0 0.0
        %6049 = vmatprep.subr.mxu0 0.0
        %6050 = vmatpush1.msra.mxu0 0.0
        %6051 = vmatprep.subr.mxu0 0.0
        %6052 = vmatpush1.msra.mxu0 0.0
        %6053 = vmatprep.subr.mxu0 0.0
        %6054 = vmatpush1.msra.mxu0 0.0
        %6055 = vmatprep.mubr.f32.mxu0 0.0
        %6056 = vmatmul.mubr.f32.gmra.mrb[0].mxu0 %v5973
        %v6057 = vpop.f32.mrb[0].mxu0
        %v6058 = vadd.f32 %v5990, %v6057
        %v6059 = vpop.f32.mrb[0].mxu0
        %6060 = vdwg.mxu0
        %vm6061 = vcmask 8192
        %v6062 = vsel %vm6061, %v6058, -inf
        %6063 = vmax.xlane.f32.xlu0 %v6062
        %v6064 = vpop.xlane.xlu0 %6063
        %v6065 = vsub.f32 %v6058, %v6064
        %v6066 = vmul.f32 %v6065, 1.442695
        %v6067 = vpow.pop %v6066
        %v6068 = vsel %vm6061, %v6067, 0.0
        %6069 = vadd.xlane.f32.xlu0 %v6068
        %v6070 = vpop.xlane.xlu0 %6069
        %v6071 = vlog2.pop %v6070
        %v6072 = vmul.f32 %v6071, 0.6931472
        %v6073 = vsub.f32 %v6065, %v6072
        %6074 = vst.msk [vmem:[%s285] sm:$0x1] %vm6061, %v6073
        %s6075 = sand.u32 %s182, 1
        %s6076 = scalar_lea.sflag [#allocation8], %s6075
        %s6077 = sand.u32 %s182, 1
        %s6078 = scalar_lea.vmem [#allocation9], %s6077
        // Predicated region
        $region53: #{model_forward.1} parent=47 // pred_check
          %p6079 = pneg %p192
        $region54: #{model_forward.1} parent=47 // pred_check_branch
          %6081 = sbr.rel (%p6079) target = $region56
        $region55: #{model_forward.1} parent=47 // pred_region
          %s6083 = ssub.s32 16, 16
          %6084 = vsyncadd %s6076, %s6083
          %s6085 = smul.addr %s22, 16
          %s6086 = scalar_lea.hbm %s7, %s6085
          %s6088 = sshll.u32 %s6078, 4
          %s6089 = int_to_ptr.vmem [resolvable:$true] %s6088
          %6091 = dma.vmem_to_hbm [thread:$0]  %s6089, 16, %s6086, %s6076
        $region56: #{model_forward.1} parent=47 // pred_fallthru
          _
      $region48: #{model_forward.1} parent=5 // pred_fallthru
        _
      %p6092 = scmp.le.s32.totalorder 2, %s17
      // Predicated region
      $region57: #{model_forward.1} parent=5 // pred_check
        %p6093 = pneg %p6092
      $region58: #{model_forward.1} parent=5 // pred_check_branch
        %6095 = sbr.rel (%p6093) target = $region60
      $region59: #{model_forward.1} parent=5 // pred_region
        %s6096 = ssub.s32 %s17, 2
        // Predicated region
        $region61: #{model_forward.1} parent=59 // pred_check
          %p6097 = pneg %p198
        $region62: #{model_forward.1} parent=59 // pred_check_branch
          %6099 = sbr.rel (%p6097) target = $region64
        $region63: #{model_forward.1} parent=59 // pred_region
          %s6100 = sand.u32 %s183, 1
          %s6101 = scalar_lea.sflag [#allocation8], %s6100
          %s6102 = sand.u32 %s183, 1
          %s6103 = scalar_lea.vmem [#allocation9], %s6102
          %6104 = dma.done %s6101, 16
        $region64: #{model_forward.1} parent=59 // pred_fallthru
          _
      $region60: #{model_forward.1} parent=5 // pred_fallthru
        _
    $region6: #{model_forward.1} parent=1 // loop_footer
      %s21 = sadd.s32 1, %s17
    $region7: #{model_forward.1} parent=1 // loop_footer_branch
      %16 = sbr.rel target = $region3
    $region8: #{model_forward.1} parent=1 // loop_exit
      _
    %6105 = vsyncpa [#allocation7], 1
    %s6106 = scalar_lea.sflag [#allocation7], 1
    %6107 = vsyncpa %s6106, 1
    %6108 = vsyncpa [#allocation8], 1
    %s6109 = scalar_lea.sflag [#allocation8], 1
    %6110 = vsyncpa %s6109, 1

</llo_original>
